<compile_context>
chip_gen: v7x
topology: tpu7x:2x2x1
jax: 0.10.0
libtpu: 0.0.40
codegen_flags: <defaults>
</compile_context>

<pallas_src>
import functools

import jax
import jax.numpy as jnp
from jax.experimental import pallas as pl
from jax.experimental.pallas import tpu as pltpu


# ----------------------------------------------------------------------------
# Kernel body
# ----------------------------------------------------------------------------
def _bottleneck_kernel_impl(x_ref, w1_ref, s1_ref, b1_ref,
                            w2_ref, s2_ref, b2_ref,
                            w3_ref, s3_ref, b3_ref,
                            o_ref, *, fuse_k, shift_mode):
    """One (image, strip) grid step.

    x_ref : (H, W, Cin)  bf16  -- whole image, resident across the strip axis
    w1_ref: (Cin, P)     bf16
    w2_ref: (9, P, P)    bf16  -- 3x3 weights, k = 3*dy + dx, laid out (cin, cout)
    w3_ref: (P, 4P)      bf16
    s*/b* : (1, C)       f32   -- folded BatchNorm scale / bias
    o_ref : (TH*W, 4P)   bf16  -- one output strip, flattened (2-D store slab)
    """
    H, W, Cin = x_ref.shape
    M, E = o_ref.shape                      # M = TH*W, E = 4*P
    P = w1_ref.shape[1]
    TH = M // W
    ME = M + 2 * W                          # (TH + 2) * W

    h = pl.program_id(1)
    n_strips = pl.num_programs(1)
    r0 = pl.multiple_of(h * TH, TH)         # first output row of this strip

    # ---- strip + 1-row halo, gathered from the resident image block ---------
    # TODO(synk): replace the 3-way concat with a single clamped (TH+2)-row
    # dynamic window once the h==0 / h==NS-1 offset is folded into the halo
    # mask (saves one (TH+2)*W*Cin bf16 copy per strip).
    top = x_ref[pl.ds(jnp.maximum(r0 - 1, 0), 1), :, :]
    mid = x_ref[pl.ds(r0, TH), :, :]
    bot = x_ref[pl.ds(jnp.minimum(r0 + TH, H - 1), 1), :, :]
    xm = jnp.concatenate([top, mid, bot], axis=0).reshape(ME, Cin)   # bf16

    # ---- conv1 (1x1) + bn1 + relu1 -------------------------------------------
    t1 = jnp.dot(xm, w1_ref[...], preferred_element_type=jnp.float32)
    t1 = jnp.maximum(t1 * s1_ref[...] + b1_ref[...], 0.0)
    t1 = t1.astype(jnp.bfloat16)                                     # (ME, P)

    # Zero the halo rows that fall outside the image (== the 3x3 conv's zero
    # padding).  NOTE: must stay AFTER bn1+relu1 (relu(bias) != 0).
    ridx = jax.lax.broadcasted_iota(jnp.int32, (ME, 1), 0)
    halo_bad = ((ridx < W) & (h == 0)) | \
               ((ridx >= (TH + 1) * W) & (h == n_strips - 1))
    t1 = jnp.where(halo_bad, 0.0, t1)

    # ---- dx in {-1, 0, +1} shifted operands (zero-padded W border) -----------
    xcol = ridx % W                         # x coordinate of each flattened row

    def shift_cols(dxo):
        if dxo == 0:
            return t1
        if shift_mode == "roll_np":         # pltpu.roll follows np.roll
            r = pltpu.roll(t1, (-dxo) % ME, 0)
        elif shift_mode == "roll_rev":      # reversed rotation convention
            r = pltpu.roll(t1, dxo % ME, 0)
        else:                               # "slice": layout-copy fallback
            zrow = jnp.zeros((1, P), jnp.bfloat16)
            if dxo == 1:
                r = jnp.concatenate([t1[1:, :], zrow], axis=0)
            else:
                r = jnp.concatenate([zrow, t1[:-1, :]], axis=0)
        bad = (xcol == W - 1) if dxo == 1 else (xcol == 0)
        return jnp.where(bad, 0.0, r)

    shifted = (shift_cols(-1), shift_cols(0), shift_cols(1))   # taps dx = 0,1,2

    # ---- conv2 (3x3, pad=1) + bn2 + relu2 -------------------------------------
    if fuse_k:
        # P % 128 == 0: lane concat is aligned -> one K = 9P matmul.
        lhs = jnp.concatenate(
            [shifted[dx][dy * W:dy * W + M, :]
             for dy in range(3) for dx in range(3)], axis=-1)        # (M, 9P)
        t2 = jnp.dot(lhs, w2_ref[...].reshape(9 * P, P),
                     preferred_element_type=jnp.float32)
    else:
        # Nine accumulating matmuls: no lane concat; dy taps are W-aligned
        # static slices of the already-shifted operands.
        t2 = jnp.zeros((M, P), jnp.float32)
        for dy in range(3):
            for dx in range(3):
                t2 += jnp.dot(shifted[dx][dy * W:dy * W + M, :],
                              w2_ref[3 * dy + dx],
                              preferred_element_type=jnp.float32)
    t2 = jnp.maximum(t2 * s2_ref[...] + b2_ref[...], 0.0)            # (M, P)

    # ---- conv3 (1x1) + bn3 -----------------------------------------------------
    t3 = jnp.dot(t2.astype(jnp.bfloat16), w3_ref[...],
                 preferred_element_type=jnp.float32)                 # (M, 4P)
    t3 = t3 * s3_ref[...] + b3_ref[...]

    # ---- residual add + relu (reuse the flattened mid rows of x) --------------
    res = xm[W:W + M, :].astype(jnp.float32)                         # Cin == 4P
    o_ref[...] = jnp.maximum(t3 + res, 0.0).astype(o_ref.dtype)


# ----------------------------------------------------------------------------
# Wrapper helpers
# ----------------------------------------------------------------------------
@functools.lru_cache(maxsize=1)
def _roll_convention():
    """One-time on-device probe pinning pltpu.roll's rotation direction.
    Returns 'roll_np' (np.roll convention), 'roll_rev', or 'slice' if sublane
    roll is unavailable."""
    def probe(x_ref, o_ref):
        o_ref[...] = pltpu.roll(x_ref[...], 1, 0)

    try:
        x = jnp.tile(jnp.arange(8, dtype=jnp.float32)[:, None], (1, 128))
        y = pl.pallas_call(
            probe, out_shape=jax.ShapeDtypeStruct((8, 128), jnp.float32))(x)
        v = float(jax.device_get(y)[0, 0])
        if v == 7.0:
            return "roll_np"
        if v == 1.0:
            return "roll_rev"
    except Exception:
        pass
    return "slice"


def _vmem_limit_bytes():
    # v7x-class parts have 64 MiB physical VMEM per TensorCore -> cap at 48 MiB.
    # v5e/v6e have 128 MiB -> ~96 MiB so whole-image strips fit on big stages.
    try:
        cap = int(pltpu.get_tpu_info().vmem_capacity_bytes)
    except Exception:
        return 48 * 1024 * 1024
    if cap <= 64 * 1024 * 1024:
        return 48 * 1024 * 1024
    return min(int(cap * 3 // 4), 112 * 1024 * 1024)


def _pick_strip(H, W, P, Cin, vmem_limit, target_rows=2048):
    """Largest divisor TH of H with TH*W in the ~1-4K matmul-row sweet spot
    whose per-strip temporaries (plus resident image + weights) fit VMEM."""
    E = 4 * P
    const_bytes = (2 * H * W * Cin * 2                        # resident x (<=2 bufs)
                   + 2 * (Cin * P + 9 * P * P + P * E) * 2    # bf16 weights
                   + 2 * 2 * (2 * P + E) * 2 * 4)             # BN scale/bias
    budget = int(vmem_limit * 0.8) - const_bytes

    def strip_bytes(th):
        me, m = (th + 2) * W, th * W
        return (me * Cin * 2           # xm (bf16)
                + 3 * me * P * 2       # t1 + two shifted copies (bf16)
                + m * P * 4            # conv2 accumulator (f32)
                + m * E * 4            # t3 (f32)
                + 2 * m * E * 2)       # output block (bf16, double buffered)

    divs = [d for d in range(1, H + 1) if H % d == 0]
    aligned = [d for d in divs if d == H or (d * W) % 8 == 0]
    ok = [d for d in aligned
          if d * W <= max(target_rows, W) and strip_bytes(d) <= budget]
    if ok:
        return max(ok)
    return min(aligned) if aligned else H


# ----------------------------------------------------------------------------
# Public forward
# ----------------------------------------------------------------------------
def bottleneck_forward_nhwc(x_nhwc, params, *, strip=None):
    """Fused BottleNeck forward.  x_nhwc: (N, H, W, Cin).  Returns bf16 NHWC."""
    (w1, s1, b1, w2, s2, b2, w3, s3, b3) = params
    N, H, W, Cin = x_nhwc.shape
    P = w1.shape[1]
    E = 4 * P
    assert Cin == E, "stride=1 / no downsample requires in_planes == 4*planes"

    vmem_limit = _vmem_limit_bytes()
    TH = strip or _pick_strip(H, W, P, Cin, vmem_limit)
    assert H % TH == 0, "strip height must divide H"
    NS = H // TH
    assert NS == 1 or (TH * W) % 8 == 0, "strip rows must be 8-aligned"

    xb = x_nhwc.astype(jnp.bfloat16)
    w1b = w1.astype(jnp.bfloat16)
    w2b = w2.reshape(9, P, P).astype(jnp.bfloat16)    # k = 3*dy + dx, (cin,cout)
    w3b = w3.astype(jnp.bfloat16)
    consts = (w1b, s1, b1, w2b, s2, b2, w3b, s3, b3)

    fuse_k = (P % 128 == 0)        # lane-aligned im2col only when 128-aligned
    shift_pref = _roll_convention()

    # TODO(synk): for late stages with tiny spatial maps (e.g. 7x7), block
    # several images per grid step so the matmul M = Nb*H*W >= 512 (MXU
    # occupancy on v6e/v7x); per-image strips are used here.
    def build(shift_mode, single_buffer):
        def kernel(*refs):
            _bottleneck_kernel_impl(*refs, fuse_k=fuse_k, shift_mode=shift_mode)

        def const_spec(a):
            idx = lambda n, h, nd=a.ndim: (0,) * nd
            if single_buffer:
                # constant blocks: single-buffer to reclaim VMEM (esp. v7x)
                return pl.BlockSpec(a.shape, idx, pipeline_mode=pl.Buffered(1))
            return pl.BlockSpec(a.shape, idx)

        in_specs = [pl.BlockSpec((None, H, W, Cin), lambda n, h: (n, 0, 0, 0))]
        in_specs += [const_spec(a) for a in consts]

        return pl.pallas_call(
            kernel,
            out_shape=jax.ShapeDtypeStruct((N, H * W, E), jnp.bfloat16),
            grid_spec=pltpu.PrefetchScalarGridSpec(
                num_scalar_prefetch=0,
                grid=(N, NS),                        # batch axis first (megacore)
                in_specs=in_specs,
                out_specs=pl.BlockSpec((None, TH * W, E),
                                       lambda n, h: (n, h, 0)),
            ),
            compiler_params=pltpu.CompilerParams(
                dimension_semantics=("parallel", "parallel"),
                vmem_limit_bytes=vmem_limit),
        )

    attempts, seen = [], set()
    for cfg in ((shift_pref, True), (shift_pref, False), ("slice", False)):
        if cfg not in seen:
            seen.add(cfg)
            attempts.append(cfg)

    err = None
    for shift_mode, single_buffer in attempts:
        try:
            out = build(shift_mode, single_buffer)(xb, *consts)
            return out.reshape(N, H, W, E)
        except Exception as e:   # fall back if Buffered(1) / roll unsupported
            err = e
    raise err


def bottleneck_forward_nchw(x_nchw, params, *, strip=None):
    """PyTorch-layout wrapper.  In a full network, change layout once at model
    boundaries, not per block."""
    x = jnp.transpose(x_nchw, (0, 2, 3, 1))
    out = bottleneck_forward_nhwc(x, params, strip=strip)
    return jnp.transpose(out, (0, 3, 1, 2))


# ----------------------------------------------------------------------------
# Params / reference
# ----------------------------------------------------------------------------
def _fold_bn(gamma, beta, mean, var, eps=1e-5):
    scale = gamma / jnp.sqrt(var + eps)
    bias = beta - mean * scale
    return scale.reshape(1, -1), bias.reshape(1, -1)


def make_params(key, in_planes, planes):
    ks = jax.random.split(key, 6)
    P, E = planes, 4 * planes
    w1 = jax.random.normal(ks[0], (in_planes, P), jnp.float32) * 0.1
    w2 = jax.random.normal(ks[1], (3, 3, P, P), jnp.float32) * 0.1    # HWIO
    w3 = jax.random.normal(ks[2], (P, E), jnp.float32) * 0.1

    def bn(k, c):
        kg, kb, km, kv = jax.random.split(k, 4)
        gamma = 1.0 + 0.1 * jax.random.normal(kg, (c,), jnp.float32)
        beta = 0.1 * jax.random.normal(kb, (c,), jnp.float32)
        mean = 0.1 * jax.random.normal(km, (c,), jnp.float32)
        var = jnp.abs(jax.random.normal(kv, (c,), jnp.float32)) + 0.5
        return _fold_bn(gamma, beta, mean, var)

    s1, b1 = bn(ks[3], P)
    s2, b2 = bn(ks[4], P)
    s3, b3 = bn(ks[5], E)
    return (w1, s1, b1, w2, s2, b2, w3, s3, b3)


def reference_forward_nhwc(x_nhwc, params):
    """Pure-JAX NHWC reference mirroring the kernel's bf16-in / f32-accum math."""
    (w1, s1, b1, w2, s2, b2, w3, s3, b3) = params
    x = x_nhwc.astype(jnp.bfloat16)
    Cin = x.shape[-1]
    P = w1.shape[1]
    dn = ("NHWC", "HWIO", "NHWC")

    def conv(inp, w, pad):
        return jax.lax.conv_general_dilated(
            inp, w, (1, 1), pad, dimension_numbers=dn,
            preferred_element_type=jnp.float32)

    t = conv(x, w1.astype(jnp.bfloat16).reshape(1, 1, Cin, P), "VALID")
    t = jnp.maximum(t * s1.reshape(1, 1, 1, -1) + b1.reshape(1, 1, 1, -1), 0.0)
    t = conv(t.astype(jnp.bfloat16), w2.astype(jnp.bfloat16), "SAME")
    t = jnp.maximum(t * s2.reshape(1, 1, 1, -1) + b2.reshape(1, 1, 1, -1), 0.0)
    t = conv(t.astype(jnp.bfloat16),
             w3.astype(jnp.bfloat16).reshape(1, 1, P, 4 * P), "VALID")
    t = t * s3.reshape(1, 1, 1, -1) + b3.reshape(1, 1, 1, -1)
    return jnp.maximum(t + x.astype(jnp.float32), 0.0)   # f32


# ----------------------------------------------------------------------------
# Demo / correctness check
# ----------------------------------------------------------------------------
if __name__ == "__main__":
    key = jax.random.PRNGKey(0)
    kx, kp = jax.random.split(key)

    planes = 4
    in_planes = 4 * planes           # residual add requires Cin == 4*planes
    N, H, W = 2, 16, 16

    x = jax.random.normal(kx, (N, H, W, in_planes), jnp.float32)   # NHWC
    params = make_params(kp, in_planes, planes)

    ref = reference_forward_nhwc(x, params)

    # strip=None -> heuristic (whole-image strip); strip=8 -> exercises the
    # multi-strip halo path.
    for strip in (None, 8):
        out = jax.block_until_ready(
            bottleneck_forward_nhwc(x, params, strip=strip))
        assert out.shape == (N, H, W, in_planes)
        assert out.dtype == jnp.bfloat16
        assert jnp.allclose(out.astype(jnp.float32), ref,
                            atol=4e-2, rtol=4e-2), "mismatch vs reference"

    print("KERNEL_OK")
</pallas_src>

<mosaic_0001>
module attributes {stable_mosaic.version = 11 : i64} {
  func.func @probe(%arg0: memref<8x128xf32, #tpu.memory_space<vmem>>, %arg1: memref<8x128xf32, #tpu.memory_space<vmem>>) attributes {dimension_semantics = [], scalar_prefetch = 0 : i64, scratch_operands = 0 : i64, tpu.core_type = #tpu.core_type<tc>} {
    %c0 = arith.constant 0 : index
    %c0_0 = arith.constant 0 : index
    %0 = vector.load %arg0[%c0, %c0_0] : memref<8x128xf32, #tpu.memory_space<vmem>>, vector<8x128xf32>
    %c1_i32 = arith.constant 1 : i32
    %1 = tpu.dynamic_rotate %0 by %c1_i32 dim 0 : vector<8x128xf32>, i32 -> vector<8x128xf32>
    %c0_1 = arith.constant 0 : index
    %c0_2 = arith.constant 0 : index
    %2 = vector.load %arg1[%c0_1, %c0_2] : memref<8x128xf32, #tpu.memory_space<vmem>>, vector<8x128xf32>
    tpu.vector_store %arg1[%c0_1, %c0_2], %1 {strides = array<i32>} : memref<8x128xf32, #tpu.memory_space<vmem>>, vector<8x128xf32>,
    return
  }
}

module attributes {stable_mosaic.version = 11 : i64} {
  func.func @kernel(%arg0: i32, %arg1: i32, %arg2: memref<1x16x16x16xbf16, #tpu.memory_space<vmem>>, %arg3: memref<16x4xbf16, #tpu.memory_space<vmem>>, %arg4: memref<1x4xf32, #tpu.memory_space<vmem>>, %arg5: memref<1x4xf32, #tpu.memory_space<vmem>>, %arg6: memref<9x4x4xbf16, #tpu.memory_space<vmem>>, %arg7: memref<1x4xf32, #tpu.memory_space<vmem>>, %arg8: memref<1x4xf32, #tpu.memory_space<vmem>>, %arg9: memref<4x16xbf16, #tpu.memory_space<vmem>>, %arg10: memref<1x16xf32, #tpu.memory_space<vmem>>, %arg11: memref<1x16xf32, #tpu.memory_space<vmem>>, %arg12: memref<1x256x16xbf16, #tpu.memory_space<vmem>>) attributes {dimension_semantics = [#tpu.dimension_semantics<parallel>, #tpu.dimension_semantics<parallel>], iteration_bounds = array<i64: 2, 1>, scalar_prefetch = 0 : i64, scratch_operands = 0 : i64, tpu.core_type = #tpu.core_type<tc>, window_params = [{transform_indices = @transform_0, window_bounds = array<i64: 1, 16, 16, 16>}, {pipeline_mode = #tpu.pipeline_mode<synchronous>, transform_indices = @transform_1, window_bounds = array<i64: 16, 4>}, {pipeline_mode = #tpu.pipeline_mode<synchronous>, transform_indices = @transform_2, window_bounds = array<i64: 1, 4>}, {pipeline_mode = #tpu.pipeline_mode<synchronous>, transform_indices = @transform_3, window_bounds = array<i64: 1, 4>}, {pipeline_mode = #tpu.pipeline_mode<synchronous>, transform_indices = @transform_4, window_bounds = array<i64: 9, 4, 4>}, {pipeline_mode = #tpu.pipeline_mode<synchronous>, transform_indices = @transform_5, window_bounds = array<i64: 1, 4>}, {pipeline_mode = #tpu.pipeline_mode<synchronous>, transform_indices = @transform_6, window_bounds = array<i64: 1, 4>}, {pipeline_mode = #tpu.pipeline_mode<synchronous>, transform_indices = @transform_7, window_bounds = array<i64: 4, 16>}, {pipeline_mode = #tpu.pipeline_mode<synchronous>, transform_indices = @transform_8, window_bounds = array<i64: 1, 16>}, {pipeline_mode = #tpu.pipeline_mode<synchronous>, transform_indices = @transform_9, window_bounds = array<i64: 1, 16>}, {transform_indices = @transform_10, window_bounds = array<i64: 1, 256, 16>}]} {
    %c16_i32 = arith.constant 16 : i32
    %0 = arith.muli %arg1, %c16_i32 : i32
    %1 = tpu.assume_multiple %0, 16 : i32
    %c1_i32 = arith.constant 1 : i32
    %2 = arith.subi %1, %c1_i32 : i32
    %c0_i32 = arith.constant 0 : i32
    %3 = arith.maxsi %2, %c0_i32 : i32
    %c0 = arith.constant 0 : index
    %4 = arith.index_cast %3 : i32 to index
    %c0_0 = arith.constant 0 : index
    %c0_1 = arith.constant 0 : index
    %5 = vector.load %arg2[%c0, %4, %c0_0, %c0_1] : memref<1x16x16x16xbf16, #tpu.memory_space<vmem>>, vector<1x1x16x16xbf16>
    %6 = vector.shape_cast %5 : vector<1x1x16x16xbf16> to vector<1x16x16xbf16>
    %c0_2 = arith.constant 0 : index
    %7 = arith.index_cast %1 : i32 to index
    %c0_3 = arith.constant 0 : index
    %c0_4 = arith.constant 0 : index
    %8 = vector.load %arg2[%c0_2, %7, %c0_3, %c0_4] : memref<1x16x16x16xbf16, #tpu.memory_space<vmem>>, vector<1x16x16x16xbf16>
    %9 = vector.shape_cast %8 : vector<1x16x16x16xbf16> to vector<16x16x16xbf16>
    %c16_i32_5 = arith.constant 16 : i32
    %10 = arith.addi %1, %c16_i32_5 : i32
    %c15_i32 = arith.constant 15 : i32
    %11 = arith.minsi %10, %c15_i32 : i32
    %c0_6 = arith.constant 0 : index
    %12 = arith.index_cast %11 : i32 to index
    %c0_7 = arith.constant 0 : index
    %c0_8 = arith.constant 0 : index
    %13 = vector.load %arg2[%c0_6, %12, %c0_7, %c0_8] : memref<1x16x16x16xbf16, #tpu.memory_space<vmem>>, vector<1x1x16x16xbf16>
    %14 = vector.shape_cast %13 : vector<1x1x16x16xbf16> to vector<1x16x16xbf16>
    %15 = tpu.concatenate %6, %9, %14 in 0 : vector<1x16x16xbf16>, vector<16x16x16xbf16>, vector<1x16x16xbf16> -> vector<18x16x16xbf16>
    %16 = vector.shape_cast %15 : vector<18x16x16xbf16> to vector<288x16xbf16>
    %c0_9 = arith.constant 0 : index
    %c0_10 = arith.constant 0 : index
    %17 = vector.load %arg3[%c0_9, %c0_10] : memref<16x4xbf16, #tpu.memory_space<vmem>>, vector<16x4xbf16>
    %cst = arith.constant dense<0.000000e+00> : vector<288x4xf32>
    %18 = tpu.matmul %16, %17, %cst {dimension_numbers = #tpu.dot_dimension_numbers<[1], [0], [0], [1], [0, 0, 1, 1], [], []>} : vector<288x16xbf16>, vector<16x4xbf16>, vector<288x4xf32> -> vector<288x4xf32>
    %c0_11 = arith.constant 0 : index
    %c0_12 = arith.constant 0 : index
    %19 = vector.load %arg4[%c0_11, %c0_12] : memref<1x4xf32, #tpu.memory_space<vmem>>, vector<1x4xf32>
    %20 = vector.broadcast %19 : vector<1x4xf32> to vector<288x4xf32>
    %21 = arith.mulf %18, %20 : vector<288x4xf32>
    %c0_13 = arith.constant 0 : index
    %c0_14 = arith.constant 0 : index
    %22 = vector.load %arg5[%c0_13, %c0_14] : memref<1x4xf32, #tpu.memory_space<vmem>>, vector<1x4xf32>
    %23 = vector.broadcast %22 : vector<1x4xf32> to vector<288x4xf32>
    %24 = arith.addf %21, %23 : vector<288x4xf32>
    %cst_15 = arith.constant 0.000000e+00 : f32
    %25 = vector.broadcast %cst_15 : f32 to vector<288x4xf32>
    %26 = arith.maximumf %24, %25 : vector<288x4xf32>
    %27 = arith.truncf %26 : vector<288x4xf32> to vector<288x4xbf16>
    %28 = tpu.iota {dimensions = array<i32: 0>} : vector<288x1xi32>
    %c16_i32_16 = arith.constant 16 : i32
    %29 = vector.broadcast %c16_i32_16 : i32 to vector<288x1xi32>
    %30 = arith.cmpi slt, %28, %29 : vector<288x1xi32>
    %c0_i32_17 = arith.constant 0 : i32
    %31 = arith.cmpi eq, %arg1, %c0_i32_17 : i32
    %32 = vector.broadcast %31 : i1 to vector<288x1xi1>
    %33 = arith.andi %30, %32 : vector<288x1xi1>
    %c272_i32 = arith.constant 272 : i32
    %34 = vector.broadcast %c272_i32 : i32 to vector<288x1xi32>
    %35 = arith.cmpi sge, %28, %34 : vector<288x1xi32>
    %c0_i32_18 = arith.constant 0 : i32
    %36 = arith.cmpi eq, %arg1, %c0_i32_18 : i32
    %37 = vector.broadcast %36 : i1 to vector<288x1xi1>
    %38 = arith.andi %35, %37 : vector<288x1xi1>
    %39 = arith.ori %33, %38 : vector<288x1xi1>
    %cst_19 = arith.constant 0.000000e+00 : f32
    %40 = arith.truncf %cst_19 : f32 to bf16
    %41 = vector.shape_cast %39 : vector<288x1xi1> to vector<288x1xi1>
    %42 = vector.broadcast %41 : vector<288x1xi1> to vector<288x4xi1>
    %43 = vector.broadcast %40 : bf16 to vector<288x4xbf16>
    %44 = arith.select %42, %43, %27 : vector<288x4xi1>, vector<288x4xbf16>
    %c16_i32_20 = arith.constant 16 : i32
    %c0_i32_21 = arith.constant 0 : i32
    %45 = arith.cmpi eq, %c16_i32_20, %c0_i32_21 : i32
    %c1_i32_22 = arith.constant 1 : i32
    %46 = arith.select %45, %c1_i32_22, %c16_i32_20 : i32
    %47 = vector.broadcast %46 : i32 to vector<288x1xi32>
    %48 = arith.remsi %28, %47 : vector<288x1xi32>
    %c0_i32_23 = arith.constant 0 : i32
    %49 = vector.broadcast %c0_i32_23 : i32 to vector<288x1xi32>
    %50 = arith.cmpi ne, %48, %49 : vector<288x1xi32>
    %c0_i32_24 = arith.constant 0 : i32
    %51 = vector.broadcast %c0_i32_24 : i32 to vector<288x1xi32>
    %52 = arith.cmpi slt, %48, %51 : vector<288x1xi32>
    %c0_i32_25 = arith.constant 0 : i32
    %53 = arith.cmpi slt, %46, %c0_i32_25 : i32
    %54 = vector.broadcast %53 : i1 to vector<288x1xi1>
    %55 = vector.broadcast %54 : vector<288x1xi1> to vector<288x1xi1>
    %56 = arith.xori %52, %55 : vector<288x1xi1>
    %57 = arith.andi %56, %50 : vector<288x1xi1>
    %58 = vector.broadcast %46 : i32 to vector<288x1xi32>
    %59 = arith.addi %48, %58 : vector<288x1xi32>
    %60 = arith.select %57, %59, %48 : vector<288x1xi1>, vector<288x1xi32>
    %cst_26 = arith.constant 0.000000e+00 : bf16
    %61 = vector.broadcast %cst_26 : bf16 to vector<1x4xbf16>
    %62 = vector.extract_strided_slice %44 {offsets = [0, 0], sizes = [287, 4], strides = [1, 1]} : vector<288x4xbf16> to vector<287x4xbf16>
    %63 = tpu.concatenate %61, %62 in 0 : vector<1x4xbf16>, vector<287x4xbf16> -> vector<288x4xbf16>
    %c0_i32_27 = arith.constant 0 : i32
    %64 = vector.broadcast %c0_i32_27 : i32 to vector<288x1xi32>
    %65 = arith.cmpi eq, %60, %64 : vector<288x1xi32>
    %cst_28 = arith.constant 0.000000e+00 : f32
    %66 = arith.truncf %cst_28 : f32 to bf16
    %67 = vector.shape_cast %65 : vector<288x1xi1> to vector<288x1xi1>
    %68 = vector.broadcast %67 : vector<288x1xi1> to vector<288x4xi1>
    %69 = vector.broadcast %66 : bf16 to vector<288x4xbf16>
    %70 = arith.select %68, %69, %63 : vector<288x4xi1>, vector<288x4xbf16>
    %cst_29 = arith.constant 0.000000e+00 : bf16
    %71 = vector.broadcast %cst_29 : bf16 to vector<1x4xbf16>
    %72 = vector.extract_strided_slice %44 {offsets = [1, 0], sizes = [287, 4], strides = [1, 1]} : vector<288x4xbf16> to vector<287x4xbf16>
    %73 = tpu.concatenate %72, %71 in 0 : vector<287x4xbf16>, vector<1x4xbf16> -> vector<288x4xbf16>
    %c15_i32_30 = arith.constant 15 : i32
    %74 = vector.broadcast %c15_i32_30 : i32 to vector<288x1xi32>
    %75 = arith.cmpi eq, %60, %74 : vector<288x1xi32>
    %cst_31 = arith.constant 0.000000e+00 : f32
    %76 = arith.truncf %cst_31 : f32 to bf16
    %77 = vector.shape_cast %75 : vector<288x1xi1> to vector<288x1xi1>
    %78 = vector.broadcast %77 : vector<288x1xi1> to vector<288x4xi1>
    %79 = vector.broadcast %76 : bf16 to vector<288x4xbf16>
    %80 = arith.select %78, %79, %73 : vector<288x4xi1>, vector<288x4xbf16>
    %cst_32 = arith.constant 0.000000e+00 : f32
    %81 = vector.broadcast %cst_32 : f32 to vector<256x4xf32>
    %82 = vector.extract_strided_slice %70 {offsets = [0, 0], sizes = [256, 4], strides = [1, 1]} : vector<288x4xbf16> to vector<256x4xbf16>
    %c0_33 = arith.constant 0 : index
    %c0_34 = arith.constant 0 : index
    %c0_35 = arith.constant 0 : index
    %83 = vector.load %arg6[%c0_33, %c0_34, %c0_35] : memref<9x4x4xbf16, #tpu.memory_space<vmem>>, vector<1x4x4xbf16>
    %84 = vector.shape_cast %83 : vector<1x4x4xbf16> to vector<4x4xbf16>
    %cst_36 = arith.constant dense<0.000000e+00> : vector<256x4xf32>
    %85 = tpu.matmul %82, %84, %cst_36 {dimension_numbers = #tpu.dot_dimension_numbers<[1], [0], [0], [1], [0, 0, 1, 1], [], []>} : vector<256x4xbf16>, vector<4x4xbf16>, vector<256x4xf32> -> vector<256x4xf32>
    %86 = arith.addf %81, %85 : vector<256x4xf32>
    %87 = vector.extract_strided_slice %44 {offsets = [0, 0], sizes = [256, 4], strides = [1, 1]} : vector<288x4xbf16> to vector<256x4xbf16>
    %c1 = arith.constant 1 : index
    %c0_37 = arith.constant 0 : index
    %c0_38 = arith.constant 0 : index
    %88 = vector.load %arg6[%c1, %c0_37, %c0_38] : memref<9x4x4xbf16, #tpu.memory_space<vmem>>, vector<1x4x4xbf16>
    %89 = vector.shape_cast %88 : vector<1x4x4xbf16> to vector<4x4xbf16>
    %cst_39 = arith.constant dense<0.000000e+00> : vector<256x4xf32>
    %90 = tpu.matmul %87, %89, %cst_39 {dimension_numbers = #tpu.dot_dimension_numbers<[1], [0], [0], [1], [0, 0, 1, 1], [], []>} : vector<256x4xbf16>, vector<4x4xbf16>, vector<256x4xf32> -> vector<256x4xf32>
    %91 = arith.addf %86, %90 : vector<256x4xf32>
    %92 = vector.extract_strided_slice %80 {offsets = [0, 0], sizes = [256, 4], strides = [1, 1]} : vector<288x4xbf16> to vector<256x4xbf16>
    %c2 = arith.constant 2 : index
    %c0_40 = arith.constant 0 : index
    %c0_41 = arith.constant 0 : index
    %93 = vector.load %arg6[%c2, %c0_40, %c0_41] : memref<9x4x4xbf16, #tpu.memory_space<vmem>>, vector<1x4x4xbf16>
    %94 = vector.shape_cast %93 : vector<1x4x4xbf16> to vector<4x4xbf16>
    %cst_42 = arith.constant dense<0.000000e+00> : vector<256x4xf32>
    %95 = tpu.matmul %92, %94, %cst_42 {dimension_numbers = #tpu.dot_dimension_numbers<[1], [0], [0], [1], [0, 0, 1, 1], [], []>} : vector<256x4xbf16>, vector<4x4xbf16>, vector<256x4xf32> -> vector<256x4xf32>
    %96 = arith.addf %91, %95 : vector<256x4xf32>
    %97 = vector.extract_strided_slice %70 {offsets = [16, 0], sizes = [256, 4], strides = [1, 1]} : vector<288x4xbf16> to vector<256x4xbf16>
    %c3 = arith.constant 3 : index
    %c0_43 = arith.constant 0 : index
    %c0_44 = arith.constant 0 : index
    %98 = vector.load %arg6[%c3, %c0_43, %c0_44] : memref<9x4x4xbf16, #tpu.memory_space<vmem>>, vector<1x4x4xbf16>
    %99 = vector.shape_cast %98 : vector<1x4x4xbf16> to vector<4x4xbf16>
    %cst_45 = arith.constant dense<0.000000e+00> : vector<256x4xf32>
    %100 = tpu.matmul %97, %99, %cst_45 {dimension_numbers = #tpu.dot_dimension_numbers<[1], [0], [0], [1], [0, 0, 1, 1], [], []>} : vector<256x4xbf16>, vector<4x4xbf16>, vector<256x4xf32> -> vector<256x4xf32>
    %101 = arith.addf %96, %100 : vector<256x4xf32>
    %102 = vector.extract_strided_slice %44 {offsets = [16, 0], sizes = [256, 4], strides = [1, 1]} : vector<288x4xbf16> to vector<256x4xbf16>
    %c4 = arith.constant 4 : index
    %c0_46 = arith.constant 0 : index
    %c0_47 = arith.constant 0 : index
    %103 = vector.load %arg6[%c4, %c0_46, %c0_47] : memref<9x4x4xbf16, #tpu.memory_space<vmem>>, vector<1x4x4xbf16>
    %104 = vector.shape_cast %103 : vector<1x4x4xbf16> to vector<4x4xbf16>
    %cst_48 = arith.constant dense<0.000000e+00> : vector<256x4xf32>
    %105 = tpu.matmul %102, %104, %cst_48 {dimension_numbers = #tpu.dot_dimension_numbers<[1], [0], [0], [1], [0, 0, 1, 1], [], []>} : vector<256x4xbf16>, vector<4x4xbf16>, vector<256x4xf32> -> vector<256x4xf32>
    %106 = arith.addf %101, %105 : vector<256x4xf32>
    %107 = vector.extract_strided_slice %80 {offsets = [16, 0], sizes = [256, 4], strides = [1, 1]} : vector<288x4xbf16> to vector<256x4xbf16>
    %c5 = arith.constant 5 : index
    %c0_49 = arith.constant 0 : index
    %c0_50 = arith.constant 0 : index
    %108 = vector.load %arg6[%c5, %c0_49, %c0_50] : memref<9x4x4xbf16, #tpu.memory_space<vmem>>, vector<1x4x4xbf16>
    %109 = vector.shape_cast %108 : vector<1x4x4xbf16> to vector<4x4xbf16>
    %cst_51 = arith.constant dense<0.000000e+00> : vector<256x4xf32>
    %110 = tpu.matmul %107, %109, %cst_51 {dimension_numbers = #tpu.dot_dimension_numbers<[1], [0], [0], [1], [0, 0, 1, 1], [], []>} : vector<256x4xbf16>, vector<4x4xbf16>, vector<256x4xf32> -> vector<256x4xf32>
    %111 = arith.addf %106, %110 : vector<256x4xf32>
    %112 = vector.extract_strided_slice %70 {offsets = [32, 0], sizes = [256, 4], strides = [1, 1]} : vector<288x4xbf16> to vector<256x4xbf16>
    %c6 = arith.constant 6 : index
    %c0_52 = arith.constant 0 : index
    %c0_53 = arith.constant 0 : index
    %113 = vector.load %arg6[%c6, %c0_52, %c0_53] : memref<9x4x4xbf16, #tpu.memory_space<vmem>>, vector<1x4x4xbf16>
    %114 = vector.shape_cast %113 : vector<1x4x4xbf16> to vector<4x4xbf16>
    %cst_54 = arith.constant dense<0.000000e+00> : vector<256x4xf32>
    %115 = tpu.matmul %112, %114, %cst_54 {dimension_numbers = #tpu.dot_dimension_numbers<[1], [0], [0], [1], [0, 0, 1, 1], [], []>} : vector<256x4xbf16>, vector<4x4xbf16>, vector<256x4xf32> -> vector<256x4xf32>
    %116 = arith.addf %111, %115 : vector<256x4xf32>
    %117 = vector.extract_strided_slice %44 {offsets = [32, 0], sizes = [256, 4], strides = [1, 1]} : vector<288x4xbf16> to vector<256x4xbf16>
    %c7 = arith.constant 7 : index
    %c0_55 = arith.constant 0 : index
    %c0_56 = arith.constant 0 : index
    %118 = vector.load %arg6[%c7, %c0_55, %c0_56] : memref<9x4x4xbf16, #tpu.memory_space<vmem>>, vector<1x4x4xbf16>
    %119 = vector.shape_cast %118 : vector<1x4x4xbf16> to vector<4x4xbf16>
    %cst_57 = arith.constant dense<0.000000e+00> : vector<256x4xf32>
    %120 = tpu.matmul %117, %119, %cst_57 {dimension_numbers = #tpu.dot_dimension_numbers<[1], [0], [0], [1], [0, 0, 1, 1], [], []>} : vector<256x4xbf16>, vector<4x4xbf16>, vector<256x4xf32> -> vector<256x4xf32>
    %121 = arith.addf %116, %120 : vector<256x4xf32>
    %122 = vector.extract_strided_slice %80 {offsets = [32, 0], sizes = [256, 4], strides = [1, 1]} : vector<288x4xbf16> to vector<256x4xbf16>
    %c8 = arith.constant 8 : index
    %c0_58 = arith.constant 0 : index
    %c0_59 = arith.constant 0 : index
    %123 = vector.load %arg6[%c8, %c0_58, %c0_59] : memref<9x4x4xbf16, #tpu.memory_space<vmem>>, vector<1x4x4xbf16>
    %124 = vector.shape_cast %123 : vector<1x4x4xbf16> to vector<4x4xbf16>
    %cst_60 = arith.constant dense<0.000000e+00> : vector<256x4xf32>
    %125 = tpu.matmul %122, %124, %cst_60 {dimension_numbers = #tpu.dot_dimension_numbers<[1], [0], [0], [1], [0, 0, 1, 1], [], []>} : vector<256x4xbf16>, vector<4x4xbf16>, vector<256x4xf32> -> vector<256x4xf32>
    %126 = arith.addf %121, %125 : vector<256x4xf32>
    %c0_61 = arith.constant 0 : index
    %c0_62 = arith.constant 0 : index
    %127 = vector.load %arg7[%c0_61, %c0_62] : memref<1x4xf32, #tpu.memory_space<vmem>>, vector<1x4xf32>
    %128 = vector.broadcast %127 : vector<1x4xf32> to vector<256x4xf32>
    %129 = arith.mulf %126, %128 : vector<256x4xf32>
    %c0_63 = arith.constant 0 : index
    %c0_64 = arith.constant 0 : index
    %130 = vector.load %arg8[%c0_63, %c0_64] : memref<1x4xf32, #tpu.memory_space<vmem>>, vector<1x4xf32>
    %131 = vector.broadcast %130 : vector<1x4xf32> to vector<256x4xf32>
    %132 = arith.addf %129, %131 : vector<256x4xf32>
    %cst_65 = arith.constant 0.000000e+00 : f32
    %133 = vector.broadcast %cst_65 : f32 to vector<256x4xf32>
    %134 = arith.maximumf %132, %133 : vector<256x4xf32>
    %135 = arith.truncf %134 : vector<256x4xf32> to vector<256x4xbf16>
    %c0_66 = arith.constant 0 : index
    %c0_67 = arith.constant 0 : index
    %136 = vector.load %arg9[%c0_66, %c0_67] : memref<4x16xbf16, #tpu.memory_space<vmem>>, vector<4x16xbf16>
    %cst_68 = arith.constant dense<0.000000e+00> : vector<256x16xf32>
    %137 = tpu.matmul %135, %136, %cst_68 {dimension_numbers = #tpu.dot_dimension_numbers<[1], [0], [0], [1], [0, 0, 1, 1], [], []>} : vector<256x4xbf16>, vector<4x16xbf16>, vector<256x16xf32> -> vector<256x16xf32>
    %c0_69 = arith.constant 0 : index
    %c0_70 = arith.constant 0 : index
    %138 = vector.load %arg10[%c0_69, %c0_70] : memref<1x16xf32, #tpu.memory_space<vmem>>, vector<1x16xf32>
    %139 = vector.broadcast %138 : vector<1x16xf32> to vector<256x16xf32>
    %140 = arith.mulf %137, %139 : vector<256x16xf32>
    %c0_71 = arith.constant 0 : index
    %c0_72 = arith.constant 0 : index
    %141 = vector.load %arg11[%c0_71, %c0_72] : memref<1x16xf32, #tpu.memory_space<vmem>>, vector<1x16xf32>
    %142 = vector.broadcast %141 : vector<1x16xf32> to vector<256x16xf32>
    %143 = arith.addf %140, %142 : vector<256x16xf32>
    %144 = vector.extract_strided_slice %16 {offsets = [16, 0], sizes = [256, 16], strides = [1, 1]} : vector<288x16xbf16> to vector<256x16xbf16>
    %145 = arith.extf %144 : vector<256x16xbf16> to vector<256x16xf32>
    %146 = arith.addf %143, %145 : vector<256x16xf32>
    %cst_73 = arith.constant 0.000000e+00 : f32
    %147 = vector.broadcast %cst_73 : f32 to vector<256x16xf32>
    %148 = arith.maximumf %146, %147 : vector<256x16xf32>
    %149 = arith.truncf %148 : vector<256x16xf32> to vector<256x16xbf16>
    %c0_74 = arith.constant 0 : index
    %c0_75 = arith.constant 0 : index
    %c0_76 = arith.constant 0 : index
    %150 = vector.load %arg12[%c0_74, %c0_75, %c0_76] : memref<1x256x16xbf16, #tpu.memory_space<vmem>>, vector<1x256x16xbf16>
    %151 = vector.shape_cast %150 : vector<1x256x16xbf16> to vector<256x16xbf16>
    %152 = vector.shape_cast %149 : vector<256x16xbf16> to vector<1x256x16xbf16>
    tpu.vector_store %arg12[%c0_74, %c0_75, %c0_76], %152 {strides = array<i32>} : memref<1x256x16xbf16, #tpu.memory_space<vmem>>, vector<1x256x16xbf16>,
    return
  }
  func.func @transform_0(%arg0: i32, %arg1: i32) -> (i32, i32, i32, i32) {
    %c0_i32 = arith.constant 0 : i32
    %c0_i32_0 = arith.constant 0 : i32
    %c0_i32_1 = arith.constant 0 : i32
    %c0_i32_2 = arith.constant 0 : i32
    return %arg0, %c0_i32, %c0_i32_0, %c0_i32_1 : i32, i32, i32, i32
  }
  func.func @transform_1(%arg0: i32, %arg1: i32) -> (i32, i32) {
    %c0_i32 = arith.constant 0 : i32
    %c0_i32_0 = arith.constant 0 : i32
    %c0_i32_1 = arith.constant 0 : i32
    return %c0_i32, %c0_i32_0 : i32, i32
  }
  func.func @transform_2(%arg0: i32, %arg1: i32) -> (i32, i32) {
    %c0_i32 = arith.constant 0 : i32
    %c0_i32_0 = arith.constant 0 : i32
    %c0_i32_1 = arith.constant 0 : i32
    return %c0_i32, %c0_i32_0 : i32, i32
  }
  func.func @transform_3(%arg0: i32, %arg1: i32) -> (i32, i32) {
    %c0_i32 = arith.constant 0 : i32
    %c0_i32_0 = arith.constant 0 : i32
    %c0_i32_1 = arith.constant 0 : i32
    return %c0_i32, %c0_i32_0 : i32, i32
  }
  func.func @transform_4(%arg0: i32, %arg1: i32) -> (i32, i32, i32) {
    %c0_i32 = arith.constant 0 : i32
    %c0_i32_0 = arith.constant 0 : i32
    %c0_i32_1 = arith.constant 0 : i32
    %c0_i32_2 = arith.constant 0 : i32
    return %c0_i32, %c0_i32_0, %c0_i32_1 : i32, i32, i32
  }
  func.func @transform_5(%arg0: i32, %arg1: i32) -> (i32, i32) {
    %c0_i32 = arith.constant 0 : i32
    %c0_i32_0 = arith.constant 0 : i32
    %c0_i32_1 = arith.constant 0 : i32
    return %c0_i32, %c0_i32_0 : i32, i32
  }
  func.func @transform_6(%arg0: i32, %arg1: i32) -> (i32, i32) {
    %c0_i32 = arith.constant 0 : i32
    %c0_i32_0 = arith.constant 0 : i32
    %c0_i32_1 = arith.constant 0 : i32
    return %c0_i32, %c0_i32_0 : i32, i32
  }
  func.func @transform_7(%arg0: i32, %arg1: i32) -> (i32, i32) {
    %c0_i32 = arith.constant 0 : i32
    %c0_i32_0 = arith.constant 0 : i32
    %c0_i32_1 = arith.constant 0 : i32
    return %c0_i32, %c0_i32_0 : i32, i32
  }
  func.func @transform_8(%arg0: i32, %arg1: i32) -> (i32, i32) {
    %c0_i32 = arith.constant 0 : i32
    %c0_i32_0 = arith.constant 0 : i32
    %c0_i32_1 = arith.constant 0 : i32
    return %c0_i32, %c0_i32_0 : i32, i32
  }
  func.func @transform_9(%arg0: i32, %arg1: i32) -> (i32, i32) {
    %c0_i32 = arith.constant 0 : i32
    %c0_i32_0 = arith.constant 0 : i32
    %c0_i32_1 = arith.constant 0 : i32
    return %c0_i32, %c0_i32_0 : i32, i32
  }
  func.func @transform_10(%arg0: i32, %arg1: i32) -> (i32, i32, i32) {
    %c0_i32 = arith.constant 0 : i32
    %c0_i32_0 = arith.constant 0 : i32
    return %arg0, %arg1, %c0_i32 : i32, i32, i32
  }
}

module attributes {stable_mosaic.version = 11 : i64} {
  func.func @kernel(%arg0: i32, %arg1: i32, %arg2: memref<1x16x16x16xbf16, #tpu.memory_space<vmem>>, %arg3: memref<16x4xbf16, #tpu.memory_space<vmem>>, %arg4: memref<1x4xf32, #tpu.memory_space<vmem>>, %arg5: memref<1x4xf32, #tpu.memory_space<vmem>>, %arg6: memref<9x4x4xbf16, #tpu.memory_space<vmem>>, %arg7: memref<1x4xf32, #tpu.memory_space<vmem>>, %arg8: memref<1x4xf32, #tpu.memory_space<vmem>>, %arg9: memref<4x16xbf16, #tpu.memory_space<vmem>>, %arg10: memref<1x16xf32, #tpu.memory_space<vmem>>, %arg11: memref<1x16xf32, #tpu.memory_space<vmem>>, %arg12: memref<1x256x16xbf16, #tpu.memory_space<vmem>>) attributes {dimension_semantics = [#tpu.dimension_semantics<parallel>, #tpu.dimension_semantics<parallel>], iteration_bounds = array<i64: 2, 1>, scalar_prefetch = 0 : i64, scratch_operands = 0 : i64, tpu.core_type = #tpu.core_type<tc>, window_params = [{transform_indices = @transform_0, window_bounds = array<i64: 1, 16, 16, 16>}, {pipeline_mode = #tpu.pipeline_mode<synchronous>, transform_indices = @transform_1, window_bounds = array<i64: 16, 4>}, {pipeline_mode = #tpu.pipeline_mode<synchronous>, transform_indices = @transform_2, window_bounds = array<i64: 1, 4>}, {pipeline_mode = #tpu.pipeline_mode<synchronous>, transform_indices = @transform_3, window_bounds = array<i64: 1, 4>}, {pipeline_mode = #tpu.pipeline_mode<synchronous>, transform_indices = @transform_4, window_bounds = array<i64: 9, 4, 4>}, {pipeline_mode = #tpu.pipeline_mode<synchronous>, transform_indices = @transform_5, window_bounds = array<i64: 1, 4>}, {pipeline_mode = #tpu.pipeline_mode<synchronous>, transform_indices = @transform_6, window_bounds = array<i64: 1, 4>}, {pipeline_mode = #tpu.pipeline_mode<synchronous>, transform_indices = @transform_7, window_bounds = array<i64: 4, 16>}, {pipeline_mode = #tpu.pipeline_mode<synchronous>, transform_indices = @transform_8, window_bounds = array<i64: 1, 16>}, {pipeline_mode = #tpu.pipeline_mode<synchronous>, transform_indices = @transform_9, window_bounds = array<i64: 1, 16>}, {transform_indices = @transform_10, window_bounds = array<i64: 1, 256, 16>}]} {
    %c16_i32 = arith.constant 16 : i32
    %0 = arith.muli %arg1, %c16_i32 : i32
    %1 = tpu.assume_multiple %0, 16 : i32
    %c1_i32 = arith.constant 1 : i32
    %2 = arith.subi %1, %c1_i32 : i32
    %c0_i32 = arith.constant 0 : i32
    %3 = arith.maxsi %2, %c0_i32 : i32
    %c0 = arith.constant 0 : index
    %4 = arith.index_cast %3 : i32 to index
    %c0_0 = arith.constant 0 : index
    %c0_1 = arith.constant 0 : index
    %5 = vector.load %arg2[%c0, %4, %c0_0, %c0_1] : memref<1x16x16x16xbf16, #tpu.memory_space<vmem>>, vector<1x1x16x16xbf16>
    %6 = vector.shape_cast %5 : vector<1x1x16x16xbf16> to vector<1x16x16xbf16>
    %c0_2 = arith.constant 0 : index
    %7 = arith.index_cast %1 : i32 to index
    %c0_3 = arith.constant 0 : index
    %c0_4 = arith.constant 0 : index
    %8 = vector.load %arg2[%c0_2, %7, %c0_3, %c0_4] : memref<1x16x16x16xbf16, #tpu.memory_space<vmem>>, vector<1x16x16x16xbf16>
    %9 = vector.shape_cast %8 : vector<1x16x16x16xbf16> to vector<16x16x16xbf16>
    %c16_i32_5 = arith.constant 16 : i32
    %10 = arith.addi %1, %c16_i32_5 : i32
    %c15_i32 = arith.constant 15 : i32
    %11 = arith.minsi %10, %c15_i32 : i32
    %c0_6 = arith.constant 0 : index
    %12 = arith.index_cast %11 : i32 to index
    %c0_7 = arith.constant 0 : index
    %c0_8 = arith.constant 0 : index
    %13 = vector.load %arg2[%c0_6, %12, %c0_7, %c0_8] : memref<1x16x16x16xbf16, #tpu.memory_space<vmem>>, vector<1x1x16x16xbf16>
    %14 = vector.shape_cast %13 : vector<1x1x16x16xbf16> to vector<1x16x16xbf16>
    %15 = tpu.concatenate %6, %9, %14 in 0 : vector<1x16x16xbf16>, vector<16x16x16xbf16>, vector<1x16x16xbf16> -> vector<18x16x16xbf16>
    %16 = vector.shape_cast %15 : vector<18x16x16xbf16> to vector<288x16xbf16>
    %c0_9 = arith.constant 0 : index
    %c0_10 = arith.constant 0 : index
    %17 = vector.load %arg3[%c0_9, %c0_10] : memref<16x4xbf16, #tpu.memory_space<vmem>>, vector<16x4xbf16>
    %cst = arith.constant dense<0.000000e+00> : vector<288x4xf32>
    %18 = tpu.matmul %16, %17, %cst {dimension_numbers = #tpu.dot_dimension_numbers<[1], [0], [0], [1], [0, 0, 1, 1], [], []>} : vector<288x16xbf16>, vector<16x4xbf16>, vector<288x4xf32> -> vector<288x4xf32>
    %c0_11 = arith.constant 0 : index
    %c0_12 = arith.constant 0 : index
    %19 = vector.load %arg4[%c0_11, %c0_12] : memref<1x4xf32, #tpu.memory_space<vmem>>, vector<1x4xf32>
    %20 = vector.broadcast %19 : vector<1x4xf32> to vector<288x4xf32>
    %21 = arith.mulf %18, %20 : vector<288x4xf32>
    %c0_13 = arith.constant 0 : index
    %c0_14 = arith.constant 0 : index
    %22 = vector.load %arg5[%c0_13, %c0_14] : memref<1x4xf32, #tpu.memory_space<vmem>>, vector<1x4xf32>
    %23 = vector.broadcast %22 : vector<1x4xf32> to vector<288x4xf32>
    %24 = arith.addf %21, %23 : vector<288x4xf32>
    %cst_15 = arith.constant 0.000000e+00 : f32
    %25 = vector.broadcast %cst_15 : f32 to vector<288x4xf32>
    %26 = arith.maximumf %24, %25 : vector<288x4xf32>
    %27 = arith.truncf %26 : vector<288x4xf32> to vector<288x4xbf16>
    %28 = tpu.iota {dimensions = array<i32: 0>} : vector<288x1xi32>
    %c16_i32_16 = arith.constant 16 : i32
    %29 = vector.broadcast %c16_i32_16 : i32 to vector<288x1xi32>
    %30 = arith.cmpi slt, %28, %29 : vector<288x1xi32>
    %c0_i32_17 = arith.constant 0 : i32
    %31 = arith.cmpi eq, %arg1, %c0_i32_17 : i32
    %32 = vector.broadcast %31 : i1 to vector<288x1xi1>
    %33 = arith.andi %30, %32 : vector<288x1xi1>
    %c272_i32 = arith.constant 272 : i32
    %34 = vector.broadcast %c272_i32 : i32 to vector<288x1xi32>
    %35 = arith.cmpi sge, %28, %34 : vector<288x1xi32>
    %c0_i32_18 = arith.constant 0 : i32
    %36 = arith.cmpi eq, %arg1, %c0_i32_18 : i32
    %37 = vector.broadcast %36 : i1 to vector<288x1xi1>
    %38 = arith.andi %35, %37 : vector<288x1xi1>
    %39 = arith.ori %33, %38 : vector<288x1xi1>
    %cst_19 = arith.constant 0.000000e+00 : f32
    %40 = arith.truncf %cst_19 : f32 to bf16
    %41 = vector.shape_cast %39 : vector<288x1xi1> to vector<288x1xi1>
    %42 = vector.broadcast %41 : vector<288x1xi1> to vector<288x4xi1>
    %43 = vector.broadcast %40 : bf16 to vector<288x4xbf16>
    %44 = arith.select %42, %43, %27 : vector<288x4xi1>, vector<288x4xbf16>
    %c16_i32_20 = arith.constant 16 : i32
    %c0_i32_21 = arith.constant 0 : i32
    %45 = arith.cmpi eq, %c16_i32_20, %c0_i32_21 : i32
    %c1_i32_22 = arith.constant 1 : i32
    %46 = arith.select %45, %c1_i32_22, %c16_i32_20 : i32
    %47 = vector.broadcast %46 : i32 to vector<288x1xi32>
    %48 = arith.remsi %28, %47 : vector<288x1xi32>
    %c0_i32_23 = arith.constant 0 : i32
    %49 = vector.broadcast %c0_i32_23 : i32 to vector<288x1xi32>
    %50 = arith.cmpi ne, %48, %49 : vector<288x1xi32>
    %c0_i32_24 = arith.constant 0 : i32
    %51 = vector.broadcast %c0_i32_24 : i32 to vector<288x1xi32>
    %52 = arith.cmpi slt, %48, %51 : vector<288x1xi32>
    %c0_i32_25 = arith.constant 0 : i32
    %53 = arith.cmpi slt, %46, %c0_i32_25 : i32
    %54 = vector.broadcast %53 : i1 to vector<288x1xi1>
    %55 = vector.broadcast %54 : vector<288x1xi1> to vector<288x1xi1>
    %56 = arith.xori %52, %55 : vector<288x1xi1>
    %57 = arith.andi %56, %50 : vector<288x1xi1>
    %58 = vector.broadcast %46 : i32 to vector<288x1xi32>
    %59 = arith.addi %48, %58 : vector<288x1xi32>
    %60 = arith.select %57, %59, %48 : vector<288x1xi1>, vector<288x1xi32>
    %cst_26 = arith.constant 0.000000e+00 : bf16
    %61 = vector.broadcast %cst_26 : bf16 to vector<1x4xbf16>
    %62 = vector.extract_strided_slice %44 {offsets = [0, 0], sizes = [287, 4], strides = [1, 1]} : vector<288x4xbf16> to vector<287x4xbf16>
    %63 = tpu.concatenate %61, %62 in 0 : vector<1x4xbf16>, vector<287x4xbf16> -> vector<288x4xbf16>
    %c0_i32_27 = arith.constant 0 : i32
    %64 = vector.broadcast %c0_i32_27 : i32 to vector<288x1xi32>
    %65 = arith.cmpi eq, %60, %64 : vector<288x1xi32>
    %cst_28 = arith.constant 0.000000e+00 : f32
    %66 = arith.truncf %cst_28 : f32 to bf16
    %67 = vector.shape_cast %65 : vector<288x1xi1> to vector<288x1xi1>
    %68 = vector.broadcast %67 : vector<288x1xi1> to vector<288x4xi1>
    %69 = vector.broadcast %66 : bf16 to vector<288x4xbf16>
    %70 = arith.select %68, %69, %63 : vector<288x4xi1>, vector<288x4xbf16>
    %cst_29 = arith.constant 0.000000e+00 : bf16
    %71 = vector.broadcast %cst_29 : bf16 to vector<1x4xbf16>
    %72 = vector.extract_strided_slice %44 {offsets = [1, 0], sizes = [287, 4], strides = [1, 1]} : vector<288x4xbf16> to vector<287x4xbf16>
    %73 = tpu.concatenate %72, %71 in 0 : vector<287x4xbf16>, vector<1x4xbf16> -> vector<288x4xbf16>
    %c15_i32_30 = arith.constant 15 : i32
    %74 = vector.broadcast %c15_i32_30 : i32 to vector<288x1xi32>
    %75 = arith.cmpi eq, %60, %74 : vector<288x1xi32>
    %cst_31 = arith.constant 0.000000e+00 : f32
    %76 = arith.truncf %cst_31 : f32 to bf16
    %77 = vector.shape_cast %75 : vector<288x1xi1> to vector<288x1xi1>
    %78 = vector.broadcast %77 : vector<288x1xi1> to vector<288x4xi1>
    %79 = vector.broadcast %76 : bf16 to vector<288x4xbf16>
    %80 = arith.select %78, %79, %73 : vector<288x4xi1>, vector<288x4xbf16>
    %cst_32 = arith.constant 0.000000e+00 : f32
    %81 = vector.broadcast %cst_32 : f32 to vector<256x4xf32>
    %82 = vector.extract_strided_slice %70 {offsets = [0, 0], sizes = [256, 4], strides = [1, 1]} : vector<288x4xbf16> to vector<256x4xbf16>
    %c0_33 = arith.constant 0 : index
    %c0_34 = arith.constant 0 : index
    %c0_35 = arith.constant 0 : index
    %83 = vector.load %arg6[%c0_33, %c0_34, %c0_35] : memref<9x4x4xbf16, #tpu.memory_space<vmem>>, vector<1x4x4xbf16>
    %84 = vector.shape_cast %83 : vector<1x4x4xbf16> to vector<4x4xbf16>
    %cst_36 = arith.constant dense<0.000000e+00> : vector<256x4xf32>
    %85 = tpu.matmul %82, %84, %cst_36 {dimension_numbers = #tpu.dot_dimension_numbers<[1], [0], [0], [1], [0, 0, 1, 1], [], []>} : vector<256x4xbf16>, vector<4x4xbf16>, vector<256x4xf32> -> vector<256x4xf32>
    %86 = arith.addf %81, %85 : vector<256x4xf32>
    %87 = vector.extract_strided_slice %44 {offsets = [0, 0], sizes = [256, 4], strides = [1, 1]} : vector<288x4xbf16> to vector<256x4xbf16>
    %c1 = arith.constant 1 : index
    %c0_37 = arith.constant 0 : index
    %c0_38 = arith.constant 0 : index
    %88 = vector.load %arg6[%c1, %c0_37, %c0_38] : memref<9x4x4xbf16, #tpu.memory_space<vmem>>, vector<1x4x4xbf16>
    %89 = vector.shape_cast %88 : vector<1x4x4xbf16> to vector<4x4xbf16>
    %cst_39 = arith.constant dense<0.000000e+00> : vector<256x4xf32>
    %90 = tpu.matmul %87, %89, %cst_39 {dimension_numbers = #tpu.dot_dimension_numbers<[1], [0], [0], [1], [0, 0, 1, 1], [], []>} : vector<256x4xbf16>, vector<4x4xbf16>, vector<256x4xf32> -> vector<256x4xf32>
    %91 = arith.addf %86, %90 : vector<256x4xf32>
    %92 = vector.extract_strided_slice %80 {offsets = [0, 0], sizes = [256, 4], strides = [1, 1]} : vector<288x4xbf16> to vector<256x4xbf16>
    %c2 = arith.constant 2 : index
    %c0_40 = arith.constant 0 : index
    %c0_41 = arith.constant 0 : index
    %93 = vector.load %arg6[%c2, %c0_40, %c0_41] : memref<9x4x4xbf16, #tpu.memory_space<vmem>>, vector<1x4x4xbf16>
    %94 = vector.shape_cast %93 : vector<1x4x4xbf16> to vector<4x4xbf16>
    %cst_42 = arith.constant dense<0.000000e+00> : vector<256x4xf32>
    %95 = tpu.matmul %92, %94, %cst_42 {dimension_numbers = #tpu.dot_dimension_numbers<[1], [0], [0], [1], [0, 0, 1, 1], [], []>} : vector<256x4xbf16>, vector<4x4xbf16>, vector<256x4xf32> -> vector<256x4xf32>
    %96 = arith.addf %91, %95 : vector<256x4xf32>
    %97 = vector.extract_strided_slice %70 {offsets = [16, 0], sizes = [256, 4], strides = [1, 1]} : vector<288x4xbf16> to vector<256x4xbf16>
    %c3 = arith.constant 3 : index
    %c0_43 = arith.constant 0 : index
    %c0_44 = arith.constant 0 : index
    %98 = vector.load %arg6[%c3, %c0_43, %c0_44] : memref<9x4x4xbf16, #tpu.memory_space<vmem>>, vector<1x4x4xbf16>
    %99 = vector.shape_cast %98 : vector<1x4x4xbf16> to vector<4x4xbf16>
    %cst_45 = arith.constant dense<0.000000e+00> : vector<256x4xf32>
    %100 = tpu.matmul %97, %99, %cst_45 {dimension_numbers = #tpu.dot_dimension_numbers<[1], [0], [0], [1], [0, 0, 1, 1], [], []>} : vector<256x4xbf16>, vector<4x4xbf16>, vector<256x4xf32> -> vector<256x4xf32>
    %101 = arith.addf %96, %100 : vector<256x4xf32>
    %102 = vector.extract_strided_slice %44 {offsets = [16, 0], sizes = [256, 4], strides = [1, 1]} : vector<288x4xbf16> to vector<256x4xbf16>
    %c4 = arith.constant 4 : index
    %c0_46 = arith.constant 0 : index
    %c0_47 = arith.constant 0 : index
    %103 = vector.load %arg6[%c4, %c0_46, %c0_47] : memref<9x4x4xbf16, #tpu.memory_space<vmem>>, vector<1x4x4xbf16>
    %104 = vector.shape_cast %103 : vector<1x4x4xbf16> to vector<4x4xbf16>
    %cst_48 = arith.constant dense<0.000000e+00> : vector<256x4xf32>
    %105 = tpu.matmul %102, %104, %cst_48 {dimension_numbers = #tpu.dot_dimension_numbers<[1], [0], [0], [1], [0, 0, 1, 1], [], []>} : vector<256x4xbf16>, vector<4x4xbf16>, vector<256x4xf32> -> vector<256x4xf32>
    %106 = arith.addf %101, %105 : vector<256x4xf32>
    %107 = vector.extract_strided_slice %80 {offsets = [16, 0], sizes = [256, 4], strides = [1, 1]} : vector<288x4xbf16> to vector<256x4xbf16>
    %c5 = arith.constant 5 : index
    %c0_49 = arith.constant 0 : index
    %c0_50 = arith.constant 0 : index
    %108 = vector.load %arg6[%c5, %c0_49, %c0_50] : memref<9x4x4xbf16, #tpu.memory_space<vmem>>, vector<1x4x4xbf16>
    %109 = vector.shape_cast %108 : vector<1x4x4xbf16> to vector<4x4xbf16>
    %cst_51 = arith.constant dense<0.000000e+00> : vector<256x4xf32>
    %110 = tpu.matmul %107, %109, %cst_51 {dimension_numbers = #tpu.dot_dimension_numbers<[1], [0], [0], [1], [0, 0, 1, 1], [], []>} : vector<256x4xbf16>, vector<4x4xbf16>, vector<256x4xf32> -> vector<256x4xf32>
    %111 = arith.addf %106, %110 : vector<256x4xf32>
    %112 = vector.extract_strided_slice %70 {offsets = [32, 0], sizes = [256, 4], strides = [1, 1]} : vector<288x4xbf16> to vector<256x4xbf16>
    %c6 = arith.constant 6 : index
    %c0_52 = arith.constant 0 : index
    %c0_53 = arith.constant 0 : index
    %113 = vector.load %arg6[%c6, %c0_52, %c0_53] : memref<9x4x4xbf16, #tpu.memory_space<vmem>>, vector<1x4x4xbf16>
    %114 = vector.shape_cast %113 : vector<1x4x4xbf16> to vector<4x4xbf16>
    %cst_54 = arith.constant dense<0.000000e+00> : vector<256x4xf32>
    %115 = tpu.matmul %112, %114, %cst_54 {dimension_numbers = #tpu.dot_dimension_numbers<[1], [0], [0], [1], [0, 0, 1, 1], [], []>} : vector<256x4xbf16>, vector<4x4xbf16>, vector<256x4xf32> -> vector<256x4xf32>
    %116 = arith.addf %111, %115 : vector<256x4xf32>
    %117 = vector.extract_strided_slice %44 {offsets = [32, 0], sizes = [256, 4], strides = [1, 1]} : vector<288x4xbf16> to vector<256x4xbf16>
    %c7 = arith.constant 7 : index
    %c0_55 = arith.constant 0 : index
    %c0_56 = arith.constant 0 : index
    %118 = vector.load %arg6[%c7, %c0_55, %c0_56] : memref<9x4x4xbf16, #tpu.memory_space<vmem>>, vector<1x4x4xbf16>
    %119 = vector.shape_cast %118 : vector<1x4x4xbf16> to vector<4x4xbf16>
    %cst_57 = arith.constant dense<0.000000e+00> : vector<256x4xf32>
    %120 = tpu.matmul %117, %119, %cst_57 {dimension_numbers = #tpu.dot_dimension_numbers<[1], [0], [0], [1], [0, 0, 1, 1], [], []>} : vector<256x4xbf16>, vector<4x4xbf16>, vector<256x4xf32> -> vector<256x4xf32>
    %121 = arith.addf %116, %120 : vector<256x4xf32>
    %122 = vector.extract_strided_slice %80 {offsets = [32, 0], sizes = [256, 4], strides = [1, 1]} : vector<288x4xbf16> to vector<256x4xbf16>
    %c8 = arith.constant 8 : index
    %c0_58 = arith.constant 0 : index
    %c0_59 = arith.constant 0 : index
    %123 = vector.load %arg6[%c8, %c0_58, %c0_59] : memref<9x4x4xbf16, #tpu.memory_space<vmem>>, vector<1x4x4xbf16>
    %124 = vector.shape_cast %123 : vector<1x4x4xbf16> to vector<4x4xbf16>
    %cst_60 = arith.constant dense<0.000000e+00> : vector<256x4xf32>
    %125 = tpu.matmul %122, %124, %cst_60 {dimension_numbers = #tpu.dot_dimension_numbers<[1], [0], [0], [1], [0, 0, 1, 1], [], []>} : vector<256x4xbf16>, vector<4x4xbf16>, vector<256x4xf32> -> vector<256x4xf32>
    %126 = arith.addf %121, %125 : vector<256x4xf32>
    %c0_61 = arith.constant 0 : index
    %c0_62 = arith.constant 0 : index
    %127 = vector.load %arg7[%c0_61, %c0_62] : memref<1x4xf32, #tpu.memory_space<vmem>>, vector<1x4xf32>
    %128 = vector.broadcast %127 : vector<1x4xf32> to vector<256x4xf32>
    %129 = arith.mulf %126, %128 : vector<256x4xf32>
    %c0_63 = arith.constant 0 : index
    %c0_64 = arith.constant 0 : index
    %130 = vector.load %arg8[%c0_63, %c0_64] : memref<1x4xf32, #tpu.memory_space<vmem>>, vector<1x4xf32>
    %131 = vector.broadcast %130 : vector<1x4xf32> to vector<256x4xf32>
    %132 = arith.addf %129, %131 : vector<256x4xf32>
    %cst_65 = arith.constant 0.000000e+00 : f32
    %133 = vector.broadcast %cst_65 : f32 to vector<256x4xf32>
    %134 = arith.maximumf %132, %133 : vector<256x4xf32>
    %135 = arith.truncf %134 : vector<256x4xf32> to vector<256x4xbf16>
    %c0_66 = arith.constant 0 : index
    %c0_67 = arith.constant 0 : index
    %136 = vector.load %arg9[%c0_66, %c0_67] : memref<4x16xbf16, #tpu.memory_space<vmem>>, vector<4x16xbf16>
    %cst_68 = arith.constant dense<0.000000e+00> : vector<256x16xf32>
    %137 = tpu.matmul %135, %136, %cst_68 {dimension_numbers = #tpu.dot_dimension_numbers<[1], [0], [0], [1], [0, 0, 1, 1], [], []>} : vector<256x4xbf16>, vector<4x16xbf16>, vector<256x16xf32> -> vector<256x16xf32>
    %c0_69 = arith.constant 0 : index
    %c0_70 = arith.constant 0 : index
    %138 = vector.load %arg10[%c0_69, %c0_70] : memref<1x16xf32, #tpu.memory_space<vmem>>, vector<1x16xf32>
    %139 = vector.broadcast %138 : vector<1x16xf32> to vector<256x16xf32>
    %140 = arith.mulf %137, %139 : vector<256x16xf32>
    %c0_71 = arith.constant 0 : index
    %c0_72 = arith.constant 0 : index
    %141 = vector.load %arg11[%c0_71, %c0_72] : memref<1x16xf32, #tpu.memory_space<vmem>>, vector<1x16xf32>
    %142 = vector.broadcast %141 : vector<1x16xf32> to vector<256x16xf32>
    %143 = arith.addf %140, %142 : vector<256x16xf32>
    %144 = vector.extract_strided_slice %16 {offsets = [16, 0], sizes = [256, 16], strides = [1, 1]} : vector<288x16xbf16> to vector<256x16xbf16>
    %145 = arith.extf %144 : vector<256x16xbf16> to vector<256x16xf32>
    %146 = arith.addf %143, %145 : vector<256x16xf32>
    %cst_73 = arith.constant 0.000000e+00 : f32
    %147 = vector.broadcast %cst_73 : f32 to vector<256x16xf32>
    %148 = arith.maximumf %146, %147 : vector<256x16xf32>
    %149 = arith.truncf %148 : vector<256x16xf32> to vector<256x16xbf16>
    %c0_74 = arith.constant 0 : index
    %c0_75 = arith.constant 0 : index
    %c0_76 = arith.constant 0 : index
    %150 = vector.load %arg12[%c0_74, %c0_75, %c0_76] : memref<1x256x16xbf16, #tpu.memory_space<vmem>>, vector<1x256x16xbf16>
    %151 = vector.shape_cast %150 : vector<1x256x16xbf16> to vector<256x16xbf16>
    %152 = vector.shape_cast %149 : vector<256x16xbf16> to vector<1x256x16xbf16>
    tpu.vector_store %arg12[%c0_74, %c0_75, %c0_76], %152 {strides = array<i32>} : memref<1x256x16xbf16, #tpu.memory_space<vmem>>, vector<1x256x16xbf16>,
    return
  }
  func.func @transform_0(%arg0: i32, %arg1: i32) -> (i32, i32, i32, i32) {
    %c0_i32 = arith.constant 0 : i32
    %c0_i32_0 = arith.constant 0 : i32
    %c0_i32_1 = arith.constant 0 : i32
    %c0_i32_2 = arith.constant 0 : i32
    return %arg0, %c0_i32, %c0_i32_0, %c0_i32_1 : i32, i32, i32, i32
  }
  func.func @transform_1(%arg0: i32, %arg1: i32) -> (i32, i32) {
    %c0_i32 = arith.constant 0 : i32
    %c0_i32_0 = arith.constant 0 : i32
    %c0_i32_1 = arith.constant 0 : i32
    return %c0_i32, %c0_i32_0 : i32, i32
  }
  func.func @transform_2(%arg0: i32, %arg1: i32) -> (i32, i32) {
    %c0_i32 = arith.constant 0 : i32
    %c0_i32_0 = arith.constant 0 : i32
    %c0_i32_1 = arith.constant 0 : i32
    return %c0_i32, %c0_i32_0 : i32, i32
  }
  func.func @transform_3(%arg0: i32, %arg1: i32) -> (i32, i32) {
    %c0_i32 = arith.constant 0 : i32
    %c0_i32_0 = arith.constant 0 : i32
    %c0_i32_1 = arith.constant 0 : i32
    return %c0_i32, %c0_i32_0 : i32, i32
  }
  func.func @transform_4(%arg0: i32, %arg1: i32) -> (i32, i32, i32) {
    %c0_i32 = arith.constant 0 : i32
    %c0_i32_0 = arith.constant 0 : i32
    %c0_i32_1 = arith.constant 0 : i32
    %c0_i32_2 = arith.constant 0 : i32
    return %c0_i32, %c0_i32_0, %c0_i32_1 : i32, i32, i32
  }
  func.func @transform_5(%arg0: i32, %arg1: i32) -> (i32, i32) {
    %c0_i32 = arith.constant 0 : i32
    %c0_i32_0 = arith.constant 0 : i32
    %c0_i32_1 = arith.constant 0 : i32
    return %c0_i32, %c0_i32_0 : i32, i32
  }
  func.func @transform_6(%arg0: i32, %arg1: i32) -> (i32, i32) {
    %c0_i32 = arith.constant 0 : i32
    %c0_i32_0 = arith.constant 0 : i32
    %c0_i32_1 = arith.constant 0 : i32
    return %c0_i32, %c0_i32_0 : i32, i32
  }
  func.func @transform_7(%arg0: i32, %arg1: i32) -> (i32, i32) {
    %c0_i32 = arith.constant 0 : i32
    %c0_i32_0 = arith.constant 0 : i32
    %c0_i32_1 = arith.constant 0 : i32
    return %c0_i32, %c0_i32_0 : i32, i32
  }
  func.func @transform_8(%arg0: i32, %arg1: i32) -> (i32, i32) {
    %c0_i32 = arith.constant 0 : i32
    %c0_i32_0 = arith.constant 0 : i32
    %c0_i32_1 = arith.constant 0 : i32
    return %c0_i32, %c0_i32_0 : i32, i32
  }
  func.func @transform_9(%arg0: i32, %arg1: i32) -> (i32, i32) {
    %c0_i32 = arith.constant 0 : i32
    %c0_i32_0 = arith.constant 0 : i32
    %c0_i32_1 = arith.constant 0 : i32
    return %c0_i32, %c0_i32_0 : i32, i32
  }
  func.func @transform_10(%arg0: i32, %arg1: i32) -> (i32, i32, i32) {
    %c0_i32 = arith.constant 0 : i32
    %c0_i32_0 = arith.constant 0 : i32
    return %arg0, %arg1, %c0_i32 : i32, i32, i32
  }
}

</mosaic_0001>

<llo_original>
// kernel: tpu_custom_call.1
$region0: #{tpu_custom_call.1}
  #allocation0 [shape = 'u32[]', space=smem, size = 0x4, offset = 0x4, fixed_abs, tag = 'smem constant byte address 0x4 - core index']
  #allocation1 [shape = 'u32[144,128]{1,0:T(1,128)}', space=vmem, size = 0x12000, scoped, tag = 'internal scratch']
  %s0 = inlined_call_operand.hbm [shape: f32[8,128], index: 0, kind: input, shape index: {}]
  %s1 = inlined_call_operand.hbm [shape: f32[8,128], index: 1, kind: output, shape index: {}]
  %s2 = sld [smem:[#allocation0]]
  $region18: #{tpu_custom_call.1} parent=0
    _
  %s4 = ssub.s32 1, %s2
  %s5 = scalar_select 0, %s4, %s2
  $region1: #{tpu_custom_call.1} parent=0
    #allocation2 [shape = 'u8[4096]{0}', space=vmem, size = 0x1000, scoped, tag = 'input window, operand 0, single buffered']
    #allocation3 [shape = 's32[1]{0}', space=sflag, size = 0x4, scoped, tag = 'scoped memory for tpu_custom_call.1']
    #allocation4 [shape = 's32[1]{0}', space=sflag, size = 0x4, scoped, tag = 'scoped memory for tpu_custom_call.1']
    #allocation5 [shape = 'u8[4096]{0}', space=vmem, size = 0x1000, scoped, tag = 'output window, operand 0, single buffered']
    %6 = vsyncpa [#allocation3], 0
    %7 = vsyncpa [#allocation4], 0
    // Predicated region
    $region2: #{tpu_custom_call.1} parent=1 // pred_check
      _
    $region3: #{tpu_custom_call.1} parent=1 // pred_check_branch
      %9 = sbr.rel (0) target = $region5
    $region4: #{tpu_custom_call.1} parent=1 // pred_region
      %s11 = ssub.s32 128, 128
      %12 = vsyncadd [#allocation3], %s11
      %s14 = sshll.u32 [#allocation2], 4
      %s15 = int_to_ptr.vmem [resolvable:$true] %s14
      %17 = dma.hbm_to_vmem [thread:$0]  %s0, 128, %s15, [#allocation3]
    $region5: #{tpu_custom_call.1} parent=1 // pred_fallthru
      _
    // Predicated region
    $region6: #{tpu_custom_call.1} parent=1 // pred_check
      _
    $region7: #{tpu_custom_call.1} parent=1 // pred_check_branch
      %19 = sbr.rel (0) target = $region9
    $region8: #{tpu_custom_call.1} parent=1 // pred_region
      %20 = dma.done [#allocation3], 128
    $region9: #{tpu_custom_call.1} parent=1 // pred_fallthru
      _
    %v21 = vld [vmem:[#allocation2] sm:$0xff]
    %v22 = vrot.slane %v21, 7
    %23 = vst [vmem:[#allocation5] sm:$0xff] %v22
    // Predicated region
    $region10: #{tpu_custom_call.1} parent=1 // pred_check
      _
    $region11: #{tpu_custom_call.1} parent=1 // pred_check_branch
      %25 = sbr.rel (0) target = $region13
    $region12: #{tpu_custom_call.1} parent=1 // pred_region
      %s27 = ssub.s32 128, 128
      %28 = vsyncadd [#allocation4], %s27
      %s30 = sshll.u32 [#allocation5], 4
      %s31 = int_to_ptr.vmem [resolvable:$true] %s30
      %33 = dma.vmem_to_hbm [thread:$0]  %s31, 128, %s1, [#allocation4]
    $region13: #{tpu_custom_call.1} parent=1 // pred_fallthru
      _
    // Predicated region
    $region14: #{tpu_custom_call.1} parent=1 // pred_check
      _
    $region15: #{tpu_custom_call.1} parent=1 // pred_check_branch
      %35 = sbr.rel (0) target = $region17
    $region16: #{tpu_custom_call.1} parent=1 // pred_region
      %36 = dma.done [#allocation4], 128
    $region17: #{tpu_custom_call.1} parent=1 // pred_fallthru
      _
    %37 = vsyncpa [#allocation3], 1
    %38 = vsyncpa [#allocation4], 1

// kernel: tpu_custom_call.1
$region0: #{tpu_custom_call.1}
  #allocation0 [shape = 'u32[]', space=smem, size = 0x4, offset = 0x4, fixed_abs, tag = 'smem constant byte address 0x4 - core index']
  #allocation1 [shape = 'u32[144,128]{1,0:T(1,128)}', space=vmem, size = 0x12000, scoped, tag = 'internal scratch']
  %s0 = inlined_call_operand.hbm [shape: bf16[2,16,16,16], index: 0, kind: input, shape index: {}]
  %s1 = inlined_call_operand.vmem [shape: bf16[16,4], index: 1, kind: input, shape index: {}]
  %s2 = inlined_call_operand.vmem [shape: f32[1,4], index: 2, kind: input, shape index: {}]
  %s3 = inlined_call_operand.vmem [shape: f32[1,4], index: 3, kind: input, shape index: {}]
  %s4 = inlined_call_operand.vmem [shape: bf16[9,4,4], index: 4, kind: input, shape index: {}]
  %s5 = inlined_call_operand.vmem [shape: f32[1,4], index: 5, kind: input, shape index: {}]
  %s6 = inlined_call_operand.vmem [shape: f32[1,4], index: 6, kind: input, shape index: {}]
  %s7 = inlined_call_operand.vmem [shape: bf16[4,16], index: 7, kind: input, shape index: {}]
  %s8 = inlined_call_operand.vmem [shape: f32[1,16], index: 8, kind: input, shape index: {}]
  %s9 = inlined_call_operand.vmem [shape: f32[1,16], index: 9, kind: input, shape index: {}]
  %s10 = inlined_call_operand.vmem [shape: bf16[2,256,16], index: 10, kind: output, shape index: {}]
  %s11 = sld [smem:[#allocation0]]
  $region77: #{tpu_custom_call.1} parent=0
    _
  %s13 = ssub.s32 1, %s11
  %s14 = scalar_select 0, %s13, %s11
  $region1: #{tpu_custom_call.1} parent=0
    #allocation2 [shape = 'u8[131072]{0}', space=vmem, size = 0x20000, scoped, tag = 'input window, operand 0']
    #allocation3 [shape = 's32[2]{0}', space=sflag, size = 0x8, scoped, tag = 'scoped memory for tpu_custom_call.1']
    %15 = vsyncpa [#allocation3], 0
    %s16 = scalar_lea.sflag [#allocation3], 1
    %17 = vsyncpa %s16, 0
    loop: start=0, step=1, limit=4
    $region2: #{tpu_custom_call.1} parent=1 // loop_pre_header
      _
    $region3: #{tpu_custom_call.1} parent=1 // loop_header
      %s19 = sphi 0, %s23
      %p20 = scmp.ge.s32.totalorder %s19, 4
      %s26 = sphi 0, %s38
      %s27 = sphi 0, %s34
      %s28 = sphi 0, %s26
      %s29 = sphi 0, %s27
      %s30 = sphi 0, %s28
      %s31 = sphi 0, %s29
      %s41 = sphi 0, %s43
      %s44 = sphi 0, %s41
      %s45 = sphi 0, %s44
      %s61 = sphi 0, %s45
      %s65 = sphi 0, %s65
      %s67 = sphi 0, %s65
      %s68 = sphi 0, %s67
      %s82 = sphi 0, %s68
      %s86 = sphi 0, %s86
      %s88 = sphi 0, %s86
      %s89 = sphi 0, %s88
      %s103 = sphi 0, %s89
      %s107 = sphi 0, %s107
      %s109 = sphi 0, %s107
      %s110 = sphi 0, %s109
      %s124 = sphi 0, %s110
      %s128 = sphi 0, %s128
      %s130 = sphi 0, %s128
      %s131 = sphi 0, %s130
      %s145 = sphi 0, %s131
      %s149 = sphi 0, %s149
      %s151 = sphi 0, %s149
      %s152 = sphi 0, %s151
      %s166 = sphi 0, %s152
      %s170 = sphi 0, %s170
      %s172 = sphi 0, %s170
      %s173 = sphi 0, %s172
      %s187 = sphi 0, %s173
      %s191 = sphi 0, %s191
      %s193 = sphi 0, %s191
      %s194 = sphi 0, %s193
      %s208 = sphi 0, %s194
      %s212 = sphi 0, %s212
      %s214 = sphi 0, %s212
      %s215 = sphi 0, %s214
      %s229 = sphi 0, %s215
      %s233 = sphi 0, %s233
      %s235 = sphi 0, %s233
      %s236 = sphi 0, %s235
      %s250 = sphi 0, %s236
      %s258 = sphi 0, %s260
      %s261 = sphi 0, %s258
      %s262 = sphi 0, %s261
      %s278 = sphi 0, %s262
    $region4: #{tpu_custom_call.1} parent=1 // loop_header_branch
      %22 = sbr.rel (%p20) target = $region8
    $region5: #{tpu_custom_call.1} parent=1 // loop_body
      %s24 = ssub.s32 %s19, 1
      %s25 = ssub.s32 %s19, 2
      %s32 = sadd.s32 1, %s27
      %p33 = scmp.ge.s32.totalorder %s32, 1
      %s34 = scalar_select %p33, 0, %s32
      %s35 = sadd.s32 1, %s26
      %s36 = scalar_select %p33, %s35, %s26
      %p37 = scmp.ge.s32.totalorder %s36, 2
      %s38 = scalar_select %p37, 0, %s36
      %s39 = ssub.s32 %s26, %s38
      %p40 = scmp.eq.s32.totalorder %s39, 0
      %s42 = sadd.s32 %s41, 1
      %s43 = scalar_select %p40, %s41, %s42
      %p46 = pneg %p40
      %p47 = scmp.eq.s32.totalorder %s19, 1
      %p48 = por %p46, %p47
      %p49 = scmp.ne.s32.totalorder %s41, %s44
      %p50 = scmp.eq.s32.totalorder %s19, 0
      %p51 = por %p49, %p50
      %p52 = scmp.ne.s32.totalorder %s41, %s44
      %p53 = scmp.eq.s32.totalorder %s24, 1
      %p54 = por %p52, %p53
      %p55 = scmp.ne.s32.totalorder %s44, %s45
      %p56 = scmp.eq.s32.totalorder %s24, 0
      %p57 = por %p55, %p56
      %p58 = scmp.ne.s32.totalorder %s44, %s45
      %p59 = scmp.eq.s32.totalorder %s25, 1
      %p60 = por %p58, %p59
      %p62 = scmp.ne.s32.totalorder %s45, %s61
      %p63 = scmp.eq.s32.totalorder %s25, 0
      %p64 = por %p62, %p63
      %s66 = sadd.s32 %s65, 1
      %p69 = scmp.eq.s32.totalorder %s19, 1
      %p70 = scmp.ne.s32.totalorder %s65, %s67
      %p71 = scmp.eq.s32.totalorder %s19, 0
      %p72 = por %p70, %p71
      %p73 = scmp.ne.s32.totalorder %s65, %s67
      %p74 = scmp.eq.s32.totalorder %s24, 1
      %p75 = por %p73, %p74
      %p76 = scmp.ne.s32.totalorder %s67, %s68
      %p77 = scmp.eq.s32.totalorder %s24, 0
      %p78 = por %p76, %p77
      %p79 = scmp.ne.s32.totalorder %s67, %s68
      %p80 = scmp.eq.s32.totalorder %s25, 1
      %p81 = por %p79, %p80
      %p83 = scmp.ne.s32.totalorder %s68, %s82
      %p84 = scmp.eq.s32.totalorder %s25, 0
      %p85 = por %p83, %p84
      %s87 = sadd.s32 %s86, 1
      %p90 = scmp.eq.s32.totalorder %s19, 1
      %p91 = scmp.ne.s32.totalorder %s86, %s88
      %p92 = scmp.eq.s32.totalorder %s19, 0
      %p93 = por %p91, %p92
      %p94 = scmp.ne.s32.totalorder %s86, %s88
      %p95 = scmp.eq.s32.totalorder %s24, 1
      %p96 = por %p94, %p95
      %p97 = scmp.ne.s32.totalorder %s88, %s89
      %p98 = scmp.eq.s32.totalorder %s24, 0
      %p99 = por %p97, %p98
      %p100 = scmp.ne.s32.totalorder %s88, %s89
      %p101 = scmp.eq.s32.totalorder %s25, 1
      %p102 = por %p100, %p101
      %p104 = scmp.ne.s32.totalorder %s89, %s103
      %p105 = scmp.eq.s32.totalorder %s25, 0
      %p106 = por %p104, %p105
      %s108 = sadd.s32 %s107, 1
      %p111 = scmp.eq.s32.totalorder %s19, 1
      %p112 = scmp.ne.s32.totalorder %s107, %s109
      %p113 = scmp.eq.s32.totalorder %s19, 0
      %p114 = por %p112, %p113
      %p115 = scmp.ne.s32.totalorder %s107, %s109
      %p116 = scmp.eq.s32.totalorder %s24, 1
      %p117 = por %p115, %p116
      %p118 = scmp.ne.s32.totalorder %s109, %s110
      %p119 = scmp.eq.s32.totalorder %s24, 0
      %p120 = por %p118, %p119
      %p121 = scmp.ne.s32.totalorder %s109, %s110
      %p122 = scmp.eq.s32.totalorder %s25, 1
      %p123 = por %p121, %p122
      %p125 = scmp.ne.s32.totalorder %s110, %s124
      %p126 = scmp.eq.s32.totalorder %s25, 0
      %p127 = por %p125, %p126
      %s129 = sadd.s32 %s128, 1
      %p132 = scmp.eq.s32.totalorder %s19, 1
      %p133 = scmp.ne.s32.totalorder %s128, %s130
      %p134 = scmp.eq.s32.totalorder %s19, 0
      %p135 = por %p133, %p134
      %p136 = scmp.ne.s32.totalorder %s128, %s130
      %p137 = scmp.eq.s32.totalorder %s24, 1
      %p138 = por %p136, %p137
      %p139 = scmp.ne.s32.totalorder %s130, %s131
      %p140 = scmp.eq.s32.totalorder %s24, 0
      %p141 = por %p139, %p140
      %p142 = scmp.ne.s32.totalorder %s130, %s131
      %p143 = scmp.eq.s32.totalorder %s25, 1
      %p144 = por %p142, %p143
      %p146 = scmp.ne.s32.totalorder %s131, %s145
      %p147 = scmp.eq.s32.totalorder %s25, 0
      %p148 = por %p146, %p147
      %s150 = sadd.s32 %s149, 1
      %p153 = scmp.eq.s32.totalorder %s19, 1
      %p154 = scmp.ne.s32.totalorder %s149, %s151
      %p155 = scmp.eq.s32.totalorder %s19, 0
      %p156 = por %p154, %p155
      %p157 = scmp.ne.s32.totalorder %s149, %s151
      %p158 = scmp.eq.s32.totalorder %s24, 1
      %p159 = por %p157, %p158
      %p160 = scmp.ne.s32.totalorder %s151, %s152
      %p161 = scmp.eq.s32.totalorder %s24, 0
      %p162 = por %p160, %p161
      %p163 = scmp.ne.s32.totalorder %s151, %s152
      %p164 = scmp.eq.s32.totalorder %s25, 1
      %p165 = por %p163, %p164
      %p167 = scmp.ne.s32.totalorder %s152, %s166
      %p168 = scmp.eq.s32.totalorder %s25, 0
      %p169 = por %p167, %p168
      %s171 = sadd.s32 %s170, 1
      %p174 = scmp.eq.s32.totalorder %s19, 1
      %p175 = scmp.ne.s32.totalorder %s170, %s172
      %p176 = scmp.eq.s32.totalorder %s19, 0
      %p177 = por %p175, %p176
      %p178 = scmp.ne.s32.totalorder %s170, %s172
      %p179 = scmp.eq.s32.totalorder %s24, 1
      %p180 = por %p178, %p179
      %p181 = scmp.ne.s32.totalorder %s172, %s173
      %p182 = scmp.eq.s32.totalorder %s24, 0
      %p183 = por %p181, %p182
      %p184 = scmp.ne.s32.totalorder %s172, %s173
      %p185 = scmp.eq.s32.totalorder %s25, 1
      %p186 = por %p184, %p185
      %p188 = scmp.ne.s32.totalorder %s173, %s187
      %p189 = scmp.eq.s32.totalorder %s25, 0
      %p190 = por %p188, %p189
      %s192 = sadd.s32 %s191, 1
      %p195 = scmp.eq.s32.totalorder %s19, 1
      %p196 = scmp.ne.s32.totalorder %s191, %s193
      %p197 = scmp.eq.s32.totalorder %s19, 0
      %p198 = por %p196, %p197
      %p199 = scmp.ne.s32.totalorder %s191, %s193
      %p200 = scmp.eq.s32.totalorder %s24, 1
      %p201 = por %p199, %p200
      %p202 = scmp.ne.s32.totalorder %s193, %s194
      %p203 = scmp.eq.s32.totalorder %s24, 0
      %p204 = por %p202, %p203
      %p205 = scmp.ne.s32.totalorder %s193, %s194
      %p206 = scmp.eq.s32.totalorder %s25, 1
      %p207 = por %p205, %p206
      %p209 = scmp.ne.s32.totalorder %s194, %s208
      %p210 = scmp.eq.s32.totalorder %s25, 0
      %p211 = por %p209, %p210
      %s213 = sadd.s32 %s212, 1
      %p216 = scmp.eq.s32.totalorder %s19, 1
      %p217 = scmp.ne.s32.totalorder %s212, %s214
      %p218 = scmp.eq.s32.totalorder %s19, 0
      %p219 = por %p217, %p218
      %p220 = scmp.ne.s32.totalorder %s212, %s214
      %p221 = scmp.eq.s32.totalorder %s24, 1
      %p222 = por %p220, %p221
      %p223 = scmp.ne.s32.totalorder %s214, %s215
      %p224 = scmp.eq.s32.totalorder %s24, 0
      %p225 = por %p223, %p224
      %p226 = scmp.ne.s32.totalorder %s214, %s215
      %p227 = scmp.eq.s32.totalorder %s25, 1
      %p228 = por %p226, %p227
      %p230 = scmp.ne.s32.totalorder %s215, %s229
      %p231 = scmp.eq.s32.totalorder %s25, 0
      %p232 = por %p230, %p231
      %s234 = sadd.s32 %s233, 1
      %p237 = scmp.eq.s32.totalorder %s19, 1
      %p238 = scmp.ne.s32.totalorder %s233, %s235
      %p239 = scmp.eq.s32.totalorder %s19, 0
      %p240 = por %p238, %p239
      %p241 = scmp.ne.s32.totalorder %s233, %s235
      %p242 = scmp.eq.s32.totalorder %s24, 1
      %p243 = por %p241, %p242
      %p244 = scmp.ne.s32.totalorder %s235, %s236
      %p245 = scmp.eq.s32.totalorder %s24, 0
      %p246 = por %p244, %p245
      %p247 = scmp.ne.s32.totalorder %s235, %s236
      %p248 = scmp.eq.s32.totalorder %s25, 1
      %p249 = por %p247, %p248
      %p251 = scmp.ne.s32.totalorder %s236, %s250
      %p252 = scmp.eq.s32.totalorder %s25, 0
      %p253 = por %p251, %p252
      %s254 = ssub.s32 %s26, %s38
      %s255 = ssub.s32 %s27, %s34
      %s256 = sor.u32 %s254, %s255
      %p257 = scmp.eq.s32.totalorder %s256, 0
      %s259 = sadd.s32 %s258, 1
      %s260 = scalar_select %p257, %s258, %s259
      %p263 = pneg %p257
      %p264 = scmp.eq.s32.totalorder %s19, 1
      %p265 = por %p263, %p264
      %p266 = scmp.ne.s32.totalorder %s258, %s261
      %p267 = scmp.eq.s32.totalorder %s19, 0
      %p268 = por %p266, %p267
      %p269 = scmp.ne.s32.totalorder %s258, %s261
      %p270 = scmp.eq.s32.totalorder %s24, 1
      %p271 = por %p269, %p270
      %p272 = scmp.ne.s32.totalorder %s261, %s262
      %p273 = scmp.eq.s32.totalorder %s24, 0
      %p274 = por %p272, %p273
      %p275 = scmp.ne.s32.totalorder %s261, %s262
      %p276 = scmp.eq.s32.totalorder %s25, 1
      %p277 = por %p275, %p276
      %p279 = scmp.ne.s32.totalorder %s262, %s278
      %p280 = scmp.eq.s32.totalorder %s25, 0
      %p281 = por %p279, %p280
      %p282 = scmp.le.s32.totalorder 1, %s19
      %p283 = scmp.lt.s32.totalorder %s19, 3
      %p284 = pnand %p282, %p283
      %p285 = pneg %p284
      // Predicated region
      $region9: #{tpu_custom_call.1} parent=5 // pred_check
        _
      $region10: #{tpu_custom_call.1} parent=5 // pred_check_branch
        %287 = sbr.rel (%p284) target = $region12
      $region11: #{tpu_custom_call.1} parent=5 // pred_region
        %s288 = ssub.s32 %s19, 1
        // Predicated region
        $region13: #{tpu_custom_call.1} parent=11 // pred_check
          %p289 = pneg %p78
        $region14: #{tpu_custom_call.1} parent=11 // pred_check_branch
          %291 = sbr.rel (%p289) target = $region16
        $region15: #{tpu_custom_call.1} parent=11 // pred_region
          _
        $region16: #{tpu_custom_call.1} parent=11 // pred_fallthru
          _
        // Predicated region
        $region17: #{tpu_custom_call.1} parent=11 // pred_check
          %p292 = pneg %p99
        $region18: #{tpu_custom_call.1} parent=11 // pred_check_branch
          %294 = sbr.rel (%p292) target = $region20
        $region19: #{tpu_custom_call.1} parent=11 // pred_region
          _
        $region20: #{tpu_custom_call.1} parent=11 // pred_fallthru
          _
        // Predicated region
        $region21: #{tpu_custom_call.1} parent=11 // pred_check
          %p295 = pneg %p120
        $region22: #{tpu_custom_call.1} parent=11 // pred_check_branch
          %297 = sbr.rel (%p295) target = $region24
        $region23: #{tpu_custom_call.1} parent=11 // pred_region
          _
        $region24: #{tpu_custom_call.1} parent=11 // pred_fallthru
          _
        // Predicated region
        $region25: #{tpu_custom_call.1} parent=11 // pred_check
          %p298 = pneg %p141
        $region26: #{tpu_custom_call.1} parent=11 // pred_check_branch
          %300 = sbr.rel (%p298) target = $region28
        $region27: #{tpu_custom_call.1} parent=11 // pred_region
          _
        $region28: #{tpu_custom_call.1} parent=11 // pred_fallthru
          _
        // Predicated region
        $region29: #{tpu_custom_call.1} parent=11 // pred_check
          %p301 = pneg %p162
        $region30: #{tpu_custom_call.1} parent=11 // pred_check_branch
          %303 = sbr.rel (%p301) target = $region32
        $region31: #{tpu_custom_call.1} parent=11 // pred_region
          _
        $region32: #{tpu_custom_call.1} parent=11 // pred_fallthru
          _
        // Predicated region
        $region33: #{tpu_custom_call.1} parent=11 // pred_check
          %p304 = pneg %p183
        $region34: #{tpu_custom_call.1} parent=11 // pred_check_branch
          %306 = sbr.rel (%p304) target = $region36
        $region35: #{tpu_custom_call.1} parent=11 // pred_region
          _
        $region36: #{tpu_custom_call.1} parent=11 // pred_fallthru
          _
        // Predicated region
        $region37: #{tpu_custom_call.1} parent=11 // pred_check
          %p307 = pneg %p204
        $region38: #{tpu_custom_call.1} parent=11 // pred_check_branch
          %309 = sbr.rel (%p307) target = $region40
        $region39: #{tpu_custom_call.1} parent=11 // pred_region
          _
        $region40: #{tpu_custom_call.1} parent=11 // pred_fallthru
          _
        // Predicated region
        $region41: #{tpu_custom_call.1} parent=11 // pred_check
          %p310 = pneg %p225
        $region42: #{tpu_custom_call.1} parent=11 // pred_check_branch
          %312 = sbr.rel (%p310) target = $region44
        $region43: #{tpu_custom_call.1} parent=11 // pred_region
          _
        $region44: #{tpu_custom_call.1} parent=11 // pred_fallthru
          _
        // Predicated region
        $region45: #{tpu_custom_call.1} parent=11 // pred_check
          %p313 = pneg %p246
        $region46: #{tpu_custom_call.1} parent=11 // pred_check_branch
          %315 = sbr.rel (%p313) target = $region48
        $region47: #{tpu_custom_call.1} parent=11 // pred_region
          _
        $region48: #{tpu_custom_call.1} parent=11 // pred_fallthru
          _
      $region12: #{tpu_custom_call.1} parent=5 // pred_fallthru
        _
      %p316 = scmp.lt.s32.totalorder %s19, 2
      // Predicated region
      $region49: #{tpu_custom_call.1} parent=5 // pred_check
        %p317 = pneg %p316
      $region50: #{tpu_custom_call.1} parent=5 // pred_check_branch
        %319 = sbr.rel (%p317) target = $region52
      $region51: #{tpu_custom_call.1} parent=5 // pred_region
        // Predicated region
        $region53: #{tpu_custom_call.1} parent=51 // pred_check
          %p320 = pneg %p51
        $region54: #{tpu_custom_call.1} parent=51 // pred_check_branch
          %322 = sbr.rel (%p320) target = $region56
        $region55: #{tpu_custom_call.1} parent=51 // pred_region
          %s323 = sand.u32 %s41, 1
          %s324 = scalar_lea.sflag [#allocation3], %s323
          %s325 = sand.u32 %s41, 1
          %s326 = smul.addr %s325, 128
          %s327 = scalar_lea.vmem [#allocation2], %s326
          %s329 = ssub.s32 2048, 2048
          %330 = vsyncadd %s324, %s329
          %s331 = smul.addr %s26, 32
          %s332 = smul.addr %s331, 64
          %s333 = scalar_lea.hbm %s0, %s332
          %s334 = sshll.u32 %s327, 4
          %s335 = int_to_ptr.vmem [resolvable:$true] %s334
          %340 = dma.hbm_to_vmem [thread:$0]  %s333, 2048, %s335, %s324, 64, 64, 4
        $region56: #{tpu_custom_call.1} parent=51 // pred_fallthru
          _
      $region52: #{tpu_custom_call.1} parent=5 // pred_fallthru
        _
      %p341 = scmp.le.s32.totalorder 1, %s19
      %p342 = scmp.lt.s32.totalorder %s19, 3
      %p343 = pnand %p341, %p342
      %p344 = pneg %p343
      // Predicated region
      $region57: #{tpu_custom_call.1} parent=5 // pred_check
        _
      $region58: #{tpu_custom_call.1} parent=5 // pred_check_branch
        %346 = sbr.rel (%p343) target = $region60
      $region59: #{tpu_custom_call.1} parent=5 // pred_region
        %s347 = ssub.s32 %s19, 1
        %s348 = sand.u32 %s44, 1
        %s349 = scalar_lea.sflag [#allocation3], %s348
        %s350 = sand.u32 %s44, 1
        %s351 = smul.addr %s350, 128
        %s352 = scalar_lea.vmem [#allocation2], %s351
        // Predicated region
        $region61: #{tpu_custom_call.1} parent=59 // pred_check
          %p353 = pneg %p57
        $region62: #{tpu_custom_call.1} parent=59 // pred_check_branch
          %355 = sbr.rel (%p353) target = $region64
        $region63: #{tpu_custom_call.1} parent=59 // pred_region
          %356 = dma.done %s349, 2048
        $region64: #{tpu_custom_call.1} parent=59 // pred_fallthru
          _
        %s357 = sand.u32 %s44, 1
        %s358 = scalar_lea.sflag [#allocation3], %s357
        %s359 = sand.u32 %s44, 1
        %s360 = smul.addr %s359, 128
        %s361 = scalar_lea.vmem [#allocation2], %s360
        %p362 = pneg %p57
        %p363 = pneg %p54
        %p364 = pneg %p78
        %p365 = pneg %p75
        %p366 = pneg %p99
        %p367 = pneg %p96
        %p368 = pneg %p120
        %p369 = pneg %p117
        %p370 = pneg %p141
        %p371 = pneg %p138
        %p372 = pneg %p162
        %p373 = pneg %p159
        %p374 = pneg %p183
        %p375 = pneg %p180
        %p376 = pneg %p204
        %p377 = pneg %p201
        %p378 = pneg %p225
        %p379 = pneg %p222
        %p380 = pneg %p246
        %p381 = pneg %p243
        %p382 = pneg %p274
        %p383 = pneg %p271
        %s384 = smul.u32 32, %s29
        %p385 = scmp.lt.s32.totalorder %s28, 1
        %s386 = scalar_select %p385, %s28, 1
        %p387 = scmp.lt.s32.totalorder %s384, 31
        %s388 = scalar_select %p387, %s384, 31
        %s389 = smul.addr %s386, 32
        %s390 = sadd.s32 %s388, %s389
        %s391 = smul.addr %s390, 4
        %s392 = scalar_lea.vmem %s10, %s391
        %s393 = smul.u32 32, %s29
        %p394 = scmp.lt.s32.totalorder %s28, 1
        %s395 = scalar_select %p394, %s28, 1
        %p396 = scmp.lt.s32.totalorder %s393, 31
        %s397 = scalar_select %p396, %s393, 31
        %s398 = smul.addr %s395, 32
        %s399 = sadd.s32 %s397, %s398
        %s400 = smul.addr %s399, 4
        %s401 = scalar_lea.vmem %s10, %s400
        %s402 = smul.u32 32, %s29
        %s406 = smul.u32 %s29, 16
        %s407 = ssub.s32 %s406, 1
        %p408 = scmp.gt.s32.totalorder %s407, 0
        %s409 = scalar_select %p408, %s407, 0
        %s410 = smul.u32 %s409, 2
        %s411 = smul.addr %s410, 4
        %s412 = scalar_lea.vmem %s352, %s411 [#allocation2]
        %v413 = vld [vmem:[%s412] sm:$0xf]
        %v414 = vld [vmem:[%s412 + $0x4] sm:$0xf]
        %s415 = smul.u32 %s406, 2
        %s416 = smul.addr %s415, 4
        %s417 = scalar_lea.vmem %s352, %s416 [#allocation2]
        %v418 = vld [vmem:[%s417] sm:$0xf]
        %v419 = vld [vmem:[%s417 + $0x4] sm:$0xf]
        %v420 = vld [vmem:[%s417 + $0x8] sm:$0xf]
        %v421 = vld [vmem:[%s417 + $0xc] sm:$0xf]
        %v422 = vld [vmem:[%s417 + $0x10] sm:$0xf]
        %v423 = vld [vmem:[%s417 + $0x14] sm:$0xf]
        %v424 = vld [vmem:[%s417 + $0x18] sm:$0xf]
        %v425 = vld [vmem:[%s417 + $0x1c] sm:$0xf]
        %v426 = vld [vmem:[%s417 + $0x20] sm:$0xf]
        %v427 = vld [vmem:[%s417 + $0x24] sm:$0xf]
        %v428 = vld [vmem:[%s417 + $0x28] sm:$0xf]
        %v429 = vld [vmem:[%s417 + $0x2c] sm:$0xf]
        %v430 = vld [vmem:[%s417 + $0x30] sm:$0xf]
        %v431 = vld [vmem:[%s417 + $0x34] sm:$0xf]
        %v432 = vld [vmem:[%s417 + $0x38] sm:$0xf]
        %v433 = vld [vmem:[%s417 + $0x3c] sm:$0xf]
        %v434 = vld [vmem:[%s417 + $0x40] sm:$0xf]
        %v435 = vld [vmem:[%s417 + $0x44] sm:$0xf]
        %v436 = vld [vmem:[%s417 + $0x48] sm:$0xf]
        %v437 = vld [vmem:[%s417 + $0x4c] sm:$0xf]
        %v438 = vld [vmem:[%s417 + $0x50] sm:$0xf]
        %v439 = vld [vmem:[%s417 + $0x54] sm:$0xf]
        %v440 = vld [vmem:[%s417 + $0x58] sm:$0xf]
        %v441 = vld [vmem:[%s417 + $0x5c] sm:$0xf]
        %v442 = vld [vmem:[%s417 + $0x60] sm:$0xf]
        %v443 = vld [vmem:[%s417 + $0x64] sm:$0xf]
        %v444 = vld [vmem:[%s417 + $0x68] sm:$0xf]
        %v445 = vld [vmem:[%s417 + $0x6c] sm:$0xf]
        %v446 = vld [vmem:[%s417 + $0x70] sm:$0xf]
        %v447 = vld [vmem:[%s417 + $0x74] sm:$0xf]
        %v448 = vld [vmem:[%s417 + $0x78] sm:$0xf]
        %v449 = vld [vmem:[%s417 + $0x7c] sm:$0xf]
        %s450 = sadd.s32 %s406, 16
        %p451 = scmp.lt.s32.totalorder %s450, 15
        %s452 = scalar_select %p451, %s450, 15
        %s453 = smul.u32 %s452, 2
        %s454 = smul.addr %s453, 4
        %s455 = scalar_lea.vmem %s352, %s454 [#allocation2]
        %v456 = vld [vmem:[%s455] sm:$0xf]
        %v457 = vld [vmem:[%s455 + $0x4] sm:$0xf]
        %v458 = vld [vmem:[%s1] sm:$0xf]
        %v459 = vld [vmem:[%s1 + $0x4] sm:$0xf]
        %v496 = vunpack.c.l.b16 %v413
        %v497 = vunpack.c.l.b16 %v414
        %v498 = vunpack.c.l.b16 %v418
        %v499 = vunpack.c.l.b16 %v419
        %v500 = vunpack.c.l.b16 %v420
        %v501 = vunpack.c.l.b16 %v421
        %v502 = vunpack.c.l.b16 %v422
        %v503 = vunpack.c.l.b16 %v423
        %v504 = vunpack.c.l.b16 %v424
        %v505 = vunpack.c.l.b16 %v425
        %v506 = vunpack.c.l.b16 %v426
        %v507 = vunpack.c.l.b16 %v427
        %v508 = vunpack.c.l.b16 %v428
        %v509 = vunpack.c.l.b16 %v429
        %v510 = vunpack.c.l.b16 %v430
        %v511 = vunpack.c.l.b16 %v431
        %v512 = vunpack.c.l.b16 %v432
        %v513 = vunpack.c.l.b16 %v433
        %v514 = vunpack.c.l.b16 %v434
        %v515 = vunpack.c.l.b16 %v435
        %v516 = vunpack.c.l.b16 %v436
        %v517 = vunpack.c.l.b16 %v437
        %v518 = vunpack.c.l.b16 %v438
        %v519 = vunpack.c.l.b16 %v439
        %v520 = vunpack.c.l.b16 %v440
        %v521 = vunpack.c.l.b16 %v441
        %v522 = vunpack.c.l.b16 %v442
        %v523 = vunpack.c.l.b16 %v443
        %v524 = vunpack.c.l.b16 %v444
        %v525 = vunpack.c.l.b16 %v445
        %v526 = vunpack.c.l.b16 %v446
        %v527 = vunpack.c.l.b16 %v447
        %v528 = vunpack.c.l.b16 %v448
        %v529 = vunpack.c.l.b16 %v449
        %v530 = vunpack.c.l.b16 %v456
        %v531 = vunpack.c.l.b16 %v457
        %v532 = vpack.c.b16 %v497, %v496
        %v533 = vpack.c.b16 %v499, %v498
        %v534 = vpack.c.b16 %v501, %v500
        %v535 = vpack.c.b16 %v503, %v502
        %v536 = vpack.c.b16 %v505, %v504
        %v537 = vpack.c.b16 %v507, %v506
        %v538 = vpack.c.b16 %v509, %v508
        %v539 = vpack.c.b16 %v511, %v510
        %v540 = vpack.c.b16 %v513, %v512
        %v541 = vpack.c.b16 %v515, %v514
        %v542 = vpack.c.b16 %v517, %v516
        %v543 = vpack.c.b16 %v519, %v518
        %v544 = vpack.c.b16 %v521, %v520
        %v545 = vpack.c.b16 %v523, %v522
        %v546 = vpack.c.b16 %v525, %v524
        %v547 = vpack.c.b16 %v527, %v526
        %v548 = vpack.c.b16 %v529, %v528
        %v549 = vpack.c.b16 %v531, %v530
        %v552 = vunpack.c.l.b16 %v458
        %v553 = vunpack.c.l.b16 %v459
        %v554 = vpack.c.b16 %v553, %v552
        %vm556 = vcmask 130048
        %v558 = vsel %vm556, %v532, 0
        %v561 = vsel %vm556, %v533, 0
        %v564 = vsel %vm556, %v534, 0
        %v567 = vsel %vm556, %v535, 0
        %v570 = vsel %vm556, %v536, 0
        %v573 = vsel %vm556, %v537, 0
        %v576 = vsel %vm556, %v538, 0
        %v579 = vsel %vm556, %v539, 0
        %v582 = vsel %vm556, %v540, 0
        %v585 = vsel %vm556, %v541, 0
        %v588 = vsel %vm556, %v542, 0
        %v591 = vsel %vm556, %v543, 0
        %v594 = vsel %vm556, %v544, 0
        %v597 = vsel %vm556, %v545, 0
        %v600 = vsel %vm556, %v546, 0
        %v603 = vsel %vm556, %v547, 0
        %v606 = vsel %vm556, %v548, 0
        %v609 = vsel %vm556, %v549, 0
        %611 = vmatprep.subr.bf16.mxu0 0
        %612 = vmatpush1.bf16.msra.mxu0 %v554
        %613 = vmatprep.subr.bf16.mxu0 0
        %614 = vmatpush1.bf16.msra.mxu0 0
        %615 = vmatprep.subr.bf16.mxu0 0
        %616 = vmatpush1.bf16.msra.mxu0 0
        %617 = vmatprep.subr.bf16.mxu0 0
        %618 = vmatpush1.bf16.msra.mxu0 0
        %619 = vmatprep.subr.bf16.mxu0 0
        %620 = vmatpush1.bf16.msra.mxu0 0
        %621 = vmatprep.subr.bf16.mxu0 0
        %622 = vmatpush1.bf16.msra.mxu0 0
        %623 = vmatprep.subr.bf16.mxu0 0
        %624 = vmatpush1.bf16.msra.mxu0 0
        %625 = vmatprep.subr.bf16.mxu0 0
        %626 = vmatpush1.bf16.msra.mxu0 0
        %627 = vmatprep.subr.bf16.mxu0 0
        %628 = vmatpush1.bf16.msra.mxu0 0
        %629 = vmatprep.subr.bf16.mxu0 0
        %630 = vmatpush1.bf16.msra.mxu0 0
        %631 = vmatprep.subr.bf16.mxu0 0
        %632 = vmatpush1.bf16.msra.mxu0 0
        %633 = vmatprep.subr.bf16.mxu0 0
        %634 = vmatpush1.bf16.msra.mxu0 0
        %635 = vmatprep.subr.bf16.mxu0 0
        %636 = vmatpush1.bf16.msra.mxu0 0
        %637 = vmatprep.subr.bf16.mxu0 0
        %638 = vmatpush1.bf16.msra.mxu0 0
        %639 = vmatprep.subr.bf16.mxu0 0
        %640 = vmatpush1.bf16.msra.mxu0 0
        %641 = vmatprep.subr.bf16.mxu0 0
        %642 = vmatpush1.bf16.msra.mxu0 0
        %643 = vmatprep.mubr.bf16.mxu0 0
        %644 = vmatmul.mubr.bf16.gmra.mrb[0].mxu0 %v558
        %v645 = vpop.f32.mrb[0].mxu0
        %v646 = vadd.f32 0.0, %v645
        %v647 = vpop.f32.mrb[0].mxu0
        %v648 = vpop.f32.mrb[0].mxu0
        %v649 = vadd.f32 0.0, %v648
        %v650 = vpop.f32.mrb[0].mxu0
        %651 = vmatprep.mubr.bf16.mxu0 0
        %652 = vmatmul.mubr.bf16.gmra.mrb[0].mxu0 %v561
        %v653 = vpop.f32.mrb[0].mxu0
        %v654 = vadd.f32 0.0, %v653
        %v655 = vpop.f32.mrb[0].mxu0
        %v656 = vpop.f32.mrb[0].mxu0
        %v657 = vadd.f32 0.0, %v656
        %v658 = vpop.f32.mrb[0].mxu0
        %659 = vmatprep.mubr.bf16.mxu0 0
        %660 = vmatmul.mubr.bf16.gmra.mrb[0].mxu0 %v564
        %v661 = vpop.f32.mrb[0].mxu0
        %v662 = vadd.f32 0.0, %v661
        %v663 = vpop.f32.mrb[0].mxu0
        %v664 = vpop.f32.mrb[0].mxu0
        %v665 = vadd.f32 0.0, %v664
        %v666 = vpop.f32.mrb[0].mxu0
        %667 = vmatprep.mubr.bf16.mxu0 0
        %668 = vmatmul.mubr.bf16.gmra.mrb[0].mxu0 %v567
        %v669 = vpop.f32.mrb[0].mxu0
        %v670 = vadd.f32 0.0, %v669
        %v671 = vpop.f32.mrb[0].mxu0
        %v672 = vpop.f32.mrb[0].mxu0
        %v673 = vadd.f32 0.0, %v672
        %v674 = vpop.f32.mrb[0].mxu0
        %675 = vmatprep.mubr.bf16.mxu0 0
        %676 = vmatmul.mubr.bf16.gmra.mrb[0].mxu0 %v570
        %v677 = vpop.f32.mrb[0].mxu0
        %v678 = vadd.f32 0.0, %v677
        %v679 = vpop.f32.mrb[0].mxu0
        %v680 = vpop.f32.mrb[0].mxu0
        %v681 = vadd.f32 0.0, %v680
        %v682 = vpop.f32.mrb[0].mxu0
        %683 = vmatprep.mubr.bf16.mxu0 0
        %684 = vmatmul.mubr.bf16.gmra.mrb[0].mxu0 %v573
        %v685 = vpop.f32.mrb[0].mxu0
        %v686 = vadd.f32 0.0, %v685
        %v687 = vpop.f32.mrb[0].mxu0
        %v688 = vpop.f32.mrb[0].mxu0
        %v689 = vadd.f32 0.0, %v688
        %v690 = vpop.f32.mrb[0].mxu0
        %691 = vmatprep.mubr.bf16.mxu0 0
        %692 = vmatmul.mubr.bf16.gmra.mrb[0].mxu0 %v576
        %v693 = vpop.f32.mrb[0].mxu0
        %v694 = vadd.f32 0.0, %v693
        %v695 = vpop.f32.mrb[0].mxu0
        %v696 = vpop.f32.mrb[0].mxu0
        %v697 = vadd.f32 0.0, %v696
        %v698 = vpop.f32.mrb[0].mxu0
        %699 = vmatprep.mubr.bf16.mxu0 0
        %700 = vmatmul.mubr.bf16.gmra.mrb[0].mxu0 %v579
        %v701 = vpop.f32.mrb[0].mxu0
        %v702 = vadd.f32 0.0, %v701
        %v703 = vpop.f32.mrb[0].mxu0
        %v704 = vpop.f32.mrb[0].mxu0
        %v705 = vadd.f32 0.0, %v704
        %v706 = vpop.f32.mrb[0].mxu0
        %707 = vmatprep.mubr.bf16.mxu0 0
        %708 = vmatmul.mubr.bf16.gmra.mrb[0].mxu0 %v582
        %v709 = vpop.f32.mrb[0].mxu0
        %v710 = vadd.f32 0.0, %v709
        %v711 = vpop.f32.mrb[0].mxu0
        %v712 = vpop.f32.mrb[0].mxu0
        %v713 = vadd.f32 0.0, %v712
        %v714 = vpop.f32.mrb[0].mxu0
        %715 = vmatprep.mubr.bf16.mxu0 0
        %716 = vmatmul.mubr.bf16.gmra.mrb[0].mxu0 %v585
        %v717 = vpop.f32.mrb[0].mxu0
        %v718 = vadd.f32 0.0, %v717
        %v719 = vpop.f32.mrb[0].mxu0
        %v720 = vpop.f32.mrb[0].mxu0
        %v721 = vadd.f32 0.0, %v720
        %v722 = vpop.f32.mrb[0].mxu0
        %723 = vmatprep.mubr.bf16.mxu0 0
        %724 = vmatmul.mubr.bf16.gmra.mrb[0].mxu0 %v588
        %v725 = vpop.f32.mrb[0].mxu0
        %v726 = vadd.f32 0.0, %v725
        %v727 = vpop.f32.mrb[0].mxu0
        %v728 = vpop.f32.mrb[0].mxu0
        %v729 = vadd.f32 0.0, %v728
        %v730 = vpop.f32.mrb[0].mxu0
        %731 = vmatprep.mubr.bf16.mxu0 0
        %732 = vmatmul.mubr.bf16.gmra.mrb[0].mxu0 %v591
        %v733 = vpop.f32.mrb[0].mxu0
        %v734 = vadd.f32 0.0, %v733
        %v735 = vpop.f32.mrb[0].mxu0
        %v736 = vpop.f32.mrb[0].mxu0
        %v737 = vadd.f32 0.0, %v736
        %v738 = vpop.f32.mrb[0].mxu0
        %739 = vmatprep.mubr.bf16.mxu0 0
        %740 = vmatmul.mubr.bf16.gmra.mrb[0].mxu0 %v594
        %v741 = vpop.f32.mrb[0].mxu0
        %v742 = vadd.f32 0.0, %v741
        %v743 = vpop.f32.mrb[0].mxu0
        %v744 = vpop.f32.mrb[0].mxu0
        %v745 = vadd.f32 0.0, %v744
        %v746 = vpop.f32.mrb[0].mxu0
        %747 = vmatprep.mubr.bf16.mxu0 0
        %748 = vmatmul.mubr.bf16.gmra.mrb[0].mxu0 %v597
        %v749 = vpop.f32.mrb[0].mxu0
        %v750 = vadd.f32 0.0, %v749
        %v751 = vpop.f32.mrb[0].mxu0
        %v752 = vpop.f32.mrb[0].mxu0
        %v753 = vadd.f32 0.0, %v752
        %v754 = vpop.f32.mrb[0].mxu0
        %755 = vmatprep.mubr.bf16.mxu0 0
        %756 = vmatmul.mubr.bf16.gmra.mrb[0].mxu0 %v600
        %v757 = vpop.f32.mrb[0].mxu0
        %v758 = vadd.f32 0.0, %v757
        %v759 = vpop.f32.mrb[0].mxu0
        %v760 = vpop.f32.mrb[0].mxu0
        %v761 = vadd.f32 0.0, %v760
        %v762 = vpop.f32.mrb[0].mxu0
        %763 = vmatprep.mubr.bf16.mxu0 0
        %764 = vmatmul.mubr.bf16.gmra.mrb[0].mxu0 %v603
        %v765 = vpop.f32.mrb[0].mxu0
        %v766 = vadd.f32 0.0, %v765
        %v767 = vpop.f32.mrb[0].mxu0
        %v768 = vpop.f32.mrb[0].mxu0
        %v769 = vadd.f32 0.0, %v768
        %v770 = vpop.f32.mrb[0].mxu0
        %771 = vmatprep.mubr.bf16.mxu0 0
        %772 = vmatmul.mubr.bf16.gmra.mrb[0].mxu0 %v606
        %v773 = vpop.f32.mrb[0].mxu0
        %v774 = vadd.f32 0.0, %v773
        %v775 = vpop.f32.mrb[0].mxu0
        %v776 = vpop.f32.mrb[0].mxu0
        %v777 = vadd.f32 0.0, %v776
        %v778 = vpop.f32.mrb[0].mxu0
        %779 = vmatprep.mubr.bf16.mxu0 0
        %780 = vmatmul.mubr.bf16.gmra.mrb[0].mxu0 %v609
        %v781 = vpop.f32.mrb[0].mxu0
        %v782 = vadd.f32 0.0, %v781
        %v783 = vpop.f32.mrb[0].mxu0
        %v784 = vpop.f32.mrb[0].mxu0
        %v785 = vadd.f32 0.0, %v784
        %v786 = vpop.f32.mrb[0].mxu0
        %787 = vdwg.mxu0
        %v788 = vld [vmem:[%s2] sm:$0x1]
        %v790 = vlaneseq
        %v791 = vshrl.u32 %v790, 7
        %v792 = vsub.s32 0, %v791
        %v793 = vrot.slane %v788, %v792
        %v795 = vmul.f32 %v646, %v793
        %v796 = vmul.f32 %v649, %v793
        %v797 = vmul.f32 %v654, %v793
        %v798 = vmul.f32 %v657, %v793
        %v799 = vmul.f32 %v662, %v793
        %v800 = vmul.f32 %v665, %v793
        %v801 = vmul.f32 %v670, %v793
        %v802 = vmul.f32 %v673, %v793
        %v803 = vmul.f32 %v678, %v793
        %v804 = vmul.f32 %v681, %v793
        %v805 = vmul.f32 %v686, %v793
        %v806 = vmul.f32 %v689, %v793
        %v807 = vmul.f32 %v694, %v793
        %v808 = vmul.f32 %v697, %v793
        %v809 = vmul.f32 %v702, %v793
        %v810 = vmul.f32 %v705, %v793
        %v811 = vmul.f32 %v710, %v793
        %v812 = vmul.f32 %v713, %v793
        %v813 = vmul.f32 %v718, %v793
        %v814 = vmul.f32 %v721, %v793
        %v815 = vmul.f32 %v726, %v793
        %v816 = vmul.f32 %v729, %v793
        %v817 = vmul.f32 %v734, %v793
        %v818 = vmul.f32 %v737, %v793
        %v819 = vmul.f32 %v742, %v793
        %v820 = vmul.f32 %v745, %v793
        %v821 = vmul.f32 %v750, %v793
        %v822 = vmul.f32 %v753, %v793
        %v823 = vmul.f32 %v758, %v793
        %v824 = vmul.f32 %v761, %v793
        %v825 = vmul.f32 %v766, %v793
        %v826 = vmul.f32 %v769, %v793
        %v827 = vmul.f32 %v774, %v793
        %v828 = vmul.f32 %v777, %v793
        %v829 = vmul.f32 %v782, %v793
        %v830 = vmul.f32 %v785, %v793
        %v831 = vld [vmem:[%s3] sm:$0x1]
        %v833 = vlaneseq
        %v834 = vshrl.u32 %v833, 7
        %v835 = vsub.s32 0, %v834
        %v836 = vrot.slane %v831, %v835
        %v838 = vadd.f32 %v795, %v836
        %v839 = vadd.f32 %v796, %v836
        %v840 = vadd.f32 %v797, %v836
        %v841 = vadd.f32 %v798, %v836
        %v842 = vadd.f32 %v799, %v836
        %v843 = vadd.f32 %v800, %v836
        %v844 = vadd.f32 %v801, %v836
        %v845 = vadd.f32 %v802, %v836
        %v846 = vadd.f32 %v803, %v836
        %v847 = vadd.f32 %v804, %v836
        %v848 = vadd.f32 %v805, %v836
        %v849 = vadd.f32 %v806, %v836
        %v850 = vadd.f32 %v807, %v836
        %v851 = vadd.f32 %v808, %v836
        %v852 = vadd.f32 %v809, %v836
        %v853 = vadd.f32 %v810, %v836
        %v854 = vadd.f32 %v811, %v836
        %v855 = vadd.f32 %v812, %v836
        %v856 = vadd.f32 %v813, %v836
        %v857 = vadd.f32 %v814, %v836
        %v858 = vadd.f32 %v815, %v836
        %v859 = vadd.f32 %v816, %v836
        %v860 = vadd.f32 %v817, %v836
        %v861 = vadd.f32 %v818, %v836
        %v862 = vadd.f32 %v819, %v836
        %v863 = vadd.f32 %v820, %v836
        %v864 = vadd.f32 %v821, %v836
        %v865 = vadd.f32 %v822, %v836
        %v866 = vadd.f32 %v823, %v836
        %v867 = vadd.f32 %v824, %v836
        %v868 = vadd.f32 %v825, %v836
        %v869 = vadd.f32 %v826, %v836
        %v870 = vadd.f32 %v827, %v836
        %v871 = vadd.f32 %v828, %v836
        %v872 = vadd.f32 %v829, %v836
        %v873 = vadd.f32 %v830, %v836
        %v874 = vmax.f32 %v838, 0.0
        %v875 = vmax.f32 %v839, 0.0
        %v876 = vmax.f32 %v840, 0.0
        %v877 = vmax.f32 %v841, 0.0
        %v878 = vmax.f32 %v842, 0.0
        %v879 = vmax.f32 %v843, 0.0
        %v880 = vmax.f32 %v844, 0.0
        %v881 = vmax.f32 %v845, 0.0
        %v882 = vmax.f32 %v846, 0.0
        %v883 = vmax.f32 %v847, 0.0
        %v884 = vmax.f32 %v848, 0.0
        %v885 = vmax.f32 %v849, 0.0
        %v886 = vmax.f32 %v850, 0.0
        %v887 = vmax.f32 %v851, 0.0
        %v888 = vmax.f32 %v852, 0.0
        %v889 = vmax.f32 %v853, 0.0
        %v890 = vmax.f32 %v854, 0.0
        %v891 = vmax.f32 %v855, 0.0
        %v892 = vmax.f32 %v856, 0.0
        %v893 = vmax.f32 %v857, 0.0
        %v894 = vmax.f32 %v858, 0.0
        %v895 = vmax.f32 %v859, 0.0
        %v896 = vmax.f32 %v860, 0.0
        %v897 = vmax.f32 %v861, 0.0
        %v898 = vmax.f32 %v862, 0.0
        %v899 = vmax.f32 %v863, 0.0
        %v900 = vmax.f32 %v864, 0.0
        %v901 = vmax.f32 %v865, 0.0
        %v902 = vmax.f32 %v866, 0.0
        %v903 = vmax.f32 %v867, 0.0
        %v904 = vmax.f32 %v868, 0.0
        %v905 = vmax.f32 %v869, 0.0
        %v906 = vmax.f32 %v870, 0.0
        %v907 = vmax.f32 %v871, 0.0
        %v908 = vmax.f32 %v872, 0.0
        %v909 = vmax.f32 %v873, 0.0
        %v910 = vpack.c.bf16 %v875, %v874
        %v911 = vpack.c.bf16 %v877, %v876
        %v912 = vpack.c.bf16 %v879, %v878
        %v913 = vpack.c.bf16 %v881, %v880
        %v914 = vpack.c.bf16 %v883, %v882
        %v915 = vpack.c.bf16 %v885, %v884
        %v916 = vpack.c.bf16 %v887, %v886
        %v917 = vpack.c.bf16 %v889, %v888
        %v918 = vpack.c.bf16 %v891, %v890
        %v919 = vpack.c.bf16 %v893, %v892
        %v920 = vpack.c.bf16 %v895, %v894
        %v921 = vpack.c.bf16 %v897, %v896
        %v922 = vpack.c.bf16 %v899, %v898
        %v923 = vpack.c.bf16 %v901, %v900
        %v924 = vpack.c.bf16 %v903, %v902
        %v925 = vpack.c.bf16 %v905, %v904
        %v926 = vpack.c.bf16 %v907, %v906
        %v927 = vpack.c.bf16 %v909, %v908
        %v928 = vlaneseq
        %v929 = vshrl.u32 %v928, 7
        %v930 = vadd.s32 %v929, 8
        %v931 = vadd.s32 %v929, 16
        %v932 = vadd.s32 %v929, 24
        %v933 = vadd.s32 %v929, 32
        %v934 = vadd.s32 %v929, 40
        %v935 = vadd.s32 %v929, 48
        %v936 = vadd.s32 %v929, 56
        %v937 = vadd.s32 %v929, 64
        %v938 = vadd.s32 %v929, 72
        %v939 = vadd.s32 %v929, 80
        %v940 = vadd.s32 %v929, 88
        %v941 = vadd.s32 %v929, 96
        %v942 = vadd.s32 %v929, 104
        %v943 = vadd.s32 %v929, 112
        %v944 = vadd.s32 %v929, 120
        %v945 = vadd.s32 %v929, 128
        %v946 = vadd.s32 %v929, 136
        %v947 = vadd.s32 %v929, 144
        %v948 = vadd.s32 %v929, 152
        %v949 = vadd.s32 %v929, 160
        %v950 = vadd.s32 %v929, 168
        %v951 = vadd.s32 %v929, 176
        %v952 = vadd.s32 %v929, 184
        %v953 = vadd.s32 %v929, 192
        %v954 = vadd.s32 %v929, 200
        %v955 = vadd.s32 %v929, 208
        %v956 = vadd.s32 %v929, 216
        %v957 = vadd.s32 %v929, 224
        %v958 = vadd.s32 %v929, 232
        %v959 = vadd.s32 %v929, 240
        %v960 = vadd.s32 %v929, 248
        %v961 = vadd.s32 %v929, 256
        %v962 = vadd.s32 %v929, 264
        %v963 = vadd.s32 %v929, 272
        %v964 = vadd.s32 %v929, 280
        %vm965 = vcmp.lt.s32.totalorder %v929, 16
        %vm966 = vcmp.lt.s32.totalorder %v930, 16
        %vm967 = vcmp.lt.s32.totalorder %v931, 16
        %vm968 = vcmp.lt.s32.totalorder %v932, 16
        %vm969 = vcmp.lt.s32.totalorder %v933, 16
        %vm970 = vcmp.lt.s32.totalorder %v934, 16
        %vm971 = vcmp.lt.s32.totalorder %v935, 16
        %vm972 = vcmp.lt.s32.totalorder %v936, 16
        %vm973 = vcmp.lt.s32.totalorder %v937, 16
        %vm974 = vcmp.lt.s32.totalorder %v938, 16
        %vm975 = vcmp.lt.s32.totalorder %v939, 16
        %vm976 = vcmp.lt.s32.totalorder %v940, 16
        %vm977 = vcmp.lt.s32.totalorder %v941, 16
        %vm978 = vcmp.lt.s32.totalorder %v942, 16
        %vm979 = vcmp.lt.s32.totalorder %v943, 16
        %vm980 = vcmp.lt.s32.totalorder %v944, 16
        %vm981 = vcmp.lt.s32.totalorder %v945, 16
        %vm982 = vcmp.lt.s32.totalorder %v946, 16
        %vm983 = vcmp.lt.s32.totalorder %v947, 16
        %vm984 = vcmp.lt.s32.totalorder %v948, 16
        %vm985 = vcmp.lt.s32.totalorder %v949, 16
        %vm986 = vcmp.lt.s32.totalorder %v950, 16
        %vm987 = vcmp.lt.s32.totalorder %v951, 16
        %vm988 = vcmp.lt.s32.totalorder %v952, 16
        %vm989 = vcmp.lt.s32.totalorder %v953, 16
        %vm990 = vcmp.lt.s32.totalorder %v954, 16
        %vm991 = vcmp.lt.s32.totalorder %v955, 16
        %vm992 = vcmp.lt.s32.totalorder %v956, 16
        %vm993 = vcmp.lt.s32.totalorder %v957, 16
        %vm994 = vcmp.lt.s32.totalorder %v958, 16
        %vm995 = vcmp.lt.s32.totalorder %v959, 16
        %vm996 = vcmp.lt.s32.totalorder %v960, 16
        %vm997 = vcmp.lt.s32.totalorder %v961, 16
        %vm998 = vcmp.lt.s32.totalorder %v962, 16
        %vm999 = vcmp.lt.s32.totalorder %v963, 16
        %vm1000 = vcmp.lt.s32.totalorder %v964, 16
        %p1001 = scmp.eq.s32.totalorder %s29, 0
        %s1002 = scalar_select %p1001, 1, 0
        %v1003 = vstv %s1002
        %vm1004 = vcmp.eq.s32.totalorder %v1003, 1
        %vm1005 = vmand %vm965, %vm1004
        %vm1006 = vmand %vm966, %vm1004
        %vm1007 = vmand %vm967, %vm1004
        %vm1008 = vmand %vm968, %vm1004
        %vm1009 = vmand %vm969, %vm1004
        %vm1010 = vmand %vm970, %vm1004
        %vm1011 = vmand %vm971, %vm1004
        %vm1012 = vmand %vm972, %vm1004
        %vm1013 = vmand %vm973, %vm1004
        %vm1014 = vmand %vm974, %vm1004
        %vm1015 = vmand %vm975, %vm1004
        %vm1016 = vmand %vm976, %vm1004
        %vm1017 = vmand %vm977, %vm1004
        %vm1018 = vmand %vm978, %vm1004
        %vm1019 = vmand %vm979, %vm1004
        %vm1020 = vmand %vm980, %vm1004
        %vm1021 = vmand %vm981, %vm1004
        %vm1022 = vmand %vm982, %vm1004
        %vm1023 = vmand %vm983, %vm1004
        %vm1024 = vmand %vm984, %vm1004
        %vm1025 = vmand %vm985, %vm1004
        %vm1026 = vmand %vm986, %vm1004
        %vm1027 = vmand %vm987, %vm1004
        %vm1028 = vmand %vm988, %vm1004
        %vm1029 = vmand %vm989, %vm1004
        %vm1030 = vmand %vm990, %vm1004
        %vm1031 = vmand %vm991, %vm1004
        %vm1032 = vmand %vm992, %vm1004
        %vm1033 = vmand %vm993, %vm1004
        %vm1034 = vmand %vm994, %vm1004
        %vm1035 = vmand %vm995, %vm1004
        %vm1036 = vmand %vm996, %vm1004
        %vm1037 = vmand %vm997, %vm1004
        %vm1038 = vmand %vm998, %vm1004
        %vm1039 = vmand %vm999, %vm1004
        %vm1040 = vmand %vm1000, %vm1004
        %vm1041 = vcmp.ge.s32.totalorder %v929, 272
        %vm1042 = vcmp.ge.s32.totalorder %v930, 272
        %vm1043 = vcmp.ge.s32.totalorder %v931, 272
        %vm1044 = vcmp.ge.s32.totalorder %v932, 272
        %vm1045 = vcmp.ge.s32.totalorder %v933, 272
        %vm1046 = vcmp.ge.s32.totalorder %v934, 272
        %vm1047 = vcmp.ge.s32.totalorder %v935, 272
        %vm1048 = vcmp.ge.s32.totalorder %v936, 272
        %vm1049 = vcmp.ge.s32.totalorder %v937, 272
        %vm1050 = vcmp.ge.s32.totalorder %v938, 272
        %vm1051 = vcmp.ge.s32.totalorder %v939, 272
        %vm1052 = vcmp.ge.s32.totalorder %v940, 272
        %vm1053 = vcmp.ge.s32.totalorder %v941, 272
        %vm1054 = vcmp.ge.s32.totalorder %v942, 272
        %vm1055 = vcmp.ge.s32.totalorder %v943, 272
        %vm1056 = vcmp.ge.s32.totalorder %v944, 272
        %vm1057 = vcmp.ge.s32.totalorder %v945, 272
        %vm1058 = vcmp.ge.s32.totalorder %v946, 272
        %vm1059 = vcmp.ge.s32.totalorder %v947, 272
        %vm1060 = vcmp.ge.s32.totalorder %v948, 272
        %vm1061 = vcmp.ge.s32.totalorder %v949, 272
        %vm1062 = vcmp.ge.s32.totalorder %v950, 272
        %vm1063 = vcmp.ge.s32.totalorder %v951, 272
        %vm1064 = vcmp.ge.s32.totalorder %v952, 272
        %vm1065 = vcmp.ge.s32.totalorder %v953, 272
        %vm1066 = vcmp.ge.s32.totalorder %v954, 272
        %vm1067 = vcmp.ge.s32.totalorder %v955, 272
        %vm1068 = vcmp.ge.s32.totalorder %v956, 272
        %vm1069 = vcmp.ge.s32.totalorder %v957, 272
        %vm1070 = vcmp.ge.s32.totalorder %v958, 272
        %vm1071 = vcmp.ge.s32.totalorder %v959, 272
        %vm1072 = vcmp.ge.s32.totalorder %v960, 272
        %vm1073 = vcmp.ge.s32.totalorder %v961, 272
        %vm1074 = vcmp.ge.s32.totalorder %v962, 272
        %vm1075 = vcmp.ge.s32.totalorder %v963, 272
        %vm1076 = vcmp.ge.s32.totalorder %v964, 272
        %vm1077 = vmand %vm1041, %vm1004
        %vm1078 = vmand %vm1042, %vm1004
        %vm1079 = vmand %vm1043, %vm1004
        %vm1080 = vmand %vm1044, %vm1004
        %vm1081 = vmand %vm1045, %vm1004
        %vm1082 = vmand %vm1046, %vm1004
        %vm1083 = vmand %vm1047, %vm1004
        %vm1084 = vmand %vm1048, %vm1004
        %vm1085 = vmand %vm1049, %vm1004
        %vm1086 = vmand %vm1050, %vm1004
        %vm1087 = vmand %vm1051, %vm1004
        %vm1088 = vmand %vm1052, %vm1004
        %vm1089 = vmand %vm1053, %vm1004
        %vm1090 = vmand %vm1054, %vm1004
        %vm1091 = vmand %vm1055, %vm1004
        %vm1092 = vmand %vm1056, %vm1004
        %vm1093 = vmand %vm1057, %vm1004
        %vm1094 = vmand %vm1058, %vm1004
        %vm1095 = vmand %vm1059, %vm1004
        %vm1096 = vmand %vm1060, %vm1004
        %vm1097 = vmand %vm1061, %vm1004
        %vm1098 = vmand %vm1062, %vm1004
        %vm1099 = vmand %vm1063, %vm1004
        %vm1100 = vmand %vm1064, %vm1004
        %vm1101 = vmand %vm1065, %vm1004
        %vm1102 = vmand %vm1066, %vm1004
        %vm1103 = vmand %vm1067, %vm1004
        %vm1104 = vmand %vm1068, %vm1004
        %vm1105 = vmand %vm1069, %vm1004
        %vm1106 = vmand %vm1070, %vm1004
        %vm1107 = vmand %vm1071, %vm1004
        %vm1108 = vmand %vm1072, %vm1004
        %vm1109 = vmand %vm1073, %vm1004
        %vm1110 = vmand %vm1074, %vm1004
        %vm1111 = vmand %vm1075, %vm1004
        %vm1112 = vmand %vm1076, %vm1004
        %vm1113 = vmor %vm1005, %vm1077
        %vm1114 = vmor %vm1006, %vm1078
        %vm1115 = vmor %vm1007, %vm1079
        %vm1116 = vmor %vm1008, %vm1080
        %vm1117 = vmor %vm1009, %vm1081
        %vm1118 = vmor %vm1010, %vm1082
        %vm1119 = vmor %vm1011, %vm1083
        %vm1120 = vmor %vm1012, %vm1084
        %vm1121 = vmor %vm1013, %vm1085
        %vm1122 = vmor %vm1014, %vm1086
        %vm1123 = vmor %vm1015, %vm1087
        %vm1124 = vmor %vm1016, %vm1088
        %vm1125 = vmor %vm1017, %vm1089
        %vm1126 = vmor %vm1018, %vm1090
        %vm1127 = vmor %vm1019, %vm1091
        %vm1128 = vmor %vm1020, %vm1092
        %vm1129 = vmor %vm1021, %vm1093
        %vm1130 = vmor %vm1022, %vm1094
        %vm1131 = vmor %vm1023, %vm1095
        %vm1132 = vmor %vm1024, %vm1096
        %vm1133 = vmor %vm1025, %vm1097
        %vm1134 = vmor %vm1026, %vm1098
        %vm1135 = vmor %vm1027, %vm1099
        %vm1136 = vmor %vm1028, %vm1100
        %vm1137 = vmor %vm1029, %vm1101
        %vm1138 = vmor %vm1030, %vm1102
        %vm1139 = vmor %vm1031, %vm1103
        %vm1140 = vmor %vm1032, %vm1104
        %vm1141 = vmor %vm1033, %vm1105
        %vm1142 = vmor %vm1034, %vm1106
        %vm1143 = vmor %vm1035, %vm1107
        %vm1144 = vmor %vm1036, %vm1108
        %vm1145 = vmor %vm1037, %vm1109
        %vm1146 = vmor %vm1038, %vm1110
        %vm1147 = vmor %vm1039, %vm1111
        %vm1148 = vmor %vm1040, %vm1112
        %v1149 = vsel %vm1113, 1, 0
        %v1150 = vsel %vm1114, 1, 0
        %v1151 = vsel %vm1115, 1, 0
        %v1152 = vsel %vm1116, 1, 0
        %v1153 = vsel %vm1117, 1, 0
        %v1154 = vsel %vm1118, 1, 0
        %v1155 = vsel %vm1119, 1, 0
        %v1156 = vsel %vm1120, 1, 0
        %v1157 = vsel %vm1121, 1, 0
        %v1158 = vsel %vm1122, 1, 0
        %v1159 = vsel %vm1123, 1, 0
        %v1160 = vsel %vm1124, 1, 0
        %v1161 = vsel %vm1125, 1, 0
        %v1162 = vsel %vm1126, 1, 0
        %v1163 = vsel %vm1127, 1, 0
        %v1164 = vsel %vm1128, 1, 0
        %v1165 = vsel %vm1129, 1, 0
        %v1166 = vsel %vm1130, 1, 0
        %v1167 = vsel %vm1131, 1, 0
        %v1168 = vsel %vm1132, 1, 0
        %v1169 = vsel %vm1133, 1, 0
        %v1170 = vsel %vm1134, 1, 0
        %v1171 = vsel %vm1135, 1, 0
        %v1172 = vsel %vm1136, 1, 0
        %v1173 = vsel %vm1137, 1, 0
        %v1174 = vsel %vm1138, 1, 0
        %v1175 = vsel %vm1139, 1, 0
        %v1176 = vsel %vm1140, 1, 0
        %v1177 = vsel %vm1141, 1, 0
        %v1178 = vsel %vm1142, 1, 0
        %v1179 = vsel %vm1143, 1, 0
        %v1180 = vsel %vm1144, 1, 0
        %v1181 = vsel %vm1145, 1, 0
        %v1182 = vsel %vm1146, 1, 0
        %v1183 = vsel %vm1147, 1, 0
        %v1184 = vsel %vm1148, 1, 0
        %vm1185 = vcmp.eq.s32.totalorder %v1149, 1
        %vm1186 = vcmp.eq.s32.totalorder %v1150, 1
        %vm1187 = vcmp.eq.s32.totalorder %v1151, 1
        %vm1188 = vcmp.eq.s32.totalorder %v1152, 1
        %vm1189 = vcmp.eq.s32.totalorder %v1153, 1
        %vm1190 = vcmp.eq.s32.totalorder %v1154, 1
        %vm1191 = vcmp.eq.s32.totalorder %v1155, 1
        %vm1192 = vcmp.eq.s32.totalorder %v1156, 1
        %vm1193 = vcmp.eq.s32.totalorder %v1157, 1
        %vm1194 = vcmp.eq.s32.totalorder %v1158, 1
        %vm1195 = vcmp.eq.s32.totalorder %v1159, 1
        %vm1196 = vcmp.eq.s32.totalorder %v1160, 1
        %vm1197 = vcmp.eq.s32.totalorder %v1161, 1
        %vm1198 = vcmp.eq.s32.totalorder %v1162, 1
        %vm1199 = vcmp.eq.s32.totalorder %v1163, 1
        %vm1200 = vcmp.eq.s32.totalorder %v1164, 1
        %vm1201 = vcmp.eq.s32.totalorder %v1165, 1
        %vm1202 = vcmp.eq.s32.totalorder %v1166, 1
        %vm1203 = vcmp.eq.s32.totalorder %v1167, 1
        %vm1204 = vcmp.eq.s32.totalorder %v1168, 1
        %vm1205 = vcmp.eq.s32.totalorder %v1169, 1
        %vm1206 = vcmp.eq.s32.totalorder %v1170, 1
        %vm1207 = vcmp.eq.s32.totalorder %v1171, 1
        %vm1208 = vcmp.eq.s32.totalorder %v1172, 1
        %vm1209 = vcmp.eq.s32.totalorder %v1173, 1
        %vm1210 = vcmp.eq.s32.totalorder %v1174, 1
        %vm1211 = vcmp.eq.s32.totalorder %v1175, 1
        %vm1212 = vcmp.eq.s32.totalorder %v1176, 1
        %vm1213 = vcmp.eq.s32.totalorder %v1177, 1
        %vm1214 = vcmp.eq.s32.totalorder %v1178, 1
        %vm1215 = vcmp.eq.s32.totalorder %v1179, 1
        %vm1216 = vcmp.eq.s32.totalorder %v1180, 1
        %vm1217 = vcmp.eq.s32.totalorder %v1181, 1
        %vm1218 = vcmp.eq.s32.totalorder %v1182, 1
        %vm1219 = vcmp.eq.s32.totalorder %v1183, 1
        %vm1220 = vcmp.eq.s32.totalorder %v1184, 1
        %vm1221 = vmpackc.low %vm1185, %vm1185
        %vm1222 = vmpackc.low %vm1186, %vm1186
        %vm1223 = vmpackc.low %vm1187, %vm1187
        %vm1224 = vmpackc.low %vm1188, %vm1188
        %vm1225 = vmpackc.low %vm1189, %vm1189
        %vm1226 = vmpackc.low %vm1190, %vm1190
        %vm1227 = vmpackc.low %vm1191, %vm1191
        %vm1228 = vmpackc.low %vm1192, %vm1192
        %vm1229 = vmpackc.low %vm1193, %vm1193
        %vm1230 = vmpackc.low %vm1194, %vm1194
        %vm1231 = vmpackc.low %vm1195, %vm1195
        %vm1232 = vmpackc.low %vm1196, %vm1196
        %vm1233 = vmpackc.low %vm1197, %vm1197
        %vm1234 = vmpackc.low %vm1198, %vm1198
        %vm1235 = vmpackc.low %vm1199, %vm1199
        %vm1236 = vmpackc.low %vm1200, %vm1200
        %vm1237 = vmpackc.low %vm1201, %vm1201
        %vm1238 = vmpackc.low %vm1202, %vm1202
        %vm1239 = vmpackc.low %vm1203, %vm1203
        %vm1240 = vmpackc.low %vm1204, %vm1204
        %vm1241 = vmpackc.low %vm1205, %vm1205
        %vm1242 = vmpackc.low %vm1206, %vm1206
        %vm1243 = vmpackc.low %vm1207, %vm1207
        %vm1244 = vmpackc.low %vm1208, %vm1208
        %vm1245 = vmpackc.low %vm1209, %vm1209
        %vm1246 = vmpackc.low %vm1210, %vm1210
        %vm1247 = vmpackc.low %vm1211, %vm1211
        %vm1248 = vmpackc.low %vm1212, %vm1212
        %vm1249 = vmpackc.low %vm1213, %vm1213
        %vm1250 = vmpackc.low %vm1214, %vm1214
        %vm1251 = vmpackc.low %vm1215, %vm1215
        %vm1252 = vmpackc.low %vm1216, %vm1216
        %vm1253 = vmpackc.low %vm1217, %vm1217
        %vm1254 = vmpackc.low %vm1218, %vm1218
        %vm1255 = vmpackc.low %vm1219, %vm1219
        %vm1256 = vmpackc.low %vm1220, %vm1220
        %v1257 = vsel %vm1221, 65537, 0
        %v1258 = vsel %vm1222, 65537, 0
        %v1259 = vsel %vm1223, 65537, 0
        %v1260 = vsel %vm1224, 65537, 0
        %v1261 = vsel %vm1225, 65537, 0
        %v1262 = vsel %vm1226, 65537, 0
        %v1263 = vsel %vm1227, 65537, 0
        %v1264 = vsel %vm1228, 65537, 0
        %v1265 = vsel %vm1229, 65537, 0
        %v1266 = vsel %vm1230, 65537, 0
        %v1267 = vsel %vm1231, 65537, 0
        %v1268 = vsel %vm1232, 65537, 0
        %v1269 = vsel %vm1233, 65537, 0
        %v1270 = vsel %vm1234, 65537, 0
        %v1271 = vsel %vm1235, 65537, 0
        %v1272 = vsel %vm1236, 65537, 0
        %v1273 = vsel %vm1237, 65537, 0
        %v1274 = vsel %vm1238, 65537, 0
        %v1275 = vsel %vm1239, 65537, 0
        %v1276 = vsel %vm1240, 65537, 0
        %v1277 = vsel %vm1241, 65537, 0
        %v1278 = vsel %vm1242, 65537, 0
        %v1279 = vsel %vm1243, 65537, 0
        %v1280 = vsel %vm1244, 65537, 0
        %v1281 = vsel %vm1245, 65537, 0
        %v1282 = vsel %vm1246, 65537, 0
        %v1283 = vsel %vm1247, 65537, 0
        %v1284 = vsel %vm1248, 65537, 0
        %v1285 = vsel %vm1249, 65537, 0
        %v1286 = vsel %vm1250, 65537, 0
        %v1287 = vsel %vm1251, 65537, 0
        %v1288 = vsel %vm1252, 65537, 0
        %v1289 = vsel %vm1253, 65537, 0
        %v1290 = vsel %vm1254, 65537, 0
        %v1291 = vsel %vm1255, 65537, 0
        %v1292 = vsel %vm1256, 65537, 0
        %v1293 = vunpack.c.l.b16 %v1257
        %v1294 = vunpack.c.l.b16 %v1258
        %v1295 = vunpack.c.l.b16 %v1259
        %v1296 = vunpack.c.l.b16 %v1260
        %v1297 = vunpack.c.l.b16 %v1261
        %v1298 = vunpack.c.l.b16 %v1262
        %v1299 = vunpack.c.l.b16 %v1263
        %v1300 = vunpack.c.l.b16 %v1264
        %v1301 = vunpack.c.l.b16 %v1265
        %v1302 = vunpack.c.l.b16 %v1266
        %v1303 = vunpack.c.l.b16 %v1267
        %v1304 = vunpack.c.l.b16 %v1268
        %v1305 = vunpack.c.l.b16 %v1269
        %v1306 = vunpack.c.l.b16 %v1270
        %v1307 = vunpack.c.l.b16 %v1271
        %v1308 = vunpack.c.l.b16 %v1272
        %v1309 = vunpack.c.l.b16 %v1273
        %v1310 = vunpack.c.l.b16 %v1274
        %v1311 = vunpack.c.l.b16 %v1275
        %v1312 = vunpack.c.l.b16 %v1276
        %v1313 = vunpack.c.l.b16 %v1277
        %v1314 = vunpack.c.l.b16 %v1278
        %v1315 = vunpack.c.l.b16 %v1279
        %v1316 = vunpack.c.l.b16 %v1280
        %v1317 = vunpack.c.l.b16 %v1281
        %v1318 = vunpack.c.l.b16 %v1282
        %v1319 = vunpack.c.l.b16 %v1283
        %v1320 = vunpack.c.l.b16 %v1284
        %v1321 = vunpack.c.l.b16 %v1285
        %v1322 = vunpack.c.l.b16 %v1286
        %v1323 = vunpack.c.l.b16 %v1287
        %v1324 = vunpack.c.l.b16 %v1288
        %v1325 = vunpack.c.l.b16 %v1289
        %v1326 = vunpack.c.l.b16 %v1290
        %v1327 = vunpack.c.l.b16 %v1291
        %v1328 = vunpack.c.l.b16 %v1292
        %v1329 = vpack.c.b16 %v1294, %v1293
        %v1330 = vpack.c.b16 %v1296, %v1295
        %v1331 = vpack.c.b16 %v1298, %v1297
        %v1332 = vpack.c.b16 %v1300, %v1299
        %v1333 = vpack.c.b16 %v1302, %v1301
        %v1334 = vpack.c.b16 %v1304, %v1303
        %v1335 = vpack.c.b16 %v1306, %v1305
        %v1336 = vpack.c.b16 %v1308, %v1307
        %v1337 = vpack.c.b16 %v1310, %v1309
        %v1338 = vpack.c.b16 %v1312, %v1311
        %v1339 = vpack.c.b16 %v1314, %v1313
        %v1340 = vpack.c.b16 %v1316, %v1315
        %v1341 = vpack.c.b16 %v1318, %v1317
        %v1342 = vpack.c.b16 %v1320, %v1319
        %v1343 = vpack.c.b16 %v1322, %v1321
        %v1344 = vpack.c.b16 %v1324, %v1323
        %v1345 = vpack.c.b16 %v1326, %v1325
        %v1346 = vpack.c.b16 %v1328, %v1327
        %vm1347 = vcmp.ne.s16.totalorder %v1329, 0
        %vm1348 = vcmp.ne.s16.totalorder %v1330, 0
        %vm1349 = vcmp.ne.s16.totalorder %v1331, 0
        %vm1350 = vcmp.ne.s16.totalorder %v1332, 0
        %vm1351 = vcmp.ne.s16.totalorder %v1333, 0
        %vm1352 = vcmp.ne.s16.totalorder %v1334, 0
        %vm1353 = vcmp.ne.s16.totalorder %v1335, 0
        %vm1354 = vcmp.ne.s16.totalorder %v1336, 0
        %vm1355 = vcmp.ne.s16.totalorder %v1337, 0
        %vm1356 = vcmp.ne.s16.totalorder %v1338, 0
        %vm1357 = vcmp.ne.s16.totalorder %v1339, 0
        %vm1358 = vcmp.ne.s16.totalorder %v1340, 0
        %vm1359 = vcmp.ne.s16.totalorder %v1341, 0
        %vm1360 = vcmp.ne.s16.totalorder %v1342, 0
        %vm1361 = vcmp.ne.s16.totalorder %v1343, 0
        %vm1362 = vcmp.ne.s16.totalorder %v1344, 0
        %vm1363 = vcmp.ne.s16.totalorder %v1345, 0
        %vm1364 = vcmp.ne.s16.totalorder %v1346, 0
        %v1365 = vsel %vm1347, 0, %v910
        %v1366 = vsel %vm1348, 0, %v911
        %v1367 = vsel %vm1349, 0, %v912
        %v1368 = vsel %vm1350, 0, %v913
        %v1369 = vsel %vm1351, 0, %v914
        %v1370 = vsel %vm1352, 0, %v915
        %v1371 = vsel %vm1353, 0, %v916
        %v1372 = vsel %vm1354, 0, %v917
        %v1373 = vsel %vm1355, 0, %v918
        %v1374 = vsel %vm1356, 0, %v919
        %v1375 = vsel %vm1357, 0, %v920
        %v1376 = vsel %vm1358, 0, %v921
        %v1377 = vsel %vm1359, 0, %v922
        %v1378 = vsel %vm1360, 0, %v923
        %v1379 = vsel %vm1361, 0, %v924
        %v1380 = vsel %vm1362, 0, %v925
        %v1381 = vsel %vm1363, 0, %v926
        %v1382 = vsel %vm1364, 0, %v927
        %vm1383 = vcmp.lt.s32.totalorder %v929, 0
        %v1384 = vsub.s32 0, %v929
        %v1385 = vsel %vm1383, %v1384, %v929
        %v1386 = vshrl.u32 %v1385, 4
        %v1387 = vand.u32 %v1385, 15
        %v1388 = vsub.s32 0, %v1387
        %v1389 = vsel %vm1383, %v1388, %v1387
        %vm1390 = vcmp.lt.s32.totalorder %v930, 0
        %v1391 = vsub.s32 0, %v930
        %v1392 = vsel %vm1390, %v1391, %v930
        %v1393 = vshrl.u32 %v1392, 4
        %v1394 = vand.u32 %v1392, 15
        %v1395 = vsub.s32 0, %v1394
        %v1396 = vsel %vm1390, %v1395, %v1394
        %vm1397 = vcmp.lt.s32.totalorder %v931, 0
        %v1398 = vsub.s32 0, %v931
        %v1399 = vsel %vm1397, %v1398, %v931
        %v1400 = vshrl.u32 %v1399, 4
        %v1401 = vand.u32 %v1399, 15
        %v1402 = vsub.s32 0, %v1401
        %v1403 = vsel %vm1397, %v1402, %v1401
        %vm1404 = vcmp.lt.s32.totalorder %v932, 0
        %v1405 = vsub.s32 0, %v932
        %v1406 = vsel %vm1404, %v1405, %v932
        %v1407 = vshrl.u32 %v1406, 4
        %v1408 = vand.u32 %v1406, 15
        %v1409 = vsub.s32 0, %v1408
        %v1410 = vsel %vm1404, %v1409, %v1408
        %vm1411 = vcmp.lt.s32.totalorder %v933, 0
        %v1412 = vsub.s32 0, %v933
        %v1413 = vsel %vm1411, %v1412, %v933
        %v1414 = vshrl.u32 %v1413, 4
        %v1415 = vand.u32 %v1413, 15
        %v1416 = vsub.s32 0, %v1415
        %v1417 = vsel %vm1411, %v1416, %v1415
        %vm1418 = vcmp.lt.s32.totalorder %v934, 0
        %v1419 = vsub.s32 0, %v934
        %v1420 = vsel %vm1418, %v1419, %v934
        %v1421 = vshrl.u32 %v1420, 4
        %v1422 = vand.u32 %v1420, 15
        %v1423 = vsub.s32 0, %v1422
        %v1424 = vsel %vm1418, %v1423, %v1422
        %vm1425 = vcmp.lt.s32.totalorder %v935, 0
        %v1426 = vsub.s32 0, %v935
        %v1427 = vsel %vm1425, %v1426, %v935
        %v1428 = vshrl.u32 %v1427, 4
        %v1429 = vand.u32 %v1427, 15
        %v1430 = vsub.s32 0, %v1429
        %v1431 = vsel %vm1425, %v1430, %v1429
        %vm1432 = vcmp.lt.s32.totalorder %v936, 0
        %v1433 = vsub.s32 0, %v936
        %v1434 = vsel %vm1432, %v1433, %v936
        %v1435 = vshrl.u32 %v1434, 4
        %v1436 = vand.u32 %v1434, 15
        %v1437 = vsub.s32 0, %v1436
        %v1438 = vsel %vm1432, %v1437, %v1436
        %vm1439 = vcmp.lt.s32.totalorder %v937, 0
        %v1440 = vsub.s32 0, %v937
        %v1441 = vsel %vm1439, %v1440, %v937
        %v1442 = vshrl.u32 %v1441, 4
        %v1443 = vand.u32 %v1441, 15
        %v1444 = vsub.s32 0, %v1443
        %v1445 = vsel %vm1439, %v1444, %v1443
        %vm1446 = vcmp.lt.s32.totalorder %v938, 0
        %v1447 = vsub.s32 0, %v938
        %v1448 = vsel %vm1446, %v1447, %v938
        %v1449 = vshrl.u32 %v1448, 4
        %v1450 = vand.u32 %v1448, 15
        %v1451 = vsub.s32 0, %v1450
        %v1452 = vsel %vm1446, %v1451, %v1450
        %vm1453 = vcmp.lt.s32.totalorder %v939, 0
        %v1454 = vsub.s32 0, %v939
        %v1455 = vsel %vm1453, %v1454, %v939
        %v1456 = vshrl.u32 %v1455, 4
        %v1457 = vand.u32 %v1455, 15
        %v1458 = vsub.s32 0, %v1457
        %v1459 = vsel %vm1453, %v1458, %v1457
        %vm1460 = vcmp.lt.s32.totalorder %v940, 0
        %v1461 = vsub.s32 0, %v940
        %v1462 = vsel %vm1460, %v1461, %v940
        %v1463 = vshrl.u32 %v1462, 4
        %v1464 = vand.u32 %v1462, 15
        %v1465 = vsub.s32 0, %v1464
        %v1466 = vsel %vm1460, %v1465, %v1464
        %vm1467 = vcmp.lt.s32.totalorder %v941, 0
        %v1468 = vsub.s32 0, %v941
        %v1469 = vsel %vm1467, %v1468, %v941
        %v1470 = vshrl.u32 %v1469, 4
        %v1471 = vand.u32 %v1469, 15
        %v1472 = vsub.s32 0, %v1471
        %v1473 = vsel %vm1467, %v1472, %v1471
        %vm1474 = vcmp.lt.s32.totalorder %v942, 0
        %v1475 = vsub.s32 0, %v942
        %v1476 = vsel %vm1474, %v1475, %v942
        %v1477 = vshrl.u32 %v1476, 4
        %v1478 = vand.u32 %v1476, 15
        %v1479 = vsub.s32 0, %v1478
        %v1480 = vsel %vm1474, %v1479, %v1478
        %vm1481 = vcmp.lt.s32.totalorder %v943, 0
        %v1482 = vsub.s32 0, %v943
        %v1483 = vsel %vm1481, %v1482, %v943
        %v1484 = vshrl.u32 %v1483, 4
        %v1485 = vand.u32 %v1483, 15
        %v1486 = vsub.s32 0, %v1485
        %v1487 = vsel %vm1481, %v1486, %v1485
        %vm1488 = vcmp.lt.s32.totalorder %v944, 0
        %v1489 = vsub.s32 0, %v944
        %v1490 = vsel %vm1488, %v1489, %v944
        %v1491 = vshrl.u32 %v1490, 4
        %v1492 = vand.u32 %v1490, 15
        %v1493 = vsub.s32 0, %v1492
        %v1494 = vsel %vm1488, %v1493, %v1492
        %vm1495 = vcmp.lt.s32.totalorder %v945, 0
        %v1496 = vsub.s32 0, %v945
        %v1497 = vsel %vm1495, %v1496, %v945
        %v1498 = vshrl.u32 %v1497, 4
        %v1499 = vand.u32 %v1497, 15
        %v1500 = vsub.s32 0, %v1499
        %v1501 = vsel %vm1495, %v1500, %v1499
        %vm1502 = vcmp.lt.s32.totalorder %v946, 0
        %v1503 = vsub.s32 0, %v946
        %v1504 = vsel %vm1502, %v1503, %v946
        %v1505 = vshrl.u32 %v1504, 4
        %v1506 = vand.u32 %v1504, 15
        %v1507 = vsub.s32 0, %v1506
        %v1508 = vsel %vm1502, %v1507, %v1506
        %vm1509 = vcmp.lt.s32.totalorder %v947, 0
        %v1510 = vsub.s32 0, %v947
        %v1511 = vsel %vm1509, %v1510, %v947
        %v1512 = vshrl.u32 %v1511, 4
        %v1513 = vand.u32 %v1511, 15
        %v1514 = vsub.s32 0, %v1513
        %v1515 = vsel %vm1509, %v1514, %v1513
        %vm1516 = vcmp.lt.s32.totalorder %v948, 0
        %v1517 = vsub.s32 0, %v948
        %v1518 = vsel %vm1516, %v1517, %v948
        %v1519 = vshrl.u32 %v1518, 4
        %v1520 = vand.u32 %v1518, 15
        %v1521 = vsub.s32 0, %v1520
        %v1522 = vsel %vm1516, %v1521, %v1520
        %vm1523 = vcmp.lt.s32.totalorder %v949, 0
        %v1524 = vsub.s32 0, %v949
        %v1525 = vsel %vm1523, %v1524, %v949
        %v1526 = vshrl.u32 %v1525, 4
        %v1527 = vand.u32 %v1525, 15
        %v1528 = vsub.s32 0, %v1527
        %v1529 = vsel %vm1523, %v1528, %v1527
        %vm1530 = vcmp.lt.s32.totalorder %v950, 0
        %v1531 = vsub.s32 0, %v950
        %v1532 = vsel %vm1530, %v1531, %v950
        %v1533 = vshrl.u32 %v1532, 4
        %v1534 = vand.u32 %v1532, 15
        %v1535 = vsub.s32 0, %v1534
        %v1536 = vsel %vm1530, %v1535, %v1534
        %vm1537 = vcmp.lt.s32.totalorder %v951, 0
        %v1538 = vsub.s32 0, %v951
        %v1539 = vsel %vm1537, %v1538, %v951
        %v1540 = vshrl.u32 %v1539, 4
        %v1541 = vand.u32 %v1539, 15
        %v1542 = vsub.s32 0, %v1541
        %v1543 = vsel %vm1537, %v1542, %v1541
        %vm1544 = vcmp.lt.s32.totalorder %v952, 0
        %v1545 = vsub.s32 0, %v952
        %v1546 = vsel %vm1544, %v1545, %v952
        %v1547 = vshrl.u32 %v1546, 4
        %v1548 = vand.u32 %v1546, 15
        %v1549 = vsub.s32 0, %v1548
        %v1550 = vsel %vm1544, %v1549, %v1548
        %vm1551 = vcmp.lt.s32.totalorder %v953, 0
        %v1552 = vsub.s32 0, %v953
        %v1553 = vsel %vm1551, %v1552, %v953
        %v1554 = vshrl.u32 %v1553, 4
        %v1555 = vand.u32 %v1553, 15
        %v1556 = vsub.s32 0, %v1555
        %v1557 = vsel %vm1551, %v1556, %v1555
        %vm1558 = vcmp.lt.s32.totalorder %v954, 0
        %v1559 = vsub.s32 0, %v954
        %v1560 = vsel %vm1558, %v1559, %v954
        %v1561 = vshrl.u32 %v1560, 4
        %v1562 = vand.u32 %v1560, 15
        %v1563 = vsub.s32 0, %v1562
        %v1564 = vsel %vm1558, %v1563, %v1562
        %vm1565 = vcmp.lt.s32.totalorder %v955, 0
        %v1566 = vsub.s32 0, %v955
        %v1567 = vsel %vm1565, %v1566, %v955
        %v1568 = vshrl.u32 %v1567, 4
        %v1569 = vand.u32 %v1567, 15
        %v1570 = vsub.s32 0, %v1569
        %v1571 = vsel %vm1565, %v1570, %v1569
        %vm1572 = vcmp.lt.s32.totalorder %v956, 0
        %v1573 = vsub.s32 0, %v956
        %v1574 = vsel %vm1572, %v1573, %v956
        %v1575 = vshrl.u32 %v1574, 4
        %v1576 = vand.u32 %v1574, 15
        %v1577 = vsub.s32 0, %v1576
        %v1578 = vsel %vm1572, %v1577, %v1576
        %vm1579 = vcmp.lt.s32.totalorder %v957, 0
        %v1580 = vsub.s32 0, %v957
        %v1581 = vsel %vm1579, %v1580, %v957
        %v1582 = vshrl.u32 %v1581, 4
        %v1583 = vand.u32 %v1581, 15
        %v1584 = vsub.s32 0, %v1583
        %v1585 = vsel %vm1579, %v1584, %v1583
        %vm1586 = vcmp.lt.s32.totalorder %v958, 0
        %v1587 = vsub.s32 0, %v958
        %v1588 = vsel %vm1586, %v1587, %v958
        %v1589 = vshrl.u32 %v1588, 4
        %v1590 = vand.u32 %v1588, 15
        %v1591 = vsub.s32 0, %v1590
        %v1592 = vsel %vm1586, %v1591, %v1590
        %vm1593 = vcmp.lt.s32.totalorder %v959, 0
        %v1594 = vsub.s32 0, %v959
        %v1595 = vsel %vm1593, %v1594, %v959
        %v1596 = vshrl.u32 %v1595, 4
        %v1597 = vand.u32 %v1595, 15
        %v1598 = vsub.s32 0, %v1597
        %v1599 = vsel %vm1593, %v1598, %v1597
        %vm1600 = vcmp.lt.s32.totalorder %v960, 0
        %v1601 = vsub.s32 0, %v960
        %v1602 = vsel %vm1600, %v1601, %v960
        %v1603 = vshrl.u32 %v1602, 4
        %v1604 = vand.u32 %v1602, 15
        %v1605 = vsub.s32 0, %v1604
        %v1606 = vsel %vm1600, %v1605, %v1604
        %vm1607 = vcmp.lt.s32.totalorder %v961, 0
        %v1608 = vsub.s32 0, %v961
        %v1609 = vsel %vm1607, %v1608, %v961
        %v1610 = vshrl.u32 %v1609, 4
        %v1611 = vand.u32 %v1609, 15
        %v1612 = vsub.s32 0, %v1611
        %v1613 = vsel %vm1607, %v1612, %v1611
        %vm1614 = vcmp.lt.s32.totalorder %v962, 0
        %v1615 = vsub.s32 0, %v962
        %v1616 = vsel %vm1614, %v1615, %v962
        %v1617 = vshrl.u32 %v1616, 4
        %v1618 = vand.u32 %v1616, 15
        %v1619 = vsub.s32 0, %v1618
        %v1620 = vsel %vm1614, %v1619, %v1618
        %vm1621 = vcmp.lt.s32.totalorder %v963, 0
        %v1622 = vsub.s32 0, %v963
        %v1623 = vsel %vm1621, %v1622, %v963
        %v1624 = vshrl.u32 %v1623, 4
        %v1625 = vand.u32 %v1623, 15
        %v1626 = vsub.s32 0, %v1625
        %v1627 = vsel %vm1621, %v1626, %v1625
        %vm1628 = vcmp.lt.s32.totalorder %v964, 0
        %v1629 = vsub.s32 0, %v964
        %v1630 = vsel %vm1628, %v1629, %v964
        %v1631 = vshrl.u32 %v1630, 4
        %v1632 = vand.u32 %v1630, 15
        %v1633 = vsub.s32 0, %v1632
        %v1634 = vsel %vm1628, %v1633, %v1632
        %vm1635 = vcmp.ne.s32.totalorder %v1389, 0
        %vm1636 = vcmp.ne.s32.totalorder %v1396, 0
        %vm1637 = vcmp.ne.s32.totalorder %v1403, 0
        %vm1638 = vcmp.ne.s32.totalorder %v1410, 0
        %vm1639 = vcmp.ne.s32.totalorder %v1417, 0
        %vm1640 = vcmp.ne.s32.totalorder %v1424, 0
        %vm1641 = vcmp.ne.s32.totalorder %v1431, 0
        %vm1642 = vcmp.ne.s32.totalorder %v1438, 0
        %vm1643 = vcmp.ne.s32.totalorder %v1445, 0
        %vm1644 = vcmp.ne.s32.totalorder %v1452, 0
        %vm1645 = vcmp.ne.s32.totalorder %v1459, 0
        %vm1646 = vcmp.ne.s32.totalorder %v1466, 0
        %vm1647 = vcmp.ne.s32.totalorder %v1473, 0
        %vm1648 = vcmp.ne.s32.totalorder %v1480, 0
        %vm1649 = vcmp.ne.s32.totalorder %v1487, 0
        %vm1650 = vcmp.ne.s32.totalorder %v1494, 0
        %vm1651 = vcmp.ne.s32.totalorder %v1501, 0
        %vm1652 = vcmp.ne.s32.totalorder %v1508, 0
        %vm1653 = vcmp.ne.s32.totalorder %v1515, 0
        %vm1654 = vcmp.ne.s32.totalorder %v1522, 0
        %vm1655 = vcmp.ne.s32.totalorder %v1529, 0
        %vm1656 = vcmp.ne.s32.totalorder %v1536, 0
        %vm1657 = vcmp.ne.s32.totalorder %v1543, 0
        %vm1658 = vcmp.ne.s32.totalorder %v1550, 0
        %vm1659 = vcmp.ne.s32.totalorder %v1557, 0
        %vm1660 = vcmp.ne.s32.totalorder %v1564, 0
        %vm1661 = vcmp.ne.s32.totalorder %v1571, 0
        %vm1662 = vcmp.ne.s32.totalorder %v1578, 0
        %vm1663 = vcmp.ne.s32.totalorder %v1585, 0
        %vm1664 = vcmp.ne.s32.totalorder %v1592, 0
        %vm1665 = vcmp.ne.s32.totalorder %v1599, 0
        %vm1666 = vcmp.ne.s32.totalorder %v1606, 0
        %vm1667 = vcmp.ne.s32.totalorder %v1613, 0
        %vm1668 = vcmp.ne.s32.totalorder %v1620, 0
        %vm1669 = vcmp.ne.s32.totalorder %v1627, 0
        %vm1670 = vcmp.ne.s32.totalorder %v1634, 0
        %vm1671 = vcmp.lt.s32.totalorder %v1389, 0
        %vm1672 = vcmp.lt.s32.totalorder %v1396, 0
        %vm1673 = vcmp.lt.s32.totalorder %v1403, 0
        %vm1674 = vcmp.lt.s32.totalorder %v1410, 0
        %vm1675 = vcmp.lt.s32.totalorder %v1417, 0
        %vm1676 = vcmp.lt.s32.totalorder %v1424, 0
        %vm1677 = vcmp.lt.s32.totalorder %v1431, 0
        %vm1678 = vcmp.lt.s32.totalorder %v1438, 0
        %vm1679 = vcmp.lt.s32.totalorder %v1445, 0
        %vm1680 = vcmp.lt.s32.totalorder %v1452, 0
        %vm1681 = vcmp.lt.s32.totalorder %v1459, 0
        %vm1682 = vcmp.lt.s32.totalorder %v1466, 0
        %vm1683 = vcmp.lt.s32.totalorder %v1473, 0
        %vm1684 = vcmp.lt.s32.totalorder %v1480, 0
        %vm1685 = vcmp.lt.s32.totalorder %v1487, 0
        %vm1686 = vcmp.lt.s32.totalorder %v1494, 0
        %vm1687 = vcmp.lt.s32.totalorder %v1501, 0
        %vm1688 = vcmp.lt.s32.totalorder %v1508, 0
        %vm1689 = vcmp.lt.s32.totalorder %v1515, 0
        %vm1690 = vcmp.lt.s32.totalorder %v1522, 0
        %vm1691 = vcmp.lt.s32.totalorder %v1529, 0
        %vm1692 = vcmp.lt.s32.totalorder %v1536, 0
        %vm1693 = vcmp.lt.s32.totalorder %v1543, 0
        %vm1694 = vcmp.lt.s32.totalorder %v1550, 0
        %vm1695 = vcmp.lt.s32.totalorder %v1557, 0
        %vm1696 = vcmp.lt.s32.totalorder %v1564, 0
        %vm1697 = vcmp.lt.s32.totalorder %v1571, 0
        %vm1698 = vcmp.lt.s32.totalorder %v1578, 0
        %vm1699 = vcmp.lt.s32.totalorder %v1585, 0
        %vm1700 = vcmp.lt.s32.totalorder %v1592, 0
        %vm1701 = vcmp.lt.s32.totalorder %v1599, 0
        %vm1702 = vcmp.lt.s32.totalorder %v1606, 0
        %vm1703 = vcmp.lt.s32.totalorder %v1613, 0
        %vm1704 = vcmp.lt.s32.totalorder %v1620, 0
        %vm1705 = vcmp.lt.s32.totalorder %v1627, 0
        %vm1706 = vcmp.lt.s32.totalorder %v1634, 0
        %vm1707 = vmand %vm1671, %vm1635
        %vm1708 = vmand %vm1672, %vm1636
        %vm1709 = vmand %vm1673, %vm1637
        %vm1710 = vmand %vm1674, %vm1638
        %vm1711 = vmand %vm1675, %vm1639
        %vm1712 = vmand %vm1676, %vm1640
        %vm1713 = vmand %vm1677, %vm1641
        %vm1714 = vmand %vm1678, %vm1642
        %vm1715 = vmand %vm1679, %vm1643
        %vm1716 = vmand %vm1680, %vm1644
        %vm1717 = vmand %vm1681, %vm1645
        %vm1718 = vmand %vm1682, %vm1646
        %vm1719 = vmand %vm1683, %vm1647
        %vm1720 = vmand %vm1684, %vm1648
        %vm1721 = vmand %vm1685, %vm1649
        %vm1722 = vmand %vm1686, %vm1650
        %vm1723 = vmand %vm1687, %vm1651
        %vm1724 = vmand %vm1688, %vm1652
        %vm1725 = vmand %vm1689, %vm1653
        %vm1726 = vmand %vm1690, %vm1654
        %vm1727 = vmand %vm1691, %vm1655
        %vm1728 = vmand %vm1692, %vm1656
        %vm1729 = vmand %vm1693, %vm1657
        %vm1730 = vmand %vm1694, %vm1658
        %vm1731 = vmand %vm1695, %vm1659
        %vm1732 = vmand %vm1696, %vm1660
        %vm1733 = vmand %vm1697, %vm1661
        %vm1734 = vmand %vm1698, %vm1662
        %vm1735 = vmand %vm1699, %vm1663
        %vm1736 = vmand %vm1700, %vm1664
        %vm1737 = vmand %vm1701, %vm1665
        %vm1738 = vmand %vm1702, %vm1666
        %vm1739 = vmand %vm1703, %vm1667
        %vm1740 = vmand %vm1704, %vm1668
        %vm1741 = vmand %vm1705, %vm1669
        %vm1742 = vmand %vm1706, %vm1670
        %v1743 = vadd.s32 %v1389, 16
        %v1744 = vadd.s32 %v1396, 16
        %v1745 = vadd.s32 %v1403, 16
        %v1746 = vadd.s32 %v1410, 16
        %v1747 = vadd.s32 %v1417, 16
        %v1748 = vadd.s32 %v1424, 16
        %v1749 = vadd.s32 %v1431, 16
        %v1750 = vadd.s32 %v1438, 16
        %v1751 = vadd.s32 %v1445, 16
        %v1752 = vadd.s32 %v1452, 16
        %v1753 = vadd.s32 %v1459, 16
        %v1754 = vadd.s32 %v1466, 16
        %v1755 = vadd.s32 %v1473, 16
        %v1756 = vadd.s32 %v1480, 16
        %v1757 = vadd.s32 %v1487, 16
        %v1758 = vadd.s32 %v1494, 16
        %v1759 = vadd.s32 %v1501, 16
        %v1760 = vadd.s32 %v1508, 16
        %v1761 = vadd.s32 %v1515, 16
        %v1762 = vadd.s32 %v1522, 16
        %v1763 = vadd.s32 %v1529, 16
        %v1764 = vadd.s32 %v1536, 16
        %v1765 = vadd.s32 %v1543, 16
        %v1766 = vadd.s32 %v1550, 16
        %v1767 = vadd.s32 %v1557, 16
        %v1768 = vadd.s32 %v1564, 16
        %v1769 = vadd.s32 %v1571, 16
        %v1770 = vadd.s32 %v1578, 16
        %v1771 = vadd.s32 %v1585, 16
        %v1772 = vadd.s32 %v1592, 16
        %v1773 = vadd.s32 %v1599, 16
        %v1774 = vadd.s32 %v1606, 16
        %v1775 = vadd.s32 %v1613, 16
        %v1776 = vadd.s32 %v1620, 16
        %v1777 = vadd.s32 %v1627, 16
        %v1778 = vadd.s32 %v1634, 16
        %v1779 = vsel %vm1707, %v1743, %v1389
        %v1780 = vsel %vm1708, %v1744, %v1396
        %v1781 = vsel %vm1709, %v1745, %v1403
        %v1782 = vsel %vm1710, %v1746, %v1410
        %v1783 = vsel %vm1711, %v1747, %v1417
        %v1784 = vsel %vm1712, %v1748, %v1424
        %v1785 = vsel %vm1713, %v1749, %v1431
        %v1786 = vsel %vm1714, %v1750, %v1438
        %v1787 = vsel %vm1715, %v1751, %v1445
        %v1788 = vsel %vm1716, %v1752, %v1452
        %v1789 = vsel %vm1717, %v1753, %v1459
        %v1790 = vsel %vm1718, %v1754, %v1466
        %v1791 = vsel %vm1719, %v1755, %v1473
        %v1792 = vsel %vm1720, %v1756, %v1480
        %v1793 = vsel %vm1721, %v1757, %v1487
        %v1794 = vsel %vm1722, %v1758, %v1494
        %v1795 = vsel %vm1723, %v1759, %v1501
        %v1796 = vsel %vm1724, %v1760, %v1508
        %v1797 = vsel %vm1725, %v1761, %v1515
        %v1798 = vsel %vm1726, %v1762, %v1522
        %v1799 = vsel %vm1727, %v1763, %v1529
        %v1800 = vsel %vm1728, %v1764, %v1536
        %v1801 = vsel %vm1729, %v1765, %v1543
        %v1802 = vsel %vm1730, %v1766, %v1550
        %v1803 = vsel %vm1731, %v1767, %v1557
        %v1804 = vsel %vm1732, %v1768, %v1564
        %v1805 = vsel %vm1733, %v1769, %v1571
        %v1806 = vsel %vm1734, %v1770, %v1578
        %v1807 = vsel %vm1735, %v1771, %v1585
        %v1808 = vsel %vm1736, %v1772, %v1592
        %v1809 = vsel %vm1737, %v1773, %v1599
        %v1810 = vsel %vm1738, %v1774, %v1606
        %v1811 = vsel %vm1739, %v1775, %v1613
        %v1812 = vsel %vm1740, %v1776, %v1620
        %v1813 = vsel %vm1741, %v1777, %v1627
        %v1814 = vsel %vm1742, %v1778, %v1634
        %vm1815 = vsmask.f32 256
        %v1817 = vshrl.u32 %v1365, 16
        %v1819 = vrot.slane %v1817, 7
        %v1820 = vshll.u32 %v1365, 16
        %v1822 = vor.u32 %v1819, %v1820
        %v1824 = vshrl.u32 %v1366, 16
        %v1826 = vrot.slane %v1824, 7
        %v1827 = vshll.u32 %v1366, 16
        %v1829 = vor.u32 %v1826, %v1827
        %v1830 = vsel %vm1815, %v1819, %v1829
        %v1832 = vshrl.u32 %v1367, 16
        %v1834 = vrot.slane %v1832, 7
        %v1835 = vshll.u32 %v1367, 16
        %v1837 = vor.u32 %v1834, %v1835
        %v1838 = vsel %vm1815, %v1826, %v1837
        %v1840 = vshrl.u32 %v1368, 16
        %v1842 = vrot.slane %v1840, 7
        %v1843 = vshll.u32 %v1368, 16
        %v1845 = vor.u32 %v1842, %v1843
        %v1846 = vsel %vm1815, %v1834, %v1845
        %v1848 = vshrl.u32 %v1369, 16
        %v1850 = vrot.slane %v1848, 7
        %v1851 = vshll.u32 %v1369, 16
        %v1853 = vor.u32 %v1850, %v1851
        %v1854 = vsel %vm1815, %v1842, %v1853
        %v1856 = vshrl.u32 %v1370, 16
        %v1858 = vrot.slane %v1856, 7
        %v1859 = vshll.u32 %v1370, 16
        %v1861 = vor.u32 %v1858, %v1859
        %v1862 = vsel %vm1815, %v1850, %v1861
        %v1864 = vshrl.u32 %v1371, 16
        %v1866 = vrot.slane %v1864, 7
        %v1867 = vshll.u32 %v1371, 16
        %v1869 = vor.u32 %v1866, %v1867
        %v1870 = vsel %vm1815, %v1858, %v1869
        %v1872 = vshrl.u32 %v1372, 16
        %v1874 = vrot.slane %v1872, 7
        %v1875 = vshll.u32 %v1372, 16
        %v1877 = vor.u32 %v1874, %v1875
        %v1878 = vsel %vm1815, %v1866, %v1877
        %v1880 = vshrl.u32 %v1373, 16
        %v1882 = vrot.slane %v1880, 7
        %v1883 = vshll.u32 %v1373, 16
        %v1885 = vor.u32 %v1882, %v1883
        %v1886 = vsel %vm1815, %v1874, %v1885
        %v1888 = vshrl.u32 %v1374, 16
        %v1890 = vrot.slane %v1888, 7
        %v1891 = vshll.u32 %v1374, 16
        %v1893 = vor.u32 %v1890, %v1891
        %v1894 = vsel %vm1815, %v1882, %v1893
        %v1896 = vshrl.u32 %v1375, 16
        %v1898 = vrot.slane %v1896, 7
        %v1899 = vshll.u32 %v1375, 16
        %v1901 = vor.u32 %v1898, %v1899
        %v1902 = vsel %vm1815, %v1890, %v1901
        %v1904 = vshrl.u32 %v1376, 16
        %v1906 = vrot.slane %v1904, 7
        %v1907 = vshll.u32 %v1376, 16
        %v1909 = vor.u32 %v1906, %v1907
        %v1910 = vsel %vm1815, %v1898, %v1909
        %v1912 = vshrl.u32 %v1377, 16
        %v1914 = vrot.slane %v1912, 7
        %v1915 = vshll.u32 %v1377, 16
        %v1917 = vor.u32 %v1914, %v1915
        %v1918 = vsel %vm1815, %v1906, %v1917
        %v1920 = vshrl.u32 %v1378, 16
        %v1922 = vrot.slane %v1920, 7
        %v1923 = vshll.u32 %v1378, 16
        %v1925 = vor.u32 %v1922, %v1923
        %v1926 = vsel %vm1815, %v1914, %v1925
        %v1928 = vshrl.u32 %v1379, 16
        %v1930 = vrot.slane %v1928, 7
        %v1931 = vshll.u32 %v1379, 16
        %v1933 = vor.u32 %v1930, %v1931
        %v1934 = vsel %vm1815, %v1922, %v1933
        %v1936 = vshrl.u32 %v1380, 16
        %v1938 = vrot.slane %v1936, 7
        %v1939 = vshll.u32 %v1380, 16
        %v1941 = vor.u32 %v1938, %v1939
        %v1942 = vsel %vm1815, %v1930, %v1941
        %v1944 = vshrl.u32 %v1381, 16
        %v1946 = vrot.slane %v1944, 7
        %v1947 = vshll.u32 %v1381, 16
        %v1949 = vor.u32 %v1946, %v1947
        %v1950 = vsel %vm1815, %v1938, %v1949
        %v1952 = vshrl.u32 %v1382, 16
        %v1954 = vrot.slane %v1952, 7
        %v1955 = vshll.u32 %v1382, 16
        %v1957 = vor.u32 %v1954, %v1955
        %v1958 = vsel %vm1815, %v1946, %v1957
        %vm1977 = vcmask 1040384
        %vm1978 = vmand %vm1977, %vm1815
        %v1979 = vsel %vm1978, 0, %v1822
        %vm1980 = vcmp.eq.s32.totalorder %v1779, 0
        %vm1981 = vcmp.eq.s32.totalorder %v1780, 0
        %vm1982 = vcmp.eq.s32.totalorder %v1781, 0
        %vm1983 = vcmp.eq.s32.totalorder %v1782, 0
        %vm1984 = vcmp.eq.s32.totalorder %v1783, 0
        %vm1985 = vcmp.eq.s32.totalorder %v1784, 0
        %vm1986 = vcmp.eq.s32.totalorder %v1785, 0
        %vm1987 = vcmp.eq.s32.totalorder %v1786, 0
        %vm1988 = vcmp.eq.s32.totalorder %v1787, 0
        %vm1989 = vcmp.eq.s32.totalorder %v1788, 0
        %vm1990 = vcmp.eq.s32.totalorder %v1789, 0
        %vm1991 = vcmp.eq.s32.totalorder %v1790, 0
        %vm1992 = vcmp.eq.s32.totalorder %v1791, 0
        %vm1993 = vcmp.eq.s32.totalorder %v1792, 0
        %vm1994 = vcmp.eq.s32.totalorder %v1793, 0
        %vm1995 = vcmp.eq.s32.totalorder %v1794, 0
        %vm1996 = vcmp.eq.s32.totalorder %v1795, 0
        %vm1997 = vcmp.eq.s32.totalorder %v1796, 0
        %vm1998 = vcmp.eq.s32.totalorder %v1797, 0
        %vm1999 = vcmp.eq.s32.totalorder %v1798, 0
        %vm2000 = vcmp.eq.s32.totalorder %v1799, 0
        %vm2001 = vcmp.eq.s32.totalorder %v1800, 0
        %vm2002 = vcmp.eq.s32.totalorder %v1801, 0
        %vm2003 = vcmp.eq.s32.totalorder %v1802, 0
        %vm2004 = vcmp.eq.s32.totalorder %v1803, 0
        %vm2005 = vcmp.eq.s32.totalorder %v1804, 0
        %vm2006 = vcmp.eq.s32.totalorder %v1805, 0
        %vm2007 = vcmp.eq.s32.totalorder %v1806, 0
        %vm2008 = vcmp.eq.s32.totalorder %v1807, 0
        %vm2009 = vcmp.eq.s32.totalorder %v1808, 0
        %vm2010 = vcmp.eq.s32.totalorder %v1809, 0
        %vm2011 = vcmp.eq.s32.totalorder %v1810, 0
        %vm2012 = vcmp.eq.s32.totalorder %v1811, 0
        %vm2013 = vcmp.eq.s32.totalorder %v1812, 0
        %vm2014 = vcmp.eq.s32.totalorder %v1813, 0
        %vm2015 = vcmp.eq.s32.totalorder %v1814, 0
        %v2016 = vsel %vm1980, 1, 0
        %v2017 = vsel %vm1981, 1, 0
        %v2018 = vsel %vm1982, 1, 0
        %v2019 = vsel %vm1983, 1, 0
        %v2020 = vsel %vm1984, 1, 0
        %v2021 = vsel %vm1985, 1, 0
        %v2022 = vsel %vm1986, 1, 0
        %v2023 = vsel %vm1987, 1, 0
        %v2024 = vsel %vm1988, 1, 0
        %v2025 = vsel %vm1989, 1, 0
        %v2026 = vsel %vm1990, 1, 0
        %v2027 = vsel %vm1991, 1, 0
        %v2028 = vsel %vm1992, 1, 0
        %v2029 = vsel %vm1993, 1, 0
        %v2030 = vsel %vm1994, 1, 0
        %v2031 = vsel %vm1995, 1, 0
        %v2032 = vsel %vm1996, 1, 0
        %v2033 = vsel %vm1997, 1, 0
        %v2034 = vsel %vm1998, 1, 0
        %v2035 = vsel %vm1999, 1, 0
        %v2036 = vsel %vm2000, 1, 0
        %v2037 = vsel %vm2001, 1, 0
        %v2038 = vsel %vm2002, 1, 0
        %v2039 = vsel %vm2003, 1, 0
        %v2040 = vsel %vm2004, 1, 0
        %v2041 = vsel %vm2005, 1, 0
        %v2042 = vsel %vm2006, 1, 0
        %v2043 = vsel %vm2007, 1, 0
        %v2044 = vsel %vm2008, 1, 0
        %v2045 = vsel %vm2009, 1, 0
        %v2046 = vsel %vm2010, 1, 0
        %v2047 = vsel %vm2011, 1, 0
        %v2048 = vsel %vm2012, 1, 0
        %v2049 = vsel %vm2013, 1, 0
        %v2050 = vsel %vm2014, 1, 0
        %v2051 = vsel %vm2015, 1, 0
        %vm2052 = vcmp.eq.s32.totalorder %v2016, 1
        %vm2053 = vcmp.eq.s32.totalorder %v2017, 1
        %vm2054 = vcmp.eq.s32.totalorder %v2018, 1
        %vm2055 = vcmp.eq.s32.totalorder %v2019, 1
        %vm2056 = vcmp.eq.s32.totalorder %v2020, 1
        %vm2057 = vcmp.eq.s32.totalorder %v2021, 1
        %vm2058 = vcmp.eq.s32.totalorder %v2022, 1
        %vm2059 = vcmp.eq.s32.totalorder %v2023, 1
        %vm2060 = vcmp.eq.s32.totalorder %v2024, 1
        %vm2061 = vcmp.eq.s32.totalorder %v2025, 1
        %vm2062 = vcmp.eq.s32.totalorder %v2026, 1
        %vm2063 = vcmp.eq.s32.totalorder %v2027, 1
        %vm2064 = vcmp.eq.s32.totalorder %v2028, 1
        %vm2065 = vcmp.eq.s32.totalorder %v2029, 1
        %vm2066 = vcmp.eq.s32.totalorder %v2030, 1
        %vm2067 = vcmp.eq.s32.totalorder %v2031, 1
        %vm2068 = vcmp.eq.s32.totalorder %v2032, 1
        %vm2069 = vcmp.eq.s32.totalorder %v2033, 1
        %vm2070 = vcmp.eq.s32.totalorder %v2034, 1
        %vm2071 = vcmp.eq.s32.totalorder %v2035, 1
        %vm2072 = vcmp.eq.s32.totalorder %v2036, 1
        %vm2073 = vcmp.eq.s32.totalorder %v2037, 1
        %vm2074 = vcmp.eq.s32.totalorder %v2038, 1
        %vm2075 = vcmp.eq.s32.totalorder %v2039, 1
        %vm2076 = vcmp.eq.s32.totalorder %v2040, 1
        %vm2077 = vcmp.eq.s32.totalorder %v2041, 1
        %vm2078 = vcmp.eq.s32.totalorder %v2042, 1
        %vm2079 = vcmp.eq.s32.totalorder %v2043, 1
        %vm2080 = vcmp.eq.s32.totalorder %v2044, 1
        %vm2081 = vcmp.eq.s32.totalorder %v2045, 1
        %vm2082 = vcmp.eq.s32.totalorder %v2046, 1
        %vm2083 = vcmp.eq.s32.totalorder %v2047, 1
        %vm2084 = vcmp.eq.s32.totalorder %v2048, 1
        %vm2085 = vcmp.eq.s32.totalorder %v2049, 1
        %vm2086 = vcmp.eq.s32.totalorder %v2050, 1
        %vm2087 = vcmp.eq.s32.totalorder %v2051, 1
        %vm2088 = vmpackc.low %vm2052, %vm2052
        %vm2089 = vmpackc.low %vm2053, %vm2053
        %vm2090 = vmpackc.low %vm2054, %vm2054
        %vm2091 = vmpackc.low %vm2055, %vm2055
        %vm2092 = vmpackc.low %vm2056, %vm2056
        %vm2093 = vmpackc.low %vm2057, %vm2057
        %vm2094 = vmpackc.low %vm2058, %vm2058
        %vm2095 = vmpackc.low %vm2059, %vm2059
        %vm2096 = vmpackc.low %vm2060, %vm2060
        %vm2097 = vmpackc.low %vm2061, %vm2061
        %vm2098 = vmpackc.low %vm2062, %vm2062
        %vm2099 = vmpackc.low %vm2063, %vm2063
        %vm2100 = vmpackc.low %vm2064, %vm2064
        %vm2101 = vmpackc.low %vm2065, %vm2065
        %vm2102 = vmpackc.low %vm2066, %vm2066
        %vm2103 = vmpackc.low %vm2067, %vm2067
        %vm2104 = vmpackc.low %vm2068, %vm2068
        %vm2105 = vmpackc.low %vm2069, %vm2069
        %vm2106 = vmpackc.low %vm2070, %vm2070
        %vm2107 = vmpackc.low %vm2071, %vm2071
        %vm2108 = vmpackc.low %vm2072, %vm2072
        %vm2109 = vmpackc.low %vm2073, %vm2073
        %vm2110 = vmpackc.low %vm2074, %vm2074
        %vm2111 = vmpackc.low %vm2075, %vm2075
        %vm2112 = vmpackc.low %vm2076, %vm2076
        %vm2113 = vmpackc.low %vm2077, %vm2077
        %vm2114 = vmpackc.low %vm2078, %vm2078
        %vm2115 = vmpackc.low %vm2079, %vm2079
        %vm2116 = vmpackc.low %vm2080, %vm2080
        %vm2117 = vmpackc.low %vm2081, %vm2081
        %vm2118 = vmpackc.low %vm2082, %vm2082
        %vm2119 = vmpackc.low %vm2083, %vm2083
        %vm2120 = vmpackc.low %vm2084, %vm2084
        %vm2121 = vmpackc.low %vm2085, %vm2085
        %vm2122 = vmpackc.low %vm2086, %vm2086
        %vm2123 = vmpackc.low %vm2087, %vm2087
        %v2124 = vsel %vm2088, 65537, 0
        %v2125 = vsel %vm2089, 65537, 0
        %v2126 = vsel %vm2090, 65537, 0
        %v2127 = vsel %vm2091, 65537, 0
        %v2128 = vsel %vm2092, 65537, 0
        %v2129 = vsel %vm2093, 65537, 0
        %v2130 = vsel %vm2094, 65537, 0
        %v2131 = vsel %vm2095, 65537, 0
        %v2132 = vsel %vm2096, 65537, 0
        %v2133 = vsel %vm2097, 65537, 0
        %v2134 = vsel %vm2098, 65537, 0
        %v2135 = vsel %vm2099, 65537, 0
        %v2136 = vsel %vm2100, 65537, 0
        %v2137 = vsel %vm2101, 65537, 0
        %v2138 = vsel %vm2102, 65537, 0
        %v2139 = vsel %vm2103, 65537, 0
        %v2140 = vsel %vm2104, 65537, 0
        %v2141 = vsel %vm2105, 65537, 0
        %v2142 = vsel %vm2106, 65537, 0
        %v2143 = vsel %vm2107, 65537, 0
        %v2144 = vsel %vm2108, 65537, 0
        %v2145 = vsel %vm2109, 65537, 0
        %v2146 = vsel %vm2110, 65537, 0
        %v2147 = vsel %vm2111, 65537, 0
        %v2148 = vsel %vm2112, 65537, 0
        %v2149 = vsel %vm2113, 65537, 0
        %v2150 = vsel %vm2114, 65537, 0
        %v2151 = vsel %vm2115, 65537, 0
        %v2152 = vsel %vm2116, 65537, 0
        %v2153 = vsel %vm2117, 65537, 0
        %v2154 = vsel %vm2118, 65537, 0
        %v2155 = vsel %vm2119, 65537, 0
        %v2156 = vsel %vm2120, 65537, 0
        %v2157 = vsel %vm2121, 65537, 0
        %v2158 = vsel %vm2122, 65537, 0
        %v2159 = vsel %vm2123, 65537, 0
        %v2160 = vunpack.c.l.b16 %v2124
        %v2161 = vunpack.c.l.b16 %v2125
        %v2162 = vunpack.c.l.b16 %v2126
        %v2163 = vunpack.c.l.b16 %v2127
        %v2164 = vunpack.c.l.b16 %v2128
        %v2165 = vunpack.c.l.b16 %v2129
        %v2166 = vunpack.c.l.b16 %v2130
        %v2167 = vunpack.c.l.b16 %v2131
        %v2168 = vunpack.c.l.b16 %v2132
        %v2169 = vunpack.c.l.b16 %v2133
        %v2170 = vunpack.c.l.b16 %v2134
        %v2171 = vunpack.c.l.b16 %v2135
        %v2172 = vunpack.c.l.b16 %v2136
        %v2173 = vunpack.c.l.b16 %v2137
        %v2174 = vunpack.c.l.b16 %v2138
        %v2175 = vunpack.c.l.b16 %v2139
        %v2176 = vunpack.c.l.b16 %v2140
        %v2177 = vunpack.c.l.b16 %v2141
        %v2178 = vunpack.c.l.b16 %v2142
        %v2179 = vunpack.c.l.b16 %v2143
        %v2180 = vunpack.c.l.b16 %v2144
        %v2181 = vunpack.c.l.b16 %v2145
        %v2182 = vunpack.c.l.b16 %v2146
        %v2183 = vunpack.c.l.b16 %v2147
        %v2184 = vunpack.c.l.b16 %v2148
        %v2185 = vunpack.c.l.b16 %v2149
        %v2186 = vunpack.c.l.b16 %v2150
        %v2187 = vunpack.c.l.b16 %v2151
        %v2188 = vunpack.c.l.b16 %v2152
        %v2189 = vunpack.c.l.b16 %v2153
        %v2190 = vunpack.c.l.b16 %v2154
        %v2191 = vunpack.c.l.b16 %v2155
        %v2192 = vunpack.c.l.b16 %v2156
        %v2193 = vunpack.c.l.b16 %v2157
        %v2194 = vunpack.c.l.b16 %v2158
        %v2195 = vunpack.c.l.b16 %v2159
        %v2196 = vpack.c.b16 %v2161, %v2160
        %v2197 = vpack.c.b16 %v2163, %v2162
        %v2198 = vpack.c.b16 %v2165, %v2164
        %v2199 = vpack.c.b16 %v2167, %v2166
        %v2200 = vpack.c.b16 %v2169, %v2168
        %v2201 = vpack.c.b16 %v2171, %v2170
        %v2202 = vpack.c.b16 %v2173, %v2172
        %v2203 = vpack.c.b16 %v2175, %v2174
        %v2204 = vpack.c.b16 %v2177, %v2176
        %v2205 = vpack.c.b16 %v2179, %v2178
        %v2206 = vpack.c.b16 %v2181, %v2180
        %v2207 = vpack.c.b16 %v2183, %v2182
        %v2208 = vpack.c.b16 %v2185, %v2184
        %v2209 = vpack.c.b16 %v2187, %v2186
        %v2210 = vpack.c.b16 %v2189, %v2188
        %v2211 = vpack.c.b16 %v2191, %v2190
        %v2212 = vpack.c.b16 %v2193, %v2192
        %v2213 = vpack.c.b16 %v2195, %v2194
        %vm2214 = vcmp.ne.s16.totalorder %v2196, 0
        %vm2215 = vcmp.ne.s16.totalorder %v2197, 0
        %vm2216 = vcmp.ne.s16.totalorder %v2198, 0
        %vm2217 = vcmp.ne.s16.totalorder %v2199, 0
        %vm2218 = vcmp.ne.s16.totalorder %v2200, 0
        %vm2219 = vcmp.ne.s16.totalorder %v2201, 0
        %vm2220 = vcmp.ne.s16.totalorder %v2202, 0
        %vm2221 = vcmp.ne.s16.totalorder %v2203, 0
        %vm2222 = vcmp.ne.s16.totalorder %v2204, 0
        %vm2223 = vcmp.ne.s16.totalorder %v2205, 0
        %vm2224 = vcmp.ne.s16.totalorder %v2206, 0
        %vm2225 = vcmp.ne.s16.totalorder %v2207, 0
        %vm2226 = vcmp.ne.s16.totalorder %v2208, 0
        %vm2227 = vcmp.ne.s16.totalorder %v2209, 0
        %vm2228 = vcmp.ne.s16.totalorder %v2210, 0
        %vm2229 = vcmp.ne.s16.totalorder %v2211, 0
        %vm2230 = vcmp.ne.s16.totalorder %v2212, 0
        %vm2231 = vcmp.ne.s16.totalorder %v2213, 0
        %v2232 = vsel %vm2214, 0, %v1979
        %v2233 = vsel %vm2215, 0, %v1830
        %v2234 = vsel %vm2216, 0, %v1838
        %v2235 = vsel %vm2217, 0, %v1846
        %v2236 = vsel %vm2218, 0, %v1854
        %v2237 = vsel %vm2219, 0, %v1862
        %v2238 = vsel %vm2220, 0, %v1870
        %v2239 = vsel %vm2221, 0, %v1878
        %v2240 = vsel %vm2222, 0, %v1886
        %v2241 = vsel %vm2223, 0, %v1894
        %v2242 = vsel %vm2224, 0, %v1902
        %v2243 = vsel %vm2225, 0, %v1910
        %v2244 = vsel %vm2226, 0, %v1918
        %v2245 = vsel %vm2227, 0, %v1926
        %v2246 = vsel %vm2228, 0, %v1934
        %v2247 = vsel %vm2229, 0, %v1942
        %v2248 = vsel %vm2230, 0, %v1950
        %v2249 = vsel %vm2231, 0, %v1958
        %vm2250 = vsmask.f32 7424
        %v2251 = vrot.slane %v1820, 1
        %v2252 = vor.u32 %v1817, %v2251
        %v2253 = vrot.slane %v1827, 1
        %v2254 = vsel %vm2250, %v2252, %v2253
        %v2255 = vor.u32 %v1824, %v2253
        %v2256 = vrot.slane %v1835, 1
        %v2257 = vsel %vm2250, %v2255, %v2256
        %v2258 = vor.u32 %v1832, %v2256
        %v2259 = vrot.slane %v1843, 1
        %v2260 = vsel %vm2250, %v2258, %v2259
        %v2261 = vor.u32 %v1840, %v2259
        %v2262 = vrot.slane %v1851, 1
        %v2263 = vsel %vm2250, %v2261, %v2262
        %v2264 = vor.u32 %v1848, %v2262
        %v2265 = vrot.slane %v1859, 1
        %v2266 = vsel %vm2250, %v2264, %v2265
        %v2267 = vor.u32 %v1856, %v2265
        %v2268 = vrot.slane %v1867, 1
        %v2269 = vsel %vm2250, %v2267, %v2268
        %v2270 = vor.u32 %v1864, %v2268
        %v2271 = vrot.slane %v1875, 1
        %v2272 = vsel %vm2250, %v2270, %v2271
        %v2273 = vor.u32 %v1872, %v2271
        %v2274 = vrot.slane %v1883, 1
        %v2275 = vsel %vm2250, %v2273, %v2274
        %v2276 = vor.u32 %v1880, %v2274
        %v2277 = vrot.slane %v1891, 1
        %v2278 = vsel %vm2250, %v2276, %v2277
        %v2279 = vor.u32 %v1888, %v2277
        %v2280 = vrot.slane %v1899, 1
        %v2281 = vsel %vm2250, %v2279, %v2280
        %v2282 = vor.u32 %v1896, %v2280
        %v2283 = vrot.slane %v1907, 1
        %v2284 = vsel %vm2250, %v2282, %v2283
        %v2285 = vor.u32 %v1904, %v2283
        %v2286 = vrot.slane %v1915, 1
        %v2287 = vsel %vm2250, %v2285, %v2286
        %v2288 = vor.u32 %v1912, %v2286
        %v2289 = vrot.slane %v1923, 1
        %v2290 = vsel %vm2250, %v2288, %v2289
        %v2291 = vor.u32 %v1920, %v2289
        %v2292 = vrot.slane %v1931, 1
        %v2293 = vsel %vm2250, %v2291, %v2292
        %v2294 = vor.u32 %v1928, %v2292
        %v2295 = vrot.slane %v1939, 1
        %v2296 = vsel %vm2250, %v2294, %v2295
        %v2297 = vor.u32 %v1936, %v2295
        %v2298 = vrot.slane %v1947, 1
        %v2299 = vsel %vm2250, %v2297, %v2298
        %v2300 = vor.u32 %v1944, %v2298
        %v2301 = vrot.slane %v1955, 1
        %v2302 = vsel %vm2250, %v2300, %v2301
        %v2303 = vor.u32 %v1952, %v2301
        %vm2322 = vcmask 1047552
        %vm2323 = vmand %vm2322, %vm2250
        %v2324 = vsel %vm2323, %v2303, 0
        %vm2325 = vcmp.eq.s32.totalorder %v1779, 15
        %vm2326 = vcmp.eq.s32.totalorder %v1780, 15
        %vm2327 = vcmp.eq.s32.totalorder %v1781, 15
        %vm2328 = vcmp.eq.s32.totalorder %v1782, 15
        %vm2329 = vcmp.eq.s32.totalorder %v1783, 15
        %vm2330 = vcmp.eq.s32.totalorder %v1784, 15
        %vm2331 = vcmp.eq.s32.totalorder %v1785, 15
        %vm2332 = vcmp.eq.s32.totalorder %v1786, 15
        %vm2333 = vcmp.eq.s32.totalorder %v1787, 15
        %vm2334 = vcmp.eq.s32.totalorder %v1788, 15
        %vm2335 = vcmp.eq.s32.totalorder %v1789, 15
        %vm2336 = vcmp.eq.s32.totalorder %v1790, 15
        %vm2337 = vcmp.eq.s32.totalorder %v1791, 15
        %vm2338 = vcmp.eq.s32.totalorder %v1792, 15
        %vm2339 = vcmp.eq.s32.totalorder %v1793, 15
        %vm2340 = vcmp.eq.s32.totalorder %v1794, 15
        %vm2341 = vcmp.eq.s32.totalorder %v1795, 15
        %vm2342 = vcmp.eq.s32.totalorder %v1796, 15
        %vm2343 = vcmp.eq.s32.totalorder %v1797, 15
        %vm2344 = vcmp.eq.s32.totalorder %v1798, 15
        %vm2345 = vcmp.eq.s32.totalorder %v1799, 15
        %vm2346 = vcmp.eq.s32.totalorder %v1800, 15
        %vm2347 = vcmp.eq.s32.totalorder %v1801, 15
        %vm2348 = vcmp.eq.s32.totalorder %v1802, 15
        %vm2349 = vcmp.eq.s32.totalorder %v1803, 15
        %vm2350 = vcmp.eq.s32.totalorder %v1804, 15
        %vm2351 = vcmp.eq.s32.totalorder %v1805, 15
        %vm2352 = vcmp.eq.s32.totalorder %v1806, 15
        %vm2353 = vcmp.eq.s32.totalorder %v1807, 15
        %vm2354 = vcmp.eq.s32.totalorder %v1808, 15
        %vm2355 = vcmp.eq.s32.totalorder %v1809, 15
        %vm2356 = vcmp.eq.s32.totalorder %v1810, 15
        %vm2357 = vcmp.eq.s32.totalorder %v1811, 15
        %vm2358 = vcmp.eq.s32.totalorder %v1812, 15
        %vm2359 = vcmp.eq.s32.totalorder %v1813, 15
        %vm2360 = vcmp.eq.s32.totalorder %v1814, 15
        %v2361 = vsel %vm2325, 1, 0
        %v2362 = vsel %vm2326, 1, 0
        %v2363 = vsel %vm2327, 1, 0
        %v2364 = vsel %vm2328, 1, 0
        %v2365 = vsel %vm2329, 1, 0
        %v2366 = vsel %vm2330, 1, 0
        %v2367 = vsel %vm2331, 1, 0
        %v2368 = vsel %vm2332, 1, 0
        %v2369 = vsel %vm2333, 1, 0
        %v2370 = vsel %vm2334, 1, 0
        %v2371 = vsel %vm2335, 1, 0
        %v2372 = vsel %vm2336, 1, 0
        %v2373 = vsel %vm2337, 1, 0
        %v2374 = vsel %vm2338, 1, 0
        %v2375 = vsel %vm2339, 1, 0
        %v2376 = vsel %vm2340, 1, 0
        %v2377 = vsel %vm2341, 1, 0
        %v2378 = vsel %vm2342, 1, 0
        %v2379 = vsel %vm2343, 1, 0
        %v2380 = vsel %vm2344, 1, 0
        %v2381 = vsel %vm2345, 1, 0
        %v2382 = vsel %vm2346, 1, 0
        %v2383 = vsel %vm2347, 1, 0
        %v2384 = vsel %vm2348, 1, 0
        %v2385 = vsel %vm2349, 1, 0
        %v2386 = vsel %vm2350, 1, 0
        %v2387 = vsel %vm2351, 1, 0
        %v2388 = vsel %vm2352, 1, 0
        %v2389 = vsel %vm2353, 1, 0
        %v2390 = vsel %vm2354, 1, 0
        %v2391 = vsel %vm2355, 1, 0
        %v2392 = vsel %vm2356, 1, 0
        %v2393 = vsel %vm2357, 1, 0
        %v2394 = vsel %vm2358, 1, 0
        %v2395 = vsel %vm2359, 1, 0
        %v2396 = vsel %vm2360, 1, 0
        %vm2397 = vcmp.eq.s32.totalorder %v2361, 1
        %vm2398 = vcmp.eq.s32.totalorder %v2362, 1
        %vm2399 = vcmp.eq.s32.totalorder %v2363, 1
        %vm2400 = vcmp.eq.s32.totalorder %v2364, 1
        %vm2401 = vcmp.eq.s32.totalorder %v2365, 1
        %vm2402 = vcmp.eq.s32.totalorder %v2366, 1
        %vm2403 = vcmp.eq.s32.totalorder %v2367, 1
        %vm2404 = vcmp.eq.s32.totalorder %v2368, 1
        %vm2405 = vcmp.eq.s32.totalorder %v2369, 1
        %vm2406 = vcmp.eq.s32.totalorder %v2370, 1
        %vm2407 = vcmp.eq.s32.totalorder %v2371, 1
        %vm2408 = vcmp.eq.s32.totalorder %v2372, 1
        %vm2409 = vcmp.eq.s32.totalorder %v2373, 1
        %vm2410 = vcmp.eq.s32.totalorder %v2374, 1
        %vm2411 = vcmp.eq.s32.totalorder %v2375, 1
        %vm2412 = vcmp.eq.s32.totalorder %v2376, 1
        %vm2413 = vcmp.eq.s32.totalorder %v2377, 1
        %vm2414 = vcmp.eq.s32.totalorder %v2378, 1
        %vm2415 = vcmp.eq.s32.totalorder %v2379, 1
        %vm2416 = vcmp.eq.s32.totalorder %v2380, 1
        %vm2417 = vcmp.eq.s32.totalorder %v2381, 1
        %vm2418 = vcmp.eq.s32.totalorder %v2382, 1
        %vm2419 = vcmp.eq.s32.totalorder %v2383, 1
        %vm2420 = vcmp.eq.s32.totalorder %v2384, 1
        %vm2421 = vcmp.eq.s32.totalorder %v2385, 1
        %vm2422 = vcmp.eq.s32.totalorder %v2386, 1
        %vm2423 = vcmp.eq.s32.totalorder %v2387, 1
        %vm2424 = vcmp.eq.s32.totalorder %v2388, 1
        %vm2425 = vcmp.eq.s32.totalorder %v2389, 1
        %vm2426 = vcmp.eq.s32.totalorder %v2390, 1
        %vm2427 = vcmp.eq.s32.totalorder %v2391, 1
        %vm2428 = vcmp.eq.s32.totalorder %v2392, 1
        %vm2429 = vcmp.eq.s32.totalorder %v2393, 1
        %vm2430 = vcmp.eq.s32.totalorder %v2394, 1
        %vm2431 = vcmp.eq.s32.totalorder %v2395, 1
        %vm2432 = vcmp.eq.s32.totalorder %v2396, 1
        %vm2433 = vmpackc.low %vm2397, %vm2397
        %vm2434 = vmpackc.low %vm2398, %vm2398
        %vm2435 = vmpackc.low %vm2399, %vm2399
        %vm2436 = vmpackc.low %vm2400, %vm2400
        %vm2437 = vmpackc.low %vm2401, %vm2401
        %vm2438 = vmpackc.low %vm2402, %vm2402
        %vm2439 = vmpackc.low %vm2403, %vm2403
        %vm2440 = vmpackc.low %vm2404, %vm2404
        %vm2441 = vmpackc.low %vm2405, %vm2405
        %vm2442 = vmpackc.low %vm2406, %vm2406
        %vm2443 = vmpackc.low %vm2407, %vm2407
        %vm2444 = vmpackc.low %vm2408, %vm2408
        %vm2445 = vmpackc.low %vm2409, %vm2409
        %vm2446 = vmpackc.low %vm2410, %vm2410
        %vm2447 = vmpackc.low %vm2411, %vm2411
        %vm2448 = vmpackc.low %vm2412, %vm2412
        %vm2449 = vmpackc.low %vm2413, %vm2413
        %vm2450 = vmpackc.low %vm2414, %vm2414
        %vm2451 = vmpackc.low %vm2415, %vm2415
        %vm2452 = vmpackc.low %vm2416, %vm2416
        %vm2453 = vmpackc.low %vm2417, %vm2417
        %vm2454 = vmpackc.low %vm2418, %vm2418
        %vm2455 = vmpackc.low %vm2419, %vm2419
        %vm2456 = vmpackc.low %vm2420, %vm2420
        %vm2457 = vmpackc.low %vm2421, %vm2421
        %vm2458 = vmpackc.low %vm2422, %vm2422
        %vm2459 = vmpackc.low %vm2423, %vm2423
        %vm2460 = vmpackc.low %vm2424, %vm2424
        %vm2461 = vmpackc.low %vm2425, %vm2425
        %vm2462 = vmpackc.low %vm2426, %vm2426
        %vm2463 = vmpackc.low %vm2427, %vm2427
        %vm2464 = vmpackc.low %vm2428, %vm2428
        %vm2465 = vmpackc.low %vm2429, %vm2429
        %vm2466 = vmpackc.low %vm2430, %vm2430
        %vm2467 = vmpackc.low %vm2431, %vm2431
        %vm2468 = vmpackc.low %vm2432, %vm2432
        %v2469 = vsel %vm2433, 65537, 0
        %v2470 = vsel %vm2434, 65537, 0
        %v2471 = vsel %vm2435, 65537, 0
        %v2472 = vsel %vm2436, 65537, 0
        %v2473 = vsel %vm2437, 65537, 0
        %v2474 = vsel %vm2438, 65537, 0
        %v2475 = vsel %vm2439, 65537, 0
        %v2476 = vsel %vm2440, 65537, 0
        %v2477 = vsel %vm2441, 65537, 0
        %v2478 = vsel %vm2442, 65537, 0
        %v2479 = vsel %vm2443, 65537, 0
        %v2480 = vsel %vm2444, 65537, 0
        %v2481 = vsel %vm2445, 65537, 0
        %v2482 = vsel %vm2446, 65537, 0
        %v2483 = vsel %vm2447, 65537, 0
        %v2484 = vsel %vm2448, 65537, 0
        %v2485 = vsel %vm2449, 65537, 0
        %v2486 = vsel %vm2450, 65537, 0
        %v2487 = vsel %vm2451, 65537, 0
        %v2488 = vsel %vm2452, 65537, 0
        %v2489 = vsel %vm2453, 65537, 0
        %v2490 = vsel %vm2454, 65537, 0
        %v2491 = vsel %vm2455, 65537, 0
        %v2492 = vsel %vm2456, 65537, 0
        %v2493 = vsel %vm2457, 65537, 0
        %v2494 = vsel %vm2458, 65537, 0
        %v2495 = vsel %vm2459, 65537, 0
        %v2496 = vsel %vm2460, 65537, 0
        %v2497 = vsel %vm2461, 65537, 0
        %v2498 = vsel %vm2462, 65537, 0
        %v2499 = vsel %vm2463, 65537, 0
        %v2500 = vsel %vm2464, 65537, 0
        %v2501 = vsel %vm2465, 65537, 0
        %v2502 = vsel %vm2466, 65537, 0
        %v2503 = vsel %vm2467, 65537, 0
        %v2504 = vsel %vm2468, 65537, 0
        %v2505 = vunpack.c.l.b16 %v2469
        %v2506 = vunpack.c.l.b16 %v2470
        %v2507 = vunpack.c.l.b16 %v2471
        %v2508 = vunpack.c.l.b16 %v2472
        %v2509 = vunpack.c.l.b16 %v2473
        %v2510 = vunpack.c.l.b16 %v2474
        %v2511 = vunpack.c.l.b16 %v2475
        %v2512 = vunpack.c.l.b16 %v2476
        %v2513 = vunpack.c.l.b16 %v2477
        %v2514 = vunpack.c.l.b16 %v2478
        %v2515 = vunpack.c.l.b16 %v2479
        %v2516 = vunpack.c.l.b16 %v2480
        %v2517 = vunpack.c.l.b16 %v2481
        %v2518 = vunpack.c.l.b16 %v2482
        %v2519 = vunpack.c.l.b16 %v2483
        %v2520 = vunpack.c.l.b16 %v2484
        %v2521 = vunpack.c.l.b16 %v2485
        %v2522 = vunpack.c.l.b16 %v2486
        %v2523 = vunpack.c.l.b16 %v2487
        %v2524 = vunpack.c.l.b16 %v2488
        %v2525 = vunpack.c.l.b16 %v2489
        %v2526 = vunpack.c.l.b16 %v2490
        %v2527 = vunpack.c.l.b16 %v2491
        %v2528 = vunpack.c.l.b16 %v2492
        %v2529 = vunpack.c.l.b16 %v2493
        %v2530 = vunpack.c.l.b16 %v2494
        %v2531 = vunpack.c.l.b16 %v2495
        %v2532 = vunpack.c.l.b16 %v2496
        %v2533 = vunpack.c.l.b16 %v2497
        %v2534 = vunpack.c.l.b16 %v2498
        %v2535 = vunpack.c.l.b16 %v2499
        %v2536 = vunpack.c.l.b16 %v2500
        %v2537 = vunpack.c.l.b16 %v2501
        %v2538 = vunpack.c.l.b16 %v2502
        %v2539 = vunpack.c.l.b16 %v2503
        %v2540 = vunpack.c.l.b16 %v2504
        %v2541 = vpack.c.b16 %v2506, %v2505
        %v2542 = vpack.c.b16 %v2508, %v2507
        %v2543 = vpack.c.b16 %v2510, %v2509
        %v2544 = vpack.c.b16 %v2512, %v2511
        %v2545 = vpack.c.b16 %v2514, %v2513
        %v2546 = vpack.c.b16 %v2516, %v2515
        %v2547 = vpack.c.b16 %v2518, %v2517
        %v2548 = vpack.c.b16 %v2520, %v2519
        %v2549 = vpack.c.b16 %v2522, %v2521
        %v2550 = vpack.c.b16 %v2524, %v2523
        %v2551 = vpack.c.b16 %v2526, %v2525
        %v2552 = vpack.c.b16 %v2528, %v2527
        %v2553 = vpack.c.b16 %v2530, %v2529
        %v2554 = vpack.c.b16 %v2532, %v2531
        %v2555 = vpack.c.b16 %v2534, %v2533
        %v2556 = vpack.c.b16 %v2536, %v2535
        %v2557 = vpack.c.b16 %v2538, %v2537
        %v2558 = vpack.c.b16 %v2540, %v2539
        %vm2559 = vcmp.ne.s16.totalorder %v2541, 0
        %vm2560 = vcmp.ne.s16.totalorder %v2542, 0
        %vm2561 = vcmp.ne.s16.totalorder %v2543, 0
        %vm2562 = vcmp.ne.s16.totalorder %v2544, 0
        %vm2563 = vcmp.ne.s16.totalorder %v2545, 0
        %vm2564 = vcmp.ne.s16.totalorder %v2546, 0
        %vm2565 = vcmp.ne.s16.totalorder %v2547, 0
        %vm2566 = vcmp.ne.s16.totalorder %v2548, 0
        %vm2567 = vcmp.ne.s16.totalorder %v2549, 0
        %vm2568 = vcmp.ne.s16.totalorder %v2550, 0
        %vm2569 = vcmp.ne.s16.totalorder %v2551, 0
        %vm2570 = vcmp.ne.s16.totalorder %v2552, 0
        %vm2571 = vcmp.ne.s16.totalorder %v2553, 0
        %vm2572 = vcmp.ne.s16.totalorder %v2554, 0
        %vm2573 = vcmp.ne.s16.totalorder %v2555, 0
        %vm2574 = vcmp.ne.s16.totalorder %v2556, 0
        %vm2575 = vcmp.ne.s16.totalorder %v2557, 0
        %vm2576 = vcmp.ne.s16.totalorder %v2558, 0
        %v2577 = vsel %vm2559, 0, %v2254
        %v2578 = vsel %vm2560, 0, %v2257
        %v2579 = vsel %vm2561, 0, %v2260
        %v2580 = vsel %vm2562, 0, %v2263
        %v2581 = vsel %vm2563, 0, %v2266
        %v2582 = vsel %vm2564, 0, %v2269
        %v2583 = vsel %vm2565, 0, %v2272
        %v2584 = vsel %vm2566, 0, %v2275
        %v2585 = vsel %vm2567, 0, %v2278
        %v2586 = vsel %vm2568, 0, %v2281
        %v2587 = vsel %vm2569, 0, %v2284
        %v2588 = vsel %vm2570, 0, %v2287
        %v2589 = vsel %vm2571, 0, %v2290
        %v2590 = vsel %vm2572, 0, %v2293
        %v2591 = vsel %vm2573, 0, %v2296
        %v2592 = vsel %vm2574, 0, %v2299
        %v2593 = vsel %vm2575, 0, %v2302
        %v2594 = vsel %vm2576, 0, %v2324
        %v2595 = vld [vmem:[%s4] sm:$0x3]
        %s2596 = scalar_lea.vmem %s4, 2
        %v2597 = vld [vmem:[%s2596] sm:$0x3]
        %vm2598 = vcmask 31744
        %v2599 = vsel %vm2598, %v1365, 0
        %v2601 = vsel %vm2598, %v1366, 0
        %v2603 = vsel %vm2598, %v1367, 0
        %v2605 = vsel %vm2598, %v1368, 0
        %v2607 = vsel %vm2598, %v1369, 0
        %v2609 = vsel %vm2598, %v1370, 0
        %v2611 = vsel %vm2598, %v1371, 0
        %v2613 = vsel %vm2598, %v1372, 0
        %v2615 = vsel %vm2598, %v1373, 0
        %v2617 = vsel %vm2598, %v1374, 0
        %v2619 = vsel %vm2598, %v1375, 0
        %v2621 = vsel %vm2598, %v1376, 0
        %v2623 = vsel %vm2598, %v1377, 0
        %v2625 = vsel %vm2598, %v1378, 0
        %v2627 = vsel %vm2598, %v1379, 0
        %v2629 = vsel %vm2598, %v1380, 0
        %vm2631 = vcmask 1041408
        %v2633 = vsel %vm2631, %v2597, 0
        %2635 = vmatprep.subr.bf16.mxu0 0
        %2636 = vmatpush1.bf16.msra.mxu0 %v2633
        %2637 = vmatprep.subr.bf16.mxu0 0
        %2638 = vmatpush1.bf16.msra.mxu0 0
        %2639 = vmatprep.subr.bf16.mxu0 0
        %2640 = vmatpush1.bf16.msra.mxu0 0
        %2641 = vmatprep.subr.bf16.mxu0 0
        %2642 = vmatpush1.bf16.msra.mxu0 0
        %2643 = vmatprep.subr.bf16.mxu0 0
        %2644 = vmatpush1.bf16.msra.mxu0 0
        %2645 = vmatprep.subr.bf16.mxu0 0
        %2646 = vmatpush1.bf16.msra.mxu0 0
        %2647 = vmatprep.subr.bf16.mxu0 0
        %2648 = vmatpush1.bf16.msra.mxu0 0
        %2649 = vmatprep.subr.bf16.mxu0 0
        %2650 = vmatpush1.bf16.msra.mxu0 0
        %2651 = vmatprep.subr.bf16.mxu0 0
        %2652 = vmatpush1.bf16.msra.mxu0 0
        %2653 = vmatprep.subr.bf16.mxu0 0
        %2654 = vmatpush1.bf16.msra.mxu0 0
        %2655 = vmatprep.subr.bf16.mxu0 0
        %2656 = vmatpush1.bf16.msra.mxu0 0
        %2657 = vmatprep.subr.bf16.mxu0 0
        %2658 = vmatpush1.bf16.msra.mxu0 0
        %2659 = vmatprep.subr.bf16.mxu0 0
        %2660 = vmatpush1.bf16.msra.mxu0 0
        %2661 = vmatprep.subr.bf16.mxu0 0
        %2662 = vmatpush1.bf16.msra.mxu0 0
        %2663 = vmatprep.subr.bf16.mxu0 0
        %2664 = vmatpush1.bf16.msra.mxu0 0
        %2665 = vmatprep.subr.bf16.mxu0 0
        %2666 = vmatpush1.bf16.msra.mxu0 0
        %2667 = vmatprep.mubr.bf16.mxu0 0
        %2668 = vmatmul.mubr.bf16.gmra.mrb[0].mxu0 %v2599
        %v2669 = vpop.f32.mrb[0].mxu0
        %v2670 = vadd.f32 0.0, %v2669
        %v2671 = vpop.f32.mrb[0].mxu0
        %v2672 = vpop.f32.mrb[0].mxu0
        %v2673 = vadd.f32 0.0, %v2672
        %v2674 = vpop.f32.mrb[0].mxu0
        %2675 = vmatprep.mubr.bf16.mxu0 0
        %2676 = vmatmul.mubr.bf16.gmra.mrb[0].mxu0 %v2601
        %v2677 = vpop.f32.mrb[0].mxu0
        %v2678 = vadd.f32 0.0, %v2677
        %v2679 = vpop.f32.mrb[0].mxu0
        %v2680 = vpop.f32.mrb[0].mxu0
        %v2681 = vadd.f32 0.0, %v2680
        %v2682 = vpop.f32.mrb[0].mxu0
        %2683 = vmatprep.mubr.bf16.mxu0 0
        %2684 = vmatmul.mubr.bf16.gmra.mrb[0].mxu0 %v2603
        %v2685 = vpop.f32.mrb[0].mxu0
        %v2686 = vadd.f32 0.0, %v2685
        %v2687 = vpop.f32.mrb[0].mxu0
        %v2688 = vpop.f32.mrb[0].mxu0
        %v2689 = vadd.f32 0.0, %v2688
        %v2690 = vpop.f32.mrb[0].mxu0
        %2691 = vmatprep.mubr.bf16.mxu0 0
        %2692 = vmatmul.mubr.bf16.gmra.mrb[0].mxu0 %v2605
        %v2693 = vpop.f32.mrb[0].mxu0
        %v2694 = vadd.f32 0.0, %v2693
        %v2695 = vpop.f32.mrb[0].mxu0
        %v2696 = vpop.f32.mrb[0].mxu0
        %v2697 = vadd.f32 0.0, %v2696
        %v2698 = vpop.f32.mrb[0].mxu0
        %2699 = vmatprep.mubr.bf16.mxu0 0
        %2700 = vmatmul.mubr.bf16.gmra.mrb[0].mxu0 %v2607
        %v2701 = vpop.f32.mrb[0].mxu0
        %v2702 = vadd.f32 0.0, %v2701
        %v2703 = vpop.f32.mrb[0].mxu0
        %v2704 = vpop.f32.mrb[0].mxu0
        %v2705 = vadd.f32 0.0, %v2704
        %v2706 = vpop.f32.mrb[0].mxu0
        %2707 = vmatprep.mubr.bf16.mxu0 0
        %2708 = vmatmul.mubr.bf16.gmra.mrb[0].mxu0 %v2609
        %v2709 = vpop.f32.mrb[0].mxu0
        %v2710 = vadd.f32 0.0, %v2709
        %v2711 = vpop.f32.mrb[0].mxu0
        %v2712 = vpop.f32.mrb[0].mxu0
        %v2713 = vadd.f32 0.0, %v2712
        %v2714 = vpop.f32.mrb[0].mxu0
        %2715 = vmatprep.mubr.bf16.mxu0 0
        %2716 = vmatmul.mubr.bf16.gmra.mrb[0].mxu0 %v2611
        %v2717 = vpop.f32.mrb[0].mxu0
        %v2718 = vadd.f32 0.0, %v2717
        %v2719 = vpop.f32.mrb[0].mxu0
        %v2720 = vpop.f32.mrb[0].mxu0
        %v2721 = vadd.f32 0.0, %v2720
        %v2722 = vpop.f32.mrb[0].mxu0
        %2723 = vmatprep.mubr.bf16.mxu0 0
        %2724 = vmatmul.mubr.bf16.gmra.mrb[0].mxu0 %v2613
        %v2725 = vpop.f32.mrb[0].mxu0
        %v2726 = vadd.f32 0.0, %v2725
        %v2727 = vpop.f32.mrb[0].mxu0
        %v2728 = vpop.f32.mrb[0].mxu0
        %v2729 = vadd.f32 0.0, %v2728
        %v2730 = vpop.f32.mrb[0].mxu0
        %2731 = vmatprep.mubr.bf16.mxu0 0
        %2732 = vmatmul.mubr.bf16.gmra.mrb[0].mxu0 %v2615
        %v2733 = vpop.f32.mrb[0].mxu0
        %v2734 = vadd.f32 0.0, %v2733
        %v2735 = vpop.f32.mrb[0].mxu0
        %v2736 = vpop.f32.mrb[0].mxu0
        %v2737 = vadd.f32 0.0, %v2736
        %v2738 = vpop.f32.mrb[0].mxu0
        %2739 = vmatprep.mubr.bf16.mxu0 0
        %2740 = vmatmul.mubr.bf16.gmra.mrb[0].mxu0 %v2617
        %v2741 = vpop.f32.mrb[0].mxu0
        %v2742 = vadd.f32 0.0, %v2741
        %v2743 = vpop.f32.mrb[0].mxu0
        %v2744 = vpop.f32.mrb[0].mxu0
        %v2745 = vadd.f32 0.0, %v2744
        %v2746 = vpop.f32.mrb[0].mxu0
        %2747 = vmatprep.mubr.bf16.mxu0 0
        %2748 = vmatmul.mubr.bf16.gmra.mrb[0].mxu0 %v2619
        %v2749 = vpop.f32.mrb[0].mxu0
        %v2750 = vadd.f32 0.0, %v2749
        %v2751 = vpop.f32.mrb[0].mxu0
        %v2752 = vpop.f32.mrb[0].mxu0
        %v2753 = vadd.f32 0.0, %v2752
        %v2754 = vpop.f32.mrb[0].mxu0
        %2755 = vmatprep.mubr.bf16.mxu0 0
        %2756 = vmatmul.mubr.bf16.gmra.mrb[0].mxu0 %v2621
        %v2757 = vpop.f32.mrb[0].mxu0
        %v2758 = vadd.f32 0.0, %v2757
        %v2759 = vpop.f32.mrb[0].mxu0
        %v2760 = vpop.f32.mrb[0].mxu0
        %v2761 = vadd.f32 0.0, %v2760
        %v2762 = vpop.f32.mrb[0].mxu0
        %2763 = vmatprep.mubr.bf16.mxu0 0
        %2764 = vmatmul.mubr.bf16.gmra.mrb[0].mxu0 %v2623
        %v2765 = vpop.f32.mrb[0].mxu0
        %v2766 = vadd.f32 0.0, %v2765
        %v2767 = vpop.f32.mrb[0].mxu0
        %v2768 = vpop.f32.mrb[0].mxu0
        %v2769 = vadd.f32 0.0, %v2768
        %v2770 = vpop.f32.mrb[0].mxu0
        %2771 = vmatprep.mubr.bf16.mxu0 0
        %2772 = vmatmul.mubr.bf16.gmra.mrb[0].mxu0 %v2625
        %v2773 = vpop.f32.mrb[0].mxu0
        %v2774 = vadd.f32 0.0, %v2773
        %v2775 = vpop.f32.mrb[0].mxu0
        %v2776 = vpop.f32.mrb[0].mxu0
        %v2777 = vadd.f32 0.0, %v2776
        %v2778 = vpop.f32.mrb[0].mxu0
        %2779 = vmatprep.mubr.bf16.mxu0 0
        %2780 = vmatmul.mubr.bf16.gmra.mrb[0].mxu0 %v2627
        %v2781 = vpop.f32.mrb[0].mxu0
        %v2782 = vadd.f32 0.0, %v2781
        %v2783 = vpop.f32.mrb[0].mxu0
        %v2784 = vpop.f32.mrb[0].mxu0
        %v2785 = vadd.f32 0.0, %v2784
        %v2786 = vpop.f32.mrb[0].mxu0
        %2787 = vmatprep.mubr.bf16.mxu0 0
        %2788 = vmatmul.mubr.bf16.gmra.mrb[0].mxu0 %v2629
        %v2789 = vpop.f32.mrb[0].mxu0
        %v2790 = vadd.f32 0.0, %v2789
        %v2791 = vpop.f32.mrb[0].mxu0
        %v2792 = vpop.f32.mrb[0].mxu0
        %v2793 = vadd.f32 0.0, %v2792
        %v2794 = vpop.f32.mrb[0].mxu0
        %2795 = vdwg.mxu0
        %v2797 = vsel %vm2598, %v2232, 0
        %v2800 = vsel %vm2598, %v2233, 0
        %v2803 = vsel %vm2598, %v2234, 0
        %v2806 = vsel %vm2598, %v2235, 0
        %v2809 = vsel %vm2598, %v2236, 0
        %v2812 = vsel %vm2598, %v2237, 0
        %v2815 = vsel %vm2598, %v2238, 0
        %v2818 = vsel %vm2598, %v2239, 0
        %v2821 = vsel %vm2598, %v2240, 0
        %v2824 = vsel %vm2598, %v2241, 0
        %v2827 = vsel %vm2598, %v2242, 0
        %v2830 = vsel %vm2598, %v2243, 0
        %v2833 = vsel %vm2598, %v2244, 0
        %v2836 = vsel %vm2598, %v2245, 0
        %v2839 = vsel %vm2598, %v2246, 0
        %v2842 = vsel %vm2598, %v2247, 0
        %v2845 = vsel %vm2631, %v2595, 0
        %2847 = vmatprep.subr.bf16.mxu0 0
        %2848 = vmatpush1.bf16.msra.mxu0 %v2845
        %2849 = vmatprep.subr.bf16.mxu0 0
        %2850 = vmatpush1.bf16.msra.mxu0 0
        %2851 = vmatprep.subr.bf16.mxu0 0
        %2852 = vmatpush1.bf16.msra.mxu0 0
        %2853 = vmatprep.subr.bf16.mxu0 0
        %2854 = vmatpush1.bf16.msra.mxu0 0
        %2855 = vmatprep.subr.bf16.mxu0 0
        %2856 = vmatpush1.bf16.msra.mxu0 0
        %2857 = vmatprep.subr.bf16.mxu0 0
        %2858 = vmatpush1.bf16.msra.mxu0 0
        %2859 = vmatprep.subr.bf16.mxu0 0
        %2860 = vmatpush1.bf16.msra.mxu0 0
        %2861 = vmatprep.subr.bf16.mxu0 0
        %2862 = vmatpush1.bf16.msra.mxu0 0
        %2863 = vmatprep.subr.bf16.mxu0 0
        %2864 = vmatpush1.bf16.msra.mxu0 0
        %2865 = vmatprep.subr.bf16.mxu0 0
        %2866 = vmatpush1.bf16.msra.mxu0 0
        %2867 = vmatprep.subr.bf16.mxu0 0
        %2868 = vmatpush1.bf16.msra.mxu0 0
        %2869 = vmatprep.subr.bf16.mxu0 0
        %2870 = vmatpush1.bf16.msra.mxu0 0
        %2871 = vmatprep.subr.bf16.mxu0 0
        %2872 = vmatpush1.bf16.msra.mxu0 0
        %2873 = vmatprep.subr.bf16.mxu0 0
        %2874 = vmatpush1.bf16.msra.mxu0 0
        %2875 = vmatprep.subr.bf16.mxu0 0
        %2876 = vmatpush1.bf16.msra.mxu0 0
        %2877 = vmatprep.subr.bf16.mxu0 0
        %2878 = vmatpush1.bf16.msra.mxu0 0
        %2879 = vmatprep.mubr.bf16.mxu0 0
        %2880 = vmatmul.mubr.bf16.gmra.mrb[0].mxu0 %v2797
        %v2881 = vpop.f32.mrb[0].mxu0
        %v2882 = vadd.f32 %v2670, %v2881
        %v2883 = vpop.f32.mrb[0].mxu0
        %v2884 = vpop.f32.mrb[0].mxu0
        %v2885 = vadd.f32 %v2673, %v2884
        %v2886 = vpop.f32.mrb[0].mxu0
        %2887 = vmatprep.mubr.bf16.mxu0 0
        %2888 = vmatmul.mubr.bf16.gmra.mrb[0].mxu0 %v2800
        %v2889 = vpop.f32.mrb[0].mxu0
        %v2890 = vadd.f32 %v2678, %v2889
        %v2891 = vpop.f32.mrb[0].mxu0
        %v2892 = vpop.f32.mrb[0].mxu0
        %v2893 = vadd.f32 %v2681, %v2892
        %v2894 = vpop.f32.mrb[0].mxu0
        %2895 = vmatprep.mubr.bf16.mxu0 0
        %2896 = vmatmul.mubr.bf16.gmra.mrb[0].mxu0 %v2803
        %v2897 = vpop.f32.mrb[0].mxu0
        %v2898 = vadd.f32 %v2686, %v2897
        %v2899 = vpop.f32.mrb[0].mxu0
        %v2900 = vpop.f32.mrb[0].mxu0
        %v2901 = vadd.f32 %v2689, %v2900
        %v2902 = vpop.f32.mrb[0].mxu0
        %2903 = vmatprep.mubr.bf16.mxu0 0
        %2904 = vmatmul.mubr.bf16.gmra.mrb[0].mxu0 %v2806
        %v2905 = vpop.f32.mrb[0].mxu0
        %v2906 = vadd.f32 %v2694, %v2905
        %v2907 = vpop.f32.mrb[0].mxu0
        %v2908 = vpop.f32.mrb[0].mxu0
        %v2909 = vadd.f32 %v2697, %v2908
        %v2910 = vpop.f32.mrb[0].mxu0
        %2911 = vmatprep.mubr.bf16.mxu0 0
        %2912 = vmatmul.mubr.bf16.gmra.mrb[0].mxu0 %v2809
        %v2913 = vpop.f32.mrb[0].mxu0
        %v2914 = vadd.f32 %v2702, %v2913
        %v2915 = vpop.f32.mrb[0].mxu0
        %v2916 = vpop.f32.mrb[0].mxu0
        %v2917 = vadd.f32 %v2705, %v2916
        %v2918 = vpop.f32.mrb[0].mxu0
        %2919 = vmatprep.mubr.bf16.mxu0 0
        %2920 = vmatmul.mubr.bf16.gmra.mrb[0].mxu0 %v2812
        %v2921 = vpop.f32.mrb[0].mxu0
        %v2922 = vadd.f32 %v2710, %v2921
        %v2923 = vpop.f32.mrb[0].mxu0
        %v2924 = vpop.f32.mrb[0].mxu0
        %v2925 = vadd.f32 %v2713, %v2924
        %v2926 = vpop.f32.mrb[0].mxu0
        %2927 = vmatprep.mubr.bf16.mxu0 0
        %2928 = vmatmul.mubr.bf16.gmra.mrb[0].mxu0 %v2815
        %v2929 = vpop.f32.mrb[0].mxu0
        %v2930 = vadd.f32 %v2718, %v2929
        %v2931 = vpop.f32.mrb[0].mxu0
        %v2932 = vpop.f32.mrb[0].mxu0
        %v2933 = vadd.f32 %v2721, %v2932
        %v2934 = vpop.f32.mrb[0].mxu0
        %2935 = vmatprep.mubr.bf16.mxu0 0
        %2936 = vmatmul.mubr.bf16.gmra.mrb[0].mxu0 %v2818
        %v2937 = vpop.f32.mrb[0].mxu0
        %v2938 = vadd.f32 %v2726, %v2937
        %v2939 = vpop.f32.mrb[0].mxu0
        %v2940 = vpop.f32.mrb[0].mxu0
        %v2941 = vadd.f32 %v2729, %v2940
        %v2942 = vpop.f32.mrb[0].mxu0
        %2943 = vmatprep.mubr.bf16.mxu0 0
        %2944 = vmatmul.mubr.bf16.gmra.mrb[0].mxu0 %v2821
        %v2945 = vpop.f32.mrb[0].mxu0
        %v2946 = vadd.f32 %v2734, %v2945
        %v2947 = vpop.f32.mrb[0].mxu0
        %v2948 = vpop.f32.mrb[0].mxu0
        %v2949 = vadd.f32 %v2737, %v2948
        %v2950 = vpop.f32.mrb[0].mxu0
        %2951 = vmatprep.mubr.bf16.mxu0 0
        %2952 = vmatmul.mubr.bf16.gmra.mrb[0].mxu0 %v2824
        %v2953 = vpop.f32.mrb[0].mxu0
        %v2954 = vadd.f32 %v2742, %v2953
        %v2955 = vpop.f32.mrb[0].mxu0
        %v2956 = vpop.f32.mrb[0].mxu0
        %v2957 = vadd.f32 %v2745, %v2956
        %v2958 = vpop.f32.mrb[0].mxu0
        %2959 = vmatprep.mubr.bf16.mxu0 0
        %2960 = vmatmul.mubr.bf16.gmra.mrb[0].mxu0 %v2827
        %v2961 = vpop.f32.mrb[0].mxu0
        %v2962 = vadd.f32 %v2750, %v2961
        %v2963 = vpop.f32.mrb[0].mxu0
        %v2964 = vpop.f32.mrb[0].mxu0
        %v2965 = vadd.f32 %v2753, %v2964
        %v2966 = vpop.f32.mrb[0].mxu0
        %2967 = vmatprep.mubr.bf16.mxu0 0
        %2968 = vmatmul.mubr.bf16.gmra.mrb[0].mxu0 %v2830
        %v2969 = vpop.f32.mrb[0].mxu0
        %v2970 = vadd.f32 %v2758, %v2969
        %v2971 = vpop.f32.mrb[0].mxu0
        %v2972 = vpop.f32.mrb[0].mxu0
        %v2973 = vadd.f32 %v2761, %v2972
        %v2974 = vpop.f32.mrb[0].mxu0
        %2975 = vmatprep.mubr.bf16.mxu0 0
        %2976 = vmatmul.mubr.bf16.gmra.mrb[0].mxu0 %v2833
        %v2977 = vpop.f32.mrb[0].mxu0
        %v2978 = vadd.f32 %v2766, %v2977
        %v2979 = vpop.f32.mrb[0].mxu0
        %v2980 = vpop.f32.mrb[0].mxu0
        %v2981 = vadd.f32 %v2769, %v2980
        %v2982 = vpop.f32.mrb[0].mxu0
        %2983 = vmatprep.mubr.bf16.mxu0 0
        %2984 = vmatmul.mubr.bf16.gmra.mrb[0].mxu0 %v2836
        %v2985 = vpop.f32.mrb[0].mxu0
        %v2986 = vadd.f32 %v2774, %v2985
        %v2987 = vpop.f32.mrb[0].mxu0
        %v2988 = vpop.f32.mrb[0].mxu0
        %v2989 = vadd.f32 %v2777, %v2988
        %v2990 = vpop.f32.mrb[0].mxu0
        %2991 = vmatprep.mubr.bf16.mxu0 0
        %2992 = vmatmul.mubr.bf16.gmra.mrb[0].mxu0 %v2839
        %v2993 = vpop.f32.mrb[0].mxu0
        %v2994 = vadd.f32 %v2782, %v2993
        %v2995 = vpop.f32.mrb[0].mxu0
        %v2996 = vpop.f32.mrb[0].mxu0
        %v2997 = vadd.f32 %v2785, %v2996
        %v2998 = vpop.f32.mrb[0].mxu0
        %2999 = vmatprep.mubr.bf16.mxu0 0
        %3000 = vmatmul.mubr.bf16.gmra.mrb[0].mxu0 %v2842
        %v3001 = vpop.f32.mrb[0].mxu0
        %v3002 = vadd.f32 %v2790, %v3001
        %v3003 = vpop.f32.mrb[0].mxu0
        %v3004 = vpop.f32.mrb[0].mxu0
        %v3005 = vadd.f32 %v2793, %v3004
        %v3006 = vpop.f32.mrb[0].mxu0
        %3007 = vdwg.mxu0
        %s3008 = scalar_lea.vmem %s4, 4
        %v3009 = vld [vmem:[%s3008] sm:$0x3]
        %v3011 = vsel %vm2598, %v2577, 0
        %v3014 = vsel %vm2598, %v2578, 0
        %v3017 = vsel %vm2598, %v2579, 0
        %v3020 = vsel %vm2598, %v2580, 0
        %v3023 = vsel %vm2598, %v2581, 0
        %v3026 = vsel %vm2598, %v2582, 0
        %v3029 = vsel %vm2598, %v2583, 0
        %v3032 = vsel %vm2598, %v2584, 0
        %v3035 = vsel %vm2598, %v2585, 0
        %v3038 = vsel %vm2598, %v2586, 0
        %v3041 = vsel %vm2598, %v2587, 0
        %v3044 = vsel %vm2598, %v2588, 0
        %v3047 = vsel %vm2598, %v2589, 0
        %v3050 = vsel %vm2598, %v2590, 0
        %v3053 = vsel %vm2598, %v2591, 0
        %v3056 = vsel %vm2598, %v2592, 0
        %v3059 = vsel %vm2631, %v3009, 0
        %3061 = vmatprep.subr.bf16.mxu0 0
        %3062 = vmatpush1.bf16.msra.mxu0 %v3059
        %3063 = vmatprep.subr.bf16.mxu0 0
        %3064 = vmatpush1.bf16.msra.mxu0 0
        %3065 = vmatprep.subr.bf16.mxu0 0
        %3066 = vmatpush1.bf16.msra.mxu0 0
        %3067 = vmatprep.subr.bf16.mxu0 0
        %3068 = vmatpush1.bf16.msra.mxu0 0
        %3069 = vmatprep.subr.bf16.mxu0 0
        %3070 = vmatpush1.bf16.msra.mxu0 0
        %3071 = vmatprep.subr.bf16.mxu0 0
        %3072 = vmatpush1.bf16.msra.mxu0 0
        %3073 = vmatprep.subr.bf16.mxu0 0
        %3074 = vmatpush1.bf16.msra.mxu0 0
        %3075 = vmatprep.subr.bf16.mxu0 0
        %3076 = vmatpush1.bf16.msra.mxu0 0
        %3077 = vmatprep.subr.bf16.mxu0 0
        %3078 = vmatpush1.bf16.msra.mxu0 0
        %3079 = vmatprep.subr.bf16.mxu0 0
        %3080 = vmatpush1.bf16.msra.mxu0 0
        %3081 = vmatprep.subr.bf16.mxu0 0
        %3082 = vmatpush1.bf16.msra.mxu0 0
        %3083 = vmatprep.subr.bf16.mxu0 0
        %3084 = vmatpush1.bf16.msra.mxu0 0
        %3085 = vmatprep.subr.bf16.mxu0 0
        %3086 = vmatpush1.bf16.msra.mxu0 0
        %3087 = vmatprep.subr.bf16.mxu0 0
        %3088 = vmatpush1.bf16.msra.mxu0 0
        %3089 = vmatprep.subr.bf16.mxu0 0
        %3090 = vmatpush1.bf16.msra.mxu0 0
        %3091 = vmatprep.subr.bf16.mxu0 0
        %3092 = vmatpush1.bf16.msra.mxu0 0
        %3093 = vmatprep.mubr.bf16.mxu0 0
        %3094 = vmatmul.mubr.bf16.gmra.mrb[0].mxu0 %v3011
        %v3095 = vpop.f32.mrb[0].mxu0
        %v3096 = vadd.f32 0.0, %v3095
        %v3097 = vpop.f32.mrb[0].mxu0
        %v3098 = vpop.f32.mrb[0].mxu0
        %v3099 = vadd.f32 0.0, %v3098
        %v3100 = vpop.f32.mrb[0].mxu0
        %3101 = vmatprep.mubr.bf16.mxu0 0
        %3102 = vmatmul.mubr.bf16.gmra.mrb[0].mxu0 %v3014
        %v3103 = vpop.f32.mrb[0].mxu0
        %v3104 = vadd.f32 0.0, %v3103
        %v3105 = vpop.f32.mrb[0].mxu0
        %v3106 = vpop.f32.mrb[0].mxu0
        %v3107 = vadd.f32 0.0, %v3106
        %v3108 = vpop.f32.mrb[0].mxu0
        %3109 = vmatprep.mubr.bf16.mxu0 0
        %3110 = vmatmul.mubr.bf16.gmra.mrb[0].mxu0 %v3017
        %v3111 = vpop.f32.mrb[0].mxu0
        %v3112 = vadd.f32 0.0, %v3111
        %v3113 = vpop.f32.mrb[0].mxu0
        %v3114 = vpop.f32.mrb[0].mxu0
        %v3115 = vadd.f32 0.0, %v3114
        %v3116 = vpop.f32.mrb[0].mxu0
        %3117 = vmatprep.mubr.bf16.mxu0 0
        %3118 = vmatmul.mubr.bf16.gmra.mrb[0].mxu0 %v3020
        %v3119 = vpop.f32.mrb[0].mxu0
        %v3120 = vadd.f32 0.0, %v3119
        %v3121 = vpop.f32.mrb[0].mxu0
        %v3122 = vpop.f32.mrb[0].mxu0
        %v3123 = vadd.f32 0.0, %v3122
        %v3124 = vpop.f32.mrb[0].mxu0
        %3125 = vmatprep.mubr.bf16.mxu0 0
        %3126 = vmatmul.mubr.bf16.gmra.mrb[0].mxu0 %v3023
        %v3127 = vpop.f32.mrb[0].mxu0
        %v3128 = vadd.f32 0.0, %v3127
        %v3129 = vpop.f32.mrb[0].mxu0
        %v3130 = vpop.f32.mrb[0].mxu0
        %v3131 = vadd.f32 0.0, %v3130
        %v3132 = vpop.f32.mrb[0].mxu0
        %3133 = vmatprep.mubr.bf16.mxu0 0
        %3134 = vmatmul.mubr.bf16.gmra.mrb[0].mxu0 %v3026
        %v3135 = vpop.f32.mrb[0].mxu0
        %v3136 = vadd.f32 0.0, %v3135
        %v3137 = vpop.f32.mrb[0].mxu0
        %v3138 = vpop.f32.mrb[0].mxu0
        %v3139 = vadd.f32 0.0, %v3138
        %v3140 = vpop.f32.mrb[0].mxu0
        %3141 = vmatprep.mubr.bf16.mxu0 0
        %3142 = vmatmul.mubr.bf16.gmra.mrb[0].mxu0 %v3029
        %v3143 = vpop.f32.mrb[0].mxu0
        %v3144 = vadd.f32 0.0, %v3143
        %v3145 = vpop.f32.mrb[0].mxu0
        %v3146 = vpop.f32.mrb[0].mxu0
        %v3147 = vadd.f32 0.0, %v3146
        %v3148 = vpop.f32.mrb[0].mxu0
        %3149 = vmatprep.mubr.bf16.mxu0 0
        %3150 = vmatmul.mubr.bf16.gmra.mrb[0].mxu0 %v3032
        %v3151 = vpop.f32.mrb[0].mxu0
        %v3152 = vadd.f32 0.0, %v3151
        %v3153 = vpop.f32.mrb[0].mxu0
        %v3154 = vpop.f32.mrb[0].mxu0
        %v3155 = vadd.f32 0.0, %v3154
        %v3156 = vpop.f32.mrb[0].mxu0
        %3157 = vmatprep.mubr.bf16.mxu0 0
        %3158 = vmatmul.mubr.bf16.gmra.mrb[0].mxu0 %v3035
        %v3159 = vpop.f32.mrb[0].mxu0
        %v3160 = vadd.f32 0.0, %v3159
        %v3161 = vpop.f32.mrb[0].mxu0
        %v3162 = vpop.f32.mrb[0].mxu0
        %v3163 = vadd.f32 0.0, %v3162
        %v3164 = vpop.f32.mrb[0].mxu0
        %3165 = vmatprep.mubr.bf16.mxu0 0
        %3166 = vmatmul.mubr.bf16.gmra.mrb[0].mxu0 %v3038
        %v3167 = vpop.f32.mrb[0].mxu0
        %v3168 = vadd.f32 0.0, %v3167
        %v3169 = vpop.f32.mrb[0].mxu0
        %v3170 = vpop.f32.mrb[0].mxu0
        %v3171 = vadd.f32 0.0, %v3170
        %v3172 = vpop.f32.mrb[0].mxu0
        %3173 = vmatprep.mubr.bf16.mxu0 0
        %3174 = vmatmul.mubr.bf16.gmra.mrb[0].mxu0 %v3041
        %v3175 = vpop.f32.mrb[0].mxu0
        %v3176 = vadd.f32 0.0, %v3175
        %v3177 = vpop.f32.mrb[0].mxu0
        %v3178 = vpop.f32.mrb[0].mxu0
        %v3179 = vadd.f32 0.0, %v3178
        %v3180 = vpop.f32.mrb[0].mxu0
        %3181 = vmatprep.mubr.bf16.mxu0 0
        %3182 = vmatmul.mubr.bf16.gmra.mrb[0].mxu0 %v3044
        %v3183 = vpop.f32.mrb[0].mxu0
        %v3184 = vadd.f32 0.0, %v3183
        %v3185 = vpop.f32.mrb[0].mxu0
        %v3186 = vpop.f32.mrb[0].mxu0
        %v3187 = vadd.f32 0.0, %v3186
        %v3188 = vpop.f32.mrb[0].mxu0
        %3189 = vmatprep.mubr.bf16.mxu0 0
        %3190 = vmatmul.mubr.bf16.gmra.mrb[0].mxu0 %v3047
        %v3191 = vpop.f32.mrb[0].mxu0
        %v3192 = vadd.f32 0.0, %v3191
        %v3193 = vpop.f32.mrb[0].mxu0
        %v3194 = vpop.f32.mrb[0].mxu0
        %v3195 = vadd.f32 0.0, %v3194
        %v3196 = vpop.f32.mrb[0].mxu0
        %3197 = vmatprep.mubr.bf16.mxu0 0
        %3198 = vmatmul.mubr.bf16.gmra.mrb[0].mxu0 %v3050
        %v3199 = vpop.f32.mrb[0].mxu0
        %v3200 = vadd.f32 0.0, %v3199
        %v3201 = vpop.f32.mrb[0].mxu0
        %v3202 = vpop.f32.mrb[0].mxu0
        %v3203 = vadd.f32 0.0, %v3202
        %v3204 = vpop.f32.mrb[0].mxu0
        %3205 = vmatprep.mubr.bf16.mxu0 0
        %3206 = vmatmul.mubr.bf16.gmra.mrb[0].mxu0 %v3053
        %v3207 = vpop.f32.mrb[0].mxu0
        %v3208 = vadd.f32 0.0, %v3207
        %v3209 = vpop.f32.mrb[0].mxu0
        %v3210 = vpop.f32.mrb[0].mxu0
        %v3211 = vadd.f32 0.0, %v3210
        %v3212 = vpop.f32.mrb[0].mxu0
        %3213 = vmatprep.mubr.bf16.mxu0 0
        %3214 = vmatmul.mubr.bf16.gmra.mrb[0].mxu0 %v3056
        %v3215 = vpop.f32.mrb[0].mxu0
        %v3216 = vadd.f32 0.0, %v3215
        %v3217 = vpop.f32.mrb[0].mxu0
        %v3218 = vpop.f32.mrb[0].mxu0
        %v3219 = vadd.f32 0.0, %v3218
        %v3220 = vpop.f32.mrb[0].mxu0
        %3221 = vdwg.mxu0
        %v3222 = vadd.f32 %v2882, %v3096
        %v3223 = vadd.f32 %v2885, %v3099
        %v3224 = vadd.f32 %v2890, %v3104
        %v3225 = vadd.f32 %v2893, %v3107
        %v3226 = vadd.f32 %v2898, %v3112
        %v3227 = vadd.f32 %v2901, %v3115
        %v3228 = vadd.f32 %v2906, %v3120
        %v3229 = vadd.f32 %v2909, %v3123
        %v3230 = vadd.f32 %v2914, %v3128
        %v3231 = vadd.f32 %v2917, %v3131
        %v3232 = vadd.f32 %v2922, %v3136
        %v3233 = vadd.f32 %v2925, %v3139
        %v3234 = vadd.f32 %v2930, %v3144
        %v3235 = vadd.f32 %v2933, %v3147
        %v3236 = vadd.f32 %v2938, %v3152
        %v3237 = vadd.f32 %v2941, %v3155
        %v3238 = vadd.f32 %v2946, %v3160
        %v3239 = vadd.f32 %v2949, %v3163
        %v3240 = vadd.f32 %v2954, %v3168
        %v3241 = vadd.f32 %v2957, %v3171
        %v3242 = vadd.f32 %v2962, %v3176
        %v3243 = vadd.f32 %v2965, %v3179
        %v3244 = vadd.f32 %v2970, %v3184
        %v3245 = vadd.f32 %v2973, %v3187
        %v3246 = vadd.f32 %v2978, %v3192
        %v3247 = vadd.f32 %v2981, %v3195
        %v3248 = vadd.f32 %v2986, %v3200
        %v3249 = vadd.f32 %v2989, %v3203
        %v3250 = vadd.f32 %v2994, %v3208
        %v3251 = vadd.f32 %v2997, %v3211
        %v3252 = vadd.f32 %v3002, %v3216
        %v3253 = vadd.f32 %v3005, %v3219
        %s3254 = scalar_lea.vmem %s4, 6
        %v3255 = vld [vmem:[%s3254] sm:$0x3]
        %v3257 = vsel %vm2598, %v2248, 0
        %v3260 = vsel %vm2631, %v3255, 0
        %3262 = vmatprep.subr.bf16.mxu0 0
        %3263 = vmatpush1.bf16.msra.mxu0 %v3260
        %3264 = vmatprep.subr.bf16.mxu0 0
        %3265 = vmatpush1.bf16.msra.mxu0 0
        %3266 = vmatprep.subr.bf16.mxu0 0
        %3267 = vmatpush1.bf16.msra.mxu0 0
        %3268 = vmatprep.subr.bf16.mxu0 0
        %3269 = vmatpush1.bf16.msra.mxu0 0
        %3270 = vmatprep.subr.bf16.mxu0 0
        %3271 = vmatpush1.bf16.msra.mxu0 0
        %3272 = vmatprep.subr.bf16.mxu0 0
        %3273 = vmatpush1.bf16.msra.mxu0 0
        %3274 = vmatprep.subr.bf16.mxu0 0
        %3275 = vmatpush1.bf16.msra.mxu0 0
        %3276 = vmatprep.subr.bf16.mxu0 0
        %3277 = vmatpush1.bf16.msra.mxu0 0
        %3278 = vmatprep.subr.bf16.mxu0 0
        %3279 = vmatpush1.bf16.msra.mxu0 0
        %3280 = vmatprep.subr.bf16.mxu0 0
        %3281 = vmatpush1.bf16.msra.mxu0 0
        %3282 = vmatprep.subr.bf16.mxu0 0
        %3283 = vmatpush1.bf16.msra.mxu0 0
        %3284 = vmatprep.subr.bf16.mxu0 0
        %3285 = vmatpush1.bf16.msra.mxu0 0
        %3286 = vmatprep.subr.bf16.mxu0 0
        %3287 = vmatpush1.bf16.msra.mxu0 0
        %3288 = vmatprep.subr.bf16.mxu0 0
        %3289 = vmatpush1.bf16.msra.mxu0 0
        %3290 = vmatprep.subr.bf16.mxu0 0
        %3291 = vmatpush1.bf16.msra.mxu0 0
        %3292 = vmatprep.subr.bf16.mxu0 0
        %3293 = vmatpush1.bf16.msra.mxu0 0
        %3294 = vmatprep.mubr.bf16.mxu0 0
        %3295 = vmatmul.mubr.bf16.gmra.mrb[0].mxu0 %v2800
        %v3296 = vpop.f32.mrb[0].mxu0
        %v3297 = vadd.f32 0.0, %v3296
        %v3298 = vpop.f32.mrb[0].mxu0
        %v3299 = vpop.f32.mrb[0].mxu0
        %v3300 = vadd.f32 0.0, %v3299
        %v3301 = vpop.f32.mrb[0].mxu0
        %3302 = vmatprep.mubr.bf16.mxu0 0
        %3303 = vmatmul.mubr.bf16.gmra.mrb[0].mxu0 %v2803
        %v3304 = vpop.f32.mrb[0].mxu0
        %v3305 = vadd.f32 0.0, %v3304
        %v3306 = vpop.f32.mrb[0].mxu0
        %v3307 = vpop.f32.mrb[0].mxu0
        %v3308 = vadd.f32 0.0, %v3307
        %v3309 = vpop.f32.mrb[0].mxu0
        %3310 = vmatprep.mubr.bf16.mxu0 0
        %3311 = vmatmul.mubr.bf16.gmra.mrb[0].mxu0 %v2806
        %v3312 = vpop.f32.mrb[0].mxu0
        %v3313 = vadd.f32 0.0, %v3312
        %v3314 = vpop.f32.mrb[0].mxu0
        %v3315 = vpop.f32.mrb[0].mxu0
        %v3316 = vadd.f32 0.0, %v3315
        %v3317 = vpop.f32.mrb[0].mxu0
        %3318 = vmatprep.mubr.bf16.mxu0 0
        %3319 = vmatmul.mubr.bf16.gmra.mrb[0].mxu0 %v2809
        %v3320 = vpop.f32.mrb[0].mxu0
        %v3321 = vadd.f32 0.0, %v3320
        %v3322 = vpop.f32.mrb[0].mxu0
        %v3323 = vpop.f32.mrb[0].mxu0
        %v3324 = vadd.f32 0.0, %v3323
        %v3325 = vpop.f32.mrb[0].mxu0
        %3326 = vmatprep.mubr.bf16.mxu0 0
        %3327 = vmatmul.mubr.bf16.gmra.mrb[0].mxu0 %v2812
        %v3328 = vpop.f32.mrb[0].mxu0
        %v3329 = vadd.f32 0.0, %v3328
        %v3330 = vpop.f32.mrb[0].mxu0
        %v3331 = vpop.f32.mrb[0].mxu0
        %v3332 = vadd.f32 0.0, %v3331
        %v3333 = vpop.f32.mrb[0].mxu0
        %3334 = vmatprep.mubr.bf16.mxu0 0
        %3335 = vmatmul.mubr.bf16.gmra.mrb[0].mxu0 %v2815
        %v3336 = vpop.f32.mrb[0].mxu0
        %v3337 = vadd.f32 0.0, %v3336
        %v3338 = vpop.f32.mrb[0].mxu0
        %v3339 = vpop.f32.mrb[0].mxu0
        %v3340 = vadd.f32 0.0, %v3339
        %v3341 = vpop.f32.mrb[0].mxu0
        %3342 = vmatprep.mubr.bf16.mxu0 0
        %3343 = vmatmul.mubr.bf16.gmra.mrb[0].mxu0 %v2818
        %v3344 = vpop.f32.mrb[0].mxu0
        %v3345 = vadd.f32 0.0, %v3344
        %v3346 = vpop.f32.mrb[0].mxu0
        %v3347 = vpop.f32.mrb[0].mxu0
        %v3348 = vadd.f32 0.0, %v3347
        %v3349 = vpop.f32.mrb[0].mxu0
        %3350 = vmatprep.mubr.bf16.mxu0 0
        %3351 = vmatmul.mubr.bf16.gmra.mrb[0].mxu0 %v2821
        %v3352 = vpop.f32.mrb[0].mxu0
        %v3353 = vadd.f32 0.0, %v3352
        %v3354 = vpop.f32.mrb[0].mxu0
        %v3355 = vpop.f32.mrb[0].mxu0
        %v3356 = vadd.f32 0.0, %v3355
        %v3357 = vpop.f32.mrb[0].mxu0
        %3358 = vmatprep.mubr.bf16.mxu0 0
        %3359 = vmatmul.mubr.bf16.gmra.mrb[0].mxu0 %v2824
        %v3360 = vpop.f32.mrb[0].mxu0
        %v3361 = vadd.f32 0.0, %v3360
        %v3362 = vpop.f32.mrb[0].mxu0
        %v3363 = vpop.f32.mrb[0].mxu0
        %v3364 = vadd.f32 0.0, %v3363
        %v3365 = vpop.f32.mrb[0].mxu0
        %3366 = vmatprep.mubr.bf16.mxu0 0
        %3367 = vmatmul.mubr.bf16.gmra.mrb[0].mxu0 %v2827
        %v3368 = vpop.f32.mrb[0].mxu0
        %v3369 = vadd.f32 0.0, %v3368
        %v3370 = vpop.f32.mrb[0].mxu0
        %v3371 = vpop.f32.mrb[0].mxu0
        %v3372 = vadd.f32 0.0, %v3371
        %v3373 = vpop.f32.mrb[0].mxu0
        %3374 = vmatprep.mubr.bf16.mxu0 0
        %3375 = vmatmul.mubr.bf16.gmra.mrb[0].mxu0 %v2830
        %v3376 = vpop.f32.mrb[0].mxu0
        %v3377 = vadd.f32 0.0, %v3376
        %v3378 = vpop.f32.mrb[0].mxu0
        %v3379 = vpop.f32.mrb[0].mxu0
        %v3380 = vadd.f32 0.0, %v3379
        %v3381 = vpop.f32.mrb[0].mxu0
        %3382 = vmatprep.mubr.bf16.mxu0 0
        %3383 = vmatmul.mubr.bf16.gmra.mrb[0].mxu0 %v2833
        %v3384 = vpop.f32.mrb[0].mxu0
        %v3385 = vadd.f32 0.0, %v3384
        %v3386 = vpop.f32.mrb[0].mxu0
        %v3387 = vpop.f32.mrb[0].mxu0
        %v3388 = vadd.f32 0.0, %v3387
        %v3389 = vpop.f32.mrb[0].mxu0
        %3390 = vmatprep.mubr.bf16.mxu0 0
        %3391 = vmatmul.mubr.bf16.gmra.mrb[0].mxu0 %v2836
        %v3392 = vpop.f32.mrb[0].mxu0
        %v3393 = vadd.f32 0.0, %v3392
        %v3394 = vpop.f32.mrb[0].mxu0
        %v3395 = vpop.f32.mrb[0].mxu0
        %v3396 = vadd.f32 0.0, %v3395
        %v3397 = vpop.f32.mrb[0].mxu0
        %3398 = vmatprep.mubr.bf16.mxu0 0
        %3399 = vmatmul.mubr.bf16.gmra.mrb[0].mxu0 %v2839
        %v3400 = vpop.f32.mrb[0].mxu0
        %v3401 = vadd.f32 0.0, %v3400
        %v3402 = vpop.f32.mrb[0].mxu0
        %v3403 = vpop.f32.mrb[0].mxu0
        %v3404 = vadd.f32 0.0, %v3403
        %v3405 = vpop.f32.mrb[0].mxu0
        %3406 = vmatprep.mubr.bf16.mxu0 0
        %3407 = vmatmul.mubr.bf16.gmra.mrb[0].mxu0 %v2842
        %v3408 = vpop.f32.mrb[0].mxu0
        %v3409 = vadd.f32 0.0, %v3408
        %v3410 = vpop.f32.mrb[0].mxu0
        %v3411 = vpop.f32.mrb[0].mxu0
        %v3412 = vadd.f32 0.0, %v3411
        %v3413 = vpop.f32.mrb[0].mxu0
        %3414 = vmatprep.mubr.bf16.mxu0 0
        %3415 = vmatmul.mubr.bf16.gmra.mrb[0].mxu0 %v3257
        %v3416 = vpop.f32.mrb[0].mxu0
        %v3417 = vadd.f32 0.0, %v3416
        %v3418 = vpop.f32.mrb[0].mxu0
        %v3419 = vpop.f32.mrb[0].mxu0
        %v3420 = vadd.f32 0.0, %v3419
        %v3421 = vpop.f32.mrb[0].mxu0
        %3422 = vdwg.mxu0
        %v3423 = vadd.f32 %v3222, %v3297
        %v3424 = vadd.f32 %v3223, %v3300
        %v3425 = vadd.f32 %v3224, %v3305
        %v3426 = vadd.f32 %v3225, %v3308
        %v3427 = vadd.f32 %v3226, %v3313
        %v3428 = vadd.f32 %v3227, %v3316
        %v3429 = vadd.f32 %v3228, %v3321
        %v3430 = vadd.f32 %v3229, %v3324
        %v3431 = vadd.f32 %v3230, %v3329
        %v3432 = vadd.f32 %v3231, %v3332
        %v3433 = vadd.f32 %v3232, %v3337
        %v3434 = vadd.f32 %v3233, %v3340
        %v3435 = vadd.f32 %v3234, %v3345
        %v3436 = vadd.f32 %v3235, %v3348
        %v3437 = vadd.f32 %v3236, %v3353
        %v3438 = vadd.f32 %v3237, %v3356
        %v3439 = vadd.f32 %v3238, %v3361
        %v3440 = vadd.f32 %v3239, %v3364
        %v3441 = vadd.f32 %v3240, %v3369
        %v3442 = vadd.f32 %v3241, %v3372
        %v3443 = vadd.f32 %v3242, %v3377
        %v3444 = vadd.f32 %v3243, %v3380
        %v3445 = vadd.f32 %v3244, %v3385
        %v3446 = vadd.f32 %v3245, %v3388
        %v3447 = vadd.f32 %v3246, %v3393
        %v3448 = vadd.f32 %v3247, %v3396
        %v3449 = vadd.f32 %v3248, %v3401
        %v3450 = vadd.f32 %v3249, %v3404
        %v3451 = vadd.f32 %v3250, %v3409
        %v3452 = vadd.f32 %v3251, %v3412
        %v3453 = vadd.f32 %v3252, %v3417
        %v3454 = vadd.f32 %v3253, %v3420
        %s3455 = scalar_lea.vmem %s4, 8
        %v3456 = vld [vmem:[%s3455] sm:$0x3]
        %v3457 = vsel %vm2598, %v1381, 0
        %v3460 = vsel %vm2631, %v3456, 0
        %3462 = vmatprep.subr.bf16.mxu0 0
        %3463 = vmatpush1.bf16.msra.mxu0 %v3460
        %3464 = vmatprep.subr.bf16.mxu0 0
        %3465 = vmatpush1.bf16.msra.mxu0 0
        %3466 = vmatprep.subr.bf16.mxu0 0
        %3467 = vmatpush1.bf16.msra.mxu0 0
        %3468 = vmatprep.subr.bf16.mxu0 0
        %3469 = vmatpush1.bf16.msra.mxu0 0
        %3470 = vmatprep.subr.bf16.mxu0 0
        %3471 = vmatpush1.bf16.msra.mxu0 0
        %3472 = vmatprep.subr.bf16.mxu0 0
        %3473 = vmatpush1.bf16.msra.mxu0 0
        %3474 = vmatprep.subr.bf16.mxu0 0
        %3475 = vmatpush1.bf16.msra.mxu0 0
        %3476 = vmatprep.subr.bf16.mxu0 0
        %3477 = vmatpush1.bf16.msra.mxu0 0
        %3478 = vmatprep.subr.bf16.mxu0 0
        %3479 = vmatpush1.bf16.msra.mxu0 0
        %3480 = vmatprep.subr.bf16.mxu0 0
        %3481 = vmatpush1.bf16.msra.mxu0 0
        %3482 = vmatprep.subr.bf16.mxu0 0
        %3483 = vmatpush1.bf16.msra.mxu0 0
        %3484 = vmatprep.subr.bf16.mxu0 0
        %3485 = vmatpush1.bf16.msra.mxu0 0
        %3486 = vmatprep.subr.bf16.mxu0 0
        %3487 = vmatpush1.bf16.msra.mxu0 0
        %3488 = vmatprep.subr.bf16.mxu0 0
        %3489 = vmatpush1.bf16.msra.mxu0 0
        %3490 = vmatprep.subr.bf16.mxu0 0
        %3491 = vmatpush1.bf16.msra.mxu0 0
        %3492 = vmatprep.subr.bf16.mxu0 0
        %3493 = vmatpush1.bf16.msra.mxu0 0
        %3494 = vmatprep.mubr.bf16.mxu0 0
        %3495 = vmatmul.mubr.bf16.gmra.mrb[0].mxu0 %v2601
        %v3496 = vpop.f32.mrb[0].mxu0
        %v3497 = vadd.f32 0.0, %v3496
        %v3498 = vpop.f32.mrb[0].mxu0
        %v3499 = vpop.f32.mrb[0].mxu0
        %v3500 = vadd.f32 0.0, %v3499
        %v3501 = vpop.f32.mrb[0].mxu0
        %3502 = vmatprep.mubr.bf16.mxu0 0
        %3503 = vmatmul.mubr.bf16.gmra.mrb[0].mxu0 %v2603
        %v3504 = vpop.f32.mrb[0].mxu0
        %v3505 = vadd.f32 0.0, %v3504
        %v3506 = vpop.f32.mrb[0].mxu0
        %v3507 = vpop.f32.mrb[0].mxu0
        %v3508 = vadd.f32 0.0, %v3507
        %v3509 = vpop.f32.mrb[0].mxu0
        %3510 = vmatprep.mubr.bf16.mxu0 0
        %3511 = vmatmul.mubr.bf16.gmra.mrb[0].mxu0 %v2605
        %v3512 = vpop.f32.mrb[0].mxu0
        %v3513 = vadd.f32 0.0, %v3512
        %v3514 = vpop.f32.mrb[0].mxu0
        %v3515 = vpop.f32.mrb[0].mxu0
        %v3516 = vadd.f32 0.0, %v3515
        %v3517 = vpop.f32.mrb[0].mxu0
        %3518 = vmatprep.mubr.bf16.mxu0 0
        %3519 = vmatmul.mubr.bf16.gmra.mrb[0].mxu0 %v2607
        %v3520 = vpop.f32.mrb[0].mxu0
        %v3521 = vadd.f32 0.0, %v3520
        %v3522 = vpop.f32.mrb[0].mxu0
        %v3523 = vpop.f32.mrb[0].mxu0
        %v3524 = vadd.f32 0.0, %v3523
        %v3525 = vpop.f32.mrb[0].mxu0
        %3526 = vmatprep.mubr.bf16.mxu0 0
        %3527 = vmatmul.mubr.bf16.gmra.mrb[0].mxu0 %v2609
        %v3528 = vpop.f32.mrb[0].mxu0
        %v3529 = vadd.f32 0.0, %v3528
        %v3530 = vpop.f32.mrb[0].mxu0
        %v3531 = vpop.f32.mrb[0].mxu0
        %v3532 = vadd.f32 0.0, %v3531
        %v3533 = vpop.f32.mrb[0].mxu0
        %3534 = vmatprep.mubr.bf16.mxu0 0
        %3535 = vmatmul.mubr.bf16.gmra.mrb[0].mxu0 %v2611
        %v3536 = vpop.f32.mrb[0].mxu0
        %v3537 = vadd.f32 0.0, %v3536
        %v3538 = vpop.f32.mrb[0].mxu0
        %v3539 = vpop.f32.mrb[0].mxu0
        %v3540 = vadd.f32 0.0, %v3539
        %v3541 = vpop.f32.mrb[0].mxu0
        %3542 = vmatprep.mubr.bf16.mxu0 0
        %3543 = vmatmul.mubr.bf16.gmra.mrb[0].mxu0 %v2613
        %v3544 = vpop.f32.mrb[0].mxu0
        %v3545 = vadd.f32 0.0, %v3544
        %v3546 = vpop.f32.mrb[0].mxu0
        %v3547 = vpop.f32.mrb[0].mxu0
        %v3548 = vadd.f32 0.0, %v3547
        %v3549 = vpop.f32.mrb[0].mxu0
        %3550 = vmatprep.mubr.bf16.mxu0 0
        %3551 = vmatmul.mubr.bf16.gmra.mrb[0].mxu0 %v2615
        %v3552 = vpop.f32.mrb[0].mxu0
        %v3553 = vadd.f32 0.0, %v3552
        %v3554 = vpop.f32.mrb[0].mxu0
        %v3555 = vpop.f32.mrb[0].mxu0
        %v3556 = vadd.f32 0.0, %v3555
        %v3557 = vpop.f32.mrb[0].mxu0
        %3558 = vmatprep.mubr.bf16.mxu0 0
        %3559 = vmatmul.mubr.bf16.gmra.mrb[0].mxu0 %v2617
        %v3560 = vpop.f32.mrb[0].mxu0
        %v3561 = vadd.f32 0.0, %v3560
        %v3562 = vpop.f32.mrb[0].mxu0
        %v3563 = vpop.f32.mrb[0].mxu0
        %v3564 = vadd.f32 0.0, %v3563
        %v3565 = vpop.f32.mrb[0].mxu0
        %3566 = vmatprep.mubr.bf16.mxu0 0
        %3567 = vmatmul.mubr.bf16.gmra.mrb[0].mxu0 %v2619
        %v3568 = vpop.f32.mrb[0].mxu0
        %v3569 = vadd.f32 0.0, %v3568
        %v3570 = vpop.f32.mrb[0].mxu0
        %v3571 = vpop.f32.mrb[0].mxu0
        %v3572 = vadd.f32 0.0, %v3571
        %v3573 = vpop.f32.mrb[0].mxu0
        %3574 = vmatprep.mubr.bf16.mxu0 0
        %3575 = vmatmul.mubr.bf16.gmra.mrb[0].mxu0 %v2621
        %v3576 = vpop.f32.mrb[0].mxu0
        %v3577 = vadd.f32 0.0, %v3576
        %v3578 = vpop.f32.mrb[0].mxu0
        %v3579 = vpop.f32.mrb[0].mxu0
        %v3580 = vadd.f32 0.0, %v3579
        %v3581 = vpop.f32.mrb[0].mxu0
        %3582 = vmatprep.mubr.bf16.mxu0 0
        %3583 = vmatmul.mubr.bf16.gmra.mrb[0].mxu0 %v2623
        %v3584 = vpop.f32.mrb[0].mxu0
        %v3585 = vadd.f32 0.0, %v3584
        %v3586 = vpop.f32.mrb[0].mxu0
        %v3587 = vpop.f32.mrb[0].mxu0
        %v3588 = vadd.f32 0.0, %v3587
        %v3589 = vpop.f32.mrb[0].mxu0
        %3590 = vmatprep.mubr.bf16.mxu0 0
        %3591 = vmatmul.mubr.bf16.gmra.mrb[0].mxu0 %v2625
        %v3592 = vpop.f32.mrb[0].mxu0
        %v3593 = vadd.f32 0.0, %v3592
        %v3594 = vpop.f32.mrb[0].mxu0
        %v3595 = vpop.f32.mrb[0].mxu0
        %v3596 = vadd.f32 0.0, %v3595
        %v3597 = vpop.f32.mrb[0].mxu0
        %3598 = vmatprep.mubr.bf16.mxu0 0
        %3599 = vmatmul.mubr.bf16.gmra.mrb[0].mxu0 %v2627
        %v3600 = vpop.f32.mrb[0].mxu0
        %v3601 = vadd.f32 0.0, %v3600
        %v3602 = vpop.f32.mrb[0].mxu0
        %v3603 = vpop.f32.mrb[0].mxu0
        %v3604 = vadd.f32 0.0, %v3603
        %v3605 = vpop.f32.mrb[0].mxu0
        %3606 = vmatprep.mubr.bf16.mxu0 0
        %3607 = vmatmul.mubr.bf16.gmra.mrb[0].mxu0 %v2629
        %v3608 = vpop.f32.mrb[0].mxu0
        %v3609 = vadd.f32 0.0, %v3608
        %v3610 = vpop.f32.mrb[0].mxu0
        %v3611 = vpop.f32.mrb[0].mxu0
        %v3612 = vadd.f32 0.0, %v3611
        %v3613 = vpop.f32.mrb[0].mxu0
        %3614 = vmatprep.mubr.bf16.mxu0 0
        %3615 = vmatmul.mubr.bf16.gmra.mrb[0].mxu0 %v3457
        %v3616 = vpop.f32.mrb[0].mxu0
        %v3617 = vadd.f32 0.0, %v3616
        %v3618 = vpop.f32.mrb[0].mxu0
        %v3619 = vpop.f32.mrb[0].mxu0
        %v3620 = vadd.f32 0.0, %v3619
        %v3621 = vpop.f32.mrb[0].mxu0
        %3622 = vdwg.mxu0
        %v3623 = vadd.f32 %v3423, %v3497
        %v3624 = vadd.f32 %v3424, %v3500
        %v3625 = vadd.f32 %v3425, %v3505
        %v3626 = vadd.f32 %v3426, %v3508
        %v3627 = vadd.f32 %v3427, %v3513
        %v3628 = vadd.f32 %v3428, %v3516
        %v3629 = vadd.f32 %v3429, %v3521
        %v3630 = vadd.f32 %v3430, %v3524
        %v3631 = vadd.f32 %v3431, %v3529
        %v3632 = vadd.f32 %v3432, %v3532
        %v3633 = vadd.f32 %v3433, %v3537
        %v3634 = vadd.f32 %v3434, %v3540
        %v3635 = vadd.f32 %v3435, %v3545
        %v3636 = vadd.f32 %v3436, %v3548
        %v3637 = vadd.f32 %v3437, %v3553
        %v3638 = vadd.f32 %v3438, %v3556
        %v3639 = vadd.f32 %v3439, %v3561
        %v3640 = vadd.f32 %v3440, %v3564
        %v3641 = vadd.f32 %v3441, %v3569
        %v3642 = vadd.f32 %v3442, %v3572
        %v3643 = vadd.f32 %v3443, %v3577
        %v3644 = vadd.f32 %v3444, %v3580
        %v3645 = vadd.f32 %v3445, %v3585
        %v3646 = vadd.f32 %v3446, %v3588
        %v3647 = vadd.f32 %v3447, %v3593
        %v3648 = vadd.f32 %v3448, %v3596
        %v3649 = vadd.f32 %v3449, %v3601
        %v3650 = vadd.f32 %v3450, %v3604
        %v3651 = vadd.f32 %v3451, %v3609
        %v3652 = vadd.f32 %v3452, %v3612
        %v3653 = vadd.f32 %v3453, %v3617
        %v3654 = vadd.f32 %v3454, %v3620
        %s3655 = scalar_lea.vmem %s4, 10
        %v3656 = vld [vmem:[%s3655] sm:$0x3]
        %v3658 = vsel %vm2598, %v2593, 0
        %v3661 = vsel %vm2631, %v3656, 0
        %3663 = vmatprep.subr.bf16.mxu0 0
        %3664 = vmatpush1.bf16.msra.mxu0 %v3661
        %3665 = vmatprep.subr.bf16.mxu0 0
        %3666 = vmatpush1.bf16.msra.mxu0 0
        %3667 = vmatprep.subr.bf16.mxu0 0
        %3668 = vmatpush1.bf16.msra.mxu0 0
        %3669 = vmatprep.subr.bf16.mxu0 0
        %3670 = vmatpush1.bf16.msra.mxu0 0
        %3671 = vmatprep.subr.bf16.mxu0 0
        %3672 = vmatpush1.bf16.msra.mxu0 0
        %3673 = vmatprep.subr.bf16.mxu0 0
        %3674 = vmatpush1.bf16.msra.mxu0 0
        %3675 = vmatprep.subr.bf16.mxu0 0
        %3676 = vmatpush1.bf16.msra.mxu0 0
        %3677 = vmatprep.subr.bf16.mxu0 0
        %3678 = vmatpush1.bf16.msra.mxu0 0
        %3679 = vmatprep.subr.bf16.mxu0 0
        %3680 = vmatpush1.bf16.msra.mxu0 0
        %3681 = vmatprep.subr.bf16.mxu0 0
        %3682 = vmatpush1.bf16.msra.mxu0 0
        %3683 = vmatprep.subr.bf16.mxu0 0
        %3684 = vmatpush1.bf16.msra.mxu0 0
        %3685 = vmatprep.subr.bf16.mxu0 0
        %3686 = vmatpush1.bf16.msra.mxu0 0
        %3687 = vmatprep.subr.bf16.mxu0 0
        %3688 = vmatpush1.bf16.msra.mxu0 0
        %3689 = vmatprep.subr.bf16.mxu0 0
        %3690 = vmatpush1.bf16.msra.mxu0 0
        %3691 = vmatprep.subr.bf16.mxu0 0
        %3692 = vmatpush1.bf16.msra.mxu0 0
        %3693 = vmatprep.subr.bf16.mxu0 0
        %3694 = vmatpush1.bf16.msra.mxu0 0
        %3695 = vmatprep.mubr.bf16.mxu0 0
        %3696 = vmatmul.mubr.bf16.gmra.mrb[0].mxu0 %v3014
        %v3697 = vpop.f32.mrb[0].mxu0
        %v3698 = vadd.f32 0.0, %v3697
        %v3699 = vpop.f32.mrb[0].mxu0
        %v3700 = vpop.f32.mrb[0].mxu0
        %v3701 = vadd.f32 0.0, %v3700
        %v3702 = vpop.f32.mrb[0].mxu0
        %3703 = vmatprep.mubr.bf16.mxu0 0
        %3704 = vmatmul.mubr.bf16.gmra.mrb[0].mxu0 %v3017
        %v3705 = vpop.f32.mrb[0].mxu0
        %v3706 = vadd.f32 0.0, %v3705
        %v3707 = vpop.f32.mrb[0].mxu0
        %v3708 = vpop.f32.mrb[0].mxu0
        %v3709 = vadd.f32 0.0, %v3708
        %v3710 = vpop.f32.mrb[0].mxu0
        %3711 = vmatprep.mubr.bf16.mxu0 0
        %3712 = vmatmul.mubr.bf16.gmra.mrb[0].mxu0 %v3020
        %v3713 = vpop.f32.mrb[0].mxu0
        %v3714 = vadd.f32 0.0, %v3713
        %v3715 = vpop.f32.mrb[0].mxu0
        %v3716 = vpop.f32.mrb[0].mxu0
        %v3717 = vadd.f32 0.0, %v3716
        %v3718 = vpop.f32.mrb[0].mxu0
        %3719 = vmatprep.mubr.bf16.mxu0 0
        %3720 = vmatmul.mubr.bf16.gmra.mrb[0].mxu0 %v3023
        %v3721 = vpop.f32.mrb[0].mxu0
        %v3722 = vadd.f32 0.0, %v3721
        %v3723 = vpop.f32.mrb[0].mxu0
        %v3724 = vpop.f32.mrb[0].mxu0
        %v3725 = vadd.f32 0.0, %v3724
        %v3726 = vpop.f32.mrb[0].mxu0
        %3727 = vmatprep.mubr.bf16.mxu0 0
        %3728 = vmatmul.mubr.bf16.gmra.mrb[0].mxu0 %v3026
        %v3729 = vpop.f32.mrb[0].mxu0
        %v3730 = vadd.f32 0.0, %v3729
        %v3731 = vpop.f32.mrb[0].mxu0
        %v3732 = vpop.f32.mrb[0].mxu0
        %v3733 = vadd.f32 0.0, %v3732
        %v3734 = vpop.f32.mrb[0].mxu0
        %3735 = vmatprep.mubr.bf16.mxu0 0
        %3736 = vmatmul.mubr.bf16.gmra.mrb[0].mxu0 %v3029
        %v3737 = vpop.f32.mrb[0].mxu0
        %v3738 = vadd.f32 0.0, %v3737
        %v3739 = vpop.f32.mrb[0].mxu0
        %v3740 = vpop.f32.mrb[0].mxu0
        %v3741 = vadd.f32 0.0, %v3740
        %v3742 = vpop.f32.mrb[0].mxu0
        %3743 = vmatprep.mubr.bf16.mxu0 0
        %3744 = vmatmul.mubr.bf16.gmra.mrb[0].mxu0 %v3032
        %v3745 = vpop.f32.mrb[0].mxu0
        %v3746 = vadd.f32 0.0, %v3745
        %v3747 = vpop.f32.mrb[0].mxu0
        %v3748 = vpop.f32.mrb[0].mxu0
        %v3749 = vadd.f32 0.0, %v3748
        %v3750 = vpop.f32.mrb[0].mxu0
        %3751 = vmatprep.mubr.bf16.mxu0 0
        %3752 = vmatmul.mubr.bf16.gmra.mrb[0].mxu0 %v3035
        %v3753 = vpop.f32.mrb[0].mxu0
        %v3754 = vadd.f32 0.0, %v3753
        %v3755 = vpop.f32.mrb[0].mxu0
        %v3756 = vpop.f32.mrb[0].mxu0
        %v3757 = vadd.f32 0.0, %v3756
        %v3758 = vpop.f32.mrb[0].mxu0
        %3759 = vmatprep.mubr.bf16.mxu0 0
        %3760 = vmatmul.mubr.bf16.gmra.mrb[0].mxu0 %v3038
        %v3761 = vpop.f32.mrb[0].mxu0
        %v3762 = vadd.f32 0.0, %v3761
        %v3763 = vpop.f32.mrb[0].mxu0
        %v3764 = vpop.f32.mrb[0].mxu0
        %v3765 = vadd.f32 0.0, %v3764
        %v3766 = vpop.f32.mrb[0].mxu0
        %3767 = vmatprep.mubr.bf16.mxu0 0
        %3768 = vmatmul.mubr.bf16.gmra.mrb[0].mxu0 %v3041
        %v3769 = vpop.f32.mrb[0].mxu0
        %v3770 = vadd.f32 0.0, %v3769
        %v3771 = vpop.f32.mrb[0].mxu0
        %v3772 = vpop.f32.mrb[0].mxu0
        %v3773 = vadd.f32 0.0, %v3772
        %v3774 = vpop.f32.mrb[0].mxu0
        %3775 = vmatprep.mubr.bf16.mxu0 0
        %3776 = vmatmul.mubr.bf16.gmra.mrb[0].mxu0 %v3044
        %v3777 = vpop.f32.mrb[0].mxu0
        %v3778 = vadd.f32 0.0, %v3777
        %v3779 = vpop.f32.mrb[0].mxu0
        %v3780 = vpop.f32.mrb[0].mxu0
        %v3781 = vadd.f32 0.0, %v3780
        %v3782 = vpop.f32.mrb[0].mxu0
        %3783 = vmatprep.mubr.bf16.mxu0 0
        %3784 = vmatmul.mubr.bf16.gmra.mrb[0].mxu0 %v3047
        %v3785 = vpop.f32.mrb[0].mxu0
        %v3786 = vadd.f32 0.0, %v3785
        %v3787 = vpop.f32.mrb[0].mxu0
        %v3788 = vpop.f32.mrb[0].mxu0
        %v3789 = vadd.f32 0.0, %v3788
        %v3790 = vpop.f32.mrb[0].mxu0
        %3791 = vmatprep.mubr.bf16.mxu0 0
        %3792 = vmatmul.mubr.bf16.gmra.mrb[0].mxu0 %v3050
        %v3793 = vpop.f32.mrb[0].mxu0
        %v3794 = vadd.f32 0.0, %v3793
        %v3795 = vpop.f32.mrb[0].mxu0
        %v3796 = vpop.f32.mrb[0].mxu0
        %v3797 = vadd.f32 0.0, %v3796
        %v3798 = vpop.f32.mrb[0].mxu0
        %3799 = vmatprep.mubr.bf16.mxu0 0
        %3800 = vmatmul.mubr.bf16.gmra.mrb[0].mxu0 %v3053
        %v3801 = vpop.f32.mrb[0].mxu0
        %v3802 = vadd.f32 0.0, %v3801
        %v3803 = vpop.f32.mrb[0].mxu0
        %v3804 = vpop.f32.mrb[0].mxu0
        %v3805 = vadd.f32 0.0, %v3804
        %v3806 = vpop.f32.mrb[0].mxu0
        %3807 = vmatprep.mubr.bf16.mxu0 0
        %3808 = vmatmul.mubr.bf16.gmra.mrb[0].mxu0 %v3056
        %v3809 = vpop.f32.mrb[0].mxu0
        %v3810 = vadd.f32 0.0, %v3809
        %v3811 = vpop.f32.mrb[0].mxu0
        %v3812 = vpop.f32.mrb[0].mxu0
        %v3813 = vadd.f32 0.0, %v3812
        %v3814 = vpop.f32.mrb[0].mxu0
        %3815 = vmatprep.mubr.bf16.mxu0 0
        %3816 = vmatmul.mubr.bf16.gmra.mrb[0].mxu0 %v3658
        %v3817 = vpop.f32.mrb[0].mxu0
        %v3818 = vadd.f32 0.0, %v3817
        %v3819 = vpop.f32.mrb[0].mxu0
        %v3820 = vpop.f32.mrb[0].mxu0
        %v3821 = vadd.f32 0.0, %v3820
        %v3822 = vpop.f32.mrb[0].mxu0
        %3823 = vdwg.mxu0
        %v3824 = vadd.f32 %v3623, %v3698
        %v3825 = vadd.f32 %v3624, %v3701
        %v3826 = vadd.f32 %v3625, %v3706
        %v3827 = vadd.f32 %v3626, %v3709
        %v3828 = vadd.f32 %v3627, %v3714
        %v3829 = vadd.f32 %v3628, %v3717
        %v3830 = vadd.f32 %v3629, %v3722
        %v3831 = vadd.f32 %v3630, %v3725
        %v3832 = vadd.f32 %v3631, %v3730
        %v3833 = vadd.f32 %v3632, %v3733
        %v3834 = vadd.f32 %v3633, %v3738
        %v3835 = vadd.f32 %v3634, %v3741
        %v3836 = vadd.f32 %v3635, %v3746
        %v3837 = vadd.f32 %v3636, %v3749
        %v3838 = vadd.f32 %v3637, %v3754
        %v3839 = vadd.f32 %v3638, %v3757
        %v3840 = vadd.f32 %v3639, %v3762
        %v3841 = vadd.f32 %v3640, %v3765
        %v3842 = vadd.f32 %v3641, %v3770
        %v3843 = vadd.f32 %v3642, %v3773
        %v3844 = vadd.f32 %v3643, %v3778
        %v3845 = vadd.f32 %v3644, %v3781
        %v3846 = vadd.f32 %v3645, %v3786
        %v3847 = vadd.f32 %v3646, %v3789
        %v3848 = vadd.f32 %v3647, %v3794
        %v3849 = vadd.f32 %v3648, %v3797
        %v3850 = vadd.f32 %v3649, %v3802
        %v3851 = vadd.f32 %v3650, %v3805
        %v3852 = vadd.f32 %v3651, %v3810
        %v3853 = vadd.f32 %v3652, %v3813
        %v3854 = vadd.f32 %v3653, %v3818
        %v3855 = vadd.f32 %v3654, %v3821
        %s3856 = scalar_lea.vmem %s4, 12
        %v3857 = vld [vmem:[%s3856] sm:$0x3]
        %v3859 = vsel %vm2598, %v2249, 0
        %v3862 = vsel %vm2631, %v3857, 0
        %3864 = vmatprep.subr.bf16.mxu0 0
        %3865 = vmatpush1.bf16.msra.mxu0 %v3862
        %3866 = vmatprep.subr.bf16.mxu0 0
        %3867 = vmatpush1.bf16.msra.mxu0 0
        %3868 = vmatprep.subr.bf16.mxu0 0
        %3869 = vmatpush1.bf16.msra.mxu0 0
        %3870 = vmatprep.subr.bf16.mxu0 0
        %3871 = vmatpush1.bf16.msra.mxu0 0
        %3872 = vmatprep.subr.bf16.mxu0 0
        %3873 = vmatpush1.bf16.msra.mxu0 0
        %3874 = vmatprep.subr.bf16.mxu0 0
        %3875 = vmatpush1.bf16.msra.mxu0 0
        %3876 = vmatprep.subr.bf16.mxu0 0
        %3877 = vmatpush1.bf16.msra.mxu0 0
        %3878 = vmatprep.subr.bf16.mxu0 0
        %3879 = vmatpush1.bf16.msra.mxu0 0
        %3880 = vmatprep.subr.bf16.mxu0 0
        %3881 = vmatpush1.bf16.msra.mxu0 0
        %3882 = vmatprep.subr.bf16.mxu0 0
        %3883 = vmatpush1.bf16.msra.mxu0 0
        %3884 = vmatprep.subr.bf16.mxu0 0
        %3885 = vmatpush1.bf16.msra.mxu0 0
        %3886 = vmatprep.subr.bf16.mxu0 0
        %3887 = vmatpush1.bf16.msra.mxu0 0
        %3888 = vmatprep.subr.bf16.mxu0 0
        %3889 = vmatpush1.bf16.msra.mxu0 0
        %3890 = vmatprep.subr.bf16.mxu0 0
        %3891 = vmatpush1.bf16.msra.mxu0 0
        %3892 = vmatprep.subr.bf16.mxu0 0
        %3893 = vmatpush1.bf16.msra.mxu0 0
        %3894 = vmatprep.subr.bf16.mxu0 0
        %3895 = vmatpush1.bf16.msra.mxu0 0
        %3896 = vmatprep.mubr.bf16.mxu0 0
        %3897 = vmatmul.mubr.bf16.gmra.mrb[0].mxu0 %v2803
        %v3898 = vpop.f32.mrb[0].mxu0
        %v3899 = vadd.f32 0.0, %v3898
        %v3900 = vpop.f32.mrb[0].mxu0
        %v3901 = vpop.f32.mrb[0].mxu0
        %v3902 = vadd.f32 0.0, %v3901
        %v3903 = vpop.f32.mrb[0].mxu0
        %3904 = vmatprep.mubr.bf16.mxu0 0
        %3905 = vmatmul.mubr.bf16.gmra.mrb[0].mxu0 %v2806
        %v3906 = vpop.f32.mrb[0].mxu0
        %v3907 = vadd.f32 0.0, %v3906
        %v3908 = vpop.f32.mrb[0].mxu0
        %v3909 = vpop.f32.mrb[0].mxu0
        %v3910 = vadd.f32 0.0, %v3909
        %v3911 = vpop.f32.mrb[0].mxu0
        %3912 = vmatprep.mubr.bf16.mxu0 0
        %3913 = vmatmul.mubr.bf16.gmra.mrb[0].mxu0 %v2809
        %v3914 = vpop.f32.mrb[0].mxu0
        %v3915 = vadd.f32 0.0, %v3914
        %v3916 = vpop.f32.mrb[0].mxu0
        %v3917 = vpop.f32.mrb[0].mxu0
        %v3918 = vadd.f32 0.0, %v3917
        %v3919 = vpop.f32.mrb[0].mxu0
        %3920 = vmatprep.mubr.bf16.mxu0 0
        %3921 = vmatmul.mubr.bf16.gmra.mrb[0].mxu0 %v2812
        %v3922 = vpop.f32.mrb[0].mxu0
        %v3923 = vadd.f32 0.0, %v3922
        %v3924 = vpop.f32.mrb[0].mxu0
        %v3925 = vpop.f32.mrb[0].mxu0
        %v3926 = vadd.f32 0.0, %v3925
        %v3927 = vpop.f32.mrb[0].mxu0
        %3928 = vmatprep.mubr.bf16.mxu0 0
        %3929 = vmatmul.mubr.bf16.gmra.mrb[0].mxu0 %v2815
        %v3930 = vpop.f32.mrb[0].mxu0
        %v3931 = vadd.f32 0.0, %v3930
        %v3932 = vpop.f32.mrb[0].mxu0
        %v3933 = vpop.f32.mrb[0].mxu0
        %v3934 = vadd.f32 0.0, %v3933
        %v3935 = vpop.f32.mrb[0].mxu0
        %3936 = vmatprep.mubr.bf16.mxu0 0
        %3937 = vmatmul.mubr.bf16.gmra.mrb[0].mxu0 %v2818
        %v3938 = vpop.f32.mrb[0].mxu0
        %v3939 = vadd.f32 0.0, %v3938
        %v3940 = vpop.f32.mrb[0].mxu0
        %v3941 = vpop.f32.mrb[0].mxu0
        %v3942 = vadd.f32 0.0, %v3941
        %v3943 = vpop.f32.mrb[0].mxu0
        %3944 = vmatprep.mubr.bf16.mxu0 0
        %3945 = vmatmul.mubr.bf16.gmra.mrb[0].mxu0 %v2821
        %v3946 = vpop.f32.mrb[0].mxu0
        %v3947 = vadd.f32 0.0, %v3946
        %v3948 = vpop.f32.mrb[0].mxu0
        %v3949 = vpop.f32.mrb[0].mxu0
        %v3950 = vadd.f32 0.0, %v3949
        %v3951 = vpop.f32.mrb[0].mxu0
        %3952 = vmatprep.mubr.bf16.mxu0 0
        %3953 = vmatmul.mubr.bf16.gmra.mrb[0].mxu0 %v2824
        %v3954 = vpop.f32.mrb[0].mxu0
        %v3955 = vadd.f32 0.0, %v3954
        %v3956 = vpop.f32.mrb[0].mxu0
        %v3957 = vpop.f32.mrb[0].mxu0
        %v3958 = vadd.f32 0.0, %v3957
        %v3959 = vpop.f32.mrb[0].mxu0
        %3960 = vmatprep.mubr.bf16.mxu0 0
        %3961 = vmatmul.mubr.bf16.gmra.mrb[0].mxu0 %v2827
        %v3962 = vpop.f32.mrb[0].mxu0
        %v3963 = vadd.f32 0.0, %v3962
        %v3964 = vpop.f32.mrb[0].mxu0
        %v3965 = vpop.f32.mrb[0].mxu0
        %v3966 = vadd.f32 0.0, %v3965
        %v3967 = vpop.f32.mrb[0].mxu0
        %3968 = vmatprep.mubr.bf16.mxu0 0
        %3969 = vmatmul.mubr.bf16.gmra.mrb[0].mxu0 %v2830
        %v3970 = vpop.f32.mrb[0].mxu0
        %v3971 = vadd.f32 0.0, %v3970
        %v3972 = vpop.f32.mrb[0].mxu0
        %v3973 = vpop.f32.mrb[0].mxu0
        %v3974 = vadd.f32 0.0, %v3973
        %v3975 = vpop.f32.mrb[0].mxu0
        %3976 = vmatprep.mubr.bf16.mxu0 0
        %3977 = vmatmul.mubr.bf16.gmra.mrb[0].mxu0 %v2833
        %v3978 = vpop.f32.mrb[0].mxu0
        %v3979 = vadd.f32 0.0, %v3978
        %v3980 = vpop.f32.mrb[0].mxu0
        %v3981 = vpop.f32.mrb[0].mxu0
        %v3982 = vadd.f32 0.0, %v3981
        %v3983 = vpop.f32.mrb[0].mxu0
        %3984 = vmatprep.mubr.bf16.mxu0 0
        %3985 = vmatmul.mubr.bf16.gmra.mrb[0].mxu0 %v2836
        %v3986 = vpop.f32.mrb[0].mxu0
        %v3987 = vadd.f32 0.0, %v3986
        %v3988 = vpop.f32.mrb[0].mxu0
        %v3989 = vpop.f32.mrb[0].mxu0
        %v3990 = vadd.f32 0.0, %v3989
        %v3991 = vpop.f32.mrb[0].mxu0
        %3992 = vmatprep.mubr.bf16.mxu0 0
        %3993 = vmatmul.mubr.bf16.gmra.mrb[0].mxu0 %v2839
        %v3994 = vpop.f32.mrb[0].mxu0
        %v3995 = vadd.f32 0.0, %v3994
        %v3996 = vpop.f32.mrb[0].mxu0
        %v3997 = vpop.f32.mrb[0].mxu0
        %v3998 = vadd.f32 0.0, %v3997
        %v3999 = vpop.f32.mrb[0].mxu0
        %4000 = vmatprep.mubr.bf16.mxu0 0
        %4001 = vmatmul.mubr.bf16.gmra.mrb[0].mxu0 %v2842
        %v4002 = vpop.f32.mrb[0].mxu0
        %v4003 = vadd.f32 0.0, %v4002
        %v4004 = vpop.f32.mrb[0].mxu0
        %v4005 = vpop.f32.mrb[0].mxu0
        %v4006 = vadd.f32 0.0, %v4005
        %v4007 = vpop.f32.mrb[0].mxu0
        %4008 = vmatprep.mubr.bf16.mxu0 0
        %4009 = vmatmul.mubr.bf16.gmra.mrb[0].mxu0 %v3257
        %v4010 = vpop.f32.mrb[0].mxu0
        %v4011 = vadd.f32 0.0, %v4010
        %v4012 = vpop.f32.mrb[0].mxu0
        %v4013 = vpop.f32.mrb[0].mxu0
        %v4014 = vadd.f32 0.0, %v4013
        %v4015 = vpop.f32.mrb[0].mxu0
        %4016 = vmatprep.mubr.bf16.mxu0 0
        %4017 = vmatmul.mubr.bf16.gmra.mrb[0].mxu0 %v3859
        %v4018 = vpop.f32.mrb[0].mxu0
        %v4019 = vadd.f32 0.0, %v4018
        %v4020 = vpop.f32.mrb[0].mxu0
        %v4021 = vpop.f32.mrb[0].mxu0
        %v4022 = vadd.f32 0.0, %v4021
        %v4023 = vpop.f32.mrb[0].mxu0
        %4024 = vdwg.mxu0
        %v4025 = vadd.f32 %v3824, %v3899
        %v4026 = vadd.f32 %v3825, %v3902
        %v4027 = vadd.f32 %v3826, %v3907
        %v4028 = vadd.f32 %v3827, %v3910
        %v4029 = vadd.f32 %v3828, %v3915
        %v4030 = vadd.f32 %v3829, %v3918
        %v4031 = vadd.f32 %v3830, %v3923
        %v4032 = vadd.f32 %v3831, %v3926
        %v4033 = vadd.f32 %v3832, %v3931
        %v4034 = vadd.f32 %v3833, %v3934
        %v4035 = vadd.f32 %v3834, %v3939
        %v4036 = vadd.f32 %v3835, %v3942
        %v4037 = vadd.f32 %v3836, %v3947
        %v4038 = vadd.f32 %v3837, %v3950
        %v4039 = vadd.f32 %v3838, %v3955
        %v4040 = vadd.f32 %v3839, %v3958
        %v4041 = vadd.f32 %v3840, %v3963
        %v4042 = vadd.f32 %v3841, %v3966
        %v4043 = vadd.f32 %v3842, %v3971
        %v4044 = vadd.f32 %v3843, %v3974
        %v4045 = vadd.f32 %v3844, %v3979
        %v4046 = vadd.f32 %v3845, %v3982
        %v4047 = vadd.f32 %v3846, %v3987
        %v4048 = vadd.f32 %v3847, %v3990
        %v4049 = vadd.f32 %v3848, %v3995
        %v4050 = vadd.f32 %v3849, %v3998
        %v4051 = vadd.f32 %v3850, %v4003
        %v4052 = vadd.f32 %v3851, %v4006
        %v4053 = vadd.f32 %v3852, %v4011
        %v4054 = vadd.f32 %v3853, %v4014
        %v4055 = vadd.f32 %v3854, %v4019
        %v4056 = vadd.f32 %v3855, %v4022
        %s4057 = scalar_lea.vmem %s4, 14
        %v4058 = vld [vmem:[%s4057] sm:$0x3]
        %v4059 = vsel %vm2598, %v1382, 0
        %v4062 = vsel %vm2631, %v4058, 0
        %4064 = vmatprep.subr.bf16.mxu0 0
        %4065 = vmatpush1.bf16.msra.mxu0 %v4062
        %4066 = vmatprep.subr.bf16.mxu0 0
        %4067 = vmatpush1.bf16.msra.mxu0 0
        %4068 = vmatprep.subr.bf16.mxu0 0
        %4069 = vmatpush1.bf16.msra.mxu0 0
        %4070 = vmatprep.subr.bf16.mxu0 0
        %4071 = vmatpush1.bf16.msra.mxu0 0
        %4072 = vmatprep.subr.bf16.mxu0 0
        %4073 = vmatpush1.bf16.msra.mxu0 0
        %4074 = vmatprep.subr.bf16.mxu0 0
        %4075 = vmatpush1.bf16.msra.mxu0 0
        %4076 = vmatprep.subr.bf16.mxu0 0
        %4077 = vmatpush1.bf16.msra.mxu0 0
        %4078 = vmatprep.subr.bf16.mxu0 0
        %4079 = vmatpush1.bf16.msra.mxu0 0
        %4080 = vmatprep.subr.bf16.mxu0 0
        %4081 = vmatpush1.bf16.msra.mxu0 0
        %4082 = vmatprep.subr.bf16.mxu0 0
        %4083 = vmatpush1.bf16.msra.mxu0 0
        %4084 = vmatprep.subr.bf16.mxu0 0
        %4085 = vmatpush1.bf16.msra.mxu0 0
        %4086 = vmatprep.subr.bf16.mxu0 0
        %4087 = vmatpush1.bf16.msra.mxu0 0
        %4088 = vmatprep.subr.bf16.mxu0 0
        %4089 = vmatpush1.bf16.msra.mxu0 0
        %4090 = vmatprep.subr.bf16.mxu0 0
        %4091 = vmatpush1.bf16.msra.mxu0 0
        %4092 = vmatprep.subr.bf16.mxu0 0
        %4093 = vmatpush1.bf16.msra.mxu0 0
        %4094 = vmatprep.subr.bf16.mxu0 0
        %4095 = vmatpush1.bf16.msra.mxu0 0
        %4096 = vmatprep.mubr.bf16.mxu0 0
        %4097 = vmatmul.mubr.bf16.gmra.mrb[0].mxu0 %v2603
        %v4098 = vpop.f32.mrb[0].mxu0
        %v4099 = vadd.f32 0.0, %v4098
        %v4100 = vpop.f32.mrb[0].mxu0
        %v4101 = vpop.f32.mrb[0].mxu0
        %v4102 = vadd.f32 0.0, %v4101
        %v4103 = vpop.f32.mrb[0].mxu0
        %4104 = vmatprep.mubr.bf16.mxu0 0
        %4105 = vmatmul.mubr.bf16.gmra.mrb[0].mxu0 %v2605
        %v4106 = vpop.f32.mrb[0].mxu0
        %v4107 = vadd.f32 0.0, %v4106
        %v4108 = vpop.f32.mrb[0].mxu0
        %v4109 = vpop.f32.mrb[0].mxu0
        %v4110 = vadd.f32 0.0, %v4109
        %v4111 = vpop.f32.mrb[0].mxu0
        %4112 = vmatprep.mubr.bf16.mxu0 0
        %4113 = vmatmul.mubr.bf16.gmra.mrb[0].mxu0 %v2607
        %v4114 = vpop.f32.mrb[0].mxu0
        %v4115 = vadd.f32 0.0, %v4114
        %v4116 = vpop.f32.mrb[0].mxu0
        %v4117 = vpop.f32.mrb[0].mxu0
        %v4118 = vadd.f32 0.0, %v4117
        %v4119 = vpop.f32.mrb[0].mxu0
        %4120 = vmatprep.mubr.bf16.mxu0 0
        %4121 = vmatmul.mubr.bf16.gmra.mrb[0].mxu0 %v2609
        %v4122 = vpop.f32.mrb[0].mxu0
        %v4123 = vadd.f32 0.0, %v4122
        %v4124 = vpop.f32.mrb[0].mxu0
        %v4125 = vpop.f32.mrb[0].mxu0
        %v4126 = vadd.f32 0.0, %v4125
        %v4127 = vpop.f32.mrb[0].mxu0
        %4128 = vmatprep.mubr.bf16.mxu0 0
        %4129 = vmatmul.mubr.bf16.gmra.mrb[0].mxu0 %v2611
        %v4130 = vpop.f32.mrb[0].mxu0
        %v4131 = vadd.f32 0.0, %v4130
        %v4132 = vpop.f32.mrb[0].mxu0
        %v4133 = vpop.f32.mrb[0].mxu0
        %v4134 = vadd.f32 0.0, %v4133
        %v4135 = vpop.f32.mrb[0].mxu0
        %4136 = vmatprep.mubr.bf16.mxu0 0
        %4137 = vmatmul.mubr.bf16.gmra.mrb[0].mxu0 %v2613
        %v4138 = vpop.f32.mrb[0].mxu0
        %v4139 = vadd.f32 0.0, %v4138
        %v4140 = vpop.f32.mrb[0].mxu0
        %v4141 = vpop.f32.mrb[0].mxu0
        %v4142 = vadd.f32 0.0, %v4141
        %v4143 = vpop.f32.mrb[0].mxu0
        %4144 = vmatprep.mubr.bf16.mxu0 0
        %4145 = vmatmul.mubr.bf16.gmra.mrb[0].mxu0 %v2615
        %v4146 = vpop.f32.mrb[0].mxu0
        %v4147 = vadd.f32 0.0, %v4146
        %v4148 = vpop.f32.mrb[0].mxu0
        %v4149 = vpop.f32.mrb[0].mxu0
        %v4150 = vadd.f32 0.0, %v4149
        %v4151 = vpop.f32.mrb[0].mxu0
        %4152 = vmatprep.mubr.bf16.mxu0 0
        %4153 = vmatmul.mubr.bf16.gmra.mrb[0].mxu0 %v2617
        %v4154 = vpop.f32.mrb[0].mxu0
        %v4155 = vadd.f32 0.0, %v4154
        %v4156 = vpop.f32.mrb[0].mxu0
        %v4157 = vpop.f32.mrb[0].mxu0
        %v4158 = vadd.f32 0.0, %v4157
        %v4159 = vpop.f32.mrb[0].mxu0
        %4160 = vmatprep.mubr.bf16.mxu0 0
        %4161 = vmatmul.mubr.bf16.gmra.mrb[0].mxu0 %v2619
        %v4162 = vpop.f32.mrb[0].mxu0
        %v4163 = vadd.f32 0.0, %v4162
        %v4164 = vpop.f32.mrb[0].mxu0
        %v4165 = vpop.f32.mrb[0].mxu0
        %v4166 = vadd.f32 0.0, %v4165
        %v4167 = vpop.f32.mrb[0].mxu0
        %4168 = vmatprep.mubr.bf16.mxu0 0
        %4169 = vmatmul.mubr.bf16.gmra.mrb[0].mxu0 %v2621
        %v4170 = vpop.f32.mrb[0].mxu0
        %v4171 = vadd.f32 0.0, %v4170
        %v4172 = vpop.f32.mrb[0].mxu0
        %v4173 = vpop.f32.mrb[0].mxu0
        %v4174 = vadd.f32 0.0, %v4173
        %v4175 = vpop.f32.mrb[0].mxu0
        %4176 = vmatprep.mubr.bf16.mxu0 0
        %4177 = vmatmul.mubr.bf16.gmra.mrb[0].mxu0 %v2623
        %v4178 = vpop.f32.mrb[0].mxu0
        %v4179 = vadd.f32 0.0, %v4178
        %v4180 = vpop.f32.mrb[0].mxu0
        %v4181 = vpop.f32.mrb[0].mxu0
        %v4182 = vadd.f32 0.0, %v4181
        %v4183 = vpop.f32.mrb[0].mxu0
        %4184 = vmatprep.mubr.bf16.mxu0 0
        %4185 = vmatmul.mubr.bf16.gmra.mrb[0].mxu0 %v2625
        %v4186 = vpop.f32.mrb[0].mxu0
        %v4187 = vadd.f32 0.0, %v4186
        %v4188 = vpop.f32.mrb[0].mxu0
        %v4189 = vpop.f32.mrb[0].mxu0
        %v4190 = vadd.f32 0.0, %v4189
        %v4191 = vpop.f32.mrb[0].mxu0
        %4192 = vmatprep.mubr.bf16.mxu0 0
        %4193 = vmatmul.mubr.bf16.gmra.mrb[0].mxu0 %v2627
        %v4194 = vpop.f32.mrb[0].mxu0
        %v4195 = vadd.f32 0.0, %v4194
        %v4196 = vpop.f32.mrb[0].mxu0
        %v4197 = vpop.f32.mrb[0].mxu0
        %v4198 = vadd.f32 0.0, %v4197
        %v4199 = vpop.f32.mrb[0].mxu0
        %4200 = vmatprep.mubr.bf16.mxu0 0
        %4201 = vmatmul.mubr.bf16.gmra.mrb[0].mxu0 %v2629
        %v4202 = vpop.f32.mrb[0].mxu0
        %v4203 = vadd.f32 0.0, %v4202
        %v4204 = vpop.f32.mrb[0].mxu0
        %v4205 = vpop.f32.mrb[0].mxu0
        %v4206 = vadd.f32 0.0, %v4205
        %v4207 = vpop.f32.mrb[0].mxu0
        %4208 = vmatprep.mubr.bf16.mxu0 0
        %4209 = vmatmul.mubr.bf16.gmra.mrb[0].mxu0 %v3457
        %v4210 = vpop.f32.mrb[0].mxu0
        %v4211 = vadd.f32 0.0, %v4210
        %v4212 = vpop.f32.mrb[0].mxu0
        %v4213 = vpop.f32.mrb[0].mxu0
        %v4214 = vadd.f32 0.0, %v4213
        %v4215 = vpop.f32.mrb[0].mxu0
        %4216 = vmatprep.mubr.bf16.mxu0 0
        %4217 = vmatmul.mubr.bf16.gmra.mrb[0].mxu0 %v4059
        %v4218 = vpop.f32.mrb[0].mxu0
        %v4219 = vadd.f32 0.0, %v4218
        %v4220 = vpop.f32.mrb[0].mxu0
        %v4221 = vpop.f32.mrb[0].mxu0
        %v4222 = vadd.f32 0.0, %v4221
        %v4223 = vpop.f32.mrb[0].mxu0
        %4224 = vdwg.mxu0
        %v4225 = vadd.f32 %v4025, %v4099
        %v4226 = vadd.f32 %v4026, %v4102
        %v4227 = vadd.f32 %v4027, %v4107
        %v4228 = vadd.f32 %v4028, %v4110
        %v4229 = vadd.f32 %v4029, %v4115
        %v4230 = vadd.f32 %v4030, %v4118
        %v4231 = vadd.f32 %v4031, %v4123
        %v4232 = vadd.f32 %v4032, %v4126
        %v4233 = vadd.f32 %v4033, %v4131
        %v4234 = vadd.f32 %v4034, %v4134
        %v4235 = vadd.f32 %v4035, %v4139
        %v4236 = vadd.f32 %v4036, %v4142
        %v4237 = vadd.f32 %v4037, %v4147
        %v4238 = vadd.f32 %v4038, %v4150
        %v4239 = vadd.f32 %v4039, %v4155
        %v4240 = vadd.f32 %v4040, %v4158
        %v4241 = vadd.f32 %v4041, %v4163
        %v4242 = vadd.f32 %v4042, %v4166
        %v4243 = vadd.f32 %v4043, %v4171
        %v4244 = vadd.f32 %v4044, %v4174
        %v4245 = vadd.f32 %v4045, %v4179
        %v4246 = vadd.f32 %v4046, %v4182
        %v4247 = vadd.f32 %v4047, %v4187
        %v4248 = vadd.f32 %v4048, %v4190
        %v4249 = vadd.f32 %v4049, %v4195
        %v4250 = vadd.f32 %v4050, %v4198
        %v4251 = vadd.f32 %v4051, %v4203
        %v4252 = vadd.f32 %v4052, %v4206
        %v4253 = vadd.f32 %v4053, %v4211
        %v4254 = vadd.f32 %v4054, %v4214
        %v4255 = vadd.f32 %v4055, %v4219
        %v4256 = vadd.f32 %v4056, %v4222
        %s4257 = scalar_lea.vmem %s4, 16
        %v4258 = vld [vmem:[%s4257] sm:$0x3]
        %v4260 = vsel %vm2598, %v2594, 0
        %v4263 = vsel %vm2631, %v4258, 0
        %4265 = vmatprep.subr.bf16.mxu0 0
        %4266 = vmatpush1.bf16.msra.mxu0 %v4263
        %4267 = vmatprep.subr.bf16.mxu0 0
        %4268 = vmatpush1.bf16.msra.mxu0 0
        %4269 = vmatprep.subr.bf16.mxu0 0
        %4270 = vmatpush1.bf16.msra.mxu0 0
        %4271 = vmatprep.subr.bf16.mxu0 0
        %4272 = vmatpush1.bf16.msra.mxu0 0
        %4273 = vmatprep.subr.bf16.mxu0 0
        %4274 = vmatpush1.bf16.msra.mxu0 0
        %4275 = vmatprep.subr.bf16.mxu0 0
        %4276 = vmatpush1.bf16.msra.mxu0 0
        %4277 = vmatprep.subr.bf16.mxu0 0
        %4278 = vmatpush1.bf16.msra.mxu0 0
        %4279 = vmatprep.subr.bf16.mxu0 0
        %4280 = vmatpush1.bf16.msra.mxu0 0
        %4281 = vmatprep.subr.bf16.mxu0 0
        %4282 = vmatpush1.bf16.msra.mxu0 0
        %4283 = vmatprep.subr.bf16.mxu0 0
        %4284 = vmatpush1.bf16.msra.mxu0 0
        %4285 = vmatprep.subr.bf16.mxu0 0
        %4286 = vmatpush1.bf16.msra.mxu0 0
        %4287 = vmatprep.subr.bf16.mxu0 0
        %4288 = vmatpush1.bf16.msra.mxu0 0
        %4289 = vmatprep.subr.bf16.mxu0 0
        %4290 = vmatpush1.bf16.msra.mxu0 0
        %4291 = vmatprep.subr.bf16.mxu0 0
        %4292 = vmatpush1.bf16.msra.mxu0 0
        %4293 = vmatprep.subr.bf16.mxu0 0
        %4294 = vmatpush1.bf16.msra.mxu0 0
        %4295 = vmatprep.subr.bf16.mxu0 0
        %4296 = vmatpush1.bf16.msra.mxu0 0
        %4297 = vmatprep.mubr.bf16.mxu0 0
        %4298 = vmatmul.mubr.bf16.gmra.mrb[0].mxu0 %v3017
        %v4299 = vpop.f32.mrb[0].mxu0
        %v4300 = vadd.f32 0.0, %v4299
        %v4301 = vpop.f32.mrb[0].mxu0
        %v4302 = vpop.f32.mrb[0].mxu0
        %v4303 = vadd.f32 0.0, %v4302
        %v4304 = vpop.f32.mrb[0].mxu0
        %4305 = vmatprep.mubr.bf16.mxu0 0
        %4306 = vmatmul.mubr.bf16.gmra.mrb[0].mxu0 %v3020
        %v4307 = vpop.f32.mrb[0].mxu0
        %v4308 = vadd.f32 0.0, %v4307
        %v4309 = vpop.f32.mrb[0].mxu0
        %v4310 = vpop.f32.mrb[0].mxu0
        %v4311 = vadd.f32 0.0, %v4310
        %v4312 = vpop.f32.mrb[0].mxu0
        %4313 = vmatprep.mubr.bf16.mxu0 0
        %4314 = vmatmul.mubr.bf16.gmra.mrb[0].mxu0 %v3023
        %v4315 = vpop.f32.mrb[0].mxu0
        %v4316 = vadd.f32 0.0, %v4315
        %v4317 = vpop.f32.mrb[0].mxu0
        %v4318 = vpop.f32.mrb[0].mxu0
        %v4319 = vadd.f32 0.0, %v4318
        %v4320 = vpop.f32.mrb[0].mxu0
        %4321 = vmatprep.mubr.bf16.mxu0 0
        %4322 = vmatmul.mubr.bf16.gmra.mrb[0].mxu0 %v3026
        %v4323 = vpop.f32.mrb[0].mxu0
        %v4324 = vadd.f32 0.0, %v4323
        %v4325 = vpop.f32.mrb[0].mxu0
        %v4326 = vpop.f32.mrb[0].mxu0
        %v4327 = vadd.f32 0.0, %v4326
        %v4328 = vpop.f32.mrb[0].mxu0
        %4329 = vmatprep.mubr.bf16.mxu0 0
        %4330 = vmatmul.mubr.bf16.gmra.mrb[0].mxu0 %v3029
        %v4331 = vpop.f32.mrb[0].mxu0
        %v4332 = vadd.f32 0.0, %v4331
        %v4333 = vpop.f32.mrb[0].mxu0
        %v4334 = vpop.f32.mrb[0].mxu0
        %v4335 = vadd.f32 0.0, %v4334
        %v4336 = vpop.f32.mrb[0].mxu0
        %4337 = vmatprep.mubr.bf16.mxu0 0
        %4338 = vmatmul.mubr.bf16.gmra.mrb[0].mxu0 %v3032
        %v4339 = vpop.f32.mrb[0].mxu0
        %v4340 = vadd.f32 0.0, %v4339
        %v4341 = vpop.f32.mrb[0].mxu0
        %v4342 = vpop.f32.mrb[0].mxu0
        %v4343 = vadd.f32 0.0, %v4342
        %v4344 = vpop.f32.mrb[0].mxu0
        %4345 = vmatprep.mubr.bf16.mxu0 0
        %4346 = vmatmul.mubr.bf16.gmra.mrb[0].mxu0 %v3035
        %v4347 = vpop.f32.mrb[0].mxu0
        %v4348 = vadd.f32 0.0, %v4347
        %v4349 = vpop.f32.mrb[0].mxu0
        %v4350 = vpop.f32.mrb[0].mxu0
        %v4351 = vadd.f32 0.0, %v4350
        %v4352 = vpop.f32.mrb[0].mxu0
        %4353 = vmatprep.mubr.bf16.mxu0 0
        %4354 = vmatmul.mubr.bf16.gmra.mrb[0].mxu0 %v3038
        %v4355 = vpop.f32.mrb[0].mxu0
        %v4356 = vadd.f32 0.0, %v4355
        %v4357 = vpop.f32.mrb[0].mxu0
        %v4358 = vpop.f32.mrb[0].mxu0
        %v4359 = vadd.f32 0.0, %v4358
        %v4360 = vpop.f32.mrb[0].mxu0
        %4361 = vmatprep.mubr.bf16.mxu0 0
        %4362 = vmatmul.mubr.bf16.gmra.mrb[0].mxu0 %v3041
        %v4363 = vpop.f32.mrb[0].mxu0
        %v4364 = vadd.f32 0.0, %v4363
        %v4365 = vpop.f32.mrb[0].mxu0
        %v4366 = vpop.f32.mrb[0].mxu0
        %v4367 = vadd.f32 0.0, %v4366
        %v4368 = vpop.f32.mrb[0].mxu0
        %4369 = vmatprep.mubr.bf16.mxu0 0
        %4370 = vmatmul.mubr.bf16.gmra.mrb[0].mxu0 %v3044
        %v4371 = vpop.f32.mrb[0].mxu0
        %v4372 = vadd.f32 0.0, %v4371
        %v4373 = vpop.f32.mrb[0].mxu0
        %v4374 = vpop.f32.mrb[0].mxu0
        %v4375 = vadd.f32 0.0, %v4374
        %v4376 = vpop.f32.mrb[0].mxu0
        %4377 = vmatprep.mubr.bf16.mxu0 0
        %4378 = vmatmul.mubr.bf16.gmra.mrb[0].mxu0 %v3047
        %v4379 = vpop.f32.mrb[0].mxu0
        %v4380 = vadd.f32 0.0, %v4379
        %v4381 = vpop.f32.mrb[0].mxu0
        %v4382 = vpop.f32.mrb[0].mxu0
        %v4383 = vadd.f32 0.0, %v4382
        %v4384 = vpop.f32.mrb[0].mxu0
        %4385 = vmatprep.mubr.bf16.mxu0 0
        %4386 = vmatmul.mubr.bf16.gmra.mrb[0].mxu0 %v3050
        %v4387 = vpop.f32.mrb[0].mxu0
        %v4388 = vadd.f32 0.0, %v4387
        %v4389 = vpop.f32.mrb[0].mxu0
        %v4390 = vpop.f32.mrb[0].mxu0
        %v4391 = vadd.f32 0.0, %v4390
        %v4392 = vpop.f32.mrb[0].mxu0
        %4393 = vmatprep.mubr.bf16.mxu0 0
        %4394 = vmatmul.mubr.bf16.gmra.mrb[0].mxu0 %v3053
        %v4395 = vpop.f32.mrb[0].mxu0
        %v4396 = vadd.f32 0.0, %v4395
        %v4397 = vpop.f32.mrb[0].mxu0
        %v4398 = vpop.f32.mrb[0].mxu0
        %v4399 = vadd.f32 0.0, %v4398
        %v4400 = vpop.f32.mrb[0].mxu0
        %4401 = vmatprep.mubr.bf16.mxu0 0
        %4402 = vmatmul.mubr.bf16.gmra.mrb[0].mxu0 %v3056
        %v4403 = vpop.f32.mrb[0].mxu0
        %v4404 = vadd.f32 0.0, %v4403
        %v4405 = vpop.f32.mrb[0].mxu0
        %v4406 = vpop.f32.mrb[0].mxu0
        %v4407 = vadd.f32 0.0, %v4406
        %v4408 = vpop.f32.mrb[0].mxu0
        %4409 = vmatprep.mubr.bf16.mxu0 0
        %4410 = vmatmul.mubr.bf16.gmra.mrb[0].mxu0 %v3658
        %v4411 = vpop.f32.mrb[0].mxu0
        %v4412 = vadd.f32 0.0, %v4411
        %v4413 = vpop.f32.mrb[0].mxu0
        %v4414 = vpop.f32.mrb[0].mxu0
        %v4415 = vadd.f32 0.0, %v4414
        %v4416 = vpop.f32.mrb[0].mxu0
        %4417 = vmatprep.mubr.bf16.mxu0 0
        %4418 = vmatmul.mubr.bf16.gmra.mrb[0].mxu0 %v4260
        %v4419 = vpop.f32.mrb[0].mxu0
        %v4420 = vadd.f32 0.0, %v4419
        %v4421 = vpop.f32.mrb[0].mxu0
        %v4422 = vpop.f32.mrb[0].mxu0
        %v4423 = vadd.f32 0.0, %v4422
        %v4424 = vpop.f32.mrb[0].mxu0
        %4425 = vdwg.mxu0
        %v4426 = vadd.f32 %v4225, %v4300
        %v4427 = vadd.f32 %v4226, %v4303
        %v4428 = vadd.f32 %v4227, %v4308
        %v4429 = vadd.f32 %v4228, %v4311
        %v4430 = vadd.f32 %v4229, %v4316
        %v4431 = vadd.f32 %v4230, %v4319
        %v4432 = vadd.f32 %v4231, %v4324
        %v4433 = vadd.f32 %v4232, %v4327
        %v4434 = vadd.f32 %v4233, %v4332
        %v4435 = vadd.f32 %v4234, %v4335
        %v4436 = vadd.f32 %v4235, %v4340
        %v4437 = vadd.f32 %v4236, %v4343
        %v4438 = vadd.f32 %v4237, %v4348
        %v4439 = vadd.f32 %v4238, %v4351
        %v4440 = vadd.f32 %v4239, %v4356
        %v4441 = vadd.f32 %v4240, %v4359
        %v4442 = vadd.f32 %v4241, %v4364
        %v4443 = vadd.f32 %v4242, %v4367
        %v4444 = vadd.f32 %v4243, %v4372
        %v4445 = vadd.f32 %v4244, %v4375
        %v4446 = vadd.f32 %v4245, %v4380
        %v4447 = vadd.f32 %v4246, %v4383
        %v4448 = vadd.f32 %v4247, %v4388
        %v4449 = vadd.f32 %v4248, %v4391
        %v4450 = vadd.f32 %v4249, %v4396
        %v4451 = vadd.f32 %v4250, %v4399
        %v4452 = vadd.f32 %v4251, %v4404
        %v4453 = vadd.f32 %v4252, %v4407
        %v4454 = vadd.f32 %v4253, %v4412
        %v4455 = vadd.f32 %v4254, %v4415
        %v4456 = vadd.f32 %v4255, %v4420
        %v4457 = vadd.f32 %v4256, %v4423
        %v4458 = vld [vmem:[%s5] sm:$0x1]
        %v4460 = vlaneseq
        %v4461 = vshrl.u32 %v4460, 7
        %v4462 = vsub.s32 0, %v4461
        %v4463 = vrot.slane %v4458, %v4462
        %v4465 = vmul.f32 %v4426, %v4463
        %v4466 = vmul.f32 %v4427, %v4463
        %v4467 = vmul.f32 %v4428, %v4463
        %v4468 = vmul.f32 %v4429, %v4463
        %v4469 = vmul.f32 %v4430, %v4463
        %v4470 = vmul.f32 %v4431, %v4463
        %v4471 = vmul.f32 %v4432, %v4463
        %v4472 = vmul.f32 %v4433, %v4463
        %v4473 = vmul.f32 %v4434, %v4463
        %v4474 = vmul.f32 %v4435, %v4463
        %v4475 = vmul.f32 %v4436, %v4463
        %v4476 = vmul.f32 %v4437, %v4463
        %v4477 = vmul.f32 %v4438, %v4463
        %v4478 = vmul.f32 %v4439, %v4463
        %v4479 = vmul.f32 %v4440, %v4463
        %v4480 = vmul.f32 %v4441, %v4463
        %v4481 = vmul.f32 %v4442, %v4463
        %v4482 = vmul.f32 %v4443, %v4463
        %v4483 = vmul.f32 %v4444, %v4463
        %v4484 = vmul.f32 %v4445, %v4463
        %v4485 = vmul.f32 %v4446, %v4463
        %v4486 = vmul.f32 %v4447, %v4463
        %v4487 = vmul.f32 %v4448, %v4463
        %v4488 = vmul.f32 %v4449, %v4463
        %v4489 = vmul.f32 %v4450, %v4463
        %v4490 = vmul.f32 %v4451, %v4463
        %v4491 = vmul.f32 %v4452, %v4463
        %v4492 = vmul.f32 %v4453, %v4463
        %v4493 = vmul.f32 %v4454, %v4463
        %v4494 = vmul.f32 %v4455, %v4463
        %v4495 = vmul.f32 %v4456, %v4463
        %v4496 = vmul.f32 %v4457, %v4463
        %v4497 = vld [vmem:[%s6] sm:$0x1]
        %v4499 = vlaneseq
        %v4500 = vshrl.u32 %v4499, 7
        %v4501 = vsub.s32 0, %v4500
        %v4502 = vrot.slane %v4497, %v4501
        %v4504 = vadd.f32 %v4465, %v4502
        %v4505 = vadd.f32 %v4466, %v4502
        %v4506 = vadd.f32 %v4467, %v4502
        %v4507 = vadd.f32 %v4468, %v4502
        %v4508 = vadd.f32 %v4469, %v4502
        %v4509 = vadd.f32 %v4470, %v4502
        %v4510 = vadd.f32 %v4471, %v4502
        %v4511 = vadd.f32 %v4472, %v4502
        %v4512 = vadd.f32 %v4473, %v4502
        %v4513 = vadd.f32 %v4474, %v4502
        %v4514 = vadd.f32 %v4475, %v4502
        %v4515 = vadd.f32 %v4476, %v4502
        %v4516 = vadd.f32 %v4477, %v4502
        %v4517 = vadd.f32 %v4478, %v4502
        %v4518 = vadd.f32 %v4479, %v4502
        %v4519 = vadd.f32 %v4480, %v4502
        %v4520 = vadd.f32 %v4481, %v4502
        %v4521 = vadd.f32 %v4482, %v4502
        %v4522 = vadd.f32 %v4483, %v4502
        %v4523 = vadd.f32 %v4484, %v4502
        %v4524 = vadd.f32 %v4485, %v4502
        %v4525 = vadd.f32 %v4486, %v4502
        %v4526 = vadd.f32 %v4487, %v4502
        %v4527 = vadd.f32 %v4488, %v4502
        %v4528 = vadd.f32 %v4489, %v4502
        %v4529 = vadd.f32 %v4490, %v4502
        %v4530 = vadd.f32 %v4491, %v4502
        %v4531 = vadd.f32 %v4492, %v4502
        %v4532 = vadd.f32 %v4493, %v4502
        %v4533 = vadd.f32 %v4494, %v4502
        %v4534 = vadd.f32 %v4495, %v4502
        %v4535 = vadd.f32 %v4496, %v4502
        %v4536 = vmax.f32 %v4504, 0.0
        %v4537 = vmax.f32 %v4505, 0.0
        %v4538 = vmax.f32 %v4506, 0.0
        %v4539 = vmax.f32 %v4507, 0.0
        %v4540 = vmax.f32 %v4508, 0.0
        %v4541 = vmax.f32 %v4509, 0.0
        %v4542 = vmax.f32 %v4510, 0.0
        %v4543 = vmax.f32 %v4511, 0.0
        %v4544 = vmax.f32 %v4512, 0.0
        %v4545 = vmax.f32 %v4513, 0.0
        %v4546 = vmax.f32 %v4514, 0.0
        %v4547 = vmax.f32 %v4515, 0.0
        %v4548 = vmax.f32 %v4516, 0.0
        %v4549 = vmax.f32 %v4517, 0.0
        %v4550 = vmax.f32 %v4518, 0.0
        %v4551 = vmax.f32 %v4519, 0.0
        %v4552 = vmax.f32 %v4520, 0.0
        %v4553 = vmax.f32 %v4521, 0.0
        %v4554 = vmax.f32 %v4522, 0.0
        %v4555 = vmax.f32 %v4523, 0.0
        %v4556 = vmax.f32 %v4524, 0.0
        %v4557 = vmax.f32 %v4525, 0.0
        %v4558 = vmax.f32 %v4526, 0.0
        %v4559 = vmax.f32 %v4527, 0.0
        %v4560 = vmax.f32 %v4528, 0.0
        %v4561 = vmax.f32 %v4529, 0.0
        %v4562 = vmax.f32 %v4530, 0.0
        %v4563 = vmax.f32 %v4531, 0.0
        %v4564 = vmax.f32 %v4532, 0.0
        %v4565 = vmax.f32 %v4533, 0.0
        %v4566 = vmax.f32 %v4534, 0.0
        %v4567 = vmax.f32 %v4535, 0.0
        %v4568 = vpack.c.bf16 %v4537, %v4536
        %v4569 = vpack.c.bf16 %v4539, %v4538
        %v4570 = vpack.c.bf16 %v4541, %v4540
        %v4571 = vpack.c.bf16 %v4543, %v4542
        %v4572 = vpack.c.bf16 %v4545, %v4544
        %v4573 = vpack.c.bf16 %v4547, %v4546
        %v4574 = vpack.c.bf16 %v4549, %v4548
        %v4575 = vpack.c.bf16 %v4551, %v4550
        %v4576 = vpack.c.bf16 %v4553, %v4552
        %v4577 = vpack.c.bf16 %v4555, %v4554
        %v4578 = vpack.c.bf16 %v4557, %v4556
        %v4579 = vpack.c.bf16 %v4559, %v4558
        %v4580 = vpack.c.bf16 %v4561, %v4560
        %v4581 = vpack.c.bf16 %v4563, %v4562
        %v4582 = vpack.c.bf16 %v4565, %v4564
        %v4583 = vpack.c.bf16 %v4567, %v4566
        %v4584 = vld [vmem:[%s7] sm:$0x3]
        %v4586 = vsel %vm2598, %v4568, 0
        %v4589 = vsel %vm2598, %v4569, 0
        %v4592 = vsel %vm2598, %v4570, 0
        %v4595 = vsel %vm2598, %v4571, 0
        %v4598 = vsel %vm2598, %v4572, 0
        %v4601 = vsel %vm2598, %v4573, 0
        %v4604 = vsel %vm2598, %v4574, 0
        %v4607 = vsel %vm2598, %v4575, 0
        %v4610 = vsel %vm2598, %v4576, 0
        %v4613 = vsel %vm2598, %v4577, 0
        %v4616 = vsel %vm2598, %v4578, 0
        %v4619 = vsel %vm2598, %v4579, 0
        %v4622 = vsel %vm2598, %v4580, 0
        %v4625 = vsel %vm2598, %v4581, 0
        %v4628 = vsel %vm2598, %v4582, 0
        %v4631 = vsel %vm2598, %v4583, 0
        %v4634 = vsel %vm2631, %v4584, 0
        %4636 = vmatprep.subr.bf16.mxu0 0
        %4637 = vmatpush1.bf16.msra.mxu0 %v4634
        %4638 = vmatprep.subr.bf16.mxu0 0
        %4639 = vmatpush1.bf16.msra.mxu0 0
        %4640 = vmatprep.subr.bf16.mxu0 0
        %4641 = vmatpush1.bf16.msra.mxu0 0
        %4642 = vmatprep.subr.bf16.mxu0 0
        %4643 = vmatpush1.bf16.msra.mxu0 0
        %4644 = vmatprep.subr.bf16.mxu0 0
        %4645 = vmatpush1.bf16.msra.mxu0 0
        %4646 = vmatprep.subr.bf16.mxu0 0
        %4647 = vmatpush1.bf16.msra.mxu0 0
        %4648 = vmatprep.subr.bf16.mxu0 0
        %4649 = vmatpush1.bf16.msra.mxu0 0
        %4650 = vmatprep.subr.bf16.mxu0 0
        %4651 = vmatpush1.bf16.msra.mxu0 0
        %4652 = vmatprep.subr.bf16.mxu0 0
        %4653 = vmatpush1.bf16.msra.mxu0 0
        %4654 = vmatprep.subr.bf16.mxu0 0
        %4655 = vmatpush1.bf16.msra.mxu0 0
        %4656 = vmatprep.subr.bf16.mxu0 0
        %4657 = vmatpush1.bf16.msra.mxu0 0
        %4658 = vmatprep.subr.bf16.mxu0 0
        %4659 = vmatpush1.bf16.msra.mxu0 0
        %4660 = vmatprep.subr.bf16.mxu0 0
        %4661 = vmatpush1.bf16.msra.mxu0 0
        %4662 = vmatprep.subr.bf16.mxu0 0
        %4663 = vmatpush1.bf16.msra.mxu0 0
        %4664 = vmatprep.subr.bf16.mxu0 0
        %4665 = vmatpush1.bf16.msra.mxu0 0
        %4666 = vmatprep.subr.bf16.mxu0 0
        %4667 = vmatpush1.bf16.msra.mxu0 0
        %4668 = vmatprep.mubr.bf16.mxu0 0
        %4669 = vmatmul.mubr.bf16.gmra.mrb[0].mxu0 %v4586
        %v4670 = vpop.f32.mrb[0].mxu0
        %v4671 = vadd.f32 0.0, %v4670
        %v4672 = vpop.f32.mrb[0].mxu0
        %v4673 = vpop.f32.mrb[0].mxu0
        %v4674 = vadd.f32 0.0, %v4673
        %v4675 = vpop.f32.mrb[0].mxu0
        %4676 = vmatprep.mubr.bf16.mxu0 0
        %4677 = vmatmul.mubr.bf16.gmra.mrb[0].mxu0 %v4589
        %v4678 = vpop.f32.mrb[0].mxu0
        %v4679 = vadd.f32 0.0, %v4678
        %v4680 = vpop.f32.mrb[0].mxu0
        %v4681 = vpop.f32.mrb[0].mxu0
        %v4682 = vadd.f32 0.0, %v4681
        %v4683 = vpop.f32.mrb[0].mxu0
        %4684 = vmatprep.mubr.bf16.mxu0 0
        %4685 = vmatmul.mubr.bf16.gmra.mrb[0].mxu0 %v4592
        %v4686 = vpop.f32.mrb[0].mxu0
        %v4687 = vadd.f32 0.0, %v4686
        %v4688 = vpop.f32.mrb[0].mxu0
        %v4689 = vpop.f32.mrb[0].mxu0
        %v4690 = vadd.f32 0.0, %v4689
        %v4691 = vpop.f32.mrb[0].mxu0
        %4692 = vmatprep.mubr.bf16.mxu0 0
        %4693 = vmatmul.mubr.bf16.gmra.mrb[0].mxu0 %v4595
        %v4694 = vpop.f32.mrb[0].mxu0
        %v4695 = vadd.f32 0.0, %v4694
        %v4696 = vpop.f32.mrb[0].mxu0
        %v4697 = vpop.f32.mrb[0].mxu0
        %v4698 = vadd.f32 0.0, %v4697
        %v4699 = vpop.f32.mrb[0].mxu0
        %4700 = vmatprep.mubr.bf16.mxu0 0
        %4701 = vmatmul.mubr.bf16.gmra.mrb[0].mxu0 %v4598
        %v4702 = vpop.f32.mrb[0].mxu0
        %v4703 = vadd.f32 0.0, %v4702
        %v4704 = vpop.f32.mrb[0].mxu0
        %v4705 = vpop.f32.mrb[0].mxu0
        %v4706 = vadd.f32 0.0, %v4705
        %v4707 = vpop.f32.mrb[0].mxu0
        %4708 = vmatprep.mubr.bf16.mxu0 0
        %4709 = vmatmul.mubr.bf16.gmra.mrb[0].mxu0 %v4601
        %v4710 = vpop.f32.mrb[0].mxu0
        %v4711 = vadd.f32 0.0, %v4710
        %v4712 = vpop.f32.mrb[0].mxu0
        %v4713 = vpop.f32.mrb[0].mxu0
        %v4714 = vadd.f32 0.0, %v4713
        %v4715 = vpop.f32.mrb[0].mxu0
        %4716 = vmatprep.mubr.bf16.mxu0 0
        %4717 = vmatmul.mubr.bf16.gmra.mrb[0].mxu0 %v4604
        %v4718 = vpop.f32.mrb[0].mxu0
        %v4719 = vadd.f32 0.0, %v4718
        %v4720 = vpop.f32.mrb[0].mxu0
        %v4721 = vpop.f32.mrb[0].mxu0
        %v4722 = vadd.f32 0.0, %v4721
        %v4723 = vpop.f32.mrb[0].mxu0
        %4724 = vmatprep.mubr.bf16.mxu0 0
        %4725 = vmatmul.mubr.bf16.gmra.mrb[0].mxu0 %v4607
        %v4726 = vpop.f32.mrb[0].mxu0
        %v4727 = vadd.f32 0.0, %v4726
        %v4728 = vpop.f32.mrb[0].mxu0
        %v4729 = vpop.f32.mrb[0].mxu0
        %v4730 = vadd.f32 0.0, %v4729
        %v4731 = vpop.f32.mrb[0].mxu0
        %4732 = vmatprep.mubr.bf16.mxu0 0
        %4733 = vmatmul.mubr.bf16.gmra.mrb[0].mxu0 %v4610
        %v4734 = vpop.f32.mrb[0].mxu0
        %v4735 = vadd.f32 0.0, %v4734
        %v4736 = vpop.f32.mrb[0].mxu0
        %v4737 = vpop.f32.mrb[0].mxu0
        %v4738 = vadd.f32 0.0, %v4737
        %v4739 = vpop.f32.mrb[0].mxu0
        %4740 = vmatprep.mubr.bf16.mxu0 0
        %4741 = vmatmul.mubr.bf16.gmra.mrb[0].mxu0 %v4613
        %v4742 = vpop.f32.mrb[0].mxu0
        %v4743 = vadd.f32 0.0, %v4742
        %v4744 = vpop.f32.mrb[0].mxu0
        %v4745 = vpop.f32.mrb[0].mxu0
        %v4746 = vadd.f32 0.0, %v4745
        %v4747 = vpop.f32.mrb[0].mxu0
        %4748 = vmatprep.mubr.bf16.mxu0 0
        %4749 = vmatmul.mubr.bf16.gmra.mrb[0].mxu0 %v4616
        %v4750 = vpop.f32.mrb[0].mxu0
        %v4751 = vadd.f32 0.0, %v4750
        %v4752 = vpop.f32.mrb[0].mxu0
        %v4753 = vpop.f32.mrb[0].mxu0
        %v4754 = vadd.f32 0.0, %v4753
        %v4755 = vpop.f32.mrb[0].mxu0
        %4756 = vmatprep.mubr.bf16.mxu0 0
        %4757 = vmatmul.mubr.bf16.gmra.mrb[0].mxu0 %v4619
        %v4758 = vpop.f32.mrb[0].mxu0
        %v4759 = vadd.f32 0.0, %v4758
        %v4760 = vpop.f32.mrb[0].mxu0
        %v4761 = vpop.f32.mrb[0].mxu0
        %v4762 = vadd.f32 0.0, %v4761
        %v4763 = vpop.f32.mrb[0].mxu0
        %4764 = vmatprep.mubr.bf16.mxu0 0
        %4765 = vmatmul.mubr.bf16.gmra.mrb[0].mxu0 %v4622
        %v4766 = vpop.f32.mrb[0].mxu0
        %v4767 = vadd.f32 0.0, %v4766
        %v4768 = vpop.f32.mrb[0].mxu0
        %v4769 = vpop.f32.mrb[0].mxu0
        %v4770 = vadd.f32 0.0, %v4769
        %v4771 = vpop.f32.mrb[0].mxu0
        %4772 = vmatprep.mubr.bf16.mxu0 0
        %4773 = vmatmul.mubr.bf16.gmra.mrb[0].mxu0 %v4625
        %v4774 = vpop.f32.mrb[0].mxu0
        %v4775 = vadd.f32 0.0, %v4774
        %v4776 = vpop.f32.mrb[0].mxu0
        %v4777 = vpop.f32.mrb[0].mxu0
        %v4778 = vadd.f32 0.0, %v4777
        %v4779 = vpop.f32.mrb[0].mxu0
        %4780 = vmatprep.mubr.bf16.mxu0 0
        %4781 = vmatmul.mubr.bf16.gmra.mrb[0].mxu0 %v4628
        %v4782 = vpop.f32.mrb[0].mxu0
        %v4783 = vadd.f32 0.0, %v4782
        %v4784 = vpop.f32.mrb[0].mxu0
        %v4785 = vpop.f32.mrb[0].mxu0
        %v4786 = vadd.f32 0.0, %v4785
        %v4787 = vpop.f32.mrb[0].mxu0
        %4788 = vmatprep.mubr.bf16.mxu0 0
        %4789 = vmatmul.mubr.bf16.gmra.mrb[0].mxu0 %v4631
        %v4790 = vpop.f32.mrb[0].mxu0
        %v4791 = vadd.f32 0.0, %v4790
        %v4792 = vpop.f32.mrb[0].mxu0
        %v4793 = vpop.f32.mrb[0].mxu0
        %v4794 = vadd.f32 0.0, %v4793
        %v4795 = vpop.f32.mrb[0].mxu0
        %4796 = vdwg.mxu0
        %v4797 = vld [vmem:[%s8] sm:$0x1]
        %v4799 = vlaneseq
        %v4800 = vshrl.u32 %v4799, 7
        %v4801 = vsub.s32 0, %v4800
        %v4802 = vrot.slane %v4797, %v4801
        %v4804 = vmul.f32 %v4671, %v4802
        %v4805 = vmul.f32 %v4674, %v4802
        %v4806 = vmul.f32 %v4679, %v4802
        %v4807 = vmul.f32 %v4682, %v4802
        %v4808 = vmul.f32 %v4687, %v4802
        %v4809 = vmul.f32 %v4690, %v4802
        %v4810 = vmul.f32 %v4695, %v4802
        %v4811 = vmul.f32 %v4698, %v4802
        %v4812 = vmul.f32 %v4703, %v4802
        %v4813 = vmul.f32 %v4706, %v4802
        %v4814 = vmul.f32 %v4711, %v4802
        %v4815 = vmul.f32 %v4714, %v4802
        %v4816 = vmul.f32 %v4719, %v4802
        %v4817 = vmul.f32 %v4722, %v4802
        %v4818 = vmul.f32 %v4727, %v4802
        %v4819 = vmul.f32 %v4730, %v4802
        %v4820 = vmul.f32 %v4735, %v4802
        %v4821 = vmul.f32 %v4738, %v4802
        %v4822 = vmul.f32 %v4743, %v4802
        %v4823 = vmul.f32 %v4746, %v4802
        %v4824 = vmul.f32 %v4751, %v4802
        %v4825 = vmul.f32 %v4754, %v4802
        %v4826 = vmul.f32 %v4759, %v4802
        %v4827 = vmul.f32 %v4762, %v4802
        %v4828 = vmul.f32 %v4767, %v4802
        %v4829 = vmul.f32 %v4770, %v4802
        %v4830 = vmul.f32 %v4775, %v4802
        %v4831 = vmul.f32 %v4778, %v4802
        %v4832 = vmul.f32 %v4783, %v4802
        %v4833 = vmul.f32 %v4786, %v4802
        %v4834 = vmul.f32 %v4791, %v4802
        %v4835 = vmul.f32 %v4794, %v4802
        %v4836 = vld [vmem:[%s9] sm:$0x1]
        %v4838 = vlaneseq
        %v4839 = vshrl.u32 %v4838, 7
        %v4840 = vsub.s32 0, %v4839
        %v4841 = vrot.slane %v4836, %v4840
        %v4843 = vadd.f32 %v4804, %v4841
        %v4844 = vadd.f32 %v4805, %v4841
        %v4845 = vadd.f32 %v4806, %v4841
        %v4846 = vadd.f32 %v4807, %v4841
        %v4847 = vadd.f32 %v4808, %v4841
        %v4848 = vadd.f32 %v4809, %v4841
        %v4849 = vadd.f32 %v4810, %v4841
        %v4850 = vadd.f32 %v4811, %v4841
        %v4851 = vadd.f32 %v4812, %v4841
        %v4852 = vadd.f32 %v4813, %v4841
        %v4853 = vadd.f32 %v4814, %v4841
        %v4854 = vadd.f32 %v4815, %v4841
        %v4855 = vadd.f32 %v4816, %v4841
        %v4856 = vadd.f32 %v4817, %v4841
        %v4857 = vadd.f32 %v4818, %v4841
        %v4858 = vadd.f32 %v4819, %v4841
        %v4859 = vadd.f32 %v4820, %v4841
        %v4860 = vadd.f32 %v4821, %v4841
        %v4861 = vadd.f32 %v4822, %v4841
        %v4862 = vadd.f32 %v4823, %v4841
        %v4863 = vadd.f32 %v4824, %v4841
        %v4864 = vadd.f32 %v4825, %v4841
        %v4865 = vadd.f32 %v4826, %v4841
        %v4866 = vadd.f32 %v4827, %v4841
        %v4867 = vadd.f32 %v4828, %v4841
        %v4868 = vadd.f32 %v4829, %v4841
        %v4869 = vadd.f32 %v4830, %v4841
        %v4870 = vadd.f32 %v4831, %v4841
        %v4871 = vadd.f32 %v4832, %v4841
        %v4872 = vadd.f32 %v4833, %v4841
        %v4873 = vadd.f32 %v4834, %v4841
        %v4874 = vadd.f32 %v4835, %v4841
        %v4875 = vunpack.c.l.bf16 %v418
        %v4876 = vunpack.c.l.bf16 %v419
        %v4877 = vunpack.c.l.bf16 %v420
        %v4878 = vunpack.c.l.bf16 %v421
        %v4879 = vunpack.c.l.bf16 %v422
        %v4880 = vunpack.c.l.bf16 %v423
        %v4881 = vunpack.c.l.bf16 %v424
        %v4882 = vunpack.c.l.bf16 %v425
        %v4883 = vunpack.c.l.bf16 %v426
        %v4884 = vunpack.c.l.bf16 %v427
        %v4885 = vunpack.c.l.bf16 %v428
        %v4886 = vunpack.c.l.bf16 %v429
        %v4887 = vunpack.c.l.bf16 %v430
        %v4888 = vunpack.c.l.bf16 %v431
        %v4889 = vunpack.c.l.bf16 %v432
        %v4890 = vunpack.c.l.bf16 %v433
        %v4891 = vunpack.c.l.bf16 %v434
        %v4892 = vunpack.c.l.bf16 %v435
        %v4893 = vunpack.c.l.bf16 %v436
        %v4894 = vunpack.c.l.bf16 %v437
        %v4895 = vunpack.c.l.bf16 %v438
        %v4896 = vunpack.c.l.bf16 %v439
        %v4897 = vunpack.c.l.bf16 %v440
        %v4898 = vunpack.c.l.bf16 %v441
        %v4899 = vunpack.c.l.bf16 %v442
        %v4900 = vunpack.c.l.bf16 %v443
        %v4901 = vunpack.c.l.bf16 %v444
        %v4902 = vunpack.c.l.bf16 %v445
        %v4903 = vunpack.c.l.bf16 %v446
        %v4904 = vunpack.c.l.bf16 %v447
        %v4905 = vunpack.c.l.bf16 %v448
        %v4906 = vunpack.c.l.bf16 %v449
        %v4907 = vadd.f32 %v4843, %v4875
        %v4908 = vadd.f32 %v4844, %v4876
        %v4909 = vadd.f32 %v4845, %v4877
        %v4910 = vadd.f32 %v4846, %v4878
        %v4911 = vadd.f32 %v4847, %v4879
        %v4912 = vadd.f32 %v4848, %v4880
        %v4913 = vadd.f32 %v4849, %v4881
        %v4914 = vadd.f32 %v4850, %v4882
        %v4915 = vadd.f32 %v4851, %v4883
        %v4916 = vadd.f32 %v4852, %v4884
        %v4917 = vadd.f32 %v4853, %v4885
        %v4918 = vadd.f32 %v4854, %v4886
        %v4919 = vadd.f32 %v4855, %v4887
        %v4920 = vadd.f32 %v4856, %v4888
        %v4921 = vadd.f32 %v4857, %v4889
        %v4922 = vadd.f32 %v4858, %v4890
        %v4923 = vadd.f32 %v4859, %v4891
        %v4924 = vadd.f32 %v4860, %v4892
        %v4925 = vadd.f32 %v4861, %v4893
        %v4926 = vadd.f32 %v4862, %v4894
        %v4927 = vadd.f32 %v4863, %v4895
        %v4928 = vadd.f32 %v4864, %v4896
        %v4929 = vadd.f32 %v4865, %v4897
        %v4930 = vadd.f32 %v4866, %v4898
        %v4931 = vadd.f32 %v4867, %v4899
        %v4932 = vadd.f32 %v4868, %v4900
        %v4933 = vadd.f32 %v4869, %v4901
        %v4934 = vadd.f32 %v4870, %v4902
        %v4935 = vadd.f32 %v4871, %v4903
        %v4936 = vadd.f32 %v4872, %v4904
        %v4937 = vadd.f32 %v4873, %v4905
        %v4938 = vadd.f32 %v4874, %v4906
        %v4939 = vmax.f32 %v4907, 0.0
        %v4940 = vmax.f32 %v4908, 0.0
        %v4941 = vmax.f32 %v4909, 0.0
        %v4942 = vmax.f32 %v4910, 0.0
        %v4943 = vmax.f32 %v4911, 0.0
        %v4944 = vmax.f32 %v4912, 0.0
        %v4945 = vmax.f32 %v4913, 0.0
        %v4946 = vmax.f32 %v4914, 0.0
        %v4947 = vmax.f32 %v4915, 0.0
        %v4948 = vmax.f32 %v4916, 0.0
        %v4949 = vmax.f32 %v4917, 0.0
        %v4950 = vmax.f32 %v4918, 0.0
        %v4951 = vmax.f32 %v4919, 0.0
        %v4952 = vmax.f32 %v4920, 0.0
        %v4953 = vmax.f32 %v4921, 0.0
        %v4954 = vmax.f32 %v4922, 0.0
        %v4955 = vmax.f32 %v4923, 0.0
        %v4956 = vmax.f32 %v4924, 0.0
        %v4957 = vmax.f32 %v4925, 0.0
        %v4958 = vmax.f32 %v4926, 0.0
        %v4959 = vmax.f32 %v4927, 0.0
        %v4960 = vmax.f32 %v4928, 0.0
        %v4961 = vmax.f32 %v4929, 0.0
        %v4962 = vmax.f32 %v4930, 0.0
        %v4963 = vmax.f32 %v4931, 0.0
        %v4964 = vmax.f32 %v4932, 0.0
        %v4965 = vmax.f32 %v4933, 0.0
        %v4966 = vmax.f32 %v4934, 0.0
        %v4967 = vmax.f32 %v4935, 0.0
        %v4968 = vmax.f32 %v4936, 0.0
        %v4969 = vmax.f32 %v4937, 0.0
        %v4970 = vmax.f32 %v4938, 0.0
        %v4971 = vpack.c.bf16 %v4940, %v4939
        %v4972 = vpack.c.bf16 %v4942, %v4941
        %v4973 = vpack.c.bf16 %v4944, %v4943
        %v4974 = vpack.c.bf16 %v4946, %v4945
        %v4975 = vpack.c.bf16 %v4948, %v4947
        %v4976 = vpack.c.bf16 %v4950, %v4949
        %v4977 = vpack.c.bf16 %v4952, %v4951
        %v4978 = vpack.c.bf16 %v4954, %v4953
        %v4979 = vpack.c.bf16 %v4956, %v4955
        %v4980 = vpack.c.bf16 %v4958, %v4957
        %v4981 = vpack.c.bf16 %v4960, %v4959
        %v4982 = vpack.c.bf16 %v4962, %v4961
        %v4983 = vpack.c.bf16 %v4964, %v4963
        %v4984 = vpack.c.bf16 %v4966, %v4965
        %v4985 = vpack.c.bf16 %v4968, %v4967
        %v4986 = vpack.c.bf16 %v4970, %v4969
        %v5003 = vunpack.c.l.b16 %v4971
        %v5004 = vunpack.c.h.b16 %v4971
        %v5005 = vunpack.c.l.b16 %v4972
        %v5006 = vunpack.c.h.b16 %v4972
        %v5007 = vunpack.c.l.b16 %v4973
        %v5008 = vunpack.c.h.b16 %v4973
        %v5009 = vunpack.c.l.b16 %v4974
        %v5010 = vunpack.c.h.b16 %v4974
        %v5011 = vunpack.c.l.b16 %v4975
        %v5012 = vunpack.c.h.b16 %v4975
        %v5013 = vunpack.c.l.b16 %v4976
        %v5014 = vunpack.c.h.b16 %v4976
        %v5015 = vunpack.c.l.b16 %v4977
        %v5016 = vunpack.c.h.b16 %v4977
        %v5017 = vunpack.c.l.b16 %v4978
        %v5018 = vunpack.c.h.b16 %v4978
        %v5019 = vunpack.c.l.b16 %v4979
        %v5020 = vunpack.c.h.b16 %v4979
        %v5021 = vunpack.c.l.b16 %v4980
        %v5022 = vunpack.c.h.b16 %v4980
        %v5023 = vunpack.c.l.b16 %v4981
        %v5024 = vunpack.c.h.b16 %v4981
        %v5025 = vunpack.c.l.b16 %v4982
        %v5026 = vunpack.c.h.b16 %v4982
        %v5027 = vunpack.c.l.b16 %v4983
        %v5028 = vunpack.c.h.b16 %v4983
        %v5029 = vunpack.c.l.b16 %v4984
        %v5030 = vunpack.c.h.b16 %v4984
        %v5031 = vunpack.c.l.b16 %v4985
        %v5032 = vunpack.c.h.b16 %v4985
        %v5033 = vunpack.c.l.b16 %v4986
        %v5034 = vunpack.c.h.b16 %v4986
        %v5035 = vpack.c.b16 %v5003, %v5003
        %v5036 = vpack.c.b16 %v5004, %v5004
        %v5037 = vpack.c.b16 %v5005, %v5005
        %v5038 = vpack.c.b16 %v5006, %v5006
        %v5039 = vpack.c.b16 %v5007, %v5007
        %v5040 = vpack.c.b16 %v5008, %v5008
        %v5041 = vpack.c.b16 %v5009, %v5009
        %v5042 = vpack.c.b16 %v5010, %v5010
        %v5043 = vpack.c.b16 %v5011, %v5011
        %v5044 = vpack.c.b16 %v5012, %v5012
        %v5045 = vpack.c.b16 %v5013, %v5013
        %v5046 = vpack.c.b16 %v5014, %v5014
        %v5047 = vpack.c.b16 %v5015, %v5015
        %v5048 = vpack.c.b16 %v5016, %v5016
        %v5049 = vpack.c.b16 %v5017, %v5017
        %v5050 = vpack.c.b16 %v5018, %v5018
        %v5051 = vpack.c.b16 %v5019, %v5019
        %v5052 = vpack.c.b16 %v5020, %v5020
        %v5053 = vpack.c.b16 %v5021, %v5021
        %v5054 = vpack.c.b16 %v5022, %v5022
        %v5055 = vpack.c.b16 %v5023, %v5023
        %v5056 = vpack.c.b16 %v5024, %v5024
        %v5057 = vpack.c.b16 %v5025, %v5025
        %v5058 = vpack.c.b16 %v5026, %v5026
        %v5059 = vpack.c.b16 %v5027, %v5027
        %v5060 = vpack.c.b16 %v5028, %v5028
        %v5061 = vpack.c.b16 %v5029, %v5029
        %v5062 = vpack.c.b16 %v5030, %v5030
        %v5063 = vpack.c.b16 %v5031, %v5031
        %v5064 = vpack.c.b16 %v5032, %v5032
        %v5065 = vpack.c.b16 %v5033, %v5033
        %v5066 = vpack.c.b16 %v5034, %v5034
        %vm5099 = vcmask 125952
        %5100 = vst.msk [vmem:[%s401] sm:$0xf] %vm5099, %v5035
        %5101 = vst.msk [vmem:[%s401 + $0x4] sm:$0xf] %vm5099, %v5036
        %5102 = vst.msk [vmem:[%s401 + $0x8] sm:$0xf] %vm5099, %v5037
        %5103 = vst.msk [vmem:[%s401 + $0xc] sm:$0xf] %vm5099, %v5038
        %5104 = vst.msk [vmem:[%s401 + $0x10] sm:$0xf] %vm5099, %v5039
        %5105 = vst.msk [vmem:[%s401 + $0x14] sm:$0xf] %vm5099, %v5040
        %5106 = vst.msk [vmem:[%s401 + $0x18] sm:$0xf] %vm5099, %v5041
        %5107 = vst.msk [vmem:[%s401 + $0x1c] sm:$0xf] %vm5099, %v5042
        %5108 = vst.msk [vmem:[%s401 + $0x20] sm:$0xf] %vm5099, %v5043
        %5109 = vst.msk [vmem:[%s401 + $0x24] sm:$0xf] %vm5099, %v5044
        %5110 = vst.msk [vmem:[%s401 + $0x28] sm:$0xf] %vm5099, %v5045
        %5111 = vst.msk [vmem:[%s401 + $0x2c] sm:$0xf] %vm5099, %v5046
        %5112 = vst.msk [vmem:[%s401 + $0x30] sm:$0xf] %vm5099, %v5047
        %5113 = vst.msk [vmem:[%s401 + $0x34] sm:$0xf] %vm5099, %v5048
        %5114 = vst.msk [vmem:[%s401 + $0x38] sm:$0xf] %vm5099, %v5049
        %5115 = vst.msk [vmem:[%s401 + $0x3c] sm:$0xf] %vm5099, %v5050
        %5116 = vst.msk [vmem:[%s401 + $0x40] sm:$0xf] %vm5099, %v5051
        %5117 = vst.msk [vmem:[%s401 + $0x44] sm:$0xf] %vm5099, %v5052
        %5118 = vst.msk [vmem:[%s401 + $0x48] sm:$0xf] %vm5099, %v5053
        %5119 = vst.msk [vmem:[%s401 + $0x4c] sm:$0xf] %vm5099, %v5054
        %5120 = vst.msk [vmem:[%s401 + $0x50] sm:$0xf] %vm5099, %v5055
        %5121 = vst.msk [vmem:[%s401 + $0x54] sm:$0xf] %vm5099, %v5056
        %5122 = vst.msk [vmem:[%s401 + $0x58] sm:$0xf] %vm5099, %v5057
        %5123 = vst.msk [vmem:[%s401 + $0x5c] sm:$0xf] %vm5099, %v5058
        %5124 = vst.msk [vmem:[%s401 + $0x60] sm:$0xf] %vm5099, %v5059
        %5125 = vst.msk [vmem:[%s401 + $0x64] sm:$0xf] %vm5099, %v5060
        %5126 = vst.msk [vmem:[%s401 + $0x68] sm:$0xf] %vm5099, %v5061
        %5127 = vst.msk [vmem:[%s401 + $0x6c] sm:$0xf] %vm5099, %v5062
        %5128 = vst.msk [vmem:[%s401 + $0x70] sm:$0xf] %vm5099, %v5063
        %5129 = vst.msk [vmem:[%s401 + $0x74] sm:$0xf] %vm5099, %v5064
        %5130 = vst.msk [vmem:[%s401 + $0x78] sm:$0xf] %vm5099, %v5065
        %5131 = vst.msk [vmem:[%s401 + $0x7c] sm:$0xf] %vm5099, %v5066
        %s5132 = smul.u32 32, %s29
        %p5133 = scmp.lt.s32.totalorder %s28, 1
        %s5134 = scalar_select %p5133, %s28, 1
        %p5135 = scmp.lt.s32.totalorder %s5132, 31
        %s5136 = scalar_select %p5135, %s5132, 31
        %s5137 = smul.addr %s5134, 32
        %s5138 = sadd.s32 %s5136, %s5137
        %s5139 = smul.addr %s5138, 4
        %s5140 = scalar_lea.vmem %s10, %s5139
        // Predicated region
        $region65: #{tpu_custom_call.1} parent=59 // pred_check
          %p5141 = pneg %p271
        $region66: #{tpu_custom_call.1} parent=59 // pred_check_branch
          %5143 = sbr.rel (%p5141) target = $region68
        $region67: #{tpu_custom_call.1} parent=59 // pred_region
          %s5144 = smul.u32 32, %s29
        $region68: #{tpu_custom_call.1} parent=59 // pred_fallthru
          _
      $region60: #{tpu_custom_call.1} parent=5 // pred_fallthru
        _
      %p5145 = scmp.le.s32.totalorder 2, %s19
      // Predicated region
      $region69: #{tpu_custom_call.1} parent=5 // pred_check
        %p5146 = pneg %p5145
      $region70: #{tpu_custom_call.1} parent=5 // pred_check_branch
        %5148 = sbr.rel (%p5146) target = $region72
      $region71: #{tpu_custom_call.1} parent=5 // pred_region
        %s5149 = ssub.s32 %s19, 2
        // Predicated region
        $region73: #{tpu_custom_call.1} parent=71 // pred_check
          %p5150 = pneg %p277
        $region74: #{tpu_custom_call.1} parent=71 // pred_check_branch
          %5152 = sbr.rel (%p5150) target = $region76
        $region75: #{tpu_custom_call.1} parent=71 // pred_region
          %s5153 = smul.u32 32, %s31
          %p5154 = scmp.lt.s32.totalorder %s30, 1
          %s5155 = scalar_select %p5154, %s30, 1
          %p5156 = scmp.lt.s32.totalorder %s5153, 31
          %s5157 = scalar_select %p5156, %s5153, 31
          %s5158 = smul.addr %s5155, 32
          %s5159 = sadd.s32 %s5157, %s5158
          %s5160 = smul.addr %s5159, 4
          %s5161 = scalar_lea.vmem %s10, %s5160
        $region76: #{tpu_custom_call.1} parent=71 // pred_fallthru
          _
      $region72: #{tpu_custom_call.1} parent=5 // pred_fallthru
        _
    $region6: #{tpu_custom_call.1} parent=1 // loop_footer
      %s23 = sadd.s32 1, %s19
    $region7: #{tpu_custom_call.1} parent=1 // loop_footer_branch
      %18 = sbr.rel target = $region3
    $region8: #{tpu_custom_call.1} parent=1 // loop_exit
      _
    %5162 = vsyncpa [#allocation3], 1
    %s5163 = scalar_lea.sflag [#allocation3], 1
    %5164 = vsyncpa %s5163, 1

// kernel: tpu_custom_call.1
$region0: #{tpu_custom_call.1}
  #allocation0 [shape = 'u32[]', space=smem, size = 0x4, offset = 0x4, fixed_abs, tag = 'smem constant byte address 0x4 - core index']
  #allocation1 [shape = 'u32[144,128]{1,0:T(1,128)}', space=vmem, size = 0x12000, scoped, tag = 'internal scratch']
  %s0 = inlined_call_operand.hbm [shape: bf16[2,16,16,16], index: 0, kind: input, shape index: {}]
  %s1 = inlined_call_operand.vmem [shape: bf16[16,4], index: 1, kind: input, shape index: {}]
  %s2 = inlined_call_operand.vmem [shape: f32[1,4], index: 2, kind: input, shape index: {}]
  %s3 = inlined_call_operand.vmem [shape: f32[1,4], index: 3, kind: input, shape index: {}]
  %s4 = inlined_call_operand.vmem [shape: bf16[9,4,4], index: 4, kind: input, shape index: {}]
  %s5 = inlined_call_operand.vmem [shape: f32[1,4], index: 5, kind: input, shape index: {}]
  %s6 = inlined_call_operand.vmem [shape: f32[1,4], index: 6, kind: input, shape index: {}]
  %s7 = inlined_call_operand.vmem [shape: bf16[4,16], index: 7, kind: input, shape index: {}]
  %s8 = inlined_call_operand.vmem [shape: f32[1,16], index: 8, kind: input, shape index: {}]
  %s9 = inlined_call_operand.vmem [shape: f32[1,16], index: 9, kind: input, shape index: {}]
  %s10 = inlined_call_operand.vmem [shape: bf16[2,256,16], index: 10, kind: output, shape index: {}]
  %s11 = sld [smem:[#allocation0]]
  $region77: #{tpu_custom_call.1} parent=0
    _
  %s13 = ssub.s32 1, %s11
  %s14 = scalar_select 0, %s13, %s11
  $region1: #{tpu_custom_call.1} parent=0
    #allocation2 [shape = 'u8[131072]{0}', space=vmem, size = 0x20000, scoped, tag = 'input window, operand 0']
    #allocation3 [shape = 's32[2]{0}', space=sflag, size = 0x8, scoped, tag = 'scoped memory for tpu_custom_call.1']
    %15 = vsyncpa [#allocation3], 0
    %s16 = scalar_lea.sflag [#allocation3], 1
    %17 = vsyncpa %s16, 0
    loop: start=0, step=1, limit=4
    $region2: #{tpu_custom_call.1} parent=1 // loop_pre_header
      _
    $region3: #{tpu_custom_call.1} parent=1 // loop_header
      %s19 = sphi 0, %s23
      %p20 = scmp.ge.s32.totalorder %s19, 4
      %s26 = sphi 0, %s38
      %s27 = sphi 0, %s34
      %s28 = sphi 0, %s26
      %s29 = sphi 0, %s27
      %s30 = sphi 0, %s28
      %s31 = sphi 0, %s29
      %s41 = sphi 0, %s43
      %s44 = sphi 0, %s41
      %s45 = sphi 0, %s44
      %s61 = sphi 0, %s45
      %s65 = sphi 0, %s65
      %s67 = sphi 0, %s65
      %s68 = sphi 0, %s67
      %s82 = sphi 0, %s68
      %s86 = sphi 0, %s86
      %s88 = sphi 0, %s86
      %s89 = sphi 0, %s88
      %s103 = sphi 0, %s89
      %s107 = sphi 0, %s107
      %s109 = sphi 0, %s107
      %s110 = sphi 0, %s109
      %s124 = sphi 0, %s110
      %s128 = sphi 0, %s128
      %s130 = sphi 0, %s128
      %s131 = sphi 0, %s130
      %s145 = sphi 0, %s131
      %s149 = sphi 0, %s149
      %s151 = sphi 0, %s149
      %s152 = sphi 0, %s151
      %s166 = sphi 0, %s152
      %s170 = sphi 0, %s170
      %s172 = sphi 0, %s170
      %s173 = sphi 0, %s172
      %s187 = sphi 0, %s173
      %s191 = sphi 0, %s191
      %s193 = sphi 0, %s191
      %s194 = sphi 0, %s193
      %s208 = sphi 0, %s194
      %s212 = sphi 0, %s212
      %s214 = sphi 0, %s212
      %s215 = sphi 0, %s214
      %s229 = sphi 0, %s215
      %s233 = sphi 0, %s233
      %s235 = sphi 0, %s233
      %s236 = sphi 0, %s235
      %s250 = sphi 0, %s236
      %s258 = sphi 0, %s260
      %s261 = sphi 0, %s258
      %s262 = sphi 0, %s261
      %s278 = sphi 0, %s262
    $region4: #{tpu_custom_call.1} parent=1 // loop_header_branch
      %22 = sbr.rel (%p20) target = $region8
    $region5: #{tpu_custom_call.1} parent=1 // loop_body
      %s24 = ssub.s32 %s19, 1
      %s25 = ssub.s32 %s19, 2
      %s32 = sadd.s32 1, %s27
      %p33 = scmp.ge.s32.totalorder %s32, 1
      %s34 = scalar_select %p33, 0, %s32
      %s35 = sadd.s32 1, %s26
      %s36 = scalar_select %p33, %s35, %s26
      %p37 = scmp.ge.s32.totalorder %s36, 2
      %s38 = scalar_select %p37, 0, %s36
      %s39 = ssub.s32 %s26, %s38
      %p40 = scmp.eq.s32.totalorder %s39, 0
      %s42 = sadd.s32 %s41, 1
      %s43 = scalar_select %p40, %s41, %s42
      %p46 = pneg %p40
      %p47 = scmp.eq.s32.totalorder %s19, 1
      %p48 = por %p46, %p47
      %p49 = scmp.ne.s32.totalorder %s41, %s44
      %p50 = scmp.eq.s32.totalorder %s19, 0
      %p51 = por %p49, %p50
      %p52 = scmp.ne.s32.totalorder %s41, %s44
      %p53 = scmp.eq.s32.totalorder %s24, 1
      %p54 = por %p52, %p53
      %p55 = scmp.ne.s32.totalorder %s44, %s45
      %p56 = scmp.eq.s32.totalorder %s24, 0
      %p57 = por %p55, %p56
      %p58 = scmp.ne.s32.totalorder %s44, %s45
      %p59 = scmp.eq.s32.totalorder %s25, 1
      %p60 = por %p58, %p59
      %p62 = scmp.ne.s32.totalorder %s45, %s61
      %p63 = scmp.eq.s32.totalorder %s25, 0
      %p64 = por %p62, %p63
      %s66 = sadd.s32 %s65, 1
      %p69 = scmp.eq.s32.totalorder %s19, 1
      %p70 = scmp.ne.s32.totalorder %s65, %s67
      %p71 = scmp.eq.s32.totalorder %s19, 0
      %p72 = por %p70, %p71
      %p73 = scmp.ne.s32.totalorder %s65, %s67
      %p74 = scmp.eq.s32.totalorder %s24, 1
      %p75 = por %p73, %p74
      %p76 = scmp.ne.s32.totalorder %s67, %s68
      %p77 = scmp.eq.s32.totalorder %s24, 0
      %p78 = por %p76, %p77
      %p79 = scmp.ne.s32.totalorder %s67, %s68
      %p80 = scmp.eq.s32.totalorder %s25, 1
      %p81 = por %p79, %p80
      %p83 = scmp.ne.s32.totalorder %s68, %s82
      %p84 = scmp.eq.s32.totalorder %s25, 0
      %p85 = por %p83, %p84
      %s87 = sadd.s32 %s86, 1
      %p90 = scmp.eq.s32.totalorder %s19, 1
      %p91 = scmp.ne.s32.totalorder %s86, %s88
      %p92 = scmp.eq.s32.totalorder %s19, 0
      %p93 = por %p91, %p92
      %p94 = scmp.ne.s32.totalorder %s86, %s88
      %p95 = scmp.eq.s32.totalorder %s24, 1
      %p96 = por %p94, %p95
      %p97 = scmp.ne.s32.totalorder %s88, %s89
      %p98 = scmp.eq.s32.totalorder %s24, 0
      %p99 = por %p97, %p98
      %p100 = scmp.ne.s32.totalorder %s88, %s89
      %p101 = scmp.eq.s32.totalorder %s25, 1
      %p102 = por %p100, %p101
      %p104 = scmp.ne.s32.totalorder %s89, %s103
      %p105 = scmp.eq.s32.totalorder %s25, 0
      %p106 = por %p104, %p105
      %s108 = sadd.s32 %s107, 1
      %p111 = scmp.eq.s32.totalorder %s19, 1
      %p112 = scmp.ne.s32.totalorder %s107, %s109
      %p113 = scmp.eq.s32.totalorder %s19, 0
      %p114 = por %p112, %p113
      %p115 = scmp.ne.s32.totalorder %s107, %s109
      %p116 = scmp.eq.s32.totalorder %s24, 1
      %p117 = por %p115, %p116
      %p118 = scmp.ne.s32.totalorder %s109, %s110
      %p119 = scmp.eq.s32.totalorder %s24, 0
      %p120 = por %p118, %p119
      %p121 = scmp.ne.s32.totalorder %s109, %s110
      %p122 = scmp.eq.s32.totalorder %s25, 1
      %p123 = por %p121, %p122
      %p125 = scmp.ne.s32.totalorder %s110, %s124
      %p126 = scmp.eq.s32.totalorder %s25, 0
      %p127 = por %p125, %p126
      %s129 = sadd.s32 %s128, 1
      %p132 = scmp.eq.s32.totalorder %s19, 1
      %p133 = scmp.ne.s32.totalorder %s128, %s130
      %p134 = scmp.eq.s32.totalorder %s19, 0
      %p135 = por %p133, %p134
      %p136 = scmp.ne.s32.totalorder %s128, %s130
      %p137 = scmp.eq.s32.totalorder %s24, 1
      %p138 = por %p136, %p137
      %p139 = scmp.ne.s32.totalorder %s130, %s131
      %p140 = scmp.eq.s32.totalorder %s24, 0
      %p141 = por %p139, %p140
      %p142 = scmp.ne.s32.totalorder %s130, %s131
      %p143 = scmp.eq.s32.totalorder %s25, 1
      %p144 = por %p142, %p143
      %p146 = scmp.ne.s32.totalorder %s131, %s145
      %p147 = scmp.eq.s32.totalorder %s25, 0
      %p148 = por %p146, %p147
      %s150 = sadd.s32 %s149, 1
      %p153 = scmp.eq.s32.totalorder %s19, 1
      %p154 = scmp.ne.s32.totalorder %s149, %s151
      %p155 = scmp.eq.s32.totalorder %s19, 0
      %p156 = por %p154, %p155
      %p157 = scmp.ne.s32.totalorder %s149, %s151
      %p158 = scmp.eq.s32.totalorder %s24, 1
      %p159 = por %p157, %p158
      %p160 = scmp.ne.s32.totalorder %s151, %s152
      %p161 = scmp.eq.s32.totalorder %s24, 0
      %p162 = por %p160, %p161
      %p163 = scmp.ne.s32.totalorder %s151, %s152
      %p164 = scmp.eq.s32.totalorder %s25, 1
      %p165 = por %p163, %p164
      %p167 = scmp.ne.s32.totalorder %s152, %s166
      %p168 = scmp.eq.s32.totalorder %s25, 0
      %p169 = por %p167, %p168
      %s171 = sadd.s32 %s170, 1
      %p174 = scmp.eq.s32.totalorder %s19, 1
      %p175 = scmp.ne.s32.totalorder %s170, %s172
      %p176 = scmp.eq.s32.totalorder %s19, 0
      %p177 = por %p175, %p176
      %p178 = scmp.ne.s32.totalorder %s170, %s172
      %p179 = scmp.eq.s32.totalorder %s24, 1
      %p180 = por %p178, %p179
      %p181 = scmp.ne.s32.totalorder %s172, %s173
      %p182 = scmp.eq.s32.totalorder %s24, 0
      %p183 = por %p181, %p182
      %p184 = scmp.ne.s32.totalorder %s172, %s173
      %p185 = scmp.eq.s32.totalorder %s25, 1
      %p186 = por %p184, %p185
      %p188 = scmp.ne.s32.totalorder %s173, %s187
      %p189 = scmp.eq.s32.totalorder %s25, 0
      %p190 = por %p188, %p189
      %s192 = sadd.s32 %s191, 1
      %p195 = scmp.eq.s32.totalorder %s19, 1
      %p196 = scmp.ne.s32.totalorder %s191, %s193
      %p197 = scmp.eq.s32.totalorder %s19, 0
      %p198 = por %p196, %p197
      %p199 = scmp.ne.s32.totalorder %s191, %s193
      %p200 = scmp.eq.s32.totalorder %s24, 1
      %p201 = por %p199, %p200
      %p202 = scmp.ne.s32.totalorder %s193, %s194
      %p203 = scmp.eq.s32.totalorder %s24, 0
      %p204 = por %p202, %p203
      %p205 = scmp.ne.s32.totalorder %s193, %s194
      %p206 = scmp.eq.s32.totalorder %s25, 1
      %p207 = por %p205, %p206
      %p209 = scmp.ne.s32.totalorder %s194, %s208
      %p210 = scmp.eq.s32.totalorder %s25, 0
      %p211 = por %p209, %p210
      %s213 = sadd.s32 %s212, 1
      %p216 = scmp.eq.s32.totalorder %s19, 1
      %p217 = scmp.ne.s32.totalorder %s212, %s214
      %p218 = scmp.eq.s32.totalorder %s19, 0
      %p219 = por %p217, %p218
      %p220 = scmp.ne.s32.totalorder %s212, %s214
      %p221 = scmp.eq.s32.totalorder %s24, 1
      %p222 = por %p220, %p221
      %p223 = scmp.ne.s32.totalorder %s214, %s215
      %p224 = scmp.eq.s32.totalorder %s24, 0
      %p225 = por %p223, %p224
      %p226 = scmp.ne.s32.totalorder %s214, %s215
      %p227 = scmp.eq.s32.totalorder %s25, 1
      %p228 = por %p226, %p227
      %p230 = scmp.ne.s32.totalorder %s215, %s229
      %p231 = scmp.eq.s32.totalorder %s25, 0
      %p232 = por %p230, %p231
      %s234 = sadd.s32 %s233, 1
      %p237 = scmp.eq.s32.totalorder %s19, 1
      %p238 = scmp.ne.s32.totalorder %s233, %s235
      %p239 = scmp.eq.s32.totalorder %s19, 0
      %p240 = por %p238, %p239
      %p241 = scmp.ne.s32.totalorder %s233, %s235
      %p242 = scmp.eq.s32.totalorder %s24, 1
      %p243 = por %p241, %p242
      %p244 = scmp.ne.s32.totalorder %s235, %s236
      %p245 = scmp.eq.s32.totalorder %s24, 0
      %p246 = por %p244, %p245
      %p247 = scmp.ne.s32.totalorder %s235, %s236
      %p248 = scmp.eq.s32.totalorder %s25, 1
      %p249 = por %p247, %p248
      %p251 = scmp.ne.s32.totalorder %s236, %s250
      %p252 = scmp.eq.s32.totalorder %s25, 0
      %p253 = por %p251, %p252
      %s254 = ssub.s32 %s26, %s38
      %s255 = ssub.s32 %s27, %s34
      %s256 = sor.u32 %s254, %s255
      %p257 = scmp.eq.s32.totalorder %s256, 0
      %s259 = sadd.s32 %s258, 1
      %s260 = scalar_select %p257, %s258, %s259
      %p263 = pneg %p257
      %p264 = scmp.eq.s32.totalorder %s19, 1
      %p265 = por %p263, %p264
      %p266 = scmp.ne.s32.totalorder %s258, %s261
      %p267 = scmp.eq.s32.totalorder %s19, 0
      %p268 = por %p266, %p267
      %p269 = scmp.ne.s32.totalorder %s258, %s261
      %p270 = scmp.eq.s32.totalorder %s24, 1
      %p271 = por %p269, %p270
      %p272 = scmp.ne.s32.totalorder %s261, %s262
      %p273 = scmp.eq.s32.totalorder %s24, 0
      %p274 = por %p272, %p273
      %p275 = scmp.ne.s32.totalorder %s261, %s262
      %p276 = scmp.eq.s32.totalorder %s25, 1
      %p277 = por %p275, %p276
      %p279 = scmp.ne.s32.totalorder %s262, %s278
      %p280 = scmp.eq.s32.totalorder %s25, 0
      %p281 = por %p279, %p280
      %p282 = scmp.le.s32.totalorder 1, %s19
      %p283 = scmp.lt.s32.totalorder %s19, 3
      %p284 = pnand %p282, %p283
      %p285 = pneg %p284
      // Predicated region
      $region9: #{tpu_custom_call.1} parent=5 // pred_check
        _
      $region10: #{tpu_custom_call.1} parent=5 // pred_check_branch
        %287 = sbr.rel (%p284) target = $region12
      $region11: #{tpu_custom_call.1} parent=5 // pred_region
        %s288 = ssub.s32 %s19, 1
        // Predicated region
        $region13: #{tpu_custom_call.1} parent=11 // pred_check
          %p289 = pneg %p78
        $region14: #{tpu_custom_call.1} parent=11 // pred_check_branch
          %291 = sbr.rel (%p289) target = $region16
        $region15: #{tpu_custom_call.1} parent=11 // pred_region
          _
        $region16: #{tpu_custom_call.1} parent=11 // pred_fallthru
          _
        // Predicated region
        $region17: #{tpu_custom_call.1} parent=11 // pred_check
          %p292 = pneg %p99
        $region18: #{tpu_custom_call.1} parent=11 // pred_check_branch
          %294 = sbr.rel (%p292) target = $region20
        $region19: #{tpu_custom_call.1} parent=11 // pred_region
          _
        $region20: #{tpu_custom_call.1} parent=11 // pred_fallthru
          _
        // Predicated region
        $region21: #{tpu_custom_call.1} parent=11 // pred_check
          %p295 = pneg %p120
        $region22: #{tpu_custom_call.1} parent=11 // pred_check_branch
          %297 = sbr.rel (%p295) target = $region24
        $region23: #{tpu_custom_call.1} parent=11 // pred_region
          _
        $region24: #{tpu_custom_call.1} parent=11 // pred_fallthru
          _
        // Predicated region
        $region25: #{tpu_custom_call.1} parent=11 // pred_check
          %p298 = pneg %p141
        $region26: #{tpu_custom_call.1} parent=11 // pred_check_branch
          %300 = sbr.rel (%p298) target = $region28
        $region27: #{tpu_custom_call.1} parent=11 // pred_region
          _
        $region28: #{tpu_custom_call.1} parent=11 // pred_fallthru
          _
        // Predicated region
        $region29: #{tpu_custom_call.1} parent=11 // pred_check
          %p301 = pneg %p162
        $region30: #{tpu_custom_call.1} parent=11 // pred_check_branch
          %303 = sbr.rel (%p301) target = $region32
        $region31: #{tpu_custom_call.1} parent=11 // pred_region
          _
        $region32: #{tpu_custom_call.1} parent=11 // pred_fallthru
          _
        // Predicated region
        $region33: #{tpu_custom_call.1} parent=11 // pred_check
          %p304 = pneg %p183
        $region34: #{tpu_custom_call.1} parent=11 // pred_check_branch
          %306 = sbr.rel (%p304) target = $region36
        $region35: #{tpu_custom_call.1} parent=11 // pred_region
          _
        $region36: #{tpu_custom_call.1} parent=11 // pred_fallthru
          _
        // Predicated region
        $region37: #{tpu_custom_call.1} parent=11 // pred_check
          %p307 = pneg %p204
        $region38: #{tpu_custom_call.1} parent=11 // pred_check_branch
          %309 = sbr.rel (%p307) target = $region40
        $region39: #{tpu_custom_call.1} parent=11 // pred_region
          _
        $region40: #{tpu_custom_call.1} parent=11 // pred_fallthru
          _
        // Predicated region
        $region41: #{tpu_custom_call.1} parent=11 // pred_check
          %p310 = pneg %p225
        $region42: #{tpu_custom_call.1} parent=11 // pred_check_branch
          %312 = sbr.rel (%p310) target = $region44
        $region43: #{tpu_custom_call.1} parent=11 // pred_region
          _
        $region44: #{tpu_custom_call.1} parent=11 // pred_fallthru
          _
        // Predicated region
        $region45: #{tpu_custom_call.1} parent=11 // pred_check
          %p313 = pneg %p246
        $region46: #{tpu_custom_call.1} parent=11 // pred_check_branch
          %315 = sbr.rel (%p313) target = $region48
        $region47: #{tpu_custom_call.1} parent=11 // pred_region
          _
        $region48: #{tpu_custom_call.1} parent=11 // pred_fallthru
          _
      $region12: #{tpu_custom_call.1} parent=5 // pred_fallthru
        _
      %p316 = scmp.lt.s32.totalorder %s19, 2
      // Predicated region
      $region49: #{tpu_custom_call.1} parent=5 // pred_check
        %p317 = pneg %p316
      $region50: #{tpu_custom_call.1} parent=5 // pred_check_branch
        %319 = sbr.rel (%p317) target = $region52
      $region51: #{tpu_custom_call.1} parent=5 // pred_region
        // Predicated region
        $region53: #{tpu_custom_call.1} parent=51 // pred_check
          %p320 = pneg %p51
        $region54: #{tpu_custom_call.1} parent=51 // pred_check_branch
          %322 = sbr.rel (%p320) target = $region56
        $region55: #{tpu_custom_call.1} parent=51 // pred_region
          %s323 = sand.u32 %s41, 1
          %s324 = scalar_lea.sflag [#allocation3], %s323
          %s325 = sand.u32 %s41, 1
          %s326 = smul.addr %s325, 128
          %s327 = scalar_lea.vmem [#allocation2], %s326
          %s329 = ssub.s32 2048, 2048
          %330 = vsyncadd %s324, %s329
          %s331 = smul.addr %s26, 32
          %s332 = smul.addr %s331, 64
          %s333 = scalar_lea.hbm %s0, %s332
          %s334 = sshll.u32 %s327, 4
          %s335 = int_to_ptr.vmem [resolvable:$true] %s334
          %340 = dma.hbm_to_vmem [thread:$0]  %s333, 2048, %s335, %s324, 64, 64, 4
        $region56: #{tpu_custom_call.1} parent=51 // pred_fallthru
          _
      $region52: #{tpu_custom_call.1} parent=5 // pred_fallthru
        _
      %p341 = scmp.le.s32.totalorder 1, %s19
      %p342 = scmp.lt.s32.totalorder %s19, 3
      %p343 = pnand %p341, %p342
      %p344 = pneg %p343
      // Predicated region
      $region57: #{tpu_custom_call.1} parent=5 // pred_check
        _
      $region58: #{tpu_custom_call.1} parent=5 // pred_check_branch
        %346 = sbr.rel (%p343) target = $region60
      $region59: #{tpu_custom_call.1} parent=5 // pred_region
        %s347 = ssub.s32 %s19, 1
        %s348 = sand.u32 %s44, 1
        %s349 = scalar_lea.sflag [#allocation3], %s348
        %s350 = sand.u32 %s44, 1
        %s351 = smul.addr %s350, 128
        %s352 = scalar_lea.vmem [#allocation2], %s351
        // Predicated region
        $region61: #{tpu_custom_call.1} parent=59 // pred_check
          %p353 = pneg %p57
        $region62: #{tpu_custom_call.1} parent=59 // pred_check_branch
          %355 = sbr.rel (%p353) target = $region64
        $region63: #{tpu_custom_call.1} parent=59 // pred_region
          %356 = dma.done %s349, 2048
        $region64: #{tpu_custom_call.1} parent=59 // pred_fallthru
          _
        %s357 = sand.u32 %s44, 1
        %s358 = scalar_lea.sflag [#allocation3], %s357
        %s359 = sand.u32 %s44, 1
        %s360 = smul.addr %s359, 128
        %s361 = scalar_lea.vmem [#allocation2], %s360
        %p362 = pneg %p57
        %p363 = pneg %p54
        %p364 = pneg %p78
        %p365 = pneg %p75
        %p366 = pneg %p99
        %p367 = pneg %p96
        %p368 = pneg %p120
        %p369 = pneg %p117
        %p370 = pneg %p141
        %p371 = pneg %p138
        %p372 = pneg %p162
        %p373 = pneg %p159
        %p374 = pneg %p183
        %p375 = pneg %p180
        %p376 = pneg %p204
        %p377 = pneg %p201
        %p378 = pneg %p225
        %p379 = pneg %p222
        %p380 = pneg %p246
        %p381 = pneg %p243
        %p382 = pneg %p274
        %p383 = pneg %p271
        %s384 = smul.u32 32, %s29
        %p385 = scmp.lt.s32.totalorder %s28, 1
        %s386 = scalar_select %p385, %s28, 1
        %p387 = scmp.lt.s32.totalorder %s384, 31
        %s388 = scalar_select %p387, %s384, 31
        %s389 = smul.addr %s386, 32
        %s390 = sadd.s32 %s388, %s389
        %s391 = smul.addr %s390, 4
        %s392 = scalar_lea.vmem %s10, %s391
        %s393 = smul.u32 32, %s29
        %p394 = scmp.lt.s32.totalorder %s28, 1
        %s395 = scalar_select %p394, %s28, 1
        %p396 = scmp.lt.s32.totalorder %s393, 31
        %s397 = scalar_select %p396, %s393, 31
        %s398 = smul.addr %s395, 32
        %s399 = sadd.s32 %s397, %s398
        %s400 = smul.addr %s399, 4
        %s401 = scalar_lea.vmem %s10, %s400
        %s402 = smul.u32 32, %s29
        %s406 = smul.u32 %s29, 16
        %s407 = ssub.s32 %s406, 1
        %p408 = scmp.gt.s32.totalorder %s407, 0
        %s409 = scalar_select %p408, %s407, 0
        %s410 = smul.u32 %s409, 2
        %s411 = smul.addr %s410, 4
        %s412 = scalar_lea.vmem %s352, %s411 [#allocation2]
        %v413 = vld [vmem:[%s412] sm:$0xf]
        %v414 = vld [vmem:[%s412 + $0x4] sm:$0xf]
        %s415 = smul.u32 %s406, 2
        %s416 = smul.addr %s415, 4
        %s417 = scalar_lea.vmem %s352, %s416 [#allocation2]
        %v418 = vld [vmem:[%s417] sm:$0xf]
        %v419 = vld [vmem:[%s417 + $0x4] sm:$0xf]
        %v420 = vld [vmem:[%s417 + $0x8] sm:$0xf]
        %v421 = vld [vmem:[%s417 + $0xc] sm:$0xf]
        %v422 = vld [vmem:[%s417 + $0x10] sm:$0xf]
        %v423 = vld [vmem:[%s417 + $0x14] sm:$0xf]
        %v424 = vld [vmem:[%s417 + $0x18] sm:$0xf]
        %v425 = vld [vmem:[%s417 + $0x1c] sm:$0xf]
        %v426 = vld [vmem:[%s417 + $0x20] sm:$0xf]
        %v427 = vld [vmem:[%s417 + $0x24] sm:$0xf]
        %v428 = vld [vmem:[%s417 + $0x28] sm:$0xf]
        %v429 = vld [vmem:[%s417 + $0x2c] sm:$0xf]
        %v430 = vld [vmem:[%s417 + $0x30] sm:$0xf]
        %v431 = vld [vmem:[%s417 + $0x34] sm:$0xf]
        %v432 = vld [vmem:[%s417 + $0x38] sm:$0xf]
        %v433 = vld [vmem:[%s417 + $0x3c] sm:$0xf]
        %v434 = vld [vmem:[%s417 + $0x40] sm:$0xf]
        %v435 = vld [vmem:[%s417 + $0x44] sm:$0xf]
        %v436 = vld [vmem:[%s417 + $0x48] sm:$0xf]
        %v437 = vld [vmem:[%s417 + $0x4c] sm:$0xf]
        %v438 = vld [vmem:[%s417 + $0x50] sm:$0xf]
        %v439 = vld [vmem:[%s417 + $0x54] sm:$0xf]
        %v440 = vld [vmem:[%s417 + $0x58] sm:$0xf]
        %v441 = vld [vmem:[%s417 + $0x5c] sm:$0xf]
        %v442 = vld [vmem:[%s417 + $0x60] sm:$0xf]
        %v443 = vld [vmem:[%s417 + $0x64] sm:$0xf]
        %v444 = vld [vmem:[%s417 + $0x68] sm:$0xf]
        %v445 = vld [vmem:[%s417 + $0x6c] sm:$0xf]
        %v446 = vld [vmem:[%s417 + $0x70] sm:$0xf]
        %v447 = vld [vmem:[%s417 + $0x74] sm:$0xf]
        %v448 = vld [vmem:[%s417 + $0x78] sm:$0xf]
        %v449 = vld [vmem:[%s417 + $0x7c] sm:$0xf]
        %s450 = sadd.s32 %s406, 16
        %p451 = scmp.lt.s32.totalorder %s450, 15
        %s452 = scalar_select %p451, %s450, 15
        %s453 = smul.u32 %s452, 2
        %s454 = smul.addr %s453, 4
        %s455 = scalar_lea.vmem %s352, %s454 [#allocation2]
        %v456 = vld [vmem:[%s455] sm:$0xf]
        %v457 = vld [vmem:[%s455 + $0x4] sm:$0xf]
        %v458 = vld [vmem:[%s1] sm:$0xf]
        %v459 = vld [vmem:[%s1 + $0x4] sm:$0xf]
        %v496 = vunpack.c.l.b16 %v413
        %v497 = vunpack.c.l.b16 %v414
        %v498 = vunpack.c.l.b16 %v418
        %v499 = vunpack.c.l.b16 %v419
        %v500 = vunpack.c.l.b16 %v420
        %v501 = vunpack.c.l.b16 %v421
        %v502 = vunpack.c.l.b16 %v422
        %v503 = vunpack.c.l.b16 %v423
        %v504 = vunpack.c.l.b16 %v424
        %v505 = vunpack.c.l.b16 %v425
        %v506 = vunpack.c.l.b16 %v426
        %v507 = vunpack.c.l.b16 %v427
        %v508 = vunpack.c.l.b16 %v428
        %v509 = vunpack.c.l.b16 %v429
        %v510 = vunpack.c.l.b16 %v430
        %v511 = vunpack.c.l.b16 %v431
        %v512 = vunpack.c.l.b16 %v432
        %v513 = vunpack.c.l.b16 %v433
        %v514 = vunpack.c.l.b16 %v434
        %v515 = vunpack.c.l.b16 %v435
        %v516 = vunpack.c.l.b16 %v436
        %v517 = vunpack.c.l.b16 %v437
        %v518 = vunpack.c.l.b16 %v438
        %v519 = vunpack.c.l.b16 %v439
        %v520 = vunpack.c.l.b16 %v440
        %v521 = vunpack.c.l.b16 %v441
        %v522 = vunpack.c.l.b16 %v442
        %v523 = vunpack.c.l.b16 %v443
        %v524 = vunpack.c.l.b16 %v444
        %v525 = vunpack.c.l.b16 %v445
        %v526 = vunpack.c.l.b16 %v446
        %v527 = vunpack.c.l.b16 %v447
        %v528 = vunpack.c.l.b16 %v448
        %v529 = vunpack.c.l.b16 %v449
        %v530 = vunpack.c.l.b16 %v456
        %v531 = vunpack.c.l.b16 %v457
        %v532 = vpack.c.b16 %v497, %v496
        %v533 = vpack.c.b16 %v499, %v498
        %v534 = vpack.c.b16 %v501, %v500
        %v535 = vpack.c.b16 %v503, %v502
        %v536 = vpack.c.b16 %v505, %v504
        %v537 = vpack.c.b16 %v507, %v506
        %v538 = vpack.c.b16 %v509, %v508
        %v539 = vpack.c.b16 %v511, %v510
        %v540 = vpack.c.b16 %v513, %v512
        %v541 = vpack.c.b16 %v515, %v514
        %v542 = vpack.c.b16 %v517, %v516
        %v543 = vpack.c.b16 %v519, %v518
        %v544 = vpack.c.b16 %v521, %v520
        %v545 = vpack.c.b16 %v523, %v522
        %v546 = vpack.c.b16 %v525, %v524
        %v547 = vpack.c.b16 %v527, %v526
        %v548 = vpack.c.b16 %v529, %v528
        %v549 = vpack.c.b16 %v531, %v530
        %v552 = vunpack.c.l.b16 %v458
        %v553 = vunpack.c.l.b16 %v459
        %v554 = vpack.c.b16 %v553, %v552
        %vm556 = vcmask 130048
        %v558 = vsel %vm556, %v532, 0
        %v561 = vsel %vm556, %v533, 0
        %v564 = vsel %vm556, %v534, 0
        %v567 = vsel %vm556, %v535, 0
        %v570 = vsel %vm556, %v536, 0
        %v573 = vsel %vm556, %v537, 0
        %v576 = vsel %vm556, %v538, 0
        %v579 = vsel %vm556, %v539, 0
        %v582 = vsel %vm556, %v540, 0
        %v585 = vsel %vm556, %v541, 0
        %v588 = vsel %vm556, %v542, 0
        %v591 = vsel %vm556, %v543, 0
        %v594 = vsel %vm556, %v544, 0
        %v597 = vsel %vm556, %v545, 0
        %v600 = vsel %vm556, %v546, 0
        %v603 = vsel %vm556, %v547, 0
        %v606 = vsel %vm556, %v548, 0
        %v609 = vsel %vm556, %v549, 0
        %611 = vmatprep.subr.bf16.mxu0 0
        %612 = vmatpush1.bf16.msra.mxu0 %v554
        %613 = vmatprep.subr.bf16.mxu0 0
        %614 = vmatpush1.bf16.msra.mxu0 0
        %615 = vmatprep.subr.bf16.mxu0 0
        %616 = vmatpush1.bf16.msra.mxu0 0
        %617 = vmatprep.subr.bf16.mxu0 0
        %618 = vmatpush1.bf16.msra.mxu0 0
        %619 = vmatprep.subr.bf16.mxu0 0
        %620 = vmatpush1.bf16.msra.mxu0 0
        %621 = vmatprep.subr.bf16.mxu0 0
        %622 = vmatpush1.bf16.msra.mxu0 0
        %623 = vmatprep.subr.bf16.mxu0 0
        %624 = vmatpush1.bf16.msra.mxu0 0
        %625 = vmatprep.subr.bf16.mxu0 0
        %626 = vmatpush1.bf16.msra.mxu0 0
        %627 = vmatprep.subr.bf16.mxu0 0
        %628 = vmatpush1.bf16.msra.mxu0 0
        %629 = vmatprep.subr.bf16.mxu0 0
        %630 = vmatpush1.bf16.msra.mxu0 0
        %631 = vmatprep.subr.bf16.mxu0 0
        %632 = vmatpush1.bf16.msra.mxu0 0
        %633 = vmatprep.subr.bf16.mxu0 0
        %634 = vmatpush1.bf16.msra.mxu0 0
        %635 = vmatprep.subr.bf16.mxu0 0
        %636 = vmatpush1.bf16.msra.mxu0 0
        %637 = vmatprep.subr.bf16.mxu0 0
        %638 = vmatpush1.bf16.msra.mxu0 0
        %639 = vmatprep.subr.bf16.mxu0 0
        %640 = vmatpush1.bf16.msra.mxu0 0
        %641 = vmatprep.subr.bf16.mxu0 0
        %642 = vmatpush1.bf16.msra.mxu0 0
        %643 = vmatprep.mubr.bf16.mxu0 0
        %644 = vmatmul.mubr.bf16.gmra.mrb[0].mxu0 %v558
        %v645 = vpop.f32.mrb[0].mxu0
        %v646 = vadd.f32 0.0, %v645
        %v647 = vpop.f32.mrb[0].mxu0
        %v648 = vpop.f32.mrb[0].mxu0
        %v649 = vadd.f32 0.0, %v648
        %v650 = vpop.f32.mrb[0].mxu0
        %651 = vmatprep.mubr.bf16.mxu0 0
        %652 = vmatmul.mubr.bf16.gmra.mrb[0].mxu0 %v561
        %v653 = vpop.f32.mrb[0].mxu0
        %v654 = vadd.f32 0.0, %v653
        %v655 = vpop.f32.mrb[0].mxu0
        %v656 = vpop.f32.mrb[0].mxu0
        %v657 = vadd.f32 0.0, %v656
        %v658 = vpop.f32.mrb[0].mxu0
        %659 = vmatprep.mubr.bf16.mxu0 0
        %660 = vmatmul.mubr.bf16.gmra.mrb[0].mxu0 %v564
        %v661 = vpop.f32.mrb[0].mxu0
        %v662 = vadd.f32 0.0, %v661
        %v663 = vpop.f32.mrb[0].mxu0
        %v664 = vpop.f32.mrb[0].mxu0
        %v665 = vadd.f32 0.0, %v664
        %v666 = vpop.f32.mrb[0].mxu0
        %667 = vmatprep.mubr.bf16.mxu0 0
        %668 = vmatmul.mubr.bf16.gmra.mrb[0].mxu0 %v567
        %v669 = vpop.f32.mrb[0].mxu0
        %v670 = vadd.f32 0.0, %v669
        %v671 = vpop.f32.mrb[0].mxu0
        %v672 = vpop.f32.mrb[0].mxu0
        %v673 = vadd.f32 0.0, %v672
        %v674 = vpop.f32.mrb[0].mxu0
        %675 = vmatprep.mubr.bf16.mxu0 0
        %676 = vmatmul.mubr.bf16.gmra.mrb[0].mxu0 %v570
        %v677 = vpop.f32.mrb[0].mxu0
        %v678 = vadd.f32 0.0, %v677
        %v679 = vpop.f32.mrb[0].mxu0
        %v680 = vpop.f32.mrb[0].mxu0
        %v681 = vadd.f32 0.0, %v680
        %v682 = vpop.f32.mrb[0].mxu0
        %683 = vmatprep.mubr.bf16.mxu0 0
        %684 = vmatmul.mubr.bf16.gmra.mrb[0].mxu0 %v573
        %v685 = vpop.f32.mrb[0].mxu0
        %v686 = vadd.f32 0.0, %v685
        %v687 = vpop.f32.mrb[0].mxu0
        %v688 = vpop.f32.mrb[0].mxu0
        %v689 = vadd.f32 0.0, %v688
        %v690 = vpop.f32.mrb[0].mxu0
        %691 = vmatprep.mubr.bf16.mxu0 0
        %692 = vmatmul.mubr.bf16.gmra.mrb[0].mxu0 %v576
        %v693 = vpop.f32.mrb[0].mxu0
        %v694 = vadd.f32 0.0, %v693
        %v695 = vpop.f32.mrb[0].mxu0
        %v696 = vpop.f32.mrb[0].mxu0
        %v697 = vadd.f32 0.0, %v696
        %v698 = vpop.f32.mrb[0].mxu0
        %699 = vmatprep.mubr.bf16.mxu0 0
        %700 = vmatmul.mubr.bf16.gmra.mrb[0].mxu0 %v579
        %v701 = vpop.f32.mrb[0].mxu0
        %v702 = vadd.f32 0.0, %v701
        %v703 = vpop.f32.mrb[0].mxu0
        %v704 = vpop.f32.mrb[0].mxu0
        %v705 = vadd.f32 0.0, %v704
        %v706 = vpop.f32.mrb[0].mxu0
        %707 = vmatprep.mubr.bf16.mxu0 0
        %708 = vmatmul.mubr.bf16.gmra.mrb[0].mxu0 %v582
        %v709 = vpop.f32.mrb[0].mxu0
        %v710 = vadd.f32 0.0, %v709
        %v711 = vpop.f32.mrb[0].mxu0
        %v712 = vpop.f32.mrb[0].mxu0
        %v713 = vadd.f32 0.0, %v712
        %v714 = vpop.f32.mrb[0].mxu0
        %715 = vmatprep.mubr.bf16.mxu0 0
        %716 = vmatmul.mubr.bf16.gmra.mrb[0].mxu0 %v585
        %v717 = vpop.f32.mrb[0].mxu0
        %v718 = vadd.f32 0.0, %v717
        %v719 = vpop.f32.mrb[0].mxu0
        %v720 = vpop.f32.mrb[0].mxu0
        %v721 = vadd.f32 0.0, %v720
        %v722 = vpop.f32.mrb[0].mxu0
        %723 = vmatprep.mubr.bf16.mxu0 0
        %724 = vmatmul.mubr.bf16.gmra.mrb[0].mxu0 %v588
        %v725 = vpop.f32.mrb[0].mxu0
        %v726 = vadd.f32 0.0, %v725
        %v727 = vpop.f32.mrb[0].mxu0
        %v728 = vpop.f32.mrb[0].mxu0
        %v729 = vadd.f32 0.0, %v728
        %v730 = vpop.f32.mrb[0].mxu0
        %731 = vmatprep.mubr.bf16.mxu0 0
        %732 = vmatmul.mubr.bf16.gmra.mrb[0].mxu0 %v591
        %v733 = vpop.f32.mrb[0].mxu0
        %v734 = vadd.f32 0.0, %v733
        %v735 = vpop.f32.mrb[0].mxu0
        %v736 = vpop.f32.mrb[0].mxu0
        %v737 = vadd.f32 0.0, %v736
        %v738 = vpop.f32.mrb[0].mxu0
        %739 = vmatprep.mubr.bf16.mxu0 0
        %740 = vmatmul.mubr.bf16.gmra.mrb[0].mxu0 %v594
        %v741 = vpop.f32.mrb[0].mxu0
        %v742 = vadd.f32 0.0, %v741
        %v743 = vpop.f32.mrb[0].mxu0
        %v744 = vpop.f32.mrb[0].mxu0
        %v745 = vadd.f32 0.0, %v744
        %v746 = vpop.f32.mrb[0].mxu0
        %747 = vmatprep.mubr.bf16.mxu0 0
        %748 = vmatmul.mubr.bf16.gmra.mrb[0].mxu0 %v597
        %v749 = vpop.f32.mrb[0].mxu0
        %v750 = vadd.f32 0.0, %v749
        %v751 = vpop.f32.mrb[0].mxu0
        %v752 = vpop.f32.mrb[0].mxu0
        %v753 = vadd.f32 0.0, %v752
        %v754 = vpop.f32.mrb[0].mxu0
        %755 = vmatprep.mubr.bf16.mxu0 0
        %756 = vmatmul.mubr.bf16.gmra.mrb[0].mxu0 %v600
        %v757 = vpop.f32.mrb[0].mxu0
        %v758 = vadd.f32 0.0, %v757
        %v759 = vpop.f32.mrb[0].mxu0
        %v760 = vpop.f32.mrb[0].mxu0
        %v761 = vadd.f32 0.0, %v760
        %v762 = vpop.f32.mrb[0].mxu0
        %763 = vmatprep.mubr.bf16.mxu0 0
        %764 = vmatmul.mubr.bf16.gmra.mrb[0].mxu0 %v603
        %v765 = vpop.f32.mrb[0].mxu0
        %v766 = vadd.f32 0.0, %v765
        %v767 = vpop.f32.mrb[0].mxu0
        %v768 = vpop.f32.mrb[0].mxu0
        %v769 = vadd.f32 0.0, %v768
        %v770 = vpop.f32.mrb[0].mxu0
        %771 = vmatprep.mubr.bf16.mxu0 0
        %772 = vmatmul.mubr.bf16.gmra.mrb[0].mxu0 %v606
        %v773 = vpop.f32.mrb[0].mxu0
        %v774 = vadd.f32 0.0, %v773
        %v775 = vpop.f32.mrb[0].mxu0
        %v776 = vpop.f32.mrb[0].mxu0
        %v777 = vadd.f32 0.0, %v776
        %v778 = vpop.f32.mrb[0].mxu0
        %779 = vmatprep.mubr.bf16.mxu0 0
        %780 = vmatmul.mubr.bf16.gmra.mrb[0].mxu0 %v609
        %v781 = vpop.f32.mrb[0].mxu0
        %v782 = vadd.f32 0.0, %v781
        %v783 = vpop.f32.mrb[0].mxu0
        %v784 = vpop.f32.mrb[0].mxu0
        %v785 = vadd.f32 0.0, %v784
        %v786 = vpop.f32.mrb[0].mxu0
        %787 = vdwg.mxu0
        %v788 = vld [vmem:[%s2] sm:$0x1]
        %v790 = vlaneseq
        %v791 = vshrl.u32 %v790, 7
        %v792 = vsub.s32 0, %v791
        %v793 = vrot.slane %v788, %v792
        %v795 = vmul.f32 %v646, %v793
        %v796 = vmul.f32 %v649, %v793
        %v797 = vmul.f32 %v654, %v793
        %v798 = vmul.f32 %v657, %v793
        %v799 = vmul.f32 %v662, %v793
        %v800 = vmul.f32 %v665, %v793
        %v801 = vmul.f32 %v670, %v793
        %v802 = vmul.f32 %v673, %v793
        %v803 = vmul.f32 %v678, %v793
        %v804 = vmul.f32 %v681, %v793
        %v805 = vmul.f32 %v686, %v793
        %v806 = vmul.f32 %v689, %v793
        %v807 = vmul.f32 %v694, %v793
        %v808 = vmul.f32 %v697, %v793
        %v809 = vmul.f32 %v702, %v793
        %v810 = vmul.f32 %v705, %v793
        %v811 = vmul.f32 %v710, %v793
        %v812 = vmul.f32 %v713, %v793
        %v813 = vmul.f32 %v718, %v793
        %v814 = vmul.f32 %v721, %v793
        %v815 = vmul.f32 %v726, %v793
        %v816 = vmul.f32 %v729, %v793
        %v817 = vmul.f32 %v734, %v793
        %v818 = vmul.f32 %v737, %v793
        %v819 = vmul.f32 %v742, %v793
        %v820 = vmul.f32 %v745, %v793
        %v821 = vmul.f32 %v750, %v793
        %v822 = vmul.f32 %v753, %v793
        %v823 = vmul.f32 %v758, %v793
        %v824 = vmul.f32 %v761, %v793
        %v825 = vmul.f32 %v766, %v793
        %v826 = vmul.f32 %v769, %v793
        %v827 = vmul.f32 %v774, %v793
        %v828 = vmul.f32 %v777, %v793
        %v829 = vmul.f32 %v782, %v793
        %v830 = vmul.f32 %v785, %v793
        %v831 = vld [vmem:[%s3] sm:$0x1]
        %v833 = vlaneseq
        %v834 = vshrl.u32 %v833, 7
        %v835 = vsub.s32 0, %v834
        %v836 = vrot.slane %v831, %v835
        %v838 = vadd.f32 %v795, %v836
        %v839 = vadd.f32 %v796, %v836
        %v840 = vadd.f32 %v797, %v836
        %v841 = vadd.f32 %v798, %v836
        %v842 = vadd.f32 %v799, %v836
        %v843 = vadd.f32 %v800, %v836
        %v844 = vadd.f32 %v801, %v836
        %v845 = vadd.f32 %v802, %v836
        %v846 = vadd.f32 %v803, %v836
        %v847 = vadd.f32 %v804, %v836
        %v848 = vadd.f32 %v805, %v836
        %v849 = vadd.f32 %v806, %v836
        %v850 = vadd.f32 %v807, %v836
        %v851 = vadd.f32 %v808, %v836
        %v852 = vadd.f32 %v809, %v836
        %v853 = vadd.f32 %v810, %v836
        %v854 = vadd.f32 %v811, %v836
        %v855 = vadd.f32 %v812, %v836
        %v856 = vadd.f32 %v813, %v836
        %v857 = vadd.f32 %v814, %v836
        %v858 = vadd.f32 %v815, %v836
        %v859 = vadd.f32 %v816, %v836
        %v860 = vadd.f32 %v817, %v836
        %v861 = vadd.f32 %v818, %v836
        %v862 = vadd.f32 %v819, %v836
        %v863 = vadd.f32 %v820, %v836
        %v864 = vadd.f32 %v821, %v836
        %v865 = vadd.f32 %v822, %v836
        %v866 = vadd.f32 %v823, %v836
        %v867 = vadd.f32 %v824, %v836
        %v868 = vadd.f32 %v825, %v836
        %v869 = vadd.f32 %v826, %v836
        %v870 = vadd.f32 %v827, %v836
        %v871 = vadd.f32 %v828, %v836
        %v872 = vadd.f32 %v829, %v836
        %v873 = vadd.f32 %v830, %v836
        %v874 = vmax.f32 %v838, 0.0
        %v875 = vmax.f32 %v839, 0.0
        %v876 = vmax.f32 %v840, 0.0
        %v877 = vmax.f32 %v841, 0.0
        %v878 = vmax.f32 %v842, 0.0
        %v879 = vmax.f32 %v843, 0.0
        %v880 = vmax.f32 %v844, 0.0
        %v881 = vmax.f32 %v845, 0.0
        %v882 = vmax.f32 %v846, 0.0
        %v883 = vmax.f32 %v847, 0.0
        %v884 = vmax.f32 %v848, 0.0
        %v885 = vmax.f32 %v849, 0.0
        %v886 = vmax.f32 %v850, 0.0
        %v887 = vmax.f32 %v851, 0.0
        %v888 = vmax.f32 %v852, 0.0
        %v889 = vmax.f32 %v853, 0.0
        %v890 = vmax.f32 %v854, 0.0
        %v891 = vmax.f32 %v855, 0.0
        %v892 = vmax.f32 %v856, 0.0
        %v893 = vmax.f32 %v857, 0.0
        %v894 = vmax.f32 %v858, 0.0
        %v895 = vmax.f32 %v859, 0.0
        %v896 = vmax.f32 %v860, 0.0
        %v897 = vmax.f32 %v861, 0.0
        %v898 = vmax.f32 %v862, 0.0
        %v899 = vmax.f32 %v863, 0.0
        %v900 = vmax.f32 %v864, 0.0
        %v901 = vmax.f32 %v865, 0.0
        %v902 = vmax.f32 %v866, 0.0
        %v903 = vmax.f32 %v867, 0.0
        %v904 = vmax.f32 %v868, 0.0
        %v905 = vmax.f32 %v869, 0.0
        %v906 = vmax.f32 %v870, 0.0
        %v907 = vmax.f32 %v871, 0.0
        %v908 = vmax.f32 %v872, 0.0
        %v909 = vmax.f32 %v873, 0.0
        %v910 = vpack.c.bf16 %v875, %v874
        %v911 = vpack.c.bf16 %v877, %v876
        %v912 = vpack.c.bf16 %v879, %v878
        %v913 = vpack.c.bf16 %v881, %v880
        %v914 = vpack.c.bf16 %v883, %v882
        %v915 = vpack.c.bf16 %v885, %v884
        %v916 = vpack.c.bf16 %v887, %v886
        %v917 = vpack.c.bf16 %v889, %v888
        %v918 = vpack.c.bf16 %v891, %v890
        %v919 = vpack.c.bf16 %v893, %v892
        %v920 = vpack.c.bf16 %v895, %v894
        %v921 = vpack.c.bf16 %v897, %v896
        %v922 = vpack.c.bf16 %v899, %v898
        %v923 = vpack.c.bf16 %v901, %v900
        %v924 = vpack.c.bf16 %v903, %v902
        %v925 = vpack.c.bf16 %v905, %v904
        %v926 = vpack.c.bf16 %v907, %v906
        %v927 = vpack.c.bf16 %v909, %v908
        %v928 = vlaneseq
        %v929 = vshrl.u32 %v928, 7
        %v930 = vadd.s32 %v929, 8
        %v931 = vadd.s32 %v929, 16
        %v932 = vadd.s32 %v929, 24
        %v933 = vadd.s32 %v929, 32
        %v934 = vadd.s32 %v929, 40
        %v935 = vadd.s32 %v929, 48
        %v936 = vadd.s32 %v929, 56
        %v937 = vadd.s32 %v929, 64
        %v938 = vadd.s32 %v929, 72
        %v939 = vadd.s32 %v929, 80
        %v940 = vadd.s32 %v929, 88
        %v941 = vadd.s32 %v929, 96
        %v942 = vadd.s32 %v929, 104
        %v943 = vadd.s32 %v929, 112
        %v944 = vadd.s32 %v929, 120
        %v945 = vadd.s32 %v929, 128
        %v946 = vadd.s32 %v929, 136
        %v947 = vadd.s32 %v929, 144
        %v948 = vadd.s32 %v929, 152
        %v949 = vadd.s32 %v929, 160
        %v950 = vadd.s32 %v929, 168
        %v951 = vadd.s32 %v929, 176
        %v952 = vadd.s32 %v929, 184
        %v953 = vadd.s32 %v929, 192
        %v954 = vadd.s32 %v929, 200
        %v955 = vadd.s32 %v929, 208
        %v956 = vadd.s32 %v929, 216
        %v957 = vadd.s32 %v929, 224
        %v958 = vadd.s32 %v929, 232
        %v959 = vadd.s32 %v929, 240
        %v960 = vadd.s32 %v929, 248
        %v961 = vadd.s32 %v929, 256
        %v962 = vadd.s32 %v929, 264
        %v963 = vadd.s32 %v929, 272
        %v964 = vadd.s32 %v929, 280
        %vm965 = vcmp.lt.s32.totalorder %v929, 16
        %vm966 = vcmp.lt.s32.totalorder %v930, 16
        %vm967 = vcmp.lt.s32.totalorder %v931, 16
        %vm968 = vcmp.lt.s32.totalorder %v932, 16
        %vm969 = vcmp.lt.s32.totalorder %v933, 16
        %vm970 = vcmp.lt.s32.totalorder %v934, 16
        %vm971 = vcmp.lt.s32.totalorder %v935, 16
        %vm972 = vcmp.lt.s32.totalorder %v936, 16
        %vm973 = vcmp.lt.s32.totalorder %v937, 16
        %vm974 = vcmp.lt.s32.totalorder %v938, 16
        %vm975 = vcmp.lt.s32.totalorder %v939, 16
        %vm976 = vcmp.lt.s32.totalorder %v940, 16
        %vm977 = vcmp.lt.s32.totalorder %v941, 16
        %vm978 = vcmp.lt.s32.totalorder %v942, 16
        %vm979 = vcmp.lt.s32.totalorder %v943, 16
        %vm980 = vcmp.lt.s32.totalorder %v944, 16
        %vm981 = vcmp.lt.s32.totalorder %v945, 16
        %vm982 = vcmp.lt.s32.totalorder %v946, 16
        %vm983 = vcmp.lt.s32.totalorder %v947, 16
        %vm984 = vcmp.lt.s32.totalorder %v948, 16
        %vm985 = vcmp.lt.s32.totalorder %v949, 16
        %vm986 = vcmp.lt.s32.totalorder %v950, 16
        %vm987 = vcmp.lt.s32.totalorder %v951, 16
        %vm988 = vcmp.lt.s32.totalorder %v952, 16
        %vm989 = vcmp.lt.s32.totalorder %v953, 16
        %vm990 = vcmp.lt.s32.totalorder %v954, 16
        %vm991 = vcmp.lt.s32.totalorder %v955, 16
        %vm992 = vcmp.lt.s32.totalorder %v956, 16
        %vm993 = vcmp.lt.s32.totalorder %v957, 16
        %vm994 = vcmp.lt.s32.totalorder %v958, 16
        %vm995 = vcmp.lt.s32.totalorder %v959, 16
        %vm996 = vcmp.lt.s32.totalorder %v960, 16
        %vm997 = vcmp.lt.s32.totalorder %v961, 16
        %vm998 = vcmp.lt.s32.totalorder %v962, 16
        %vm999 = vcmp.lt.s32.totalorder %v963, 16
        %vm1000 = vcmp.lt.s32.totalorder %v964, 16
        %p1001 = scmp.eq.s32.totalorder %s29, 0
        %s1002 = scalar_select %p1001, 1, 0
        %v1003 = vstv %s1002
        %vm1004 = vcmp.eq.s32.totalorder %v1003, 1
        %vm1005 = vmand %vm965, %vm1004
        %vm1006 = vmand %vm966, %vm1004
        %vm1007 = vmand %vm967, %vm1004
        %vm1008 = vmand %vm968, %vm1004
        %vm1009 = vmand %vm969, %vm1004
        %vm1010 = vmand %vm970, %vm1004
        %vm1011 = vmand %vm971, %vm1004
        %vm1012 = vmand %vm972, %vm1004
        %vm1013 = vmand %vm973, %vm1004
        %vm1014 = vmand %vm974, %vm1004
        %vm1015 = vmand %vm975, %vm1004
        %vm1016 = vmand %vm976, %vm1004
        %vm1017 = vmand %vm977, %vm1004
        %vm1018 = vmand %vm978, %vm1004
        %vm1019 = vmand %vm979, %vm1004
        %vm1020 = vmand %vm980, %vm1004
        %vm1021 = vmand %vm981, %vm1004
        %vm1022 = vmand %vm982, %vm1004
        %vm1023 = vmand %vm983, %vm1004
        %vm1024 = vmand %vm984, %vm1004
        %vm1025 = vmand %vm985, %vm1004
        %vm1026 = vmand %vm986, %vm1004
        %vm1027 = vmand %vm987, %vm1004
        %vm1028 = vmand %vm988, %vm1004
        %vm1029 = vmand %vm989, %vm1004
        %vm1030 = vmand %vm990, %vm1004
        %vm1031 = vmand %vm991, %vm1004
        %vm1032 = vmand %vm992, %vm1004
        %vm1033 = vmand %vm993, %vm1004
        %vm1034 = vmand %vm994, %vm1004
        %vm1035 = vmand %vm995, %vm1004
        %vm1036 = vmand %vm996, %vm1004
        %vm1037 = vmand %vm997, %vm1004
        %vm1038 = vmand %vm998, %vm1004
        %vm1039 = vmand %vm999, %vm1004
        %vm1040 = vmand %vm1000, %vm1004
        %vm1041 = vcmp.ge.s32.totalorder %v929, 272
        %vm1042 = vcmp.ge.s32.totalorder %v930, 272
        %vm1043 = vcmp.ge.s32.totalorder %v931, 272
        %vm1044 = vcmp.ge.s32.totalorder %v932, 272
        %vm1045 = vcmp.ge.s32.totalorder %v933, 272
        %vm1046 = vcmp.ge.s32.totalorder %v934, 272
        %vm1047 = vcmp.ge.s32.totalorder %v935, 272
        %vm1048 = vcmp.ge.s32.totalorder %v936, 272
        %vm1049 = vcmp.ge.s32.totalorder %v937, 272
        %vm1050 = vcmp.ge.s32.totalorder %v938, 272
        %vm1051 = vcmp.ge.s32.totalorder %v939, 272
        %vm1052 = vcmp.ge.s32.totalorder %v940, 272
        %vm1053 = vcmp.ge.s32.totalorder %v941, 272
        %vm1054 = vcmp.ge.s32.totalorder %v942, 272
        %vm1055 = vcmp.ge.s32.totalorder %v943, 272
        %vm1056 = vcmp.ge.s32.totalorder %v944, 272
        %vm1057 = vcmp.ge.s32.totalorder %v945, 272
        %vm1058 = vcmp.ge.s32.totalorder %v946, 272
        %vm1059 = vcmp.ge.s32.totalorder %v947, 272
        %vm1060 = vcmp.ge.s32.totalorder %v948, 272
        %vm1061 = vcmp.ge.s32.totalorder %v949, 272
        %vm1062 = vcmp.ge.s32.totalorder %v950, 272
        %vm1063 = vcmp.ge.s32.totalorder %v951, 272
        %vm1064 = vcmp.ge.s32.totalorder %v952, 272
        %vm1065 = vcmp.ge.s32.totalorder %v953, 272
        %vm1066 = vcmp.ge.s32.totalorder %v954, 272
        %vm1067 = vcmp.ge.s32.totalorder %v955, 272
        %vm1068 = vcmp.ge.s32.totalorder %v956, 272
        %vm1069 = vcmp.ge.s32.totalorder %v957, 272
        %vm1070 = vcmp.ge.s32.totalorder %v958, 272
        %vm1071 = vcmp.ge.s32.totalorder %v959, 272
        %vm1072 = vcmp.ge.s32.totalorder %v960, 272
        %vm1073 = vcmp.ge.s32.totalorder %v961, 272
        %vm1074 = vcmp.ge.s32.totalorder %v962, 272
        %vm1075 = vcmp.ge.s32.totalorder %v963, 272
        %vm1076 = vcmp.ge.s32.totalorder %v964, 272
        %vm1077 = vmand %vm1041, %vm1004
        %vm1078 = vmand %vm1042, %vm1004
        %vm1079 = vmand %vm1043, %vm1004
        %vm1080 = vmand %vm1044, %vm1004
        %vm1081 = vmand %vm1045, %vm1004
        %vm1082 = vmand %vm1046, %vm1004
        %vm1083 = vmand %vm1047, %vm1004
        %vm1084 = vmand %vm1048, %vm1004
        %vm1085 = vmand %vm1049, %vm1004
        %vm1086 = vmand %vm1050, %vm1004
        %vm1087 = vmand %vm1051, %vm1004
        %vm1088 = vmand %vm1052, %vm1004
        %vm1089 = vmand %vm1053, %vm1004
        %vm1090 = vmand %vm1054, %vm1004
        %vm1091 = vmand %vm1055, %vm1004
        %vm1092 = vmand %vm1056, %vm1004
        %vm1093 = vmand %vm1057, %vm1004
        %vm1094 = vmand %vm1058, %vm1004
        %vm1095 = vmand %vm1059, %vm1004
        %vm1096 = vmand %vm1060, %vm1004
        %vm1097 = vmand %vm1061, %vm1004
        %vm1098 = vmand %vm1062, %vm1004
        %vm1099 = vmand %vm1063, %vm1004
        %vm1100 = vmand %vm1064, %vm1004
        %vm1101 = vmand %vm1065, %vm1004
        %vm1102 = vmand %vm1066, %vm1004
        %vm1103 = vmand %vm1067, %vm1004
        %vm1104 = vmand %vm1068, %vm1004
        %vm1105 = vmand %vm1069, %vm1004
        %vm1106 = vmand %vm1070, %vm1004
        %vm1107 = vmand %vm1071, %vm1004
        %vm1108 = vmand %vm1072, %vm1004
        %vm1109 = vmand %vm1073, %vm1004
        %vm1110 = vmand %vm1074, %vm1004
        %vm1111 = vmand %vm1075, %vm1004
        %vm1112 = vmand %vm1076, %vm1004
        %vm1113 = vmor %vm1005, %vm1077
        %vm1114 = vmor %vm1006, %vm1078
        %vm1115 = vmor %vm1007, %vm1079
        %vm1116 = vmor %vm1008, %vm1080
        %vm1117 = vmor %vm1009, %vm1081
        %vm1118 = vmor %vm1010, %vm1082
        %vm1119 = vmor %vm1011, %vm1083
        %vm1120 = vmor %vm1012, %vm1084
        %vm1121 = vmor %vm1013, %vm1085
        %vm1122 = vmor %vm1014, %vm1086
        %vm1123 = vmor %vm1015, %vm1087
        %vm1124 = vmor %vm1016, %vm1088
        %vm1125 = vmor %vm1017, %vm1089
        %vm1126 = vmor %vm1018, %vm1090
        %vm1127 = vmor %vm1019, %vm1091
        %vm1128 = vmor %vm1020, %vm1092
        %vm1129 = vmor %vm1021, %vm1093
        %vm1130 = vmor %vm1022, %vm1094
        %vm1131 = vmor %vm1023, %vm1095
        %vm1132 = vmor %vm1024, %vm1096
        %vm1133 = vmor %vm1025, %vm1097
        %vm1134 = vmor %vm1026, %vm1098
        %vm1135 = vmor %vm1027, %vm1099
        %vm1136 = vmor %vm1028, %vm1100
        %vm1137 = vmor %vm1029, %vm1101
        %vm1138 = vmor %vm1030, %vm1102
        %vm1139 = vmor %vm1031, %vm1103
        %vm1140 = vmor %vm1032, %vm1104
        %vm1141 = vmor %vm1033, %vm1105
        %vm1142 = vmor %vm1034, %vm1106
        %vm1143 = vmor %vm1035, %vm1107
        %vm1144 = vmor %vm1036, %vm1108
        %vm1145 = vmor %vm1037, %vm1109
        %vm1146 = vmor %vm1038, %vm1110
        %vm1147 = vmor %vm1039, %vm1111
        %vm1148 = vmor %vm1040, %vm1112
        %v1149 = vsel %vm1113, 1, 0
        %v1150 = vsel %vm1114, 1, 0
        %v1151 = vsel %vm1115, 1, 0
        %v1152 = vsel %vm1116, 1, 0
        %v1153 = vsel %vm1117, 1, 0
        %v1154 = vsel %vm1118, 1, 0
        %v1155 = vsel %vm1119, 1, 0
        %v1156 = vsel %vm1120, 1, 0
        %v1157 = vsel %vm1121, 1, 0
        %v1158 = vsel %vm1122, 1, 0
        %v1159 = vsel %vm1123, 1, 0
        %v1160 = vsel %vm1124, 1, 0
        %v1161 = vsel %vm1125, 1, 0
        %v1162 = vsel %vm1126, 1, 0
        %v1163 = vsel %vm1127, 1, 0
        %v1164 = vsel %vm1128, 1, 0
        %v1165 = vsel %vm1129, 1, 0
        %v1166 = vsel %vm1130, 1, 0
        %v1167 = vsel %vm1131, 1, 0
        %v1168 = vsel %vm1132, 1, 0
        %v1169 = vsel %vm1133, 1, 0
        %v1170 = vsel %vm1134, 1, 0
        %v1171 = vsel %vm1135, 1, 0
        %v1172 = vsel %vm1136, 1, 0
        %v1173 = vsel %vm1137, 1, 0
        %v1174 = vsel %vm1138, 1, 0
        %v1175 = vsel %vm1139, 1, 0
        %v1176 = vsel %vm1140, 1, 0
        %v1177 = vsel %vm1141, 1, 0
        %v1178 = vsel %vm1142, 1, 0
        %v1179 = vsel %vm1143, 1, 0
        %v1180 = vsel %vm1144, 1, 0
        %v1181 = vsel %vm1145, 1, 0
        %v1182 = vsel %vm1146, 1, 0
        %v1183 = vsel %vm1147, 1, 0
        %v1184 = vsel %vm1148, 1, 0
        %vm1185 = vcmp.eq.s32.totalorder %v1149, 1
        %vm1186 = vcmp.eq.s32.totalorder %v1150, 1
        %vm1187 = vcmp.eq.s32.totalorder %v1151, 1
        %vm1188 = vcmp.eq.s32.totalorder %v1152, 1
        %vm1189 = vcmp.eq.s32.totalorder %v1153, 1
        %vm1190 = vcmp.eq.s32.totalorder %v1154, 1
        %vm1191 = vcmp.eq.s32.totalorder %v1155, 1
        %vm1192 = vcmp.eq.s32.totalorder %v1156, 1
        %vm1193 = vcmp.eq.s32.totalorder %v1157, 1
        %vm1194 = vcmp.eq.s32.totalorder %v1158, 1
        %vm1195 = vcmp.eq.s32.totalorder %v1159, 1
        %vm1196 = vcmp.eq.s32.totalorder %v1160, 1
        %vm1197 = vcmp.eq.s32.totalorder %v1161, 1
        %vm1198 = vcmp.eq.s32.totalorder %v1162, 1
        %vm1199 = vcmp.eq.s32.totalorder %v1163, 1
        %vm1200 = vcmp.eq.s32.totalorder %v1164, 1
        %vm1201 = vcmp.eq.s32.totalorder %v1165, 1
        %vm1202 = vcmp.eq.s32.totalorder %v1166, 1
        %vm1203 = vcmp.eq.s32.totalorder %v1167, 1
        %vm1204 = vcmp.eq.s32.totalorder %v1168, 1
        %vm1205 = vcmp.eq.s32.totalorder %v1169, 1
        %vm1206 = vcmp.eq.s32.totalorder %v1170, 1
        %vm1207 = vcmp.eq.s32.totalorder %v1171, 1
        %vm1208 = vcmp.eq.s32.totalorder %v1172, 1
        %vm1209 = vcmp.eq.s32.totalorder %v1173, 1
        %vm1210 = vcmp.eq.s32.totalorder %v1174, 1
        %vm1211 = vcmp.eq.s32.totalorder %v1175, 1
        %vm1212 = vcmp.eq.s32.totalorder %v1176, 1
        %vm1213 = vcmp.eq.s32.totalorder %v1177, 1
        %vm1214 = vcmp.eq.s32.totalorder %v1178, 1
        %vm1215 = vcmp.eq.s32.totalorder %v1179, 1
        %vm1216 = vcmp.eq.s32.totalorder %v1180, 1
        %vm1217 = vcmp.eq.s32.totalorder %v1181, 1
        %vm1218 = vcmp.eq.s32.totalorder %v1182, 1
        %vm1219 = vcmp.eq.s32.totalorder %v1183, 1
        %vm1220 = vcmp.eq.s32.totalorder %v1184, 1
        %vm1221 = vmpackc.low %vm1185, %vm1185
        %vm1222 = vmpackc.low %vm1186, %vm1186
        %vm1223 = vmpackc.low %vm1187, %vm1187
        %vm1224 = vmpackc.low %vm1188, %vm1188
        %vm1225 = vmpackc.low %vm1189, %vm1189
        %vm1226 = vmpackc.low %vm1190, %vm1190
        %vm1227 = vmpackc.low %vm1191, %vm1191
        %vm1228 = vmpackc.low %vm1192, %vm1192
        %vm1229 = vmpackc.low %vm1193, %vm1193
        %vm1230 = vmpackc.low %vm1194, %vm1194
        %vm1231 = vmpackc.low %vm1195, %vm1195
        %vm1232 = vmpackc.low %vm1196, %vm1196
        %vm1233 = vmpackc.low %vm1197, %vm1197
        %vm1234 = vmpackc.low %vm1198, %vm1198
        %vm1235 = vmpackc.low %vm1199, %vm1199
        %vm1236 = vmpackc.low %vm1200, %vm1200
        %vm1237 = vmpackc.low %vm1201, %vm1201
        %vm1238 = vmpackc.low %vm1202, %vm1202
        %vm1239 = vmpackc.low %vm1203, %vm1203
        %vm1240 = vmpackc.low %vm1204, %vm1204
        %vm1241 = vmpackc.low %vm1205, %vm1205
        %vm1242 = vmpackc.low %vm1206, %vm1206
        %vm1243 = vmpackc.low %vm1207, %vm1207
        %vm1244 = vmpackc.low %vm1208, %vm1208
        %vm1245 = vmpackc.low %vm1209, %vm1209
        %vm1246 = vmpackc.low %vm1210, %vm1210
        %vm1247 = vmpackc.low %vm1211, %vm1211
        %vm1248 = vmpackc.low %vm1212, %vm1212
        %vm1249 = vmpackc.low %vm1213, %vm1213
        %vm1250 = vmpackc.low %vm1214, %vm1214
        %vm1251 = vmpackc.low %vm1215, %vm1215
        %vm1252 = vmpackc.low %vm1216, %vm1216
        %vm1253 = vmpackc.low %vm1217, %vm1217
        %vm1254 = vmpackc.low %vm1218, %vm1218
        %vm1255 = vmpackc.low %vm1219, %vm1219
        %vm1256 = vmpackc.low %vm1220, %vm1220
        %v1257 = vsel %vm1221, 65537, 0
        %v1258 = vsel %vm1222, 65537, 0
        %v1259 = vsel %vm1223, 65537, 0
        %v1260 = vsel %vm1224, 65537, 0
        %v1261 = vsel %vm1225, 65537, 0
        %v1262 = vsel %vm1226, 65537, 0
        %v1263 = vsel %vm1227, 65537, 0
        %v1264 = vsel %vm1228, 65537, 0
        %v1265 = vsel %vm1229, 65537, 0
        %v1266 = vsel %vm1230, 65537, 0
        %v1267 = vsel %vm1231, 65537, 0
        %v1268 = vsel %vm1232, 65537, 0
        %v1269 = vsel %vm1233, 65537, 0
        %v1270 = vsel %vm1234, 65537, 0
        %v1271 = vsel %vm1235, 65537, 0
        %v1272 = vsel %vm1236, 65537, 0
        %v1273 = vsel %vm1237, 65537, 0
        %v1274 = vsel %vm1238, 65537, 0
        %v1275 = vsel %vm1239, 65537, 0
        %v1276 = vsel %vm1240, 65537, 0
        %v1277 = vsel %vm1241, 65537, 0
        %v1278 = vsel %vm1242, 65537, 0
        %v1279 = vsel %vm1243, 65537, 0
        %v1280 = vsel %vm1244, 65537, 0
        %v1281 = vsel %vm1245, 65537, 0
        %v1282 = vsel %vm1246, 65537, 0
        %v1283 = vsel %vm1247, 65537, 0
        %v1284 = vsel %vm1248, 65537, 0
        %v1285 = vsel %vm1249, 65537, 0
        %v1286 = vsel %vm1250, 65537, 0
        %v1287 = vsel %vm1251, 65537, 0
        %v1288 = vsel %vm1252, 65537, 0
        %v1289 = vsel %vm1253, 65537, 0
        %v1290 = vsel %vm1254, 65537, 0
        %v1291 = vsel %vm1255, 65537, 0
        %v1292 = vsel %vm1256, 65537, 0
        %v1293 = vunpack.c.l.b16 %v1257
        %v1294 = vunpack.c.l.b16 %v1258
        %v1295 = vunpack.c.l.b16 %v1259
        %v1296 = vunpack.c.l.b16 %v1260
        %v1297 = vunpack.c.l.b16 %v1261
        %v1298 = vunpack.c.l.b16 %v1262
        %v1299 = vunpack.c.l.b16 %v1263
        %v1300 = vunpack.c.l.b16 %v1264
        %v1301 = vunpack.c.l.b16 %v1265
        %v1302 = vunpack.c.l.b16 %v1266
        %v1303 = vunpack.c.l.b16 %v1267
        %v1304 = vunpack.c.l.b16 %v1268
        %v1305 = vunpack.c.l.b16 %v1269
        %v1306 = vunpack.c.l.b16 %v1270
        %v1307 = vunpack.c.l.b16 %v1271
        %v1308 = vunpack.c.l.b16 %v1272
        %v1309 = vunpack.c.l.b16 %v1273
        %v1310 = vunpack.c.l.b16 %v1274
        %v1311 = vunpack.c.l.b16 %v1275
        %v1312 = vunpack.c.l.b16 %v1276
        %v1313 = vunpack.c.l.b16 %v1277
        %v1314 = vunpack.c.l.b16 %v1278
        %v1315 = vunpack.c.l.b16 %v1279
        %v1316 = vunpack.c.l.b16 %v1280
        %v1317 = vunpack.c.l.b16 %v1281
        %v1318 = vunpack.c.l.b16 %v1282
        %v1319 = vunpack.c.l.b16 %v1283
        %v1320 = vunpack.c.l.b16 %v1284
        %v1321 = vunpack.c.l.b16 %v1285
        %v1322 = vunpack.c.l.b16 %v1286
        %v1323 = vunpack.c.l.b16 %v1287
        %v1324 = vunpack.c.l.b16 %v1288
        %v1325 = vunpack.c.l.b16 %v1289
        %v1326 = vunpack.c.l.b16 %v1290
        %v1327 = vunpack.c.l.b16 %v1291
        %v1328 = vunpack.c.l.b16 %v1292
        %v1329 = vpack.c.b16 %v1294, %v1293
        %v1330 = vpack.c.b16 %v1296, %v1295
        %v1331 = vpack.c.b16 %v1298, %v1297
        %v1332 = vpack.c.b16 %v1300, %v1299
        %v1333 = vpack.c.b16 %v1302, %v1301
        %v1334 = vpack.c.b16 %v1304, %v1303
        %v1335 = vpack.c.b16 %v1306, %v1305
        %v1336 = vpack.c.b16 %v1308, %v1307
        %v1337 = vpack.c.b16 %v1310, %v1309
        %v1338 = vpack.c.b16 %v1312, %v1311
        %v1339 = vpack.c.b16 %v1314, %v1313
        %v1340 = vpack.c.b16 %v1316, %v1315
        %v1341 = vpack.c.b16 %v1318, %v1317
        %v1342 = vpack.c.b16 %v1320, %v1319
        %v1343 = vpack.c.b16 %v1322, %v1321
        %v1344 = vpack.c.b16 %v1324, %v1323
        %v1345 = vpack.c.b16 %v1326, %v1325
        %v1346 = vpack.c.b16 %v1328, %v1327
        %vm1347 = vcmp.ne.s16.totalorder %v1329, 0
        %vm1348 = vcmp.ne.s16.totalorder %v1330, 0
        %vm1349 = vcmp.ne.s16.totalorder %v1331, 0
        %vm1350 = vcmp.ne.s16.totalorder %v1332, 0
        %vm1351 = vcmp.ne.s16.totalorder %v1333, 0
        %vm1352 = vcmp.ne.s16.totalorder %v1334, 0
        %vm1353 = vcmp.ne.s16.totalorder %v1335, 0
        %vm1354 = vcmp.ne.s16.totalorder %v1336, 0
        %vm1355 = vcmp.ne.s16.totalorder %v1337, 0
        %vm1356 = vcmp.ne.s16.totalorder %v1338, 0
        %vm1357 = vcmp.ne.s16.totalorder %v1339, 0
        %vm1358 = vcmp.ne.s16.totalorder %v1340, 0
        %vm1359 = vcmp.ne.s16.totalorder %v1341, 0
        %vm1360 = vcmp.ne.s16.totalorder %v1342, 0
        %vm1361 = vcmp.ne.s16.totalorder %v1343, 0
        %vm1362 = vcmp.ne.s16.totalorder %v1344, 0
        %vm1363 = vcmp.ne.s16.totalorder %v1345, 0
        %vm1364 = vcmp.ne.s16.totalorder %v1346, 0
        %v1365 = vsel %vm1347, 0, %v910
        %v1366 = vsel %vm1348, 0, %v911
        %v1367 = vsel %vm1349, 0, %v912
        %v1368 = vsel %vm1350, 0, %v913
        %v1369 = vsel %vm1351, 0, %v914
        %v1370 = vsel %vm1352, 0, %v915
        %v1371 = vsel %vm1353, 0, %v916
        %v1372 = vsel %vm1354, 0, %v917
        %v1373 = vsel %vm1355, 0, %v918
        %v1374 = vsel %vm1356, 0, %v919
        %v1375 = vsel %vm1357, 0, %v920
        %v1376 = vsel %vm1358, 0, %v921
        %v1377 = vsel %vm1359, 0, %v922
        %v1378 = vsel %vm1360, 0, %v923
        %v1379 = vsel %vm1361, 0, %v924
        %v1380 = vsel %vm1362, 0, %v925
        %v1381 = vsel %vm1363, 0, %v926
        %v1382 = vsel %vm1364, 0, %v927
        %vm1383 = vcmp.lt.s32.totalorder %v929, 0
        %v1384 = vsub.s32 0, %v929
        %v1385 = vsel %vm1383, %v1384, %v929
        %v1386 = vshrl.u32 %v1385, 4
        %v1387 = vand.u32 %v1385, 15
        %v1388 = vsub.s32 0, %v1387
        %v1389 = vsel %vm1383, %v1388, %v1387
        %vm1390 = vcmp.lt.s32.totalorder %v930, 0
        %v1391 = vsub.s32 0, %v930
        %v1392 = vsel %vm1390, %v1391, %v930
        %v1393 = vshrl.u32 %v1392, 4
        %v1394 = vand.u32 %v1392, 15
        %v1395 = vsub.s32 0, %v1394
        %v1396 = vsel %vm1390, %v1395, %v1394
        %vm1397 = vcmp.lt.s32.totalorder %v931, 0
        %v1398 = vsub.s32 0, %v931
        %v1399 = vsel %vm1397, %v1398, %v931
        %v1400 = vshrl.u32 %v1399, 4
        %v1401 = vand.u32 %v1399, 15
        %v1402 = vsub.s32 0, %v1401
        %v1403 = vsel %vm1397, %v1402, %v1401
        %vm1404 = vcmp.lt.s32.totalorder %v932, 0
        %v1405 = vsub.s32 0, %v932
        %v1406 = vsel %vm1404, %v1405, %v932
        %v1407 = vshrl.u32 %v1406, 4
        %v1408 = vand.u32 %v1406, 15
        %v1409 = vsub.s32 0, %v1408
        %v1410 = vsel %vm1404, %v1409, %v1408
        %vm1411 = vcmp.lt.s32.totalorder %v933, 0
        %v1412 = vsub.s32 0, %v933
        %v1413 = vsel %vm1411, %v1412, %v933
        %v1414 = vshrl.u32 %v1413, 4
        %v1415 = vand.u32 %v1413, 15
        %v1416 = vsub.s32 0, %v1415
        %v1417 = vsel %vm1411, %v1416, %v1415
        %vm1418 = vcmp.lt.s32.totalorder %v934, 0
        %v1419 = vsub.s32 0, %v934
        %v1420 = vsel %vm1418, %v1419, %v934
        %v1421 = vshrl.u32 %v1420, 4
        %v1422 = vand.u32 %v1420, 15
        %v1423 = vsub.s32 0, %v1422
        %v1424 = vsel %vm1418, %v1423, %v1422
        %vm1425 = vcmp.lt.s32.totalorder %v935, 0
        %v1426 = vsub.s32 0, %v935
        %v1427 = vsel %vm1425, %v1426, %v935
        %v1428 = vshrl.u32 %v1427, 4
        %v1429 = vand.u32 %v1427, 15
        %v1430 = vsub.s32 0, %v1429
        %v1431 = vsel %vm1425, %v1430, %v1429
        %vm1432 = vcmp.lt.s32.totalorder %v936, 0
        %v1433 = vsub.s32 0, %v936
        %v1434 = vsel %vm1432, %v1433, %v936
        %v1435 = vshrl.u32 %v1434, 4
        %v1436 = vand.u32 %v1434, 15
        %v1437 = vsub.s32 0, %v1436
        %v1438 = vsel %vm1432, %v1437, %v1436
        %vm1439 = vcmp.lt.s32.totalorder %v937, 0
        %v1440 = vsub.s32 0, %v937
        %v1441 = vsel %vm1439, %v1440, %v937
        %v1442 = vshrl.u32 %v1441, 4
        %v1443 = vand.u32 %v1441, 15
        %v1444 = vsub.s32 0, %v1443
        %v1445 = vsel %vm1439, %v1444, %v1443
        %vm1446 = vcmp.lt.s32.totalorder %v938, 0
        %v1447 = vsub.s32 0, %v938
        %v1448 = vsel %vm1446, %v1447, %v938
        %v1449 = vshrl.u32 %v1448, 4
        %v1450 = vand.u32 %v1448, 15
        %v1451 = vsub.s32 0, %v1450
        %v1452 = vsel %vm1446, %v1451, %v1450
        %vm1453 = vcmp.lt.s32.totalorder %v939, 0
        %v1454 = vsub.s32 0, %v939
        %v1455 = vsel %vm1453, %v1454, %v939
        %v1456 = vshrl.u32 %v1455, 4
        %v1457 = vand.u32 %v1455, 15
        %v1458 = vsub.s32 0, %v1457
        %v1459 = vsel %vm1453, %v1458, %v1457
        %vm1460 = vcmp.lt.s32.totalorder %v940, 0
        %v1461 = vsub.s32 0, %v940
        %v1462 = vsel %vm1460, %v1461, %v940
        %v1463 = vshrl.u32 %v1462, 4
        %v1464 = vand.u32 %v1462, 15
        %v1465 = vsub.s32 0, %v1464
        %v1466 = vsel %vm1460, %v1465, %v1464
        %vm1467 = vcmp.lt.s32.totalorder %v941, 0
        %v1468 = vsub.s32 0, %v941
        %v1469 = vsel %vm1467, %v1468, %v941
        %v1470 = vshrl.u32 %v1469, 4
        %v1471 = vand.u32 %v1469, 15
        %v1472 = vsub.s32 0, %v1471
        %v1473 = vsel %vm1467, %v1472, %v1471
        %vm1474 = vcmp.lt.s32.totalorder %v942, 0
        %v1475 = vsub.s32 0, %v942
        %v1476 = vsel %vm1474, %v1475, %v942
        %v1477 = vshrl.u32 %v1476, 4
        %v1478 = vand.u32 %v1476, 15
        %v1479 = vsub.s32 0, %v1478
        %v1480 = vsel %vm1474, %v1479, %v1478
        %vm1481 = vcmp.lt.s32.totalorder %v943, 0
        %v1482 = vsub.s32 0, %v943
        %v1483 = vsel %vm1481, %v1482, %v943
        %v1484 = vshrl.u32 %v1483, 4
        %v1485 = vand.u32 %v1483, 15
        %v1486 = vsub.s32 0, %v1485
        %v1487 = vsel %vm1481, %v1486, %v1485
        %vm1488 = vcmp.lt.s32.totalorder %v944, 0
        %v1489 = vsub.s32 0, %v944
        %v1490 = vsel %vm1488, %v1489, %v944
        %v1491 = vshrl.u32 %v1490, 4
        %v1492 = vand.u32 %v1490, 15
        %v1493 = vsub.s32 0, %v1492
        %v1494 = vsel %vm1488, %v1493, %v1492
        %vm1495 = vcmp.lt.s32.totalorder %v945, 0
        %v1496 = vsub.s32 0, %v945
        %v1497 = vsel %vm1495, %v1496, %v945
        %v1498 = vshrl.u32 %v1497, 4
        %v1499 = vand.u32 %v1497, 15
        %v1500 = vsub.s32 0, %v1499
        %v1501 = vsel %vm1495, %v1500, %v1499
        %vm1502 = vcmp.lt.s32.totalorder %v946, 0
        %v1503 = vsub.s32 0, %v946
        %v1504 = vsel %vm1502, %v1503, %v946
        %v1505 = vshrl.u32 %v1504, 4
        %v1506 = vand.u32 %v1504, 15
        %v1507 = vsub.s32 0, %v1506
        %v1508 = vsel %vm1502, %v1507, %v1506
        %vm1509 = vcmp.lt.s32.totalorder %v947, 0
        %v1510 = vsub.s32 0, %v947
        %v1511 = vsel %vm1509, %v1510, %v947
        %v1512 = vshrl.u32 %v1511, 4
        %v1513 = vand.u32 %v1511, 15
        %v1514 = vsub.s32 0, %v1513
        %v1515 = vsel %vm1509, %v1514, %v1513
        %vm1516 = vcmp.lt.s32.totalorder %v948, 0
        %v1517 = vsub.s32 0, %v948
        %v1518 = vsel %vm1516, %v1517, %v948
        %v1519 = vshrl.u32 %v1518, 4
        %v1520 = vand.u32 %v1518, 15
        %v1521 = vsub.s32 0, %v1520
        %v1522 = vsel %vm1516, %v1521, %v1520
        %vm1523 = vcmp.lt.s32.totalorder %v949, 0
        %v1524 = vsub.s32 0, %v949
        %v1525 = vsel %vm1523, %v1524, %v949
        %v1526 = vshrl.u32 %v1525, 4
        %v1527 = vand.u32 %v1525, 15
        %v1528 = vsub.s32 0, %v1527
        %v1529 = vsel %vm1523, %v1528, %v1527
        %vm1530 = vcmp.lt.s32.totalorder %v950, 0
        %v1531 = vsub.s32 0, %v950
        %v1532 = vsel %vm1530, %v1531, %v950
        %v1533 = vshrl.u32 %v1532, 4
        %v1534 = vand.u32 %v1532, 15
        %v1535 = vsub.s32 0, %v1534
        %v1536 = vsel %vm1530, %v1535, %v1534
        %vm1537 = vcmp.lt.s32.totalorder %v951, 0
        %v1538 = vsub.s32 0, %v951
        %v1539 = vsel %vm1537, %v1538, %v951
        %v1540 = vshrl.u32 %v1539, 4
        %v1541 = vand.u32 %v1539, 15
        %v1542 = vsub.s32 0, %v1541
        %v1543 = vsel %vm1537, %v1542, %v1541
        %vm1544 = vcmp.lt.s32.totalorder %v952, 0
        %v1545 = vsub.s32 0, %v952
        %v1546 = vsel %vm1544, %v1545, %v952
        %v1547 = vshrl.u32 %v1546, 4
        %v1548 = vand.u32 %v1546, 15
        %v1549 = vsub.s32 0, %v1548
        %v1550 = vsel %vm1544, %v1549, %v1548
        %vm1551 = vcmp.lt.s32.totalorder %v953, 0
        %v1552 = vsub.s32 0, %v953
        %v1553 = vsel %vm1551, %v1552, %v953
        %v1554 = vshrl.u32 %v1553, 4
        %v1555 = vand.u32 %v1553, 15
        %v1556 = vsub.s32 0, %v1555
        %v1557 = vsel %vm1551, %v1556, %v1555
        %vm1558 = vcmp.lt.s32.totalorder %v954, 0
        %v1559 = vsub.s32 0, %v954
        %v1560 = vsel %vm1558, %v1559, %v954
        %v1561 = vshrl.u32 %v1560, 4
        %v1562 = vand.u32 %v1560, 15
        %v1563 = vsub.s32 0, %v1562
        %v1564 = vsel %vm1558, %v1563, %v1562
        %vm1565 = vcmp.lt.s32.totalorder %v955, 0
        %v1566 = vsub.s32 0, %v955
        %v1567 = vsel %vm1565, %v1566, %v955
        %v1568 = vshrl.u32 %v1567, 4
        %v1569 = vand.u32 %v1567, 15
        %v1570 = vsub.s32 0, %v1569
        %v1571 = vsel %vm1565, %v1570, %v1569
        %vm1572 = vcmp.lt.s32.totalorder %v956, 0
        %v1573 = vsub.s32 0, %v956
        %v1574 = vsel %vm1572, %v1573, %v956
        %v1575 = vshrl.u32 %v1574, 4
        %v1576 = vand.u32 %v1574, 15
        %v1577 = vsub.s32 0, %v1576
        %v1578 = vsel %vm1572, %v1577, %v1576
        %vm1579 = vcmp.lt.s32.totalorder %v957, 0
        %v1580 = vsub.s32 0, %v957
        %v1581 = vsel %vm1579, %v1580, %v957
        %v1582 = vshrl.u32 %v1581, 4
        %v1583 = vand.u32 %v1581, 15
        %v1584 = vsub.s32 0, %v1583
        %v1585 = vsel %vm1579, %v1584, %v1583
        %vm1586 = vcmp.lt.s32.totalorder %v958, 0
        %v1587 = vsub.s32 0, %v958
        %v1588 = vsel %vm1586, %v1587, %v958
        %v1589 = vshrl.u32 %v1588, 4
        %v1590 = vand.u32 %v1588, 15
        %v1591 = vsub.s32 0, %v1590
        %v1592 = vsel %vm1586, %v1591, %v1590
        %vm1593 = vcmp.lt.s32.totalorder %v959, 0
        %v1594 = vsub.s32 0, %v959
        %v1595 = vsel %vm1593, %v1594, %v959
        %v1596 = vshrl.u32 %v1595, 4
        %v1597 = vand.u32 %v1595, 15
        %v1598 = vsub.s32 0, %v1597
        %v1599 = vsel %vm1593, %v1598, %v1597
        %vm1600 = vcmp.lt.s32.totalorder %v960, 0
        %v1601 = vsub.s32 0, %v960
        %v1602 = vsel %vm1600, %v1601, %v960
        %v1603 = vshrl.u32 %v1602, 4
        %v1604 = vand.u32 %v1602, 15
        %v1605 = vsub.s32 0, %v1604
        %v1606 = vsel %vm1600, %v1605, %v1604
        %vm1607 = vcmp.lt.s32.totalorder %v961, 0
        %v1608 = vsub.s32 0, %v961
        %v1609 = vsel %vm1607, %v1608, %v961
        %v1610 = vshrl.u32 %v1609, 4
        %v1611 = vand.u32 %v1609, 15
        %v1612 = vsub.s32 0, %v1611
        %v1613 = vsel %vm1607, %v1612, %v1611
        %vm1614 = vcmp.lt.s32.totalorder %v962, 0
        %v1615 = vsub.s32 0, %v962
        %v1616 = vsel %vm1614, %v1615, %v962
        %v1617 = vshrl.u32 %v1616, 4
        %v1618 = vand.u32 %v1616, 15
        %v1619 = vsub.s32 0, %v1618
        %v1620 = vsel %vm1614, %v1619, %v1618
        %vm1621 = vcmp.lt.s32.totalorder %v963, 0
        %v1622 = vsub.s32 0, %v963
        %v1623 = vsel %vm1621, %v1622, %v963
        %v1624 = vshrl.u32 %v1623, 4
        %v1625 = vand.u32 %v1623, 15
        %v1626 = vsub.s32 0, %v1625
        %v1627 = vsel %vm1621, %v1626, %v1625
        %vm1628 = vcmp.lt.s32.totalorder %v964, 0
        %v1629 = vsub.s32 0, %v964
        %v1630 = vsel %vm1628, %v1629, %v964
        %v1631 = vshrl.u32 %v1630, 4
        %v1632 = vand.u32 %v1630, 15
        %v1633 = vsub.s32 0, %v1632
        %v1634 = vsel %vm1628, %v1633, %v1632
        %vm1635 = vcmp.ne.s32.totalorder %v1389, 0
        %vm1636 = vcmp.ne.s32.totalorder %v1396, 0
        %vm1637 = vcmp.ne.s32.totalorder %v1403, 0
        %vm1638 = vcmp.ne.s32.totalorder %v1410, 0
        %vm1639 = vcmp.ne.s32.totalorder %v1417, 0
        %vm1640 = vcmp.ne.s32.totalorder %v1424, 0
        %vm1641 = vcmp.ne.s32.totalorder %v1431, 0
        %vm1642 = vcmp.ne.s32.totalorder %v1438, 0
        %vm1643 = vcmp.ne.s32.totalorder %v1445, 0
        %vm1644 = vcmp.ne.s32.totalorder %v1452, 0
        %vm1645 = vcmp.ne.s32.totalorder %v1459, 0
        %vm1646 = vcmp.ne.s32.totalorder %v1466, 0
        %vm1647 = vcmp.ne.s32.totalorder %v1473, 0
        %vm1648 = vcmp.ne.s32.totalorder %v1480, 0
        %vm1649 = vcmp.ne.s32.totalorder %v1487, 0
        %vm1650 = vcmp.ne.s32.totalorder %v1494, 0
        %vm1651 = vcmp.ne.s32.totalorder %v1501, 0
        %vm1652 = vcmp.ne.s32.totalorder %v1508, 0
        %vm1653 = vcmp.ne.s32.totalorder %v1515, 0
        %vm1654 = vcmp.ne.s32.totalorder %v1522, 0
        %vm1655 = vcmp.ne.s32.totalorder %v1529, 0
        %vm1656 = vcmp.ne.s32.totalorder %v1536, 0
        %vm1657 = vcmp.ne.s32.totalorder %v1543, 0
        %vm1658 = vcmp.ne.s32.totalorder %v1550, 0
        %vm1659 = vcmp.ne.s32.totalorder %v1557, 0
        %vm1660 = vcmp.ne.s32.totalorder %v1564, 0
        %vm1661 = vcmp.ne.s32.totalorder %v1571, 0
        %vm1662 = vcmp.ne.s32.totalorder %v1578, 0
        %vm1663 = vcmp.ne.s32.totalorder %v1585, 0
        %vm1664 = vcmp.ne.s32.totalorder %v1592, 0
        %vm1665 = vcmp.ne.s32.totalorder %v1599, 0
        %vm1666 = vcmp.ne.s32.totalorder %v1606, 0
        %vm1667 = vcmp.ne.s32.totalorder %v1613, 0
        %vm1668 = vcmp.ne.s32.totalorder %v1620, 0
        %vm1669 = vcmp.ne.s32.totalorder %v1627, 0
        %vm1670 = vcmp.ne.s32.totalorder %v1634, 0
        %vm1671 = vcmp.lt.s32.totalorder %v1389, 0
        %vm1672 = vcmp.lt.s32.totalorder %v1396, 0
        %vm1673 = vcmp.lt.s32.totalorder %v1403, 0
        %vm1674 = vcmp.lt.s32.totalorder %v1410, 0
        %vm1675 = vcmp.lt.s32.totalorder %v1417, 0
        %vm1676 = vcmp.lt.s32.totalorder %v1424, 0
        %vm1677 = vcmp.lt.s32.totalorder %v1431, 0
        %vm1678 = vcmp.lt.s32.totalorder %v1438, 0
        %vm1679 = vcmp.lt.s32.totalorder %v1445, 0
        %vm1680 = vcmp.lt.s32.totalorder %v1452, 0
        %vm1681 = vcmp.lt.s32.totalorder %v1459, 0
        %vm1682 = vcmp.lt.s32.totalorder %v1466, 0
        %vm1683 = vcmp.lt.s32.totalorder %v1473, 0
        %vm1684 = vcmp.lt.s32.totalorder %v1480, 0
        %vm1685 = vcmp.lt.s32.totalorder %v1487, 0
        %vm1686 = vcmp.lt.s32.totalorder %v1494, 0
        %vm1687 = vcmp.lt.s32.totalorder %v1501, 0
        %vm1688 = vcmp.lt.s32.totalorder %v1508, 0
        %vm1689 = vcmp.lt.s32.totalorder %v1515, 0
        %vm1690 = vcmp.lt.s32.totalorder %v1522, 0
        %vm1691 = vcmp.lt.s32.totalorder %v1529, 0
        %vm1692 = vcmp.lt.s32.totalorder %v1536, 0
        %vm1693 = vcmp.lt.s32.totalorder %v1543, 0
        %vm1694 = vcmp.lt.s32.totalorder %v1550, 0
        %vm1695 = vcmp.lt.s32.totalorder %v1557, 0
        %vm1696 = vcmp.lt.s32.totalorder %v1564, 0
        %vm1697 = vcmp.lt.s32.totalorder %v1571, 0
        %vm1698 = vcmp.lt.s32.totalorder %v1578, 0
        %vm1699 = vcmp.lt.s32.totalorder %v1585, 0
        %vm1700 = vcmp.lt.s32.totalorder %v1592, 0
        %vm1701 = vcmp.lt.s32.totalorder %v1599, 0
        %vm1702 = vcmp.lt.s32.totalorder %v1606, 0
        %vm1703 = vcmp.lt.s32.totalorder %v1613, 0
        %vm1704 = vcmp.lt.s32.totalorder %v1620, 0
        %vm1705 = vcmp.lt.s32.totalorder %v1627, 0
        %vm1706 = vcmp.lt.s32.totalorder %v1634, 0
        %vm1707 = vmand %vm1671, %vm1635
        %vm1708 = vmand %vm1672, %vm1636
        %vm1709 = vmand %vm1673, %vm1637
        %vm1710 = vmand %vm1674, %vm1638
        %vm1711 = vmand %vm1675, %vm1639
        %vm1712 = vmand %vm1676, %vm1640
        %vm1713 = vmand %vm1677, %vm1641
        %vm1714 = vmand %vm1678, %vm1642
        %vm1715 = vmand %vm1679, %vm1643
        %vm1716 = vmand %vm1680, %vm1644
        %vm1717 = vmand %vm1681, %vm1645
        %vm1718 = vmand %vm1682, %vm1646
        %vm1719 = vmand %vm1683, %vm1647
        %vm1720 = vmand %vm1684, %vm1648
        %vm1721 = vmand %vm1685, %vm1649
        %vm1722 = vmand %vm1686, %vm1650
        %vm1723 = vmand %vm1687, %vm1651
        %vm1724 = vmand %vm1688, %vm1652
        %vm1725 = vmand %vm1689, %vm1653
        %vm1726 = vmand %vm1690, %vm1654
        %vm1727 = vmand %vm1691, %vm1655
        %vm1728 = vmand %vm1692, %vm1656
        %vm1729 = vmand %vm1693, %vm1657
        %vm1730 = vmand %vm1694, %vm1658
        %vm1731 = vmand %vm1695, %vm1659
        %vm1732 = vmand %vm1696, %vm1660
        %vm1733 = vmand %vm1697, %vm1661
        %vm1734 = vmand %vm1698, %vm1662
        %vm1735 = vmand %vm1699, %vm1663
        %vm1736 = vmand %vm1700, %vm1664
        %vm1737 = vmand %vm1701, %vm1665
        %vm1738 = vmand %vm1702, %vm1666
        %vm1739 = vmand %vm1703, %vm1667
        %vm1740 = vmand %vm1704, %vm1668
        %vm1741 = vmand %vm1705, %vm1669
        %vm1742 = vmand %vm1706, %vm1670
        %v1743 = vadd.s32 %v1389, 16
        %v1744 = vadd.s32 %v1396, 16
        %v1745 = vadd.s32 %v1403, 16
        %v1746 = vadd.s32 %v1410, 16
        %v1747 = vadd.s32 %v1417, 16
        %v1748 = vadd.s32 %v1424, 16
        %v1749 = vadd.s32 %v1431, 16
        %v1750 = vadd.s32 %v1438, 16
        %v1751 = vadd.s32 %v1445, 16
        %v1752 = vadd.s32 %v1452, 16
        %v1753 = vadd.s32 %v1459, 16
        %v1754 = vadd.s32 %v1466, 16
        %v1755 = vadd.s32 %v1473, 16
        %v1756 = vadd.s32 %v1480, 16
        %v1757 = vadd.s32 %v1487, 16
        %v1758 = vadd.s32 %v1494, 16
        %v1759 = vadd.s32 %v1501, 16
        %v1760 = vadd.s32 %v1508, 16
        %v1761 = vadd.s32 %v1515, 16
        %v1762 = vadd.s32 %v1522, 16
        %v1763 = vadd.s32 %v1529, 16
        %v1764 = vadd.s32 %v1536, 16
        %v1765 = vadd.s32 %v1543, 16
        %v1766 = vadd.s32 %v1550, 16
        %v1767 = vadd.s32 %v1557, 16
        %v1768 = vadd.s32 %v1564, 16
        %v1769 = vadd.s32 %v1571, 16
        %v1770 = vadd.s32 %v1578, 16
        %v1771 = vadd.s32 %v1585, 16
        %v1772 = vadd.s32 %v1592, 16
        %v1773 = vadd.s32 %v1599, 16
        %v1774 = vadd.s32 %v1606, 16
        %v1775 = vadd.s32 %v1613, 16
        %v1776 = vadd.s32 %v1620, 16
        %v1777 = vadd.s32 %v1627, 16
        %v1778 = vadd.s32 %v1634, 16
        %v1779 = vsel %vm1707, %v1743, %v1389
        %v1780 = vsel %vm1708, %v1744, %v1396
        %v1781 = vsel %vm1709, %v1745, %v1403
        %v1782 = vsel %vm1710, %v1746, %v1410
        %v1783 = vsel %vm1711, %v1747, %v1417
        %v1784 = vsel %vm1712, %v1748, %v1424
        %v1785 = vsel %vm1713, %v1749, %v1431
        %v1786 = vsel %vm1714, %v1750, %v1438
        %v1787 = vsel %vm1715, %v1751, %v1445
        %v1788 = vsel %vm1716, %v1752, %v1452
        %v1789 = vsel %vm1717, %v1753, %v1459
        %v1790 = vsel %vm1718, %v1754, %v1466
        %v1791 = vsel %vm1719, %v1755, %v1473
        %v1792 = vsel %vm1720, %v1756, %v1480
        %v1793 = vsel %vm1721, %v1757, %v1487
        %v1794 = vsel %vm1722, %v1758, %v1494
        %v1795 = vsel %vm1723, %v1759, %v1501
        %v1796 = vsel %vm1724, %v1760, %v1508
        %v1797 = vsel %vm1725, %v1761, %v1515
        %v1798 = vsel %vm1726, %v1762, %v1522
        %v1799 = vsel %vm1727, %v1763, %v1529
        %v1800 = vsel %vm1728, %v1764, %v1536
        %v1801 = vsel %vm1729, %v1765, %v1543
        %v1802 = vsel %vm1730, %v1766, %v1550
        %v1803 = vsel %vm1731, %v1767, %v1557
        %v1804 = vsel %vm1732, %v1768, %v1564
        %v1805 = vsel %vm1733, %v1769, %v1571
        %v1806 = vsel %vm1734, %v1770, %v1578
        %v1807 = vsel %vm1735, %v1771, %v1585
        %v1808 = vsel %vm1736, %v1772, %v1592
        %v1809 = vsel %vm1737, %v1773, %v1599
        %v1810 = vsel %vm1738, %v1774, %v1606
        %v1811 = vsel %vm1739, %v1775, %v1613
        %v1812 = vsel %vm1740, %v1776, %v1620
        %v1813 = vsel %vm1741, %v1777, %v1627
        %v1814 = vsel %vm1742, %v1778, %v1634
        %vm1815 = vsmask.f32 256
        %v1817 = vshrl.u32 %v1365, 16
        %v1819 = vrot.slane %v1817, 7
        %v1820 = vshll.u32 %v1365, 16
        %v1822 = vor.u32 %v1819, %v1820
        %v1824 = vshrl.u32 %v1366, 16
        %v1826 = vrot.slane %v1824, 7
        %v1827 = vshll.u32 %v1366, 16
        %v1829 = vor.u32 %v1826, %v1827
        %v1830 = vsel %vm1815, %v1819, %v1829
        %v1832 = vshrl.u32 %v1367, 16
        %v1834 = vrot.slane %v1832, 7
        %v1835 = vshll.u32 %v1367, 16
        %v1837 = vor.u32 %v1834, %v1835
        %v1838 = vsel %vm1815, %v1826, %v1837
        %v1840 = vshrl.u32 %v1368, 16
        %v1842 = vrot.slane %v1840, 7
        %v1843 = vshll.u32 %v1368, 16
        %v1845 = vor.u32 %v1842, %v1843
        %v1846 = vsel %vm1815, %v1834, %v1845
        %v1848 = vshrl.u32 %v1369, 16
        %v1850 = vrot.slane %v1848, 7
        %v1851 = vshll.u32 %v1369, 16
        %v1853 = vor.u32 %v1850, %v1851
        %v1854 = vsel %vm1815, %v1842, %v1853
        %v1856 = vshrl.u32 %v1370, 16
        %v1858 = vrot.slane %v1856, 7
        %v1859 = vshll.u32 %v1370, 16
        %v1861 = vor.u32 %v1858, %v1859
        %v1862 = vsel %vm1815, %v1850, %v1861
        %v1864 = vshrl.u32 %v1371, 16
        %v1866 = vrot.slane %v1864, 7
        %v1867 = vshll.u32 %v1371, 16
        %v1869 = vor.u32 %v1866, %v1867
        %v1870 = vsel %vm1815, %v1858, %v1869
        %v1872 = vshrl.u32 %v1372, 16
        %v1874 = vrot.slane %v1872, 7
        %v1875 = vshll.u32 %v1372, 16
        %v1877 = vor.u32 %v1874, %v1875
        %v1878 = vsel %vm1815, %v1866, %v1877
        %v1880 = vshrl.u32 %v1373, 16
        %v1882 = vrot.slane %v1880, 7
        %v1883 = vshll.u32 %v1373, 16
        %v1885 = vor.u32 %v1882, %v1883
        %v1886 = vsel %vm1815, %v1874, %v1885
        %v1888 = vshrl.u32 %v1374, 16
        %v1890 = vrot.slane %v1888, 7
        %v1891 = vshll.u32 %v1374, 16
        %v1893 = vor.u32 %v1890, %v1891
        %v1894 = vsel %vm1815, %v1882, %v1893
        %v1896 = vshrl.u32 %v1375, 16
        %v1898 = vrot.slane %v1896, 7
        %v1899 = vshll.u32 %v1375, 16
        %v1901 = vor.u32 %v1898, %v1899
        %v1902 = vsel %vm1815, %v1890, %v1901
        %v1904 = vshrl.u32 %v1376, 16
        %v1906 = vrot.slane %v1904, 7
        %v1907 = vshll.u32 %v1376, 16
        %v1909 = vor.u32 %v1906, %v1907
        %v1910 = vsel %vm1815, %v1898, %v1909
        %v1912 = vshrl.u32 %v1377, 16
        %v1914 = vrot.slane %v1912, 7
        %v1915 = vshll.u32 %v1377, 16
        %v1917 = vor.u32 %v1914, %v1915
        %v1918 = vsel %vm1815, %v1906, %v1917
        %v1920 = vshrl.u32 %v1378, 16
        %v1922 = vrot.slane %v1920, 7
        %v1923 = vshll.u32 %v1378, 16
        %v1925 = vor.u32 %v1922, %v1923
        %v1926 = vsel %vm1815, %v1914, %v1925
        %v1928 = vshrl.u32 %v1379, 16
        %v1930 = vrot.slane %v1928, 7
        %v1931 = vshll.u32 %v1379, 16
        %v1933 = vor.u32 %v1930, %v1931
        %v1934 = vsel %vm1815, %v1922, %v1933
        %v1936 = vshrl.u32 %v1380, 16
        %v1938 = vrot.slane %v1936, 7
        %v1939 = vshll.u32 %v1380, 16
        %v1941 = vor.u32 %v1938, %v1939
        %v1942 = vsel %vm1815, %v1930, %v1941
        %v1944 = vshrl.u32 %v1381, 16
        %v1946 = vrot.slane %v1944, 7
        %v1947 = vshll.u32 %v1381, 16
        %v1949 = vor.u32 %v1946, %v1947
        %v1950 = vsel %vm1815, %v1938, %v1949
        %v1952 = vshrl.u32 %v1382, 16
        %v1954 = vrot.slane %v1952, 7
        %v1955 = vshll.u32 %v1382, 16
        %v1957 = vor.u32 %v1954, %v1955
        %v1958 = vsel %vm1815, %v1946, %v1957
        %vm1977 = vcmask 1040384
        %vm1978 = vmand %vm1977, %vm1815
        %v1979 = vsel %vm1978, 0, %v1822
        %vm1980 = vcmp.eq.s32.totalorder %v1779, 0
        %vm1981 = vcmp.eq.s32.totalorder %v1780, 0
        %vm1982 = vcmp.eq.s32.totalorder %v1781, 0
        %vm1983 = vcmp.eq.s32.totalorder %v1782, 0
        %vm1984 = vcmp.eq.s32.totalorder %v1783, 0
        %vm1985 = vcmp.eq.s32.totalorder %v1784, 0
        %vm1986 = vcmp.eq.s32.totalorder %v1785, 0
        %vm1987 = vcmp.eq.s32.totalorder %v1786, 0
        %vm1988 = vcmp.eq.s32.totalorder %v1787, 0
        %vm1989 = vcmp.eq.s32.totalorder %v1788, 0
        %vm1990 = vcmp.eq.s32.totalorder %v1789, 0
        %vm1991 = vcmp.eq.s32.totalorder %v1790, 0
        %vm1992 = vcmp.eq.s32.totalorder %v1791, 0
        %vm1993 = vcmp.eq.s32.totalorder %v1792, 0
        %vm1994 = vcmp.eq.s32.totalorder %v1793, 0
        %vm1995 = vcmp.eq.s32.totalorder %v1794, 0
        %vm1996 = vcmp.eq.s32.totalorder %v1795, 0
        %vm1997 = vcmp.eq.s32.totalorder %v1796, 0
        %vm1998 = vcmp.eq.s32.totalorder %v1797, 0
        %vm1999 = vcmp.eq.s32.totalorder %v1798, 0
        %vm2000 = vcmp.eq.s32.totalorder %v1799, 0
        %vm2001 = vcmp.eq.s32.totalorder %v1800, 0
        %vm2002 = vcmp.eq.s32.totalorder %v1801, 0
        %vm2003 = vcmp.eq.s32.totalorder %v1802, 0
        %vm2004 = vcmp.eq.s32.totalorder %v1803, 0
        %vm2005 = vcmp.eq.s32.totalorder %v1804, 0
        %vm2006 = vcmp.eq.s32.totalorder %v1805, 0
        %vm2007 = vcmp.eq.s32.totalorder %v1806, 0
        %vm2008 = vcmp.eq.s32.totalorder %v1807, 0
        %vm2009 = vcmp.eq.s32.totalorder %v1808, 0
        %vm2010 = vcmp.eq.s32.totalorder %v1809, 0
        %vm2011 = vcmp.eq.s32.totalorder %v1810, 0
        %vm2012 = vcmp.eq.s32.totalorder %v1811, 0
        %vm2013 = vcmp.eq.s32.totalorder %v1812, 0
        %vm2014 = vcmp.eq.s32.totalorder %v1813, 0
        %vm2015 = vcmp.eq.s32.totalorder %v1814, 0
        %v2016 = vsel %vm1980, 1, 0
        %v2017 = vsel %vm1981, 1, 0
        %v2018 = vsel %vm1982, 1, 0
        %v2019 = vsel %vm1983, 1, 0
        %v2020 = vsel %vm1984, 1, 0
        %v2021 = vsel %vm1985, 1, 0
        %v2022 = vsel %vm1986, 1, 0
        %v2023 = vsel %vm1987, 1, 0
        %v2024 = vsel %vm1988, 1, 0
        %v2025 = vsel %vm1989, 1, 0
        %v2026 = vsel %vm1990, 1, 0
        %v2027 = vsel %vm1991, 1, 0
        %v2028 = vsel %vm1992, 1, 0
        %v2029 = vsel %vm1993, 1, 0
        %v2030 = vsel %vm1994, 1, 0
        %v2031 = vsel %vm1995, 1, 0
        %v2032 = vsel %vm1996, 1, 0
        %v2033 = vsel %vm1997, 1, 0
        %v2034 = vsel %vm1998, 1, 0
        %v2035 = vsel %vm1999, 1, 0
        %v2036 = vsel %vm2000, 1, 0
        %v2037 = vsel %vm2001, 1, 0
        %v2038 = vsel %vm2002, 1, 0
        %v2039 = vsel %vm2003, 1, 0
        %v2040 = vsel %vm2004, 1, 0
        %v2041 = vsel %vm2005, 1, 0
        %v2042 = vsel %vm2006, 1, 0
        %v2043 = vsel %vm2007, 1, 0
        %v2044 = vsel %vm2008, 1, 0
        %v2045 = vsel %vm2009, 1, 0
        %v2046 = vsel %vm2010, 1, 0
        %v2047 = vsel %vm2011, 1, 0
        %v2048 = vsel %vm2012, 1, 0
        %v2049 = vsel %vm2013, 1, 0
        %v2050 = vsel %vm2014, 1, 0
        %v2051 = vsel %vm2015, 1, 0
        %vm2052 = vcmp.eq.s32.totalorder %v2016, 1
        %vm2053 = vcmp.eq.s32.totalorder %v2017, 1
        %vm2054 = vcmp.eq.s32.totalorder %v2018, 1
        %vm2055 = vcmp.eq.s32.totalorder %v2019, 1
        %vm2056 = vcmp.eq.s32.totalorder %v2020, 1
        %vm2057 = vcmp.eq.s32.totalorder %v2021, 1
        %vm2058 = vcmp.eq.s32.totalorder %v2022, 1
        %vm2059 = vcmp.eq.s32.totalorder %v2023, 1
        %vm2060 = vcmp.eq.s32.totalorder %v2024, 1
        %vm2061 = vcmp.eq.s32.totalorder %v2025, 1
        %vm2062 = vcmp.eq.s32.totalorder %v2026, 1
        %vm2063 = vcmp.eq.s32.totalorder %v2027, 1
        %vm2064 = vcmp.eq.s32.totalorder %v2028, 1
        %vm2065 = vcmp.eq.s32.totalorder %v2029, 1
        %vm2066 = vcmp.eq.s32.totalorder %v2030, 1
        %vm2067 = vcmp.eq.s32.totalorder %v2031, 1
        %vm2068 = vcmp.eq.s32.totalorder %v2032, 1
        %vm2069 = vcmp.eq.s32.totalorder %v2033, 1
        %vm2070 = vcmp.eq.s32.totalorder %v2034, 1
        %vm2071 = vcmp.eq.s32.totalorder %v2035, 1
        %vm2072 = vcmp.eq.s32.totalorder %v2036, 1
        %vm2073 = vcmp.eq.s32.totalorder %v2037, 1
        %vm2074 = vcmp.eq.s32.totalorder %v2038, 1
        %vm2075 = vcmp.eq.s32.totalorder %v2039, 1
        %vm2076 = vcmp.eq.s32.totalorder %v2040, 1
        %vm2077 = vcmp.eq.s32.totalorder %v2041, 1
        %vm2078 = vcmp.eq.s32.totalorder %v2042, 1
        %vm2079 = vcmp.eq.s32.totalorder %v2043, 1
        %vm2080 = vcmp.eq.s32.totalorder %v2044, 1
        %vm2081 = vcmp.eq.s32.totalorder %v2045, 1
        %vm2082 = vcmp.eq.s32.totalorder %v2046, 1
        %vm2083 = vcmp.eq.s32.totalorder %v2047, 1
        %vm2084 = vcmp.eq.s32.totalorder %v2048, 1
        %vm2085 = vcmp.eq.s32.totalorder %v2049, 1
        %vm2086 = vcmp.eq.s32.totalorder %v2050, 1
        %vm2087 = vcmp.eq.s32.totalorder %v2051, 1
        %vm2088 = vmpackc.low %vm2052, %vm2052
        %vm2089 = vmpackc.low %vm2053, %vm2053
        %vm2090 = vmpackc.low %vm2054, %vm2054
        %vm2091 = vmpackc.low %vm2055, %vm2055
        %vm2092 = vmpackc.low %vm2056, %vm2056
        %vm2093 = vmpackc.low %vm2057, %vm2057
        %vm2094 = vmpackc.low %vm2058, %vm2058
        %vm2095 = vmpackc.low %vm2059, %vm2059
        %vm2096 = vmpackc.low %vm2060, %vm2060
        %vm2097 = vmpackc.low %vm2061, %vm2061
        %vm2098 = vmpackc.low %vm2062, %vm2062
        %vm2099 = vmpackc.low %vm2063, %vm2063
        %vm2100 = vmpackc.low %vm2064, %vm2064
        %vm2101 = vmpackc.low %vm2065, %vm2065
        %vm2102 = vmpackc.low %vm2066, %vm2066
        %vm2103 = vmpackc.low %vm2067, %vm2067
        %vm2104 = vmpackc.low %vm2068, %vm2068
        %vm2105 = vmpackc.low %vm2069, %vm2069
        %vm2106 = vmpackc.low %vm2070, %vm2070
        %vm2107 = vmpackc.low %vm2071, %vm2071
        %vm2108 = vmpackc.low %vm2072, %vm2072
        %vm2109 = vmpackc.low %vm2073, %vm2073
        %vm2110 = vmpackc.low %vm2074, %vm2074
        %vm2111 = vmpackc.low %vm2075, %vm2075
        %vm2112 = vmpackc.low %vm2076, %vm2076
        %vm2113 = vmpackc.low %vm2077, %vm2077
        %vm2114 = vmpackc.low %vm2078, %vm2078
        %vm2115 = vmpackc.low %vm2079, %vm2079
        %vm2116 = vmpackc.low %vm2080, %vm2080
        %vm2117 = vmpackc.low %vm2081, %vm2081
        %vm2118 = vmpackc.low %vm2082, %vm2082
        %vm2119 = vmpackc.low %vm2083, %vm2083
        %vm2120 = vmpackc.low %vm2084, %vm2084
        %vm2121 = vmpackc.low %vm2085, %vm2085
        %vm2122 = vmpackc.low %vm2086, %vm2086
        %vm2123 = vmpackc.low %vm2087, %vm2087
        %v2124 = vsel %vm2088, 65537, 0
        %v2125 = vsel %vm2089, 65537, 0
        %v2126 = vsel %vm2090, 65537, 0
        %v2127 = vsel %vm2091, 65537, 0
        %v2128 = vsel %vm2092, 65537, 0
        %v2129 = vsel %vm2093, 65537, 0
        %v2130 = vsel %vm2094, 65537, 0
        %v2131 = vsel %vm2095, 65537, 0
        %v2132 = vsel %vm2096, 65537, 0
        %v2133 = vsel %vm2097, 65537, 0
        %v2134 = vsel %vm2098, 65537, 0
        %v2135 = vsel %vm2099, 65537, 0
        %v2136 = vsel %vm2100, 65537, 0
        %v2137 = vsel %vm2101, 65537, 0
        %v2138 = vsel %vm2102, 65537, 0
        %v2139 = vsel %vm2103, 65537, 0
        %v2140 = vsel %vm2104, 65537, 0
        %v2141 = vsel %vm2105, 65537, 0
        %v2142 = vsel %vm2106, 65537, 0
        %v2143 = vsel %vm2107, 65537, 0
        %v2144 = vsel %vm2108, 65537, 0
        %v2145 = vsel %vm2109, 65537, 0
        %v2146 = vsel %vm2110, 65537, 0
        %v2147 = vsel %vm2111, 65537, 0
        %v2148 = vsel %vm2112, 65537, 0
        %v2149 = vsel %vm2113, 65537, 0
        %v2150 = vsel %vm2114, 65537, 0
        %v2151 = vsel %vm2115, 65537, 0
        %v2152 = vsel %vm2116, 65537, 0
        %v2153 = vsel %vm2117, 65537, 0
        %v2154 = vsel %vm2118, 65537, 0
        %v2155 = vsel %vm2119, 65537, 0
        %v2156 = vsel %vm2120, 65537, 0
        %v2157 = vsel %vm2121, 65537, 0
        %v2158 = vsel %vm2122, 65537, 0
        %v2159 = vsel %vm2123, 65537, 0
        %v2160 = vunpack.c.l.b16 %v2124
        %v2161 = vunpack.c.l.b16 %v2125
        %v2162 = vunpack.c.l.b16 %v2126
        %v2163 = vunpack.c.l.b16 %v2127
        %v2164 = vunpack.c.l.b16 %v2128
        %v2165 = vunpack.c.l.b16 %v2129
        %v2166 = vunpack.c.l.b16 %v2130
        %v2167 = vunpack.c.l.b16 %v2131
        %v2168 = vunpack.c.l.b16 %v2132
        %v2169 = vunpack.c.l.b16 %v2133
        %v2170 = vunpack.c.l.b16 %v2134
        %v2171 = vunpack.c.l.b16 %v2135
        %v2172 = vunpack.c.l.b16 %v2136
        %v2173 = vunpack.c.l.b16 %v2137
        %v2174 = vunpack.c.l.b16 %v2138
        %v2175 = vunpack.c.l.b16 %v2139
        %v2176 = vunpack.c.l.b16 %v2140
        %v2177 = vunpack.c.l.b16 %v2141
        %v2178 = vunpack.c.l.b16 %v2142
        %v2179 = vunpack.c.l.b16 %v2143
        %v2180 = vunpack.c.l.b16 %v2144
        %v2181 = vunpack.c.l.b16 %v2145
        %v2182 = vunpack.c.l.b16 %v2146
        %v2183 = vunpack.c.l.b16 %v2147
        %v2184 = vunpack.c.l.b16 %v2148
        %v2185 = vunpack.c.l.b16 %v2149
        %v2186 = vunpack.c.l.b16 %v2150
        %v2187 = vunpack.c.l.b16 %v2151
        %v2188 = vunpack.c.l.b16 %v2152
        %v2189 = vunpack.c.l.b16 %v2153
        %v2190 = vunpack.c.l.b16 %v2154
        %v2191 = vunpack.c.l.b16 %v2155
        %v2192 = vunpack.c.l.b16 %v2156
        %v2193 = vunpack.c.l.b16 %v2157
        %v2194 = vunpack.c.l.b16 %v2158
        %v2195 = vunpack.c.l.b16 %v2159
        %v2196 = vpack.c.b16 %v2161, %v2160
        %v2197 = vpack.c.b16 %v2163, %v2162
        %v2198 = vpack.c.b16 %v2165, %v2164
        %v2199 = vpack.c.b16 %v2167, %v2166
        %v2200 = vpack.c.b16 %v2169, %v2168
        %v2201 = vpack.c.b16 %v2171, %v2170
        %v2202 = vpack.c.b16 %v2173, %v2172
        %v2203 = vpack.c.b16 %v2175, %v2174
        %v2204 = vpack.c.b16 %v2177, %v2176
        %v2205 = vpack.c.b16 %v2179, %v2178
        %v2206 = vpack.c.b16 %v2181, %v2180
        %v2207 = vpack.c.b16 %v2183, %v2182
        %v2208 = vpack.c.b16 %v2185, %v2184
        %v2209 = vpack.c.b16 %v2187, %v2186
        %v2210 = vpack.c.b16 %v2189, %v2188
        %v2211 = vpack.c.b16 %v2191, %v2190
        %v2212 = vpack.c.b16 %v2193, %v2192
        %v2213 = vpack.c.b16 %v2195, %v2194
        %vm2214 = vcmp.ne.s16.totalorder %v2196, 0
        %vm2215 = vcmp.ne.s16.totalorder %v2197, 0
        %vm2216 = vcmp.ne.s16.totalorder %v2198, 0
        %vm2217 = vcmp.ne.s16.totalorder %v2199, 0
        %vm2218 = vcmp.ne.s16.totalorder %v2200, 0
        %vm2219 = vcmp.ne.s16.totalorder %v2201, 0
        %vm2220 = vcmp.ne.s16.totalorder %v2202, 0
        %vm2221 = vcmp.ne.s16.totalorder %v2203, 0
        %vm2222 = vcmp.ne.s16.totalorder %v2204, 0
        %vm2223 = vcmp.ne.s16.totalorder %v2205, 0
        %vm2224 = vcmp.ne.s16.totalorder %v2206, 0
        %vm2225 = vcmp.ne.s16.totalorder %v2207, 0
        %vm2226 = vcmp.ne.s16.totalorder %v2208, 0
        %vm2227 = vcmp.ne.s16.totalorder %v2209, 0
        %vm2228 = vcmp.ne.s16.totalorder %v2210, 0
        %vm2229 = vcmp.ne.s16.totalorder %v2211, 0
        %vm2230 = vcmp.ne.s16.totalorder %v2212, 0
        %vm2231 = vcmp.ne.s16.totalorder %v2213, 0
        %v2232 = vsel %vm2214, 0, %v1979
        %v2233 = vsel %vm2215, 0, %v1830
        %v2234 = vsel %vm2216, 0, %v1838
        %v2235 = vsel %vm2217, 0, %v1846
        %v2236 = vsel %vm2218, 0, %v1854
        %v2237 = vsel %vm2219, 0, %v1862
        %v2238 = vsel %vm2220, 0, %v1870
        %v2239 = vsel %vm2221, 0, %v1878
        %v2240 = vsel %vm2222, 0, %v1886
        %v2241 = vsel %vm2223, 0, %v1894
        %v2242 = vsel %vm2224, 0, %v1902
        %v2243 = vsel %vm2225, 0, %v1910
        %v2244 = vsel %vm2226, 0, %v1918
        %v2245 = vsel %vm2227, 0, %v1926
        %v2246 = vsel %vm2228, 0, %v1934
        %v2247 = vsel %vm2229, 0, %v1942
        %v2248 = vsel %vm2230, 0, %v1950
        %v2249 = vsel %vm2231, 0, %v1958
        %vm2250 = vsmask.f32 7424
        %v2251 = vrot.slane %v1820, 1
        %v2252 = vor.u32 %v1817, %v2251
        %v2253 = vrot.slane %v1827, 1
        %v2254 = vsel %vm2250, %v2252, %v2253
        %v2255 = vor.u32 %v1824, %v2253
        %v2256 = vrot.slane %v1835, 1
        %v2257 = vsel %vm2250, %v2255, %v2256
        %v2258 = vor.u32 %v1832, %v2256
        %v2259 = vrot.slane %v1843, 1
        %v2260 = vsel %vm2250, %v2258, %v2259
        %v2261 = vor.u32 %v1840, %v2259
        %v2262 = vrot.slane %v1851, 1
        %v2263 = vsel %vm2250, %v2261, %v2262
        %v2264 = vor.u32 %v1848, %v2262
        %v2265 = vrot.slane %v1859, 1
        %v2266 = vsel %vm2250, %v2264, %v2265
        %v2267 = vor.u32 %v1856, %v2265
        %v2268 = vrot.slane %v1867, 1
        %v2269 = vsel %vm2250, %v2267, %v2268
        %v2270 = vor.u32 %v1864, %v2268
        %v2271 = vrot.slane %v1875, 1
        %v2272 = vsel %vm2250, %v2270, %v2271
        %v2273 = vor.u32 %v1872, %v2271
        %v2274 = vrot.slane %v1883, 1
        %v2275 = vsel %vm2250, %v2273, %v2274
        %v2276 = vor.u32 %v1880, %v2274
        %v2277 = vrot.slane %v1891, 1
        %v2278 = vsel %vm2250, %v2276, %v2277
        %v2279 = vor.u32 %v1888, %v2277
        %v2280 = vrot.slane %v1899, 1
        %v2281 = vsel %vm2250, %v2279, %v2280
        %v2282 = vor.u32 %v1896, %v2280
        %v2283 = vrot.slane %v1907, 1
        %v2284 = vsel %vm2250, %v2282, %v2283
        %v2285 = vor.u32 %v1904, %v2283
        %v2286 = vrot.slane %v1915, 1
        %v2287 = vsel %vm2250, %v2285, %v2286
        %v2288 = vor.u32 %v1912, %v2286
        %v2289 = vrot.slane %v1923, 1
        %v2290 = vsel %vm2250, %v2288, %v2289
        %v2291 = vor.u32 %v1920, %v2289
        %v2292 = vrot.slane %v1931, 1
        %v2293 = vsel %vm2250, %v2291, %v2292
        %v2294 = vor.u32 %v1928, %v2292
        %v2295 = vrot.slane %v1939, 1
        %v2296 = vsel %vm2250, %v2294, %v2295
        %v2297 = vor.u32 %v1936, %v2295
        %v2298 = vrot.slane %v1947, 1
        %v2299 = vsel %vm2250, %v2297, %v2298
        %v2300 = vor.u32 %v1944, %v2298
        %v2301 = vrot.slane %v1955, 1
        %v2302 = vsel %vm2250, %v2300, %v2301
        %v2303 = vor.u32 %v1952, %v2301
        %vm2322 = vcmask 1047552
        %vm2323 = vmand %vm2322, %vm2250
        %v2324 = vsel %vm2323, %v2303, 0
        %vm2325 = vcmp.eq.s32.totalorder %v1779, 15
        %vm2326 = vcmp.eq.s32.totalorder %v1780, 15
        %vm2327 = vcmp.eq.s32.totalorder %v1781, 15
        %vm2328 = vcmp.eq.s32.totalorder %v1782, 15
        %vm2329 = vcmp.eq.s32.totalorder %v1783, 15
        %vm2330 = vcmp.eq.s32.totalorder %v1784, 15
        %vm2331 = vcmp.eq.s32.totalorder %v1785, 15
        %vm2332 = vcmp.eq.s32.totalorder %v1786, 15
        %vm2333 = vcmp.eq.s32.totalorder %v1787, 15
        %vm2334 = vcmp.eq.s32.totalorder %v1788, 15
        %vm2335 = vcmp.eq.s32.totalorder %v1789, 15
        %vm2336 = vcmp.eq.s32.totalorder %v1790, 15
        %vm2337 = vcmp.eq.s32.totalorder %v1791, 15
        %vm2338 = vcmp.eq.s32.totalorder %v1792, 15
        %vm2339 = vcmp.eq.s32.totalorder %v1793, 15
        %vm2340 = vcmp.eq.s32.totalorder %v1794, 15
        %vm2341 = vcmp.eq.s32.totalorder %v1795, 15
        %vm2342 = vcmp.eq.s32.totalorder %v1796, 15
        %vm2343 = vcmp.eq.s32.totalorder %v1797, 15
        %vm2344 = vcmp.eq.s32.totalorder %v1798, 15
        %vm2345 = vcmp.eq.s32.totalorder %v1799, 15
        %vm2346 = vcmp.eq.s32.totalorder %v1800, 15
        %vm2347 = vcmp.eq.s32.totalorder %v1801, 15
        %vm2348 = vcmp.eq.s32.totalorder %v1802, 15
        %vm2349 = vcmp.eq.s32.totalorder %v1803, 15
        %vm2350 = vcmp.eq.s32.totalorder %v1804, 15
        %vm2351 = vcmp.eq.s32.totalorder %v1805, 15
        %vm2352 = vcmp.eq.s32.totalorder %v1806, 15
        %vm2353 = vcmp.eq.s32.totalorder %v1807, 15
        %vm2354 = vcmp.eq.s32.totalorder %v1808, 15
        %vm2355 = vcmp.eq.s32.totalorder %v1809, 15
        %vm2356 = vcmp.eq.s32.totalorder %v1810, 15
        %vm2357 = vcmp.eq.s32.totalorder %v1811, 15
        %vm2358 = vcmp.eq.s32.totalorder %v1812, 15
        %vm2359 = vcmp.eq.s32.totalorder %v1813, 15
        %vm2360 = vcmp.eq.s32.totalorder %v1814, 15
        %v2361 = vsel %vm2325, 1, 0
        %v2362 = vsel %vm2326, 1, 0
        %v2363 = vsel %vm2327, 1, 0
        %v2364 = vsel %vm2328, 1, 0
        %v2365 = vsel %vm2329, 1, 0
        %v2366 = vsel %vm2330, 1, 0
        %v2367 = vsel %vm2331, 1, 0
        %v2368 = vsel %vm2332, 1, 0
        %v2369 = vsel %vm2333, 1, 0
        %v2370 = vsel %vm2334, 1, 0
        %v2371 = vsel %vm2335, 1, 0
        %v2372 = vsel %vm2336, 1, 0
        %v2373 = vsel %vm2337, 1, 0
        %v2374 = vsel %vm2338, 1, 0
        %v2375 = vsel %vm2339, 1, 0
        %v2376 = vsel %vm2340, 1, 0
        %v2377 = vsel %vm2341, 1, 0
        %v2378 = vsel %vm2342, 1, 0
        %v2379 = vsel %vm2343, 1, 0
        %v2380 = vsel %vm2344, 1, 0
        %v2381 = vsel %vm2345, 1, 0
        %v2382 = vsel %vm2346, 1, 0
        %v2383 = vsel %vm2347, 1, 0
        %v2384 = vsel %vm2348, 1, 0
        %v2385 = vsel %vm2349, 1, 0
        %v2386 = vsel %vm2350, 1, 0
        %v2387 = vsel %vm2351, 1, 0
        %v2388 = vsel %vm2352, 1, 0
        %v2389 = vsel %vm2353, 1, 0
        %v2390 = vsel %vm2354, 1, 0
        %v2391 = vsel %vm2355, 1, 0
        %v2392 = vsel %vm2356, 1, 0
        %v2393 = vsel %vm2357, 1, 0
        %v2394 = vsel %vm2358, 1, 0
        %v2395 = vsel %vm2359, 1, 0
        %v2396 = vsel %vm2360, 1, 0
        %vm2397 = vcmp.eq.s32.totalorder %v2361, 1
        %vm2398 = vcmp.eq.s32.totalorder %v2362, 1
        %vm2399 = vcmp.eq.s32.totalorder %v2363, 1
        %vm2400 = vcmp.eq.s32.totalorder %v2364, 1
        %vm2401 = vcmp.eq.s32.totalorder %v2365, 1
        %vm2402 = vcmp.eq.s32.totalorder %v2366, 1
        %vm2403 = vcmp.eq.s32.totalorder %v2367, 1
        %vm2404 = vcmp.eq.s32.totalorder %v2368, 1
        %vm2405 = vcmp.eq.s32.totalorder %v2369, 1
        %vm2406 = vcmp.eq.s32.totalorder %v2370, 1
        %vm2407 = vcmp.eq.s32.totalorder %v2371, 1
        %vm2408 = vcmp.eq.s32.totalorder %v2372, 1
        %vm2409 = vcmp.eq.s32.totalorder %v2373, 1
        %vm2410 = vcmp.eq.s32.totalorder %v2374, 1
        %vm2411 = vcmp.eq.s32.totalorder %v2375, 1
        %vm2412 = vcmp.eq.s32.totalorder %v2376, 1
        %vm2413 = vcmp.eq.s32.totalorder %v2377, 1
        %vm2414 = vcmp.eq.s32.totalorder %v2378, 1
        %vm2415 = vcmp.eq.s32.totalorder %v2379, 1
        %vm2416 = vcmp.eq.s32.totalorder %v2380, 1
        %vm2417 = vcmp.eq.s32.totalorder %v2381, 1
        %vm2418 = vcmp.eq.s32.totalorder %v2382, 1
        %vm2419 = vcmp.eq.s32.totalorder %v2383, 1
        %vm2420 = vcmp.eq.s32.totalorder %v2384, 1
        %vm2421 = vcmp.eq.s32.totalorder %v2385, 1
        %vm2422 = vcmp.eq.s32.totalorder %v2386, 1
        %vm2423 = vcmp.eq.s32.totalorder %v2387, 1
        %vm2424 = vcmp.eq.s32.totalorder %v2388, 1
        %vm2425 = vcmp.eq.s32.totalorder %v2389, 1
        %vm2426 = vcmp.eq.s32.totalorder %v2390, 1
        %vm2427 = vcmp.eq.s32.totalorder %v2391, 1
        %vm2428 = vcmp.eq.s32.totalorder %v2392, 1
        %vm2429 = vcmp.eq.s32.totalorder %v2393, 1
        %vm2430 = vcmp.eq.s32.totalorder %v2394, 1
        %vm2431 = vcmp.eq.s32.totalorder %v2395, 1
        %vm2432 = vcmp.eq.s32.totalorder %v2396, 1
        %vm2433 = vmpackc.low %vm2397, %vm2397
        %vm2434 = vmpackc.low %vm2398, %vm2398
        %vm2435 = vmpackc.low %vm2399, %vm2399
        %vm2436 = vmpackc.low %vm2400, %vm2400
        %vm2437 = vmpackc.low %vm2401, %vm2401
        %vm2438 = vmpackc.low %vm2402, %vm2402
        %vm2439 = vmpackc.low %vm2403, %vm2403
        %vm2440 = vmpackc.low %vm2404, %vm2404
        %vm2441 = vmpackc.low %vm2405, %vm2405
        %vm2442 = vmpackc.low %vm2406, %vm2406
        %vm2443 = vmpackc.low %vm2407, %vm2407
        %vm2444 = vmpackc.low %vm2408, %vm2408
        %vm2445 = vmpackc.low %vm2409, %vm2409
        %vm2446 = vmpackc.low %vm2410, %vm2410
        %vm2447 = vmpackc.low %vm2411, %vm2411
        %vm2448 = vmpackc.low %vm2412, %vm2412
        %vm2449 = vmpackc.low %vm2413, %vm2413
        %vm2450 = vmpackc.low %vm2414, %vm2414
        %vm2451 = vmpackc.low %vm2415, %vm2415
        %vm2452 = vmpackc.low %vm2416, %vm2416
        %vm2453 = vmpackc.low %vm2417, %vm2417
        %vm2454 = vmpackc.low %vm2418, %vm2418
        %vm2455 = vmpackc.low %vm2419, %vm2419
        %vm2456 = vmpackc.low %vm2420, %vm2420
        %vm2457 = vmpackc.low %vm2421, %vm2421
        %vm2458 = vmpackc.low %vm2422, %vm2422
        %vm2459 = vmpackc.low %vm2423, %vm2423
        %vm2460 = vmpackc.low %vm2424, %vm2424
        %vm2461 = vmpackc.low %vm2425, %vm2425
        %vm2462 = vmpackc.low %vm2426, %vm2426
        %vm2463 = vmpackc.low %vm2427, %vm2427
        %vm2464 = vmpackc.low %vm2428, %vm2428
        %vm2465 = vmpackc.low %vm2429, %vm2429
        %vm2466 = vmpackc.low %vm2430, %vm2430
        %vm2467 = vmpackc.low %vm2431, %vm2431
        %vm2468 = vmpackc.low %vm2432, %vm2432
        %v2469 = vsel %vm2433, 65537, 0
        %v2470 = vsel %vm2434, 65537, 0
        %v2471 = vsel %vm2435, 65537, 0
        %v2472 = vsel %vm2436, 65537, 0
        %v2473 = vsel %vm2437, 65537, 0
        %v2474 = vsel %vm2438, 65537, 0
        %v2475 = vsel %vm2439, 65537, 0
        %v2476 = vsel %vm2440, 65537, 0
        %v2477 = vsel %vm2441, 65537, 0
        %v2478 = vsel %vm2442, 65537, 0
        %v2479 = vsel %vm2443, 65537, 0
        %v2480 = vsel %vm2444, 65537, 0
        %v2481 = vsel %vm2445, 65537, 0
        %v2482 = vsel %vm2446, 65537, 0
        %v2483 = vsel %vm2447, 65537, 0
        %v2484 = vsel %vm2448, 65537, 0
        %v2485 = vsel %vm2449, 65537, 0
        %v2486 = vsel %vm2450, 65537, 0
        %v2487 = vsel %vm2451, 65537, 0
        %v2488 = vsel %vm2452, 65537, 0
        %v2489 = vsel %vm2453, 65537, 0
        %v2490 = vsel %vm2454, 65537, 0
        %v2491 = vsel %vm2455, 65537, 0
        %v2492 = vsel %vm2456, 65537, 0
        %v2493 = vsel %vm2457, 65537, 0
        %v2494 = vsel %vm2458, 65537, 0
        %v2495 = vsel %vm2459, 65537, 0
        %v2496 = vsel %vm2460, 65537, 0
        %v2497 = vsel %vm2461, 65537, 0
        %v2498 = vsel %vm2462, 65537, 0
        %v2499 = vsel %vm2463, 65537, 0
        %v2500 = vsel %vm2464, 65537, 0
        %v2501 = vsel %vm2465, 65537, 0
        %v2502 = vsel %vm2466, 65537, 0
        %v2503 = vsel %vm2467, 65537, 0
        %v2504 = vsel %vm2468, 65537, 0
        %v2505 = vunpack.c.l.b16 %v2469
        %v2506 = vunpack.c.l.b16 %v2470
        %v2507 = vunpack.c.l.b16 %v2471
        %v2508 = vunpack.c.l.b16 %v2472
        %v2509 = vunpack.c.l.b16 %v2473
        %v2510 = vunpack.c.l.b16 %v2474
        %v2511 = vunpack.c.l.b16 %v2475
        %v2512 = vunpack.c.l.b16 %v2476
        %v2513 = vunpack.c.l.b16 %v2477
        %v2514 = vunpack.c.l.b16 %v2478
        %v2515 = vunpack.c.l.b16 %v2479
        %v2516 = vunpack.c.l.b16 %v2480
        %v2517 = vunpack.c.l.b16 %v2481
        %v2518 = vunpack.c.l.b16 %v2482
        %v2519 = vunpack.c.l.b16 %v2483
        %v2520 = vunpack.c.l.b16 %v2484
        %v2521 = vunpack.c.l.b16 %v2485
        %v2522 = vunpack.c.l.b16 %v2486
        %v2523 = vunpack.c.l.b16 %v2487
        %v2524 = vunpack.c.l.b16 %v2488
        %v2525 = vunpack.c.l.b16 %v2489
        %v2526 = vunpack.c.l.b16 %v2490
        %v2527 = vunpack.c.l.b16 %v2491
        %v2528 = vunpack.c.l.b16 %v2492
        %v2529 = vunpack.c.l.b16 %v2493
        %v2530 = vunpack.c.l.b16 %v2494
        %v2531 = vunpack.c.l.b16 %v2495
        %v2532 = vunpack.c.l.b16 %v2496
        %v2533 = vunpack.c.l.b16 %v2497
        %v2534 = vunpack.c.l.b16 %v2498
        %v2535 = vunpack.c.l.b16 %v2499
        %v2536 = vunpack.c.l.b16 %v2500
        %v2537 = vunpack.c.l.b16 %v2501
        %v2538 = vunpack.c.l.b16 %v2502
        %v2539 = vunpack.c.l.b16 %v2503
        %v2540 = vunpack.c.l.b16 %v2504
        %v2541 = vpack.c.b16 %v2506, %v2505
        %v2542 = vpack.c.b16 %v2508, %v2507
        %v2543 = vpack.c.b16 %v2510, %v2509
        %v2544 = vpack.c.b16 %v2512, %v2511
        %v2545 = vpack.c.b16 %v2514, %v2513
        %v2546 = vpack.c.b16 %v2516, %v2515
        %v2547 = vpack.c.b16 %v2518, %v2517
        %v2548 = vpack.c.b16 %v2520, %v2519
        %v2549 = vpack.c.b16 %v2522, %v2521
        %v2550 = vpack.c.b16 %v2524, %v2523
        %v2551 = vpack.c.b16 %v2526, %v2525
        %v2552 = vpack.c.b16 %v2528, %v2527
        %v2553 = vpack.c.b16 %v2530, %v2529
        %v2554 = vpack.c.b16 %v2532, %v2531
        %v2555 = vpack.c.b16 %v2534, %v2533
        %v2556 = vpack.c.b16 %v2536, %v2535
        %v2557 = vpack.c.b16 %v2538, %v2537
        %v2558 = vpack.c.b16 %v2540, %v2539
        %vm2559 = vcmp.ne.s16.totalorder %v2541, 0
        %vm2560 = vcmp.ne.s16.totalorder %v2542, 0
        %vm2561 = vcmp.ne.s16.totalorder %v2543, 0
        %vm2562 = vcmp.ne.s16.totalorder %v2544, 0
        %vm2563 = vcmp.ne.s16.totalorder %v2545, 0
        %vm2564 = vcmp.ne.s16.totalorder %v2546, 0
        %vm2565 = vcmp.ne.s16.totalorder %v2547, 0
        %vm2566 = vcmp.ne.s16.totalorder %v2548, 0
        %vm2567 = vcmp.ne.s16.totalorder %v2549, 0
        %vm2568 = vcmp.ne.s16.totalorder %v2550, 0
        %vm2569 = vcmp.ne.s16.totalorder %v2551, 0
        %vm2570 = vcmp.ne.s16.totalorder %v2552, 0
        %vm2571 = vcmp.ne.s16.totalorder %v2553, 0
        %vm2572 = vcmp.ne.s16.totalorder %v2554, 0
        %vm2573 = vcmp.ne.s16.totalorder %v2555, 0
        %vm2574 = vcmp.ne.s16.totalorder %v2556, 0
        %vm2575 = vcmp.ne.s16.totalorder %v2557, 0
        %vm2576 = vcmp.ne.s16.totalorder %v2558, 0
        %v2577 = vsel %vm2559, 0, %v2254
        %v2578 = vsel %vm2560, 0, %v2257
        %v2579 = vsel %vm2561, 0, %v2260
        %v2580 = vsel %vm2562, 0, %v2263
        %v2581 = vsel %vm2563, 0, %v2266
        %v2582 = vsel %vm2564, 0, %v2269
        %v2583 = vsel %vm2565, 0, %v2272
        %v2584 = vsel %vm2566, 0, %v2275
        %v2585 = vsel %vm2567, 0, %v2278
        %v2586 = vsel %vm2568, 0, %v2281
        %v2587 = vsel %vm2569, 0, %v2284
        %v2588 = vsel %vm2570, 0, %v2287
        %v2589 = vsel %vm2571, 0, %v2290
        %v2590 = vsel %vm2572, 0, %v2293
        %v2591 = vsel %vm2573, 0, %v2296
        %v2592 = vsel %vm2574, 0, %v2299
        %v2593 = vsel %vm2575, 0, %v2302
        %v2594 = vsel %vm2576, 0, %v2324
        %v2595 = vld [vmem:[%s4] sm:$0x3]
        %s2596 = scalar_lea.vmem %s4, 2
        %v2597 = vld [vmem:[%s2596] sm:$0x3]
        %vm2598 = vcmask 31744
        %v2599 = vsel %vm2598, %v1365, 0
        %v2601 = vsel %vm2598, %v1366, 0
        %v2603 = vsel %vm2598, %v1367, 0
        %v2605 = vsel %vm2598, %v1368, 0
        %v2607 = vsel %vm2598, %v1369, 0
        %v2609 = vsel %vm2598, %v1370, 0
        %v2611 = vsel %vm2598, %v1371, 0
        %v2613 = vsel %vm2598, %v1372, 0
        %v2615 = vsel %vm2598, %v1373, 0
        %v2617 = vsel %vm2598, %v1374, 0
        %v2619 = vsel %vm2598, %v1375, 0
        %v2621 = vsel %vm2598, %v1376, 0
        %v2623 = vsel %vm2598, %v1377, 0
        %v2625 = vsel %vm2598, %v1378, 0
        %v2627 = vsel %vm2598, %v1379, 0
        %v2629 = vsel %vm2598, %v1380, 0
        %vm2631 = vcmask 1041408
        %v2633 = vsel %vm2631, %v2597, 0
        %2635 = vmatprep.subr.bf16.mxu0 0
        %2636 = vmatpush1.bf16.msra.mxu0 %v2633
        %2637 = vmatprep.subr.bf16.mxu0 0
        %2638 = vmatpush1.bf16.msra.mxu0 0
        %2639 = vmatprep.subr.bf16.mxu0 0
        %2640 = vmatpush1.bf16.msra.mxu0 0
        %2641 = vmatprep.subr.bf16.mxu0 0
        %2642 = vmatpush1.bf16.msra.mxu0 0
        %2643 = vmatprep.subr.bf16.mxu0 0
        %2644 = vmatpush1.bf16.msra.mxu0 0
        %2645 = vmatprep.subr.bf16.mxu0 0
        %2646 = vmatpush1.bf16.msra.mxu0 0
        %2647 = vmatprep.subr.bf16.mxu0 0
        %2648 = vmatpush1.bf16.msra.mxu0 0
        %2649 = vmatprep.subr.bf16.mxu0 0
        %2650 = vmatpush1.bf16.msra.mxu0 0
        %2651 = vmatprep.subr.bf16.mxu0 0
        %2652 = vmatpush1.bf16.msra.mxu0 0
        %2653 = vmatprep.subr.bf16.mxu0 0
        %2654 = vmatpush1.bf16.msra.mxu0 0
        %2655 = vmatprep.subr.bf16.mxu0 0
        %2656 = vmatpush1.bf16.msra.mxu0 0
        %2657 = vmatprep.subr.bf16.mxu0 0
        %2658 = vmatpush1.bf16.msra.mxu0 0
        %2659 = vmatprep.subr.bf16.mxu0 0
        %2660 = vmatpush1.bf16.msra.mxu0 0
        %2661 = vmatprep.subr.bf16.mxu0 0
        %2662 = vmatpush1.bf16.msra.mxu0 0
        %2663 = vmatprep.subr.bf16.mxu0 0
        %2664 = vmatpush1.bf16.msra.mxu0 0
        %2665 = vmatprep.subr.bf16.mxu0 0
        %2666 = vmatpush1.bf16.msra.mxu0 0
        %2667 = vmatprep.mubr.bf16.mxu0 0
        %2668 = vmatmul.mubr.bf16.gmra.mrb[0].mxu0 %v2599
        %v2669 = vpop.f32.mrb[0].mxu0
        %v2670 = vadd.f32 0.0, %v2669
        %v2671 = vpop.f32.mrb[0].mxu0
        %v2672 = vpop.f32.mrb[0].mxu0
        %v2673 = vadd.f32 0.0, %v2672
        %v2674 = vpop.f32.mrb[0].mxu0
        %2675 = vmatprep.mubr.bf16.mxu0 0
        %2676 = vmatmul.mubr.bf16.gmra.mrb[0].mxu0 %v2601
        %v2677 = vpop.f32.mrb[0].mxu0
        %v2678 = vadd.f32 0.0, %v2677
        %v2679 = vpop.f32.mrb[0].mxu0
        %v2680 = vpop.f32.mrb[0].mxu0
        %v2681 = vadd.f32 0.0, %v2680
        %v2682 = vpop.f32.mrb[0].mxu0
        %2683 = vmatprep.mubr.bf16.mxu0 0
        %2684 = vmatmul.mubr.bf16.gmra.mrb[0].mxu0 %v2603
        %v2685 = vpop.f32.mrb[0].mxu0
        %v2686 = vadd.f32 0.0, %v2685
        %v2687 = vpop.f32.mrb[0].mxu0
        %v2688 = vpop.f32.mrb[0].mxu0
        %v2689 = vadd.f32 0.0, %v2688
        %v2690 = vpop.f32.mrb[0].mxu0
        %2691 = vmatprep.mubr.bf16.mxu0 0
        %2692 = vmatmul.mubr.bf16.gmra.mrb[0].mxu0 %v2605
        %v2693 = vpop.f32.mrb[0].mxu0
        %v2694 = vadd.f32 0.0, %v2693
        %v2695 = vpop.f32.mrb[0].mxu0
        %v2696 = vpop.f32.mrb[0].mxu0
        %v2697 = vadd.f32 0.0, %v2696
        %v2698 = vpop.f32.mrb[0].mxu0
        %2699 = vmatprep.mubr.bf16.mxu0 0
        %2700 = vmatmul.mubr.bf16.gmra.mrb[0].mxu0 %v2607
        %v2701 = vpop.f32.mrb[0].mxu0
        %v2702 = vadd.f32 0.0, %v2701
        %v2703 = vpop.f32.mrb[0].mxu0
        %v2704 = vpop.f32.mrb[0].mxu0
        %v2705 = vadd.f32 0.0, %v2704
        %v2706 = vpop.f32.mrb[0].mxu0
        %2707 = vmatprep.mubr.bf16.mxu0 0
        %2708 = vmatmul.mubr.bf16.gmra.mrb[0].mxu0 %v2609
        %v2709 = vpop.f32.mrb[0].mxu0
        %v2710 = vadd.f32 0.0, %v2709
        %v2711 = vpop.f32.mrb[0].mxu0
        %v2712 = vpop.f32.mrb[0].mxu0
        %v2713 = vadd.f32 0.0, %v2712
        %v2714 = vpop.f32.mrb[0].mxu0
        %2715 = vmatprep.mubr.bf16.mxu0 0
        %2716 = vmatmul.mubr.bf16.gmra.mrb[0].mxu0 %v2611
        %v2717 = vpop.f32.mrb[0].mxu0
        %v2718 = vadd.f32 0.0, %v2717
        %v2719 = vpop.f32.mrb[0].mxu0
        %v2720 = vpop.f32.mrb[0].mxu0
        %v2721 = vadd.f32 0.0, %v2720
        %v2722 = vpop.f32.mrb[0].mxu0
        %2723 = vmatprep.mubr.bf16.mxu0 0
        %2724 = vmatmul.mubr.bf16.gmra.mrb[0].mxu0 %v2613
        %v2725 = vpop.f32.mrb[0].mxu0
        %v2726 = vadd.f32 0.0, %v2725
        %v2727 = vpop.f32.mrb[0].mxu0
        %v2728 = vpop.f32.mrb[0].mxu0
        %v2729 = vadd.f32 0.0, %v2728
        %v2730 = vpop.f32.mrb[0].mxu0
        %2731 = vmatprep.mubr.bf16.mxu0 0
        %2732 = vmatmul.mubr.bf16.gmra.mrb[0].mxu0 %v2615
        %v2733 = vpop.f32.mrb[0].mxu0
        %v2734 = vadd.f32 0.0, %v2733
        %v2735 = vpop.f32.mrb[0].mxu0
        %v2736 = vpop.f32.mrb[0].mxu0
        %v2737 = vadd.f32 0.0, %v2736
        %v2738 = vpop.f32.mrb[0].mxu0
        %2739 = vmatprep.mubr.bf16.mxu0 0
        %2740 = vmatmul.mubr.bf16.gmra.mrb[0].mxu0 %v2617
        %v2741 = vpop.f32.mrb[0].mxu0
        %v2742 = vadd.f32 0.0, %v2741
        %v2743 = vpop.f32.mrb[0].mxu0
        %v2744 = vpop.f32.mrb[0].mxu0
        %v2745 = vadd.f32 0.0, %v2744
        %v2746 = vpop.f32.mrb[0].mxu0
        %2747 = vmatprep.mubr.bf16.mxu0 0
        %2748 = vmatmul.mubr.bf16.gmra.mrb[0].mxu0 %v2619
        %v2749 = vpop.f32.mrb[0].mxu0
        %v2750 = vadd.f32 0.0, %v2749
        %v2751 = vpop.f32.mrb[0].mxu0
        %v2752 = vpop.f32.mrb[0].mxu0
        %v2753 = vadd.f32 0.0, %v2752
        %v2754 = vpop.f32.mrb[0].mxu0
        %2755 = vmatprep.mubr.bf16.mxu0 0
        %2756 = vmatmul.mubr.bf16.gmra.mrb[0].mxu0 %v2621
        %v2757 = vpop.f32.mrb[0].mxu0
        %v2758 = vadd.f32 0.0, %v2757
        %v2759 = vpop.f32.mrb[0].mxu0
        %v2760 = vpop.f32.mrb[0].mxu0
        %v2761 = vadd.f32 0.0, %v2760
        %v2762 = vpop.f32.mrb[0].mxu0
        %2763 = vmatprep.mubr.bf16.mxu0 0
        %2764 = vmatmul.mubr.bf16.gmra.mrb[0].mxu0 %v2623
        %v2765 = vpop.f32.mrb[0].mxu0
        %v2766 = vadd.f32 0.0, %v2765
        %v2767 = vpop.f32.mrb[0].mxu0
        %v2768 = vpop.f32.mrb[0].mxu0
        %v2769 = vadd.f32 0.0, %v2768
        %v2770 = vpop.f32.mrb[0].mxu0
        %2771 = vmatprep.mubr.bf16.mxu0 0
        %2772 = vmatmul.mubr.bf16.gmra.mrb[0].mxu0 %v2625
        %v2773 = vpop.f32.mrb[0].mxu0
        %v2774 = vadd.f32 0.0, %v2773
        %v2775 = vpop.f32.mrb[0].mxu0
        %v2776 = vpop.f32.mrb[0].mxu0
        %v2777 = vadd.f32 0.0, %v2776
        %v2778 = vpop.f32.mrb[0].mxu0
        %2779 = vmatprep.mubr.bf16.mxu0 0
        %2780 = vmatmul.mubr.bf16.gmra.mrb[0].mxu0 %v2627
        %v2781 = vpop.f32.mrb[0].mxu0
        %v2782 = vadd.f32 0.0, %v2781
        %v2783 = vpop.f32.mrb[0].mxu0
        %v2784 = vpop.f32.mrb[0].mxu0
        %v2785 = vadd.f32 0.0, %v2784
        %v2786 = vpop.f32.mrb[0].mxu0
        %2787 = vmatprep.mubr.bf16.mxu0 0
        %2788 = vmatmul.mubr.bf16.gmra.mrb[0].mxu0 %v2629
        %v2789 = vpop.f32.mrb[0].mxu0
        %v2790 = vadd.f32 0.0, %v2789
        %v2791 = vpop.f32.mrb[0].mxu0
        %v2792 = vpop.f32.mrb[0].mxu0
        %v2793 = vadd.f32 0.0, %v2792
        %v2794 = vpop.f32.mrb[0].mxu0
        %2795 = vdwg.mxu0
        %v2797 = vsel %vm2598, %v2232, 0
        %v2800 = vsel %vm2598, %v2233, 0
        %v2803 = vsel %vm2598, %v2234, 0
        %v2806 = vsel %vm2598, %v2235, 0
        %v2809 = vsel %vm2598, %v2236, 0
        %v2812 = vsel %vm2598, %v2237, 0
        %v2815 = vsel %vm2598, %v2238, 0
        %v2818 = vsel %vm2598, %v2239, 0
        %v2821 = vsel %vm2598, %v2240, 0
        %v2824 = vsel %vm2598, %v2241, 0
        %v2827 = vsel %vm2598, %v2242, 0
        %v2830 = vsel %vm2598, %v2243, 0
        %v2833 = vsel %vm2598, %v2244, 0
        %v2836 = vsel %vm2598, %v2245, 0
        %v2839 = vsel %vm2598, %v2246, 0
        %v2842 = vsel %vm2598, %v2247, 0
        %v2845 = vsel %vm2631, %v2595, 0
        %2847 = vmatprep.subr.bf16.mxu0 0
        %2848 = vmatpush1.bf16.msra.mxu0 %v2845
        %2849 = vmatprep.subr.bf16.mxu0 0
        %2850 = vmatpush1.bf16.msra.mxu0 0
        %2851 = vmatprep.subr.bf16.mxu0 0
        %2852 = vmatpush1.bf16.msra.mxu0 0
        %2853 = vmatprep.subr.bf16.mxu0 0
        %2854 = vmatpush1.bf16.msra.mxu0 0
        %2855 = vmatprep.subr.bf16.mxu0 0
        %2856 = vmatpush1.bf16.msra.mxu0 0
        %2857 = vmatprep.subr.bf16.mxu0 0
        %2858 = vmatpush1.bf16.msra.mxu0 0
        %2859 = vmatprep.subr.bf16.mxu0 0
        %2860 = vmatpush1.bf16.msra.mxu0 0
        %2861 = vmatprep.subr.bf16.mxu0 0
        %2862 = vmatpush1.bf16.msra.mxu0 0
        %2863 = vmatprep.subr.bf16.mxu0 0
        %2864 = vmatpush1.bf16.msra.mxu0 0
        %2865 = vmatprep.subr.bf16.mxu0 0
        %2866 = vmatpush1.bf16.msra.mxu0 0
        %2867 = vmatprep.subr.bf16.mxu0 0
        %2868 = vmatpush1.bf16.msra.mxu0 0
        %2869 = vmatprep.subr.bf16.mxu0 0
        %2870 = vmatpush1.bf16.msra.mxu0 0
        %2871 = vmatprep.subr.bf16.mxu0 0
        %2872 = vmatpush1.bf16.msra.mxu0 0
        %2873 = vmatprep.subr.bf16.mxu0 0
        %2874 = vmatpush1.bf16.msra.mxu0 0
        %2875 = vmatprep.subr.bf16.mxu0 0
        %2876 = vmatpush1.bf16.msra.mxu0 0
        %2877 = vmatprep.subr.bf16.mxu0 0
        %2878 = vmatpush1.bf16.msra.mxu0 0
        %2879 = vmatprep.mubr.bf16.mxu0 0
        %2880 = vmatmul.mubr.bf16.gmra.mrb[0].mxu0 %v2797
        %v2881 = vpop.f32.mrb[0].mxu0
        %v2882 = vadd.f32 %v2670, %v2881
        %v2883 = vpop.f32.mrb[0].mxu0
        %v2884 = vpop.f32.mrb[0].mxu0
        %v2885 = vadd.f32 %v2673, %v2884
        %v2886 = vpop.f32.mrb[0].mxu0
        %2887 = vmatprep.mubr.bf16.mxu0 0
        %2888 = vmatmul.mubr.bf16.gmra.mrb[0].mxu0 %v2800
        %v2889 = vpop.f32.mrb[0].mxu0
        %v2890 = vadd.f32 %v2678, %v2889
        %v2891 = vpop.f32.mrb[0].mxu0
        %v2892 = vpop.f32.mrb[0].mxu0
        %v2893 = vadd.f32 %v2681, %v2892
        %v2894 = vpop.f32.mrb[0].mxu0
        %2895 = vmatprep.mubr.bf16.mxu0 0
        %2896 = vmatmul.mubr.bf16.gmra.mrb[0].mxu0 %v2803
        %v2897 = vpop.f32.mrb[0].mxu0
        %v2898 = vadd.f32 %v2686, %v2897
        %v2899 = vpop.f32.mrb[0].mxu0
        %v2900 = vpop.f32.mrb[0].mxu0
        %v2901 = vadd.f32 %v2689, %v2900
        %v2902 = vpop.f32.mrb[0].mxu0
        %2903 = vmatprep.mubr.bf16.mxu0 0
        %2904 = vmatmul.mubr.bf16.gmra.mrb[0].mxu0 %v2806
        %v2905 = vpop.f32.mrb[0].mxu0
        %v2906 = vadd.f32 %v2694, %v2905
        %v2907 = vpop.f32.mrb[0].mxu0
        %v2908 = vpop.f32.mrb[0].mxu0
        %v2909 = vadd.f32 %v2697, %v2908
        %v2910 = vpop.f32.mrb[0].mxu0
        %2911 = vmatprep.mubr.bf16.mxu0 0
        %2912 = vmatmul.mubr.bf16.gmra.mrb[0].mxu0 %v2809
        %v2913 = vpop.f32.mrb[0].mxu0
        %v2914 = vadd.f32 %v2702, %v2913
        %v2915 = vpop.f32.mrb[0].mxu0
        %v2916 = vpop.f32.mrb[0].mxu0
        %v2917 = vadd.f32 %v2705, %v2916
        %v2918 = vpop.f32.mrb[0].mxu0
        %2919 = vmatprep.mubr.bf16.mxu0 0
        %2920 = vmatmul.mubr.bf16.gmra.mrb[0].mxu0 %v2812
        %v2921 = vpop.f32.mrb[0].mxu0
        %v2922 = vadd.f32 %v2710, %v2921
        %v2923 = vpop.f32.mrb[0].mxu0
        %v2924 = vpop.f32.mrb[0].mxu0
        %v2925 = vadd.f32 %v2713, %v2924
        %v2926 = vpop.f32.mrb[0].mxu0
        %2927 = vmatprep.mubr.bf16.mxu0 0
        %2928 = vmatmul.mubr.bf16.gmra.mrb[0].mxu0 %v2815
        %v2929 = vpop.f32.mrb[0].mxu0
        %v2930 = vadd.f32 %v2718, %v2929
        %v2931 = vpop.f32.mrb[0].mxu0
        %v2932 = vpop.f32.mrb[0].mxu0
        %v2933 = vadd.f32 %v2721, %v2932
        %v2934 = vpop.f32.mrb[0].mxu0
        %2935 = vmatprep.mubr.bf16.mxu0 0
        %2936 = vmatmul.mubr.bf16.gmra.mrb[0].mxu0 %v2818
        %v2937 = vpop.f32.mrb[0].mxu0
        %v2938 = vadd.f32 %v2726, %v2937
        %v2939 = vpop.f32.mrb[0].mxu0
        %v2940 = vpop.f32.mrb[0].mxu0
        %v2941 = vadd.f32 %v2729, %v2940
        %v2942 = vpop.f32.mrb[0].mxu0
        %2943 = vmatprep.mubr.bf16.mxu0 0
        %2944 = vmatmul.mubr.bf16.gmra.mrb[0].mxu0 %v2821
        %v2945 = vpop.f32.mrb[0].mxu0
        %v2946 = vadd.f32 %v2734, %v2945
        %v2947 = vpop.f32.mrb[0].mxu0
        %v2948 = vpop.f32.mrb[0].mxu0
        %v2949 = vadd.f32 %v2737, %v2948
        %v2950 = vpop.f32.mrb[0].mxu0
        %2951 = vmatprep.mubr.bf16.mxu0 0
        %2952 = vmatmul.mubr.bf16.gmra.mrb[0].mxu0 %v2824
        %v2953 = vpop.f32.mrb[0].mxu0
        %v2954 = vadd.f32 %v2742, %v2953
        %v2955 = vpop.f32.mrb[0].mxu0
        %v2956 = vpop.f32.mrb[0].mxu0
        %v2957 = vadd.f32 %v2745, %v2956
        %v2958 = vpop.f32.mrb[0].mxu0
        %2959 = vmatprep.mubr.bf16.mxu0 0
        %2960 = vmatmul.mubr.bf16.gmra.mrb[0].mxu0 %v2827
        %v2961 = vpop.f32.mrb[0].mxu0
        %v2962 = vadd.f32 %v2750, %v2961
        %v2963 = vpop.f32.mrb[0].mxu0
        %v2964 = vpop.f32.mrb[0].mxu0
        %v2965 = vadd.f32 %v2753, %v2964
        %v2966 = vpop.f32.mrb[0].mxu0
        %2967 = vmatprep.mubr.bf16.mxu0 0
        %2968 = vmatmul.mubr.bf16.gmra.mrb[0].mxu0 %v2830
        %v2969 = vpop.f32.mrb[0].mxu0
        %v2970 = vadd.f32 %v2758, %v2969
        %v2971 = vpop.f32.mrb[0].mxu0
        %v2972 = vpop.f32.mrb[0].mxu0
        %v2973 = vadd.f32 %v2761, %v2972
        %v2974 = vpop.f32.mrb[0].mxu0
        %2975 = vmatprep.mubr.bf16.mxu0 0
        %2976 = vmatmul.mubr.bf16.gmra.mrb[0].mxu0 %v2833
        %v2977 = vpop.f32.mrb[0].mxu0
        %v2978 = vadd.f32 %v2766, %v2977
        %v2979 = vpop.f32.mrb[0].mxu0
        %v2980 = vpop.f32.mrb[0].mxu0
        %v2981 = vadd.f32 %v2769, %v2980
        %v2982 = vpop.f32.mrb[0].mxu0
        %2983 = vmatprep.mubr.bf16.mxu0 0
        %2984 = vmatmul.mubr.bf16.gmra.mrb[0].mxu0 %v2836
        %v2985 = vpop.f32.mrb[0].mxu0
        %v2986 = vadd.f32 %v2774, %v2985
        %v2987 = vpop.f32.mrb[0].mxu0
        %v2988 = vpop.f32.mrb[0].mxu0
        %v2989 = vadd.f32 %v2777, %v2988
        %v2990 = vpop.f32.mrb[0].mxu0
        %2991 = vmatprep.mubr.bf16.mxu0 0
        %2992 = vmatmul.mubr.bf16.gmra.mrb[0].mxu0 %v2839
        %v2993 = vpop.f32.mrb[0].mxu0
        %v2994 = vadd.f32 %v2782, %v2993
        %v2995 = vpop.f32.mrb[0].mxu0
        %v2996 = vpop.f32.mrb[0].mxu0
        %v2997 = vadd.f32 %v2785, %v2996
        %v2998 = vpop.f32.mrb[0].mxu0
        %2999 = vmatprep.mubr.bf16.mxu0 0
        %3000 = vmatmul.mubr.bf16.gmra.mrb[0].mxu0 %v2842
        %v3001 = vpop.f32.mrb[0].mxu0
        %v3002 = vadd.f32 %v2790, %v3001
        %v3003 = vpop.f32.mrb[0].mxu0
        %v3004 = vpop.f32.mrb[0].mxu0
        %v3005 = vadd.f32 %v2793, %v3004
        %v3006 = vpop.f32.mrb[0].mxu0
        %3007 = vdwg.mxu0
        %s3008 = scalar_lea.vmem %s4, 4
        %v3009 = vld [vmem:[%s3008] sm:$0x3]
        %v3011 = vsel %vm2598, %v2577, 0
        %v3014 = vsel %vm2598, %v2578, 0
        %v3017 = vsel %vm2598, %v2579, 0
        %v3020 = vsel %vm2598, %v2580, 0
        %v3023 = vsel %vm2598, %v2581, 0
        %v3026 = vsel %vm2598, %v2582, 0
        %v3029 = vsel %vm2598, %v2583, 0
        %v3032 = vsel %vm2598, %v2584, 0
        %v3035 = vsel %vm2598, %v2585, 0
        %v3038 = vsel %vm2598, %v2586, 0
        %v3041 = vsel %vm2598, %v2587, 0
        %v3044 = vsel %vm2598, %v2588, 0
        %v3047 = vsel %vm2598, %v2589, 0
        %v3050 = vsel %vm2598, %v2590, 0
        %v3053 = vsel %vm2598, %v2591, 0
        %v3056 = vsel %vm2598, %v2592, 0
        %v3059 = vsel %vm2631, %v3009, 0
        %3061 = vmatprep.subr.bf16.mxu0 0
        %3062 = vmatpush1.bf16.msra.mxu0 %v3059
        %3063 = vmatprep.subr.bf16.mxu0 0
        %3064 = vmatpush1.bf16.msra.mxu0 0
        %3065 = vmatprep.subr.bf16.mxu0 0
        %3066 = vmatpush1.bf16.msra.mxu0 0
        %3067 = vmatprep.subr.bf16.mxu0 0
        %3068 = vmatpush1.bf16.msra.mxu0 0
        %3069 = vmatprep.subr.bf16.mxu0 0
        %3070 = vmatpush1.bf16.msra.mxu0 0
        %3071 = vmatprep.subr.bf16.mxu0 0
        %3072 = vmatpush1.bf16.msra.mxu0 0
        %3073 = vmatprep.subr.bf16.mxu0 0
        %3074 = vmatpush1.bf16.msra.mxu0 0
        %3075 = vmatprep.subr.bf16.mxu0 0
        %3076 = vmatpush1.bf16.msra.mxu0 0
        %3077 = vmatprep.subr.bf16.mxu0 0
        %3078 = vmatpush1.bf16.msra.mxu0 0
        %3079 = vmatprep.subr.bf16.mxu0 0
        %3080 = vmatpush1.bf16.msra.mxu0 0
        %3081 = vmatprep.subr.bf16.mxu0 0
        %3082 = vmatpush1.bf16.msra.mxu0 0
        %3083 = vmatprep.subr.bf16.mxu0 0
        %3084 = vmatpush1.bf16.msra.mxu0 0
        %3085 = vmatprep.subr.bf16.mxu0 0
        %3086 = vmatpush1.bf16.msra.mxu0 0
        %3087 = vmatprep.subr.bf16.mxu0 0
        %3088 = vmatpush1.bf16.msra.mxu0 0
        %3089 = vmatprep.subr.bf16.mxu0 0
        %3090 = vmatpush1.bf16.msra.mxu0 0
        %3091 = vmatprep.subr.bf16.mxu0 0
        %3092 = vmatpush1.bf16.msra.mxu0 0
        %3093 = vmatprep.mubr.bf16.mxu0 0
        %3094 = vmatmul.mubr.bf16.gmra.mrb[0].mxu0 %v3011
        %v3095 = vpop.f32.mrb[0].mxu0
        %v3096 = vadd.f32 0.0, %v3095
        %v3097 = vpop.f32.mrb[0].mxu0
        %v3098 = vpop.f32.mrb[0].mxu0
        %v3099 = vadd.f32 0.0, %v3098
        %v3100 = vpop.f32.mrb[0].mxu0
        %3101 = vmatprep.mubr.bf16.mxu0 0
        %3102 = vmatmul.mubr.bf16.gmra.mrb[0].mxu0 %v3014
        %v3103 = vpop.f32.mrb[0].mxu0
        %v3104 = vadd.f32 0.0, %v3103
        %v3105 = vpop.f32.mrb[0].mxu0
        %v3106 = vpop.f32.mrb[0].mxu0
        %v3107 = vadd.f32 0.0, %v3106
        %v3108 = vpop.f32.mrb[0].mxu0
        %3109 = vmatprep.mubr.bf16.mxu0 0
        %3110 = vmatmul.mubr.bf16.gmra.mrb[0].mxu0 %v3017
        %v3111 = vpop.f32.mrb[0].mxu0
        %v3112 = vadd.f32 0.0, %v3111
        %v3113 = vpop.f32.mrb[0].mxu0
        %v3114 = vpop.f32.mrb[0].mxu0
        %v3115 = vadd.f32 0.0, %v3114
        %v3116 = vpop.f32.mrb[0].mxu0
        %3117 = vmatprep.mubr.bf16.mxu0 0
        %3118 = vmatmul.mubr.bf16.gmra.mrb[0].mxu0 %v3020
        %v3119 = vpop.f32.mrb[0].mxu0
        %v3120 = vadd.f32 0.0, %v3119
        %v3121 = vpop.f32.mrb[0].mxu0
        %v3122 = vpop.f32.mrb[0].mxu0
        %v3123 = vadd.f32 0.0, %v3122
        %v3124 = vpop.f32.mrb[0].mxu0
        %3125 = vmatprep.mubr.bf16.mxu0 0
        %3126 = vmatmul.mubr.bf16.gmra.mrb[0].mxu0 %v3023
        %v3127 = vpop.f32.mrb[0].mxu0
        %v3128 = vadd.f32 0.0, %v3127
        %v3129 = vpop.f32.mrb[0].mxu0
        %v3130 = vpop.f32.mrb[0].mxu0
        %v3131 = vadd.f32 0.0, %v3130
        %v3132 = vpop.f32.mrb[0].mxu0
        %3133 = vmatprep.mubr.bf16.mxu0 0
        %3134 = vmatmul.mubr.bf16.gmra.mrb[0].mxu0 %v3026
        %v3135 = vpop.f32.mrb[0].mxu0
        %v3136 = vadd.f32 0.0, %v3135
        %v3137 = vpop.f32.mrb[0].mxu0
        %v3138 = vpop.f32.mrb[0].mxu0
        %v3139 = vadd.f32 0.0, %v3138
        %v3140 = vpop.f32.mrb[0].mxu0
        %3141 = vmatprep.mubr.bf16.mxu0 0
        %3142 = vmatmul.mubr.bf16.gmra.mrb[0].mxu0 %v3029
        %v3143 = vpop.f32.mrb[0].mxu0
        %v3144 = vadd.f32 0.0, %v3143
        %v3145 = vpop.f32.mrb[0].mxu0
        %v3146 = vpop.f32.mrb[0].mxu0
        %v3147 = vadd.f32 0.0, %v3146
        %v3148 = vpop.f32.mrb[0].mxu0
        %3149 = vmatprep.mubr.bf16.mxu0 0
        %3150 = vmatmul.mubr.bf16.gmra.mrb[0].mxu0 %v3032
        %v3151 = vpop.f32.mrb[0].mxu0
        %v3152 = vadd.f32 0.0, %v3151
        %v3153 = vpop.f32.mrb[0].mxu0
        %v3154 = vpop.f32.mrb[0].mxu0
        %v3155 = vadd.f32 0.0, %v3154
        %v3156 = vpop.f32.mrb[0].mxu0
        %3157 = vmatprep.mubr.bf16.mxu0 0
        %3158 = vmatmul.mubr.bf16.gmra.mrb[0].mxu0 %v3035
        %v3159 = vpop.f32.mrb[0].mxu0
        %v3160 = vadd.f32 0.0, %v3159
        %v3161 = vpop.f32.mrb[0].mxu0
        %v3162 = vpop.f32.mrb[0].mxu0
        %v3163 = vadd.f32 0.0, %v3162
        %v3164 = vpop.f32.mrb[0].mxu0
        %3165 = vmatprep.mubr.bf16.mxu0 0
        %3166 = vmatmul.mubr.bf16.gmra.mrb[0].mxu0 %v3038
        %v3167 = vpop.f32.mrb[0].mxu0
        %v3168 = vadd.f32 0.0, %v3167
        %v3169 = vpop.f32.mrb[0].mxu0
        %v3170 = vpop.f32.mrb[0].mxu0
        %v3171 = vadd.f32 0.0, %v3170
        %v3172 = vpop.f32.mrb[0].mxu0
        %3173 = vmatprep.mubr.bf16.mxu0 0
        %3174 = vmatmul.mubr.bf16.gmra.mrb[0].mxu0 %v3041
        %v3175 = vpop.f32.mrb[0].mxu0
        %v3176 = vadd.f32 0.0, %v3175
        %v3177 = vpop.f32.mrb[0].mxu0
        %v3178 = vpop.f32.mrb[0].mxu0
        %v3179 = vadd.f32 0.0, %v3178
        %v3180 = vpop.f32.mrb[0].mxu0
        %3181 = vmatprep.mubr.bf16.mxu0 0
        %3182 = vmatmul.mubr.bf16.gmra.mrb[0].mxu0 %v3044
        %v3183 = vpop.f32.mrb[0].mxu0
        %v3184 = vadd.f32 0.0, %v3183
        %v3185 = vpop.f32.mrb[0].mxu0
        %v3186 = vpop.f32.mrb[0].mxu0
        %v3187 = vadd.f32 0.0, %v3186
        %v3188 = vpop.f32.mrb[0].mxu0
        %3189 = vmatprep.mubr.bf16.mxu0 0
        %3190 = vmatmul.mubr.bf16.gmra.mrb[0].mxu0 %v3047
        %v3191 = vpop.f32.mrb[0].mxu0
        %v3192 = vadd.f32 0.0, %v3191
        %v3193 = vpop.f32.mrb[0].mxu0
        %v3194 = vpop.f32.mrb[0].mxu0
        %v3195 = vadd.f32 0.0, %v3194
        %v3196 = vpop.f32.mrb[0].mxu0
        %3197 = vmatprep.mubr.bf16.mxu0 0
        %3198 = vmatmul.mubr.bf16.gmra.mrb[0].mxu0 %v3050
        %v3199 = vpop.f32.mrb[0].mxu0
        %v3200 = vadd.f32 0.0, %v3199
        %v3201 = vpop.f32.mrb[0].mxu0
        %v3202 = vpop.f32.mrb[0].mxu0
        %v3203 = vadd.f32 0.0, %v3202
        %v3204 = vpop.f32.mrb[0].mxu0
        %3205 = vmatprep.mubr.bf16.mxu0 0
        %3206 = vmatmul.mubr.bf16.gmra.mrb[0].mxu0 %v3053
        %v3207 = vpop.f32.mrb[0].mxu0
        %v3208 = vadd.f32 0.0, %v3207
        %v3209 = vpop.f32.mrb[0].mxu0
        %v3210 = vpop.f32.mrb[0].mxu0
        %v3211 = vadd.f32 0.0, %v3210
        %v3212 = vpop.f32.mrb[0].mxu0
        %3213 = vmatprep.mubr.bf16.mxu0 0
        %3214 = vmatmul.mubr.bf16.gmra.mrb[0].mxu0 %v3056
        %v3215 = vpop.f32.mrb[0].mxu0
        %v3216 = vadd.f32 0.0, %v3215
        %v3217 = vpop.f32.mrb[0].mxu0
        %v3218 = vpop.f32.mrb[0].mxu0
        %v3219 = vadd.f32 0.0, %v3218
        %v3220 = vpop.f32.mrb[0].mxu0
        %3221 = vdwg.mxu0
        %v3222 = vadd.f32 %v2882, %v3096
        %v3223 = vadd.f32 %v2885, %v3099
        %v3224 = vadd.f32 %v2890, %v3104
        %v3225 = vadd.f32 %v2893, %v3107
        %v3226 = vadd.f32 %v2898, %v3112
        %v3227 = vadd.f32 %v2901, %v3115
        %v3228 = vadd.f32 %v2906, %v3120
        %v3229 = vadd.f32 %v2909, %v3123
        %v3230 = vadd.f32 %v2914, %v3128
        %v3231 = vadd.f32 %v2917, %v3131
        %v3232 = vadd.f32 %v2922, %v3136
        %v3233 = vadd.f32 %v2925, %v3139
        %v3234 = vadd.f32 %v2930, %v3144
        %v3235 = vadd.f32 %v2933, %v3147
        %v3236 = vadd.f32 %v2938, %v3152
        %v3237 = vadd.f32 %v2941, %v3155
        %v3238 = vadd.f32 %v2946, %v3160
        %v3239 = vadd.f32 %v2949, %v3163
        %v3240 = vadd.f32 %v2954, %v3168
        %v3241 = vadd.f32 %v2957, %v3171
        %v3242 = vadd.f32 %v2962, %v3176
        %v3243 = vadd.f32 %v2965, %v3179
        %v3244 = vadd.f32 %v2970, %v3184
        %v3245 = vadd.f32 %v2973, %v3187
        %v3246 = vadd.f32 %v2978, %v3192
        %v3247 = vadd.f32 %v2981, %v3195
        %v3248 = vadd.f32 %v2986, %v3200
        %v3249 = vadd.f32 %v2989, %v3203
        %v3250 = vadd.f32 %v2994, %v3208
        %v3251 = vadd.f32 %v2997, %v3211
        %v3252 = vadd.f32 %v3002, %v3216
        %v3253 = vadd.f32 %v3005, %v3219
        %s3254 = scalar_lea.vmem %s4, 6
        %v3255 = vld [vmem:[%s3254] sm:$0x3]
        %v3257 = vsel %vm2598, %v2248, 0
        %v3260 = vsel %vm2631, %v3255, 0
        %3262 = vmatprep.subr.bf16.mxu0 0
        %3263 = vmatpush1.bf16.msra.mxu0 %v3260
        %3264 = vmatprep.subr.bf16.mxu0 0
        %3265 = vmatpush1.bf16.msra.mxu0 0
        %3266 = vmatprep.subr.bf16.mxu0 0
        %3267 = vmatpush1.bf16.msra.mxu0 0
        %3268 = vmatprep.subr.bf16.mxu0 0
        %3269 = vmatpush1.bf16.msra.mxu0 0
        %3270 = vmatprep.subr.bf16.mxu0 0
        %3271 = vmatpush1.bf16.msra.mxu0 0
        %3272 = vmatprep.subr.bf16.mxu0 0
        %3273 = vmatpush1.bf16.msra.mxu0 0
        %3274 = vmatprep.subr.bf16.mxu0 0
        %3275 = vmatpush1.bf16.msra.mxu0 0
        %3276 = vmatprep.subr.bf16.mxu0 0
        %3277 = vmatpush1.bf16.msra.mxu0 0
        %3278 = vmatprep.subr.bf16.mxu0 0
        %3279 = vmatpush1.bf16.msra.mxu0 0
        %3280 = vmatprep.subr.bf16.mxu0 0
        %3281 = vmatpush1.bf16.msra.mxu0 0
        %3282 = vmatprep.subr.bf16.mxu0 0
        %3283 = vmatpush1.bf16.msra.mxu0 0
        %3284 = vmatprep.subr.bf16.mxu0 0
        %3285 = vmatpush1.bf16.msra.mxu0 0
        %3286 = vmatprep.subr.bf16.mxu0 0
        %3287 = vmatpush1.bf16.msra.mxu0 0
        %3288 = vmatprep.subr.bf16.mxu0 0
        %3289 = vmatpush1.bf16.msra.mxu0 0
        %3290 = vmatprep.subr.bf16.mxu0 0
        %3291 = vmatpush1.bf16.msra.mxu0 0
        %3292 = vmatprep.subr.bf16.mxu0 0
        %3293 = vmatpush1.bf16.msra.mxu0 0
        %3294 = vmatprep.mubr.bf16.mxu0 0
        %3295 = vmatmul.mubr.bf16.gmra.mrb[0].mxu0 %v2800
        %v3296 = vpop.f32.mrb[0].mxu0
        %v3297 = vadd.f32 0.0, %v3296
        %v3298 = vpop.f32.mrb[0].mxu0
        %v3299 = vpop.f32.mrb[0].mxu0
        %v3300 = vadd.f32 0.0, %v3299
        %v3301 = vpop.f32.mrb[0].mxu0
        %3302 = vmatprep.mubr.bf16.mxu0 0
        %3303 = vmatmul.mubr.bf16.gmra.mrb[0].mxu0 %v2803
        %v3304 = vpop.f32.mrb[0].mxu0
        %v3305 = vadd.f32 0.0, %v3304
        %v3306 = vpop.f32.mrb[0].mxu0
        %v3307 = vpop.f32.mrb[0].mxu0
        %v3308 = vadd.f32 0.0, %v3307
        %v3309 = vpop.f32.mrb[0].mxu0
        %3310 = vmatprep.mubr.bf16.mxu0 0
        %3311 = vmatmul.mubr.bf16.gmra.mrb[0].mxu0 %v2806
        %v3312 = vpop.f32.mrb[0].mxu0
        %v3313 = vadd.f32 0.0, %v3312
        %v3314 = vpop.f32.mrb[0].mxu0
        %v3315 = vpop.f32.mrb[0].mxu0
        %v3316 = vadd.f32 0.0, %v3315
        %v3317 = vpop.f32.mrb[0].mxu0
        %3318 = vmatprep.mubr.bf16.mxu0 0
        %3319 = vmatmul.mubr.bf16.gmra.mrb[0].mxu0 %v2809
        %v3320 = vpop.f32.mrb[0].mxu0
        %v3321 = vadd.f32 0.0, %v3320
        %v3322 = vpop.f32.mrb[0].mxu0
        %v3323 = vpop.f32.mrb[0].mxu0
        %v3324 = vadd.f32 0.0, %v3323
        %v3325 = vpop.f32.mrb[0].mxu0
        %3326 = vmatprep.mubr.bf16.mxu0 0
        %3327 = vmatmul.mubr.bf16.gmra.mrb[0].mxu0 %v2812
        %v3328 = vpop.f32.mrb[0].mxu0
        %v3329 = vadd.f32 0.0, %v3328
        %v3330 = vpop.f32.mrb[0].mxu0
        %v3331 = vpop.f32.mrb[0].mxu0
        %v3332 = vadd.f32 0.0, %v3331
        %v3333 = vpop.f32.mrb[0].mxu0
        %3334 = vmatprep.mubr.bf16.mxu0 0
        %3335 = vmatmul.mubr.bf16.gmra.mrb[0].mxu0 %v2815
        %v3336 = vpop.f32.mrb[0].mxu0
        %v3337 = vadd.f32 0.0, %v3336
        %v3338 = vpop.f32.mrb[0].mxu0
        %v3339 = vpop.f32.mrb[0].mxu0
        %v3340 = vadd.f32 0.0, %v3339
        %v3341 = vpop.f32.mrb[0].mxu0
        %3342 = vmatprep.mubr.bf16.mxu0 0
        %3343 = vmatmul.mubr.bf16.gmra.mrb[0].mxu0 %v2818
        %v3344 = vpop.f32.mrb[0].mxu0
        %v3345 = vadd.f32 0.0, %v3344
        %v3346 = vpop.f32.mrb[0].mxu0
        %v3347 = vpop.f32.mrb[0].mxu0
        %v3348 = vadd.f32 0.0, %v3347
        %v3349 = vpop.f32.mrb[0].mxu0
        %3350 = vmatprep.mubr.bf16.mxu0 0
        %3351 = vmatmul.mubr.bf16.gmra.mrb[0].mxu0 %v2821
        %v3352 = vpop.f32.mrb[0].mxu0
        %v3353 = vadd.f32 0.0, %v3352
        %v3354 = vpop.f32.mrb[0].mxu0
        %v3355 = vpop.f32.mrb[0].mxu0
        %v3356 = vadd.f32 0.0, %v3355
        %v3357 = vpop.f32.mrb[0].mxu0
        %3358 = vmatprep.mubr.bf16.mxu0 0
        %3359 = vmatmul.mubr.bf16.gmra.mrb[0].mxu0 %v2824
        %v3360 = vpop.f32.mrb[0].mxu0
        %v3361 = vadd.f32 0.0, %v3360
        %v3362 = vpop.f32.mrb[0].mxu0
        %v3363 = vpop.f32.mrb[0].mxu0
        %v3364 = vadd.f32 0.0, %v3363
        %v3365 = vpop.f32.mrb[0].mxu0
        %3366 = vmatprep.mubr.bf16.mxu0 0
        %3367 = vmatmul.mubr.bf16.gmra.mrb[0].mxu0 %v2827
        %v3368 = vpop.f32.mrb[0].mxu0
        %v3369 = vadd.f32 0.0, %v3368
        %v3370 = vpop.f32.mrb[0].mxu0
        %v3371 = vpop.f32.mrb[0].mxu0
        %v3372 = vadd.f32 0.0, %v3371
        %v3373 = vpop.f32.mrb[0].mxu0
        %3374 = vmatprep.mubr.bf16.mxu0 0
        %3375 = vmatmul.mubr.bf16.gmra.mrb[0].mxu0 %v2830
        %v3376 = vpop.f32.mrb[0].mxu0
        %v3377 = vadd.f32 0.0, %v3376
        %v3378 = vpop.f32.mrb[0].mxu0
        %v3379 = vpop.f32.mrb[0].mxu0
        %v3380 = vadd.f32 0.0, %v3379
        %v3381 = vpop.f32.mrb[0].mxu0
        %3382 = vmatprep.mubr.bf16.mxu0 0
        %3383 = vmatmul.mubr.bf16.gmra.mrb[0].mxu0 %v2833
        %v3384 = vpop.f32.mrb[0].mxu0
        %v3385 = vadd.f32 0.0, %v3384
        %v3386 = vpop.f32.mrb[0].mxu0
        %v3387 = vpop.f32.mrb[0].mxu0
        %v3388 = vadd.f32 0.0, %v3387
        %v3389 = vpop.f32.mrb[0].mxu0
        %3390 = vmatprep.mubr.bf16.mxu0 0
        %3391 = vmatmul.mubr.bf16.gmra.mrb[0].mxu0 %v2836
        %v3392 = vpop.f32.mrb[0].mxu0
        %v3393 = vadd.f32 0.0, %v3392
        %v3394 = vpop.f32.mrb[0].mxu0
        %v3395 = vpop.f32.mrb[0].mxu0
        %v3396 = vadd.f32 0.0, %v3395
        %v3397 = vpop.f32.mrb[0].mxu0
        %3398 = vmatprep.mubr.bf16.mxu0 0
        %3399 = vmatmul.mubr.bf16.gmra.mrb[0].mxu0 %v2839
        %v3400 = vpop.f32.mrb[0].mxu0
        %v3401 = vadd.f32 0.0, %v3400
        %v3402 = vpop.f32.mrb[0].mxu0
        %v3403 = vpop.f32.mrb[0].mxu0
        %v3404 = vadd.f32 0.0, %v3403
        %v3405 = vpop.f32.mrb[0].mxu0
        %3406 = vmatprep.mubr.bf16.mxu0 0
        %3407 = vmatmul.mubr.bf16.gmra.mrb[0].mxu0 %v2842
        %v3408 = vpop.f32.mrb[0].mxu0
        %v3409 = vadd.f32 0.0, %v3408
        %v3410 = vpop.f32.mrb[0].mxu0
        %v3411 = vpop.f32.mrb[0].mxu0
        %v3412 = vadd.f32 0.0, %v3411
        %v3413 = vpop.f32.mrb[0].mxu0
        %3414 = vmatprep.mubr.bf16.mxu0 0
        %3415 = vmatmul.mubr.bf16.gmra.mrb[0].mxu0 %v3257
        %v3416 = vpop.f32.mrb[0].mxu0
        %v3417 = vadd.f32 0.0, %v3416
        %v3418 = vpop.f32.mrb[0].mxu0
        %v3419 = vpop.f32.mrb[0].mxu0
        %v3420 = vadd.f32 0.0, %v3419
        %v3421 = vpop.f32.mrb[0].mxu0
        %3422 = vdwg.mxu0
        %v3423 = vadd.f32 %v3222, %v3297
        %v3424 = vadd.f32 %v3223, %v3300
        %v3425 = vadd.f32 %v3224, %v3305
        %v3426 = vadd.f32 %v3225, %v3308
        %v3427 = vadd.f32 %v3226, %v3313
        %v3428 = vadd.f32 %v3227, %v3316
        %v3429 = vadd.f32 %v3228, %v3321
        %v3430 = vadd.f32 %v3229, %v3324
        %v3431 = vadd.f32 %v3230, %v3329
        %v3432 = vadd.f32 %v3231, %v3332
        %v3433 = vadd.f32 %v3232, %v3337
        %v3434 = vadd.f32 %v3233, %v3340
        %v3435 = vadd.f32 %v3234, %v3345
        %v3436 = vadd.f32 %v3235, %v3348
        %v3437 = vadd.f32 %v3236, %v3353
        %v3438 = vadd.f32 %v3237, %v3356
        %v3439 = vadd.f32 %v3238, %v3361
        %v3440 = vadd.f32 %v3239, %v3364
        %v3441 = vadd.f32 %v3240, %v3369
        %v3442 = vadd.f32 %v3241, %v3372
        %v3443 = vadd.f32 %v3242, %v3377
        %v3444 = vadd.f32 %v3243, %v3380
        %v3445 = vadd.f32 %v3244, %v3385
        %v3446 = vadd.f32 %v3245, %v3388
        %v3447 = vadd.f32 %v3246, %v3393
        %v3448 = vadd.f32 %v3247, %v3396
        %v3449 = vadd.f32 %v3248, %v3401
        %v3450 = vadd.f32 %v3249, %v3404
        %v3451 = vadd.f32 %v3250, %v3409
        %v3452 = vadd.f32 %v3251, %v3412
        %v3453 = vadd.f32 %v3252, %v3417
        %v3454 = vadd.f32 %v3253, %v3420
        %s3455 = scalar_lea.vmem %s4, 8
        %v3456 = vld [vmem:[%s3455] sm:$0x3]
        %v3457 = vsel %vm2598, %v1381, 0
        %v3460 = vsel %vm2631, %v3456, 0
        %3462 = vmatprep.subr.bf16.mxu0 0
        %3463 = vmatpush1.bf16.msra.mxu0 %v3460
        %3464 = vmatprep.subr.bf16.mxu0 0
        %3465 = vmatpush1.bf16.msra.mxu0 0
        %3466 = vmatprep.subr.bf16.mxu0 0
        %3467 = vmatpush1.bf16.msra.mxu0 0
        %3468 = vmatprep.subr.bf16.mxu0 0
        %3469 = vmatpush1.bf16.msra.mxu0 0
        %3470 = vmatprep.subr.bf16.mxu0 0
        %3471 = vmatpush1.bf16.msra.mxu0 0
        %3472 = vmatprep.subr.bf16.mxu0 0
        %3473 = vmatpush1.bf16.msra.mxu0 0
        %3474 = vmatprep.subr.bf16.mxu0 0
        %3475 = vmatpush1.bf16.msra.mxu0 0
        %3476 = vmatprep.subr.bf16.mxu0 0
        %3477 = vmatpush1.bf16.msra.mxu0 0
        %3478 = vmatprep.subr.bf16.mxu0 0
        %3479 = vmatpush1.bf16.msra.mxu0 0
        %3480 = vmatprep.subr.bf16.mxu0 0
        %3481 = vmatpush1.bf16.msra.mxu0 0
        %3482 = vmatprep.subr.bf16.mxu0 0
        %3483 = vmatpush1.bf16.msra.mxu0 0
        %3484 = vmatprep.subr.bf16.mxu0 0
        %3485 = vmatpush1.bf16.msra.mxu0 0
        %3486 = vmatprep.subr.bf16.mxu0 0
        %3487 = vmatpush1.bf16.msra.mxu0 0
        %3488 = vmatprep.subr.bf16.mxu0 0
        %3489 = vmatpush1.bf16.msra.mxu0 0
        %3490 = vmatprep.subr.bf16.mxu0 0
        %3491 = vmatpush1.bf16.msra.mxu0 0
        %3492 = vmatprep.subr.bf16.mxu0 0
        %3493 = vmatpush1.bf16.msra.mxu0 0
        %3494 = vmatprep.mubr.bf16.mxu0 0
        %3495 = vmatmul.mubr.bf16.gmra.mrb[0].mxu0 %v2601
        %v3496 = vpop.f32.mrb[0].mxu0
        %v3497 = vadd.f32 0.0, %v3496
        %v3498 = vpop.f32.mrb[0].mxu0
        %v3499 = vpop.f32.mrb[0].mxu0
        %v3500 = vadd.f32 0.0, %v3499
        %v3501 = vpop.f32.mrb[0].mxu0
        %3502 = vmatprep.mubr.bf16.mxu0 0
        %3503 = vmatmul.mubr.bf16.gmra.mrb[0].mxu0 %v2603
        %v3504 = vpop.f32.mrb[0].mxu0
        %v3505 = vadd.f32 0.0, %v3504
        %v3506 = vpop.f32.mrb[0].mxu0
        %v3507 = vpop.f32.mrb[0].mxu0
        %v3508 = vadd.f32 0.0, %v3507
        %v3509 = vpop.f32.mrb[0].mxu0
        %3510 = vmatprep.mubr.bf16.mxu0 0
        %3511 = vmatmul.mubr.bf16.gmra.mrb[0].mxu0 %v2605
        %v3512 = vpop.f32.mrb[0].mxu0
        %v3513 = vadd.f32 0.0, %v3512
        %v3514 = vpop.f32.mrb[0].mxu0
        %v3515 = vpop.f32.mrb[0].mxu0
        %v3516 = vadd.f32 0.0, %v3515
        %v3517 = vpop.f32.mrb[0].mxu0
        %3518 = vmatprep.mubr.bf16.mxu0 0
        %3519 = vmatmul.mubr.bf16.gmra.mrb[0].mxu0 %v2607
        %v3520 = vpop.f32.mrb[0].mxu0
        %v3521 = vadd.f32 0.0, %v3520
        %v3522 = vpop.f32.mrb[0].mxu0
        %v3523 = vpop.f32.mrb[0].mxu0
        %v3524 = vadd.f32 0.0, %v3523
        %v3525 = vpop.f32.mrb[0].mxu0
        %3526 = vmatprep.mubr.bf16.mxu0 0
        %3527 = vmatmul.mubr.bf16.gmra.mrb[0].mxu0 %v2609
        %v3528 = vpop.f32.mrb[0].mxu0
        %v3529 = vadd.f32 0.0, %v3528
        %v3530 = vpop.f32.mrb[0].mxu0
        %v3531 = vpop.f32.mrb[0].mxu0
        %v3532 = vadd.f32 0.0, %v3531
        %v3533 = vpop.f32.mrb[0].mxu0
        %3534 = vmatprep.mubr.bf16.mxu0 0
        %3535 = vmatmul.mubr.bf16.gmra.mrb[0].mxu0 %v2611
        %v3536 = vpop.f32.mrb[0].mxu0
        %v3537 = vadd.f32 0.0, %v3536
        %v3538 = vpop.f32.mrb[0].mxu0
        %v3539 = vpop.f32.mrb[0].mxu0
        %v3540 = vadd.f32 0.0, %v3539
        %v3541 = vpop.f32.mrb[0].mxu0
        %3542 = vmatprep.mubr.bf16.mxu0 0
        %3543 = vmatmul.mubr.bf16.gmra.mrb[0].mxu0 %v2613
        %v3544 = vpop.f32.mrb[0].mxu0
        %v3545 = vadd.f32 0.0, %v3544
        %v3546 = vpop.f32.mrb[0].mxu0
        %v3547 = vpop.f32.mrb[0].mxu0
        %v3548 = vadd.f32 0.0, %v3547
        %v3549 = vpop.f32.mrb[0].mxu0
        %3550 = vmatprep.mubr.bf16.mxu0 0
        %3551 = vmatmul.mubr.bf16.gmra.mrb[0].mxu0 %v2615
        %v3552 = vpop.f32.mrb[0].mxu0
        %v3553 = vadd.f32 0.0, %v3552
        %v3554 = vpop.f32.mrb[0].mxu0
        %v3555 = vpop.f32.mrb[0].mxu0
        %v3556 = vadd.f32 0.0, %v3555
        %v3557 = vpop.f32.mrb[0].mxu0
        %3558 = vmatprep.mubr.bf16.mxu0 0
        %3559 = vmatmul.mubr.bf16.gmra.mrb[0].mxu0 %v2617
        %v3560 = vpop.f32.mrb[0].mxu0
        %v3561 = vadd.f32 0.0, %v3560
        %v3562 = vpop.f32.mrb[0].mxu0
        %v3563 = vpop.f32.mrb[0].mxu0
        %v3564 = vadd.f32 0.0, %v3563
        %v3565 = vpop.f32.mrb[0].mxu0
        %3566 = vmatprep.mubr.bf16.mxu0 0
        %3567 = vmatmul.mubr.bf16.gmra.mrb[0].mxu0 %v2619
        %v3568 = vpop.f32.mrb[0].mxu0
        %v3569 = vadd.f32 0.0, %v3568
        %v3570 = vpop.f32.mrb[0].mxu0
        %v3571 = vpop.f32.mrb[0].mxu0
        %v3572 = vadd.f32 0.0, %v3571
        %v3573 = vpop.f32.mrb[0].mxu0
        %3574 = vmatprep.mubr.bf16.mxu0 0
        %3575 = vmatmul.mubr.bf16.gmra.mrb[0].mxu0 %v2621
        %v3576 = vpop.f32.mrb[0].mxu0
        %v3577 = vadd.f32 0.0, %v3576
        %v3578 = vpop.f32.mrb[0].mxu0
        %v3579 = vpop.f32.mrb[0].mxu0
        %v3580 = vadd.f32 0.0, %v3579
        %v3581 = vpop.f32.mrb[0].mxu0
        %3582 = vmatprep.mubr.bf16.mxu0 0
        %3583 = vmatmul.mubr.bf16.gmra.mrb[0].mxu0 %v2623
        %v3584 = vpop.f32.mrb[0].mxu0
        %v3585 = vadd.f32 0.0, %v3584
        %v3586 = vpop.f32.mrb[0].mxu0
        %v3587 = vpop.f32.mrb[0].mxu0
        %v3588 = vadd.f32 0.0, %v3587
        %v3589 = vpop.f32.mrb[0].mxu0
        %3590 = vmatprep.mubr.bf16.mxu0 0
        %3591 = vmatmul.mubr.bf16.gmra.mrb[0].mxu0 %v2625
        %v3592 = vpop.f32.mrb[0].mxu0
        %v3593 = vadd.f32 0.0, %v3592
        %v3594 = vpop.f32.mrb[0].mxu0
        %v3595 = vpop.f32.mrb[0].mxu0
        %v3596 = vadd.f32 0.0, %v3595
        %v3597 = vpop.f32.mrb[0].mxu0
        %3598 = vmatprep.mubr.bf16.mxu0 0
        %3599 = vmatmul.mubr.bf16.gmra.mrb[0].mxu0 %v2627
        %v3600 = vpop.f32.mrb[0].mxu0
        %v3601 = vadd.f32 0.0, %v3600
        %v3602 = vpop.f32.mrb[0].mxu0
        %v3603 = vpop.f32.mrb[0].mxu0
        %v3604 = vadd.f32 0.0, %v3603
        %v3605 = vpop.f32.mrb[0].mxu0
        %3606 = vmatprep.mubr.bf16.mxu0 0
        %3607 = vmatmul.mubr.bf16.gmra.mrb[0].mxu0 %v2629
        %v3608 = vpop.f32.mrb[0].mxu0
        %v3609 = vadd.f32 0.0, %v3608
        %v3610 = vpop.f32.mrb[0].mxu0
        %v3611 = vpop.f32.mrb[0].mxu0
        %v3612 = vadd.f32 0.0, %v3611
        %v3613 = vpop.f32.mrb[0].mxu0
        %3614 = vmatprep.mubr.bf16.mxu0 0
        %3615 = vmatmul.mubr.bf16.gmra.mrb[0].mxu0 %v3457
        %v3616 = vpop.f32.mrb[0].mxu0
        %v3617 = vadd.f32 0.0, %v3616
        %v3618 = vpop.f32.mrb[0].mxu0
        %v3619 = vpop.f32.mrb[0].mxu0
        %v3620 = vadd.f32 0.0, %v3619
        %v3621 = vpop.f32.mrb[0].mxu0
        %3622 = vdwg.mxu0
        %v3623 = vadd.f32 %v3423, %v3497
        %v3624 = vadd.f32 %v3424, %v3500
        %v3625 = vadd.f32 %v3425, %v3505
        %v3626 = vadd.f32 %v3426, %v3508
        %v3627 = vadd.f32 %v3427, %v3513
        %v3628 = vadd.f32 %v3428, %v3516
        %v3629 = vadd.f32 %v3429, %v3521
        %v3630 = vadd.f32 %v3430, %v3524
        %v3631 = vadd.f32 %v3431, %v3529
        %v3632 = vadd.f32 %v3432, %v3532
        %v3633 = vadd.f32 %v3433, %v3537
        %v3634 = vadd.f32 %v3434, %v3540
        %v3635 = vadd.f32 %v3435, %v3545
        %v3636 = vadd.f32 %v3436, %v3548
        %v3637 = vadd.f32 %v3437, %v3553
        %v3638 = vadd.f32 %v3438, %v3556
        %v3639 = vadd.f32 %v3439, %v3561
        %v3640 = vadd.f32 %v3440, %v3564
        %v3641 = vadd.f32 %v3441, %v3569
        %v3642 = vadd.f32 %v3442, %v3572
        %v3643 = vadd.f32 %v3443, %v3577
        %v3644 = vadd.f32 %v3444, %v3580
        %v3645 = vadd.f32 %v3445, %v3585
        %v3646 = vadd.f32 %v3446, %v3588
        %v3647 = vadd.f32 %v3447, %v3593
        %v3648 = vadd.f32 %v3448, %v3596
        %v3649 = vadd.f32 %v3449, %v3601
        %v3650 = vadd.f32 %v3450, %v3604
        %v3651 = vadd.f32 %v3451, %v3609
        %v3652 = vadd.f32 %v3452, %v3612
        %v3653 = vadd.f32 %v3453, %v3617
        %v3654 = vadd.f32 %v3454, %v3620
        %s3655 = scalar_lea.vmem %s4, 10
        %v3656 = vld [vmem:[%s3655] sm:$0x3]
        %v3658 = vsel %vm2598, %v2593, 0
        %v3661 = vsel %vm2631, %v3656, 0
        %3663 = vmatprep.subr.bf16.mxu0 0
        %3664 = vmatpush1.bf16.msra.mxu0 %v3661
        %3665 = vmatprep.subr.bf16.mxu0 0
        %3666 = vmatpush1.bf16.msra.mxu0 0
        %3667 = vmatprep.subr.bf16.mxu0 0
        %3668 = vmatpush1.bf16.msra.mxu0 0
        %3669 = vmatprep.subr.bf16.mxu0 0
        %3670 = vmatpush1.bf16.msra.mxu0 0
        %3671 = vmatprep.subr.bf16.mxu0 0
        %3672 = vmatpush1.bf16.msra.mxu0 0
        %3673 = vmatprep.subr.bf16.mxu0 0
        %3674 = vmatpush1.bf16.msra.mxu0 0
        %3675 = vmatprep.subr.bf16.mxu0 0
        %3676 = vmatpush1.bf16.msra.mxu0 0
        %3677 = vmatprep.subr.bf16.mxu0 0
        %3678 = vmatpush1.bf16.msra.mxu0 0
        %3679 = vmatprep.subr.bf16.mxu0 0
        %3680 = vmatpush1.bf16.msra.mxu0 0
        %3681 = vmatprep.subr.bf16.mxu0 0
        %3682 = vmatpush1.bf16.msra.mxu0 0
        %3683 = vmatprep.subr.bf16.mxu0 0
        %3684 = vmatpush1.bf16.msra.mxu0 0
        %3685 = vmatprep.subr.bf16.mxu0 0
        %3686 = vmatpush1.bf16.msra.mxu0 0
        %3687 = vmatprep.subr.bf16.mxu0 0
        %3688 = vmatpush1.bf16.msra.mxu0 0
        %3689 = vmatprep.subr.bf16.mxu0 0
        %3690 = vmatpush1.bf16.msra.mxu0 0
        %3691 = vmatprep.subr.bf16.mxu0 0
        %3692 = vmatpush1.bf16.msra.mxu0 0
        %3693 = vmatprep.subr.bf16.mxu0 0
        %3694 = vmatpush1.bf16.msra.mxu0 0
        %3695 = vmatprep.mubr.bf16.mxu0 0
        %3696 = vmatmul.mubr.bf16.gmra.mrb[0].mxu0 %v3014
        %v3697 = vpop.f32.mrb[0].mxu0
        %v3698 = vadd.f32 0.0, %v3697
        %v3699 = vpop.f32.mrb[0].mxu0
        %v3700 = vpop.f32.mrb[0].mxu0
        %v3701 = vadd.f32 0.0, %v3700
        %v3702 = vpop.f32.mrb[0].mxu0
        %3703 = vmatprep.mubr.bf16.mxu0 0
        %3704 = vmatmul.mubr.bf16.gmra.mrb[0].mxu0 %v3017
        %v3705 = vpop.f32.mrb[0].mxu0
        %v3706 = vadd.f32 0.0, %v3705
        %v3707 = vpop.f32.mrb[0].mxu0
        %v3708 = vpop.f32.mrb[0].mxu0
        %v3709 = vadd.f32 0.0, %v3708
        %v3710 = vpop.f32.mrb[0].mxu0
        %3711 = vmatprep.mubr.bf16.mxu0 0
        %3712 = vmatmul.mubr.bf16.gmra.mrb[0].mxu0 %v3020
        %v3713 = vpop.f32.mrb[0].mxu0
        %v3714 = vadd.f32 0.0, %v3713
        %v3715 = vpop.f32.mrb[0].mxu0
        %v3716 = vpop.f32.mrb[0].mxu0
        %v3717 = vadd.f32 0.0, %v3716
        %v3718 = vpop.f32.mrb[0].mxu0
        %3719 = vmatprep.mubr.bf16.mxu0 0
        %3720 = vmatmul.mubr.bf16.gmra.mrb[0].mxu0 %v3023
        %v3721 = vpop.f32.mrb[0].mxu0
        %v3722 = vadd.f32 0.0, %v3721
        %v3723 = vpop.f32.mrb[0].mxu0
        %v3724 = vpop.f32.mrb[0].mxu0
        %v3725 = vadd.f32 0.0, %v3724
        %v3726 = vpop.f32.mrb[0].mxu0
        %3727 = vmatprep.mubr.bf16.mxu0 0
        %3728 = vmatmul.mubr.bf16.gmra.mrb[0].mxu0 %v3026
        %v3729 = vpop.f32.mrb[0].mxu0
        %v3730 = vadd.f32 0.0, %v3729
        %v3731 = vpop.f32.mrb[0].mxu0
        %v3732 = vpop.f32.mrb[0].mxu0
        %v3733 = vadd.f32 0.0, %v3732
        %v3734 = vpop.f32.mrb[0].mxu0
        %3735 = vmatprep.mubr.bf16.mxu0 0
        %3736 = vmatmul.mubr.bf16.gmra.mrb[0].mxu0 %v3029
        %v3737 = vpop.f32.mrb[0].mxu0
        %v3738 = vadd.f32 0.0, %v3737
        %v3739 = vpop.f32.mrb[0].mxu0
        %v3740 = vpop.f32.mrb[0].mxu0
        %v3741 = vadd.f32 0.0, %v3740
        %v3742 = vpop.f32.mrb[0].mxu0
        %3743 = vmatprep.mubr.bf16.mxu0 0
        %3744 = vmatmul.mubr.bf16.gmra.mrb[0].mxu0 %v3032
        %v3745 = vpop.f32.mrb[0].mxu0
        %v3746 = vadd.f32 0.0, %v3745
        %v3747 = vpop.f32.mrb[0].mxu0
        %v3748 = vpop.f32.mrb[0].mxu0
        %v3749 = vadd.f32 0.0, %v3748
        %v3750 = vpop.f32.mrb[0].mxu0
        %3751 = vmatprep.mubr.bf16.mxu0 0
        %3752 = vmatmul.mubr.bf16.gmra.mrb[0].mxu0 %v3035
        %v3753 = vpop.f32.mrb[0].mxu0
        %v3754 = vadd.f32 0.0, %v3753
        %v3755 = vpop.f32.mrb[0].mxu0
        %v3756 = vpop.f32.mrb[0].mxu0
        %v3757 = vadd.f32 0.0, %v3756
        %v3758 = vpop.f32.mrb[0].mxu0
        %3759 = vmatprep.mubr.bf16.mxu0 0
        %3760 = vmatmul.mubr.bf16.gmra.mrb[0].mxu0 %v3038
        %v3761 = vpop.f32.mrb[0].mxu0
        %v3762 = vadd.f32 0.0, %v3761
        %v3763 = vpop.f32.mrb[0].mxu0
        %v3764 = vpop.f32.mrb[0].mxu0
        %v3765 = vadd.f32 0.0, %v3764
        %v3766 = vpop.f32.mrb[0].mxu0
        %3767 = vmatprep.mubr.bf16.mxu0 0
        %3768 = vmatmul.mubr.bf16.gmra.mrb[0].mxu0 %v3041
        %v3769 = vpop.f32.mrb[0].mxu0
        %v3770 = vadd.f32 0.0, %v3769
        %v3771 = vpop.f32.mrb[0].mxu0
        %v3772 = vpop.f32.mrb[0].mxu0
        %v3773 = vadd.f32 0.0, %v3772
        %v3774 = vpop.f32.mrb[0].mxu0
        %3775 = vmatprep.mubr.bf16.mxu0 0
        %3776 = vmatmul.mubr.bf16.gmra.mrb[0].mxu0 %v3044
        %v3777 = vpop.f32.mrb[0].mxu0
        %v3778 = vadd.f32 0.0, %v3777
        %v3779 = vpop.f32.mrb[0].mxu0
        %v3780 = vpop.f32.mrb[0].mxu0
        %v3781 = vadd.f32 0.0, %v3780
        %v3782 = vpop.f32.mrb[0].mxu0
        %3783 = vmatprep.mubr.bf16.mxu0 0
        %3784 = vmatmul.mubr.bf16.gmra.mrb[0].mxu0 %v3047
        %v3785 = vpop.f32.mrb[0].mxu0
        %v3786 = vadd.f32 0.0, %v3785
        %v3787 = vpop.f32.mrb[0].mxu0
        %v3788 = vpop.f32.mrb[0].mxu0
        %v3789 = vadd.f32 0.0, %v3788
        %v3790 = vpop.f32.mrb[0].mxu0
        %3791 = vmatprep.mubr.bf16.mxu0 0
        %3792 = vmatmul.mubr.bf16.gmra.mrb[0].mxu0 %v3050
        %v3793 = vpop.f32.mrb[0].mxu0
        %v3794 = vadd.f32 0.0, %v3793
        %v3795 = vpop.f32.mrb[0].mxu0
        %v3796 = vpop.f32.mrb[0].mxu0
        %v3797 = vadd.f32 0.0, %v3796
        %v3798 = vpop.f32.mrb[0].mxu0
        %3799 = vmatprep.mubr.bf16.mxu0 0
        %3800 = vmatmul.mubr.bf16.gmra.mrb[0].mxu0 %v3053
        %v3801 = vpop.f32.mrb[0].mxu0
        %v3802 = vadd.f32 0.0, %v3801
        %v3803 = vpop.f32.mrb[0].mxu0
        %v3804 = vpop.f32.mrb[0].mxu0
        %v3805 = vadd.f32 0.0, %v3804
        %v3806 = vpop.f32.mrb[0].mxu0
        %3807 = vmatprep.mubr.bf16.mxu0 0
        %3808 = vmatmul.mubr.bf16.gmra.mrb[0].mxu0 %v3056
        %v3809 = vpop.f32.mrb[0].mxu0
        %v3810 = vadd.f32 0.0, %v3809
        %v3811 = vpop.f32.mrb[0].mxu0
        %v3812 = vpop.f32.mrb[0].mxu0
        %v3813 = vadd.f32 0.0, %v3812
        %v3814 = vpop.f32.mrb[0].mxu0
        %3815 = vmatprep.mubr.bf16.mxu0 0
        %3816 = vmatmul.mubr.bf16.gmra.mrb[0].mxu0 %v3658
        %v3817 = vpop.f32.mrb[0].mxu0
        %v3818 = vadd.f32 0.0, %v3817
        %v3819 = vpop.f32.mrb[0].mxu0
        %v3820 = vpop.f32.mrb[0].mxu0
        %v3821 = vadd.f32 0.0, %v3820
        %v3822 = vpop.f32.mrb[0].mxu0
        %3823 = vdwg.mxu0
        %v3824 = vadd.f32 %v3623, %v3698
        %v3825 = vadd.f32 %v3624, %v3701
        %v3826 = vadd.f32 %v3625, %v3706
        %v3827 = vadd.f32 %v3626, %v3709
        %v3828 = vadd.f32 %v3627, %v3714
        %v3829 = vadd.f32 %v3628, %v3717
        %v3830 = vadd.f32 %v3629, %v3722
        %v3831 = vadd.f32 %v3630, %v3725
        %v3832 = vadd.f32 %v3631, %v3730
        %v3833 = vadd.f32 %v3632, %v3733
        %v3834 = vadd.f32 %v3633, %v3738
        %v3835 = vadd.f32 %v3634, %v3741
        %v3836 = vadd.f32 %v3635, %v3746
        %v3837 = vadd.f32 %v3636, %v3749
        %v3838 = vadd.f32 %v3637, %v3754
        %v3839 = vadd.f32 %v3638, %v3757
        %v3840 = vadd.f32 %v3639, %v3762
        %v3841 = vadd.f32 %v3640, %v3765
        %v3842 = vadd.f32 %v3641, %v3770
        %v3843 = vadd.f32 %v3642, %v3773
        %v3844 = vadd.f32 %v3643, %v3778
        %v3845 = vadd.f32 %v3644, %v3781
        %v3846 = vadd.f32 %v3645, %v3786
        %v3847 = vadd.f32 %v3646, %v3789
        %v3848 = vadd.f32 %v3647, %v3794
        %v3849 = vadd.f32 %v3648, %v3797
        %v3850 = vadd.f32 %v3649, %v3802
        %v3851 = vadd.f32 %v3650, %v3805
        %v3852 = vadd.f32 %v3651, %v3810
        %v3853 = vadd.f32 %v3652, %v3813
        %v3854 = vadd.f32 %v3653, %v3818
        %v3855 = vadd.f32 %v3654, %v3821
        %s3856 = scalar_lea.vmem %s4, 12
        %v3857 = vld [vmem:[%s3856] sm:$0x3]
        %v3859 = vsel %vm2598, %v2249, 0
        %v3862 = vsel %vm2631, %v3857, 0
        %3864 = vmatprep.subr.bf16.mxu0 0
        %3865 = vmatpush1.bf16.msra.mxu0 %v3862
        %3866 = vmatprep.subr.bf16.mxu0 0
        %3867 = vmatpush1.bf16.msra.mxu0 0
        %3868 = vmatprep.subr.bf16.mxu0 0
        %3869 = vmatpush1.bf16.msra.mxu0 0
        %3870 = vmatprep.subr.bf16.mxu0 0
        %3871 = vmatpush1.bf16.msra.mxu0 0
        %3872 = vmatprep.subr.bf16.mxu0 0
        %3873 = vmatpush1.bf16.msra.mxu0 0
        %3874 = vmatprep.subr.bf16.mxu0 0
        %3875 = vmatpush1.bf16.msra.mxu0 0
        %3876 = vmatprep.subr.bf16.mxu0 0
        %3877 = vmatpush1.bf16.msra.mxu0 0
        %3878 = vmatprep.subr.bf16.mxu0 0
        %3879 = vmatpush1.bf16.msra.mxu0 0
        %3880 = vmatprep.subr.bf16.mxu0 0
        %3881 = vmatpush1.bf16.msra.mxu0 0
        %3882 = vmatprep.subr.bf16.mxu0 0
        %3883 = vmatpush1.bf16.msra.mxu0 0
        %3884 = vmatprep.subr.bf16.mxu0 0
        %3885 = vmatpush1.bf16.msra.mxu0 0
        %3886 = vmatprep.subr.bf16.mxu0 0
        %3887 = vmatpush1.bf16.msra.mxu0 0
        %3888 = vmatprep.subr.bf16.mxu0 0
        %3889 = vmatpush1.bf16.msra.mxu0 0
        %3890 = vmatprep.subr.bf16.mxu0 0
        %3891 = vmatpush1.bf16.msra.mxu0 0
        %3892 = vmatprep.subr.bf16.mxu0 0
        %3893 = vmatpush1.bf16.msra.mxu0 0
        %3894 = vmatprep.subr.bf16.mxu0 0
        %3895 = vmatpush1.bf16.msra.mxu0 0
        %3896 = vmatprep.mubr.bf16.mxu0 0
        %3897 = vmatmul.mubr.bf16.gmra.mrb[0].mxu0 %v2803
        %v3898 = vpop.f32.mrb[0].mxu0
        %v3899 = vadd.f32 0.0, %v3898
        %v3900 = vpop.f32.mrb[0].mxu0
        %v3901 = vpop.f32.mrb[0].mxu0
        %v3902 = vadd.f32 0.0, %v3901
        %v3903 = vpop.f32.mrb[0].mxu0
        %3904 = vmatprep.mubr.bf16.mxu0 0
        %3905 = vmatmul.mubr.bf16.gmra.mrb[0].mxu0 %v2806
        %v3906 = vpop.f32.mrb[0].mxu0
        %v3907 = vadd.f32 0.0, %v3906
        %v3908 = vpop.f32.mrb[0].mxu0
        %v3909 = vpop.f32.mrb[0].mxu0
        %v3910 = vadd.f32 0.0, %v3909
        %v3911 = vpop.f32.mrb[0].mxu0
        %3912 = vmatprep.mubr.bf16.mxu0 0
        %3913 = vmatmul.mubr.bf16.gmra.mrb[0].mxu0 %v2809
        %v3914 = vpop.f32.mrb[0].mxu0
        %v3915 = vadd.f32 0.0, %v3914
        %v3916 = vpop.f32.mrb[0].mxu0
        %v3917 = vpop.f32.mrb[0].mxu0
        %v3918 = vadd.f32 0.0, %v3917
        %v3919 = vpop.f32.mrb[0].mxu0
        %3920 = vmatprep.mubr.bf16.mxu0 0
        %3921 = vmatmul.mubr.bf16.gmra.mrb[0].mxu0 %v2812
        %v3922 = vpop.f32.mrb[0].mxu0
        %v3923 = vadd.f32 0.0, %v3922
        %v3924 = vpop.f32.mrb[0].mxu0
        %v3925 = vpop.f32.mrb[0].mxu0
        %v3926 = vadd.f32 0.0, %v3925
        %v3927 = vpop.f32.mrb[0].mxu0
        %3928 = vmatprep.mubr.bf16.mxu0 0
        %3929 = vmatmul.mubr.bf16.gmra.mrb[0].mxu0 %v2815
        %v3930 = vpop.f32.mrb[0].mxu0
        %v3931 = vadd.f32 0.0, %v3930
        %v3932 = vpop.f32.mrb[0].mxu0
        %v3933 = vpop.f32.mrb[0].mxu0
        %v3934 = vadd.f32 0.0, %v3933
        %v3935 = vpop.f32.mrb[0].mxu0
        %3936 = vmatprep.mubr.bf16.mxu0 0
        %3937 = vmatmul.mubr.bf16.gmra.mrb[0].mxu0 %v2818
        %v3938 = vpop.f32.mrb[0].mxu0
        %v3939 = vadd.f32 0.0, %v3938
        %v3940 = vpop.f32.mrb[0].mxu0
        %v3941 = vpop.f32.mrb[0].mxu0
        %v3942 = vadd.f32 0.0, %v3941
        %v3943 = vpop.f32.mrb[0].mxu0
        %3944 = vmatprep.mubr.bf16.mxu0 0
        %3945 = vmatmul.mubr.bf16.gmra.mrb[0].mxu0 %v2821
        %v3946 = vpop.f32.mrb[0].mxu0
        %v3947 = vadd.f32 0.0, %v3946
        %v3948 = vpop.f32.mrb[0].mxu0
        %v3949 = vpop.f32.mrb[0].mxu0
        %v3950 = vadd.f32 0.0, %v3949
        %v3951 = vpop.f32.mrb[0].mxu0
        %3952 = vmatprep.mubr.bf16.mxu0 0
        %3953 = vmatmul.mubr.bf16.gmra.mrb[0].mxu0 %v2824
        %v3954 = vpop.f32.mrb[0].mxu0
        %v3955 = vadd.f32 0.0, %v3954
        %v3956 = vpop.f32.mrb[0].mxu0
        %v3957 = vpop.f32.mrb[0].mxu0
        %v3958 = vadd.f32 0.0, %v3957
        %v3959 = vpop.f32.mrb[0].mxu0
        %3960 = vmatprep.mubr.bf16.mxu0 0
        %3961 = vmatmul.mubr.bf16.gmra.mrb[0].mxu0 %v2827
        %v3962 = vpop.f32.mrb[0].mxu0
        %v3963 = vadd.f32 0.0, %v3962
        %v3964 = vpop.f32.mrb[0].mxu0
        %v3965 = vpop.f32.mrb[0].mxu0
        %v3966 = vadd.f32 0.0, %v3965
        %v3967 = vpop.f32.mrb[0].mxu0
        %3968 = vmatprep.mubr.bf16.mxu0 0
        %3969 = vmatmul.mubr.bf16.gmra.mrb[0].mxu0 %v2830
        %v3970 = vpop.f32.mrb[0].mxu0
        %v3971 = vadd.f32 0.0, %v3970
        %v3972 = vpop.f32.mrb[0].mxu0
        %v3973 = vpop.f32.mrb[0].mxu0
        %v3974 = vadd.f32 0.0, %v3973
        %v3975 = vpop.f32.mrb[0].mxu0
        %3976 = vmatprep.mubr.bf16.mxu0 0
        %3977 = vmatmul.mubr.bf16.gmra.mrb[0].mxu0 %v2833
        %v3978 = vpop.f32.mrb[0].mxu0
        %v3979 = vadd.f32 0.0, %v3978
        %v3980 = vpop.f32.mrb[0].mxu0
        %v3981 = vpop.f32.mrb[0].mxu0
        %v3982 = vadd.f32 0.0, %v3981
        %v3983 = vpop.f32.mrb[0].mxu0
        %3984 = vmatprep.mubr.bf16.mxu0 0
        %3985 = vmatmul.mubr.bf16.gmra.mrb[0].mxu0 %v2836
        %v3986 = vpop.f32.mrb[0].mxu0
        %v3987 = vadd.f32 0.0, %v3986
        %v3988 = vpop.f32.mrb[0].mxu0
        %v3989 = vpop.f32.mrb[0].mxu0
        %v3990 = vadd.f32 0.0, %v3989
        %v3991 = vpop.f32.mrb[0].mxu0
        %3992 = vmatprep.mubr.bf16.mxu0 0
        %3993 = vmatmul.mubr.bf16.gmra.mrb[0].mxu0 %v2839
        %v3994 = vpop.f32.mrb[0].mxu0
        %v3995 = vadd.f32 0.0, %v3994
        %v3996 = vpop.f32.mrb[0].mxu0
        %v3997 = vpop.f32.mrb[0].mxu0
        %v3998 = vadd.f32 0.0, %v3997
        %v3999 = vpop.f32.mrb[0].mxu0
        %4000 = vmatprep.mubr.bf16.mxu0 0
        %4001 = vmatmul.mubr.bf16.gmra.mrb[0].mxu0 %v2842
        %v4002 = vpop.f32.mrb[0].mxu0
        %v4003 = vadd.f32 0.0, %v4002
        %v4004 = vpop.f32.mrb[0].mxu0
        %v4005 = vpop.f32.mrb[0].mxu0
        %v4006 = vadd.f32 0.0, %v4005
        %v4007 = vpop.f32.mrb[0].mxu0
        %4008 = vmatprep.mubr.bf16.mxu0 0
        %4009 = vmatmul.mubr.bf16.gmra.mrb[0].mxu0 %v3257
        %v4010 = vpop.f32.mrb[0].mxu0
        %v4011 = vadd.f32 0.0, %v4010
        %v4012 = vpop.f32.mrb[0].mxu0
        %v4013 = vpop.f32.mrb[0].mxu0
        %v4014 = vadd.f32 0.0, %v4013
        %v4015 = vpop.f32.mrb[0].mxu0
        %4016 = vmatprep.mubr.bf16.mxu0 0
        %4017 = vmatmul.mubr.bf16.gmra.mrb[0].mxu0 %v3859
        %v4018 = vpop.f32.mrb[0].mxu0
        %v4019 = vadd.f32 0.0, %v4018
        %v4020 = vpop.f32.mrb[0].mxu0
        %v4021 = vpop.f32.mrb[0].mxu0
        %v4022 = vadd.f32 0.0, %v4021
        %v4023 = vpop.f32.mrb[0].mxu0
        %4024 = vdwg.mxu0
        %v4025 = vadd.f32 %v3824, %v3899
        %v4026 = vadd.f32 %v3825, %v3902
        %v4027 = vadd.f32 %v3826, %v3907
        %v4028 = vadd.f32 %v3827, %v3910
        %v4029 = vadd.f32 %v3828, %v3915
        %v4030 = vadd.f32 %v3829, %v3918
        %v4031 = vadd.f32 %v3830, %v3923
        %v4032 = vadd.f32 %v3831, %v3926
        %v4033 = vadd.f32 %v3832, %v3931
        %v4034 = vadd.f32 %v3833, %v3934
        %v4035 = vadd.f32 %v3834, %v3939
        %v4036 = vadd.f32 %v3835, %v3942
        %v4037 = vadd.f32 %v3836, %v3947
        %v4038 = vadd.f32 %v3837, %v3950
        %v4039 = vadd.f32 %v3838, %v3955
        %v4040 = vadd.f32 %v3839, %v3958
        %v4041 = vadd.f32 %v3840, %v3963
        %v4042 = vadd.f32 %v3841, %v3966
        %v4043 = vadd.f32 %v3842, %v3971
        %v4044 = vadd.f32 %v3843, %v3974
        %v4045 = vadd.f32 %v3844, %v3979
        %v4046 = vadd.f32 %v3845, %v3982
        %v4047 = vadd.f32 %v3846, %v3987
        %v4048 = vadd.f32 %v3847, %v3990
        %v4049 = vadd.f32 %v3848, %v3995
        %v4050 = vadd.f32 %v3849, %v3998
        %v4051 = vadd.f32 %v3850, %v4003
        %v4052 = vadd.f32 %v3851, %v4006
        %v4053 = vadd.f32 %v3852, %v4011
        %v4054 = vadd.f32 %v3853, %v4014
        %v4055 = vadd.f32 %v3854, %v4019
        %v4056 = vadd.f32 %v3855, %v4022
        %s4057 = scalar_lea.vmem %s4, 14
        %v4058 = vld [vmem:[%s4057] sm:$0x3]
        %v4059 = vsel %vm2598, %v1382, 0
        %v4062 = vsel %vm2631, %v4058, 0
        %4064 = vmatprep.subr.bf16.mxu0 0
        %4065 = vmatpush1.bf16.msra.mxu0 %v4062
        %4066 = vmatprep.subr.bf16.mxu0 0
        %4067 = vmatpush1.bf16.msra.mxu0 0
        %4068 = vmatprep.subr.bf16.mxu0 0
        %4069 = vmatpush1.bf16.msra.mxu0 0
        %4070 = vmatprep.subr.bf16.mxu0 0
        %4071 = vmatpush1.bf16.msra.mxu0 0
        %4072 = vmatprep.subr.bf16.mxu0 0
        %4073 = vmatpush1.bf16.msra.mxu0 0
        %4074 = vmatprep.subr.bf16.mxu0 0
        %4075 = vmatpush1.bf16.msra.mxu0 0
        %4076 = vmatprep.subr.bf16.mxu0 0
        %4077 = vmatpush1.bf16.msra.mxu0 0
        %4078 = vmatprep.subr.bf16.mxu0 0
        %4079 = vmatpush1.bf16.msra.mxu0 0
        %4080 = vmatprep.subr.bf16.mxu0 0
        %4081 = vmatpush1.bf16.msra.mxu0 0
        %4082 = vmatprep.subr.bf16.mxu0 0
        %4083 = vmatpush1.bf16.msra.mxu0 0
        %4084 = vmatprep.subr.bf16.mxu0 0
        %4085 = vmatpush1.bf16.msra.mxu0 0
        %4086 = vmatprep.subr.bf16.mxu0 0
        %4087 = vmatpush1.bf16.msra.mxu0 0
        %4088 = vmatprep.subr.bf16.mxu0 0
        %4089 = vmatpush1.bf16.msra.mxu0 0
        %4090 = vmatprep.subr.bf16.mxu0 0
        %4091 = vmatpush1.bf16.msra.mxu0 0
        %4092 = vmatprep.subr.bf16.mxu0 0
        %4093 = vmatpush1.bf16.msra.mxu0 0
        %4094 = vmatprep.subr.bf16.mxu0 0
        %4095 = vmatpush1.bf16.msra.mxu0 0
        %4096 = vmatprep.mubr.bf16.mxu0 0
        %4097 = vmatmul.mubr.bf16.gmra.mrb[0].mxu0 %v2603
        %v4098 = vpop.f32.mrb[0].mxu0
        %v4099 = vadd.f32 0.0, %v4098
        %v4100 = vpop.f32.mrb[0].mxu0
        %v4101 = vpop.f32.mrb[0].mxu0
        %v4102 = vadd.f32 0.0, %v4101
        %v4103 = vpop.f32.mrb[0].mxu0
        %4104 = vmatprep.mubr.bf16.mxu0 0
        %4105 = vmatmul.mubr.bf16.gmra.mrb[0].mxu0 %v2605
        %v4106 = vpop.f32.mrb[0].mxu0
        %v4107 = vadd.f32 0.0, %v4106
        %v4108 = vpop.f32.mrb[0].mxu0
        %v4109 = vpop.f32.mrb[0].mxu0
        %v4110 = vadd.f32 0.0, %v4109
        %v4111 = vpop.f32.mrb[0].mxu0
        %4112 = vmatprep.mubr.bf16.mxu0 0
        %4113 = vmatmul.mubr.bf16.gmra.mrb[0].mxu0 %v2607
        %v4114 = vpop.f32.mrb[0].mxu0
        %v4115 = vadd.f32 0.0, %v4114
        %v4116 = vpop.f32.mrb[0].mxu0
        %v4117 = vpop.f32.mrb[0].mxu0
        %v4118 = vadd.f32 0.0, %v4117
        %v4119 = vpop.f32.mrb[0].mxu0
        %4120 = vmatprep.mubr.bf16.mxu0 0
        %4121 = vmatmul.mubr.bf16.gmra.mrb[0].mxu0 %v2609
        %v4122 = vpop.f32.mrb[0].mxu0
        %v4123 = vadd.f32 0.0, %v4122
        %v4124 = vpop.f32.mrb[0].mxu0
        %v4125 = vpop.f32.mrb[0].mxu0
        %v4126 = vadd.f32 0.0, %v4125
        %v4127 = vpop.f32.mrb[0].mxu0
        %4128 = vmatprep.mubr.bf16.mxu0 0
        %4129 = vmatmul.mubr.bf16.gmra.mrb[0].mxu0 %v2611
        %v4130 = vpop.f32.mrb[0].mxu0
        %v4131 = vadd.f32 0.0, %v4130
        %v4132 = vpop.f32.mrb[0].mxu0
        %v4133 = vpop.f32.mrb[0].mxu0
        %v4134 = vadd.f32 0.0, %v4133
        %v4135 = vpop.f32.mrb[0].mxu0
        %4136 = vmatprep.mubr.bf16.mxu0 0
        %4137 = vmatmul.mubr.bf16.gmra.mrb[0].mxu0 %v2613
        %v4138 = vpop.f32.mrb[0].mxu0
        %v4139 = vadd.f32 0.0, %v4138
        %v4140 = vpop.f32.mrb[0].mxu0
        %v4141 = vpop.f32.mrb[0].mxu0
        %v4142 = vadd.f32 0.0, %v4141
        %v4143 = vpop.f32.mrb[0].mxu0
        %4144 = vmatprep.mubr.bf16.mxu0 0
        %4145 = vmatmul.mubr.bf16.gmra.mrb[0].mxu0 %v2615
        %v4146 = vpop.f32.mrb[0].mxu0
        %v4147 = vadd.f32 0.0, %v4146
        %v4148 = vpop.f32.mrb[0].mxu0
        %v4149 = vpop.f32.mrb[0].mxu0
        %v4150 = vadd.f32 0.0, %v4149
        %v4151 = vpop.f32.mrb[0].mxu0
        %4152 = vmatprep.mubr.bf16.mxu0 0
        %4153 = vmatmul.mubr.bf16.gmra.mrb[0].mxu0 %v2617
        %v4154 = vpop.f32.mrb[0].mxu0
        %v4155 = vadd.f32 0.0, %v4154
        %v4156 = vpop.f32.mrb[0].mxu0
        %v4157 = vpop.f32.mrb[0].mxu0
        %v4158 = vadd.f32 0.0, %v4157
        %v4159 = vpop.f32.mrb[0].mxu0
        %4160 = vmatprep.mubr.bf16.mxu0 0
        %4161 = vmatmul.mubr.bf16.gmra.mrb[0].mxu0 %v2619
        %v4162 = vpop.f32.mrb[0].mxu0
        %v4163 = vadd.f32 0.0, %v4162
        %v4164 = vpop.f32.mrb[0].mxu0
        %v4165 = vpop.f32.mrb[0].mxu0
        %v4166 = vadd.f32 0.0, %v4165
        %v4167 = vpop.f32.mrb[0].mxu0
        %4168 = vmatprep.mubr.bf16.mxu0 0
        %4169 = vmatmul.mubr.bf16.gmra.mrb[0].mxu0 %v2621
        %v4170 = vpop.f32.mrb[0].mxu0
        %v4171 = vadd.f32 0.0, %v4170
        %v4172 = vpop.f32.mrb[0].mxu0
        %v4173 = vpop.f32.mrb[0].mxu0
        %v4174 = vadd.f32 0.0, %v4173
        %v4175 = vpop.f32.mrb[0].mxu0
        %4176 = vmatprep.mubr.bf16.mxu0 0
        %4177 = vmatmul.mubr.bf16.gmra.mrb[0].mxu0 %v2623
        %v4178 = vpop.f32.mrb[0].mxu0
        %v4179 = vadd.f32 0.0, %v4178
        %v4180 = vpop.f32.mrb[0].mxu0
        %v4181 = vpop.f32.mrb[0].mxu0
        %v4182 = vadd.f32 0.0, %v4181
        %v4183 = vpop.f32.mrb[0].mxu0
        %4184 = vmatprep.mubr.bf16.mxu0 0
        %4185 = vmatmul.mubr.bf16.gmra.mrb[0].mxu0 %v2625
        %v4186 = vpop.f32.mrb[0].mxu0
        %v4187 = vadd.f32 0.0, %v4186
        %v4188 = vpop.f32.mrb[0].mxu0
        %v4189 = vpop.f32.mrb[0].mxu0
        %v4190 = vadd.f32 0.0, %v4189
        %v4191 = vpop.f32.mrb[0].mxu0
        %4192 = vmatprep.mubr.bf16.mxu0 0
        %4193 = vmatmul.mubr.bf16.gmra.mrb[0].mxu0 %v2627
        %v4194 = vpop.f32.mrb[0].mxu0
        %v4195 = vadd.f32 0.0, %v4194
        %v4196 = vpop.f32.mrb[0].mxu0
        %v4197 = vpop.f32.mrb[0].mxu0
        %v4198 = vadd.f32 0.0, %v4197
        %v4199 = vpop.f32.mrb[0].mxu0
        %4200 = vmatprep.mubr.bf16.mxu0 0
        %4201 = vmatmul.mubr.bf16.gmra.mrb[0].mxu0 %v2629
        %v4202 = vpop.f32.mrb[0].mxu0
        %v4203 = vadd.f32 0.0, %v4202
        %v4204 = vpop.f32.mrb[0].mxu0
        %v4205 = vpop.f32.mrb[0].mxu0
        %v4206 = vadd.f32 0.0, %v4205
        %v4207 = vpop.f32.mrb[0].mxu0
        %4208 = vmatprep.mubr.bf16.mxu0 0
        %4209 = vmatmul.mubr.bf16.gmra.mrb[0].mxu0 %v3457
        %v4210 = vpop.f32.mrb[0].mxu0
        %v4211 = vadd.f32 0.0, %v4210
        %v4212 = vpop.f32.mrb[0].mxu0
        %v4213 = vpop.f32.mrb[0].mxu0
        %v4214 = vadd.f32 0.0, %v4213
        %v4215 = vpop.f32.mrb[0].mxu0
        %4216 = vmatprep.mubr.bf16.mxu0 0
        %4217 = vmatmul.mubr.bf16.gmra.mrb[0].mxu0 %v4059
        %v4218 = vpop.f32.mrb[0].mxu0
        %v4219 = vadd.f32 0.0, %v4218
        %v4220 = vpop.f32.mrb[0].mxu0
        %v4221 = vpop.f32.mrb[0].mxu0
        %v4222 = vadd.f32 0.0, %v4221
        %v4223 = vpop.f32.mrb[0].mxu0
        %4224 = vdwg.mxu0
        %v4225 = vadd.f32 %v4025, %v4099
        %v4226 = vadd.f32 %v4026, %v4102
        %v4227 = vadd.f32 %v4027, %v4107
        %v4228 = vadd.f32 %v4028, %v4110
        %v4229 = vadd.f32 %v4029, %v4115
        %v4230 = vadd.f32 %v4030, %v4118
        %v4231 = vadd.f32 %v4031, %v4123
        %v4232 = vadd.f32 %v4032, %v4126
        %v4233 = vadd.f32 %v4033, %v4131
        %v4234 = vadd.f32 %v4034, %v4134
        %v4235 = vadd.f32 %v4035, %v4139
        %v4236 = vadd.f32 %v4036, %v4142
        %v4237 = vadd.f32 %v4037, %v4147
        %v4238 = vadd.f32 %v4038, %v4150
        %v4239 = vadd.f32 %v4039, %v4155
        %v4240 = vadd.f32 %v4040, %v4158
        %v4241 = vadd.f32 %v4041, %v4163
        %v4242 = vadd.f32 %v4042, %v4166
        %v4243 = vadd.f32 %v4043, %v4171
        %v4244 = vadd.f32 %v4044, %v4174
        %v4245 = vadd.f32 %v4045, %v4179
        %v4246 = vadd.f32 %v4046, %v4182
        %v4247 = vadd.f32 %v4047, %v4187
        %v4248 = vadd.f32 %v4048, %v4190
        %v4249 = vadd.f32 %v4049, %v4195
        %v4250 = vadd.f32 %v4050, %v4198
        %v4251 = vadd.f32 %v4051, %v4203
        %v4252 = vadd.f32 %v4052, %v4206
        %v4253 = vadd.f32 %v4053, %v4211
        %v4254 = vadd.f32 %v4054, %v4214
        %v4255 = vadd.f32 %v4055, %v4219
        %v4256 = vadd.f32 %v4056, %v4222
        %s4257 = scalar_lea.vmem %s4, 16
        %v4258 = vld [vmem:[%s4257] sm:$0x3]
        %v4260 = vsel %vm2598, %v2594, 0
        %v4263 = vsel %vm2631, %v4258, 0
        %4265 = vmatprep.subr.bf16.mxu0 0
        %4266 = vmatpush1.bf16.msra.mxu0 %v4263
        %4267 = vmatprep.subr.bf16.mxu0 0
        %4268 = vmatpush1.bf16.msra.mxu0 0
        %4269 = vmatprep.subr.bf16.mxu0 0
        %4270 = vmatpush1.bf16.msra.mxu0 0
        %4271 = vmatprep.subr.bf16.mxu0 0
        %4272 = vmatpush1.bf16.msra.mxu0 0
        %4273 = vmatprep.subr.bf16.mxu0 0
        %4274 = vmatpush1.bf16.msra.mxu0 0
        %4275 = vmatprep.subr.bf16.mxu0 0
        %4276 = vmatpush1.bf16.msra.mxu0 0
        %4277 = vmatprep.subr.bf16.mxu0 0
        %4278 = vmatpush1.bf16.msra.mxu0 0
        %4279 = vmatprep.subr.bf16.mxu0 0
        %4280 = vmatpush1.bf16.msra.mxu0 0
        %4281 = vmatprep.subr.bf16.mxu0 0
        %4282 = vmatpush1.bf16.msra.mxu0 0
        %4283 = vmatprep.subr.bf16.mxu0 0
        %4284 = vmatpush1.bf16.msra.mxu0 0
        %4285 = vmatprep.subr.bf16.mxu0 0
        %4286 = vmatpush1.bf16.msra.mxu0 0
        %4287 = vmatprep.subr.bf16.mxu0 0
        %4288 = vmatpush1.bf16.msra.mxu0 0
        %4289 = vmatprep.subr.bf16.mxu0 0
        %4290 = vmatpush1.bf16.msra.mxu0 0
        %4291 = vmatprep.subr.bf16.mxu0 0
        %4292 = vmatpush1.bf16.msra.mxu0 0
        %4293 = vmatprep.subr.bf16.mxu0 0
        %4294 = vmatpush1.bf16.msra.mxu0 0
        %4295 = vmatprep.subr.bf16.mxu0 0
        %4296 = vmatpush1.bf16.msra.mxu0 0
        %4297 = vmatprep.mubr.bf16.mxu0 0
        %4298 = vmatmul.mubr.bf16.gmra.mrb[0].mxu0 %v3017
        %v4299 = vpop.f32.mrb[0].mxu0
        %v4300 = vadd.f32 0.0, %v4299
        %v4301 = vpop.f32.mrb[0].mxu0
        %v4302 = vpop.f32.mrb[0].mxu0
        %v4303 = vadd.f32 0.0, %v4302
        %v4304 = vpop.f32.mrb[0].mxu0
        %4305 = vmatprep.mubr.bf16.mxu0 0
        %4306 = vmatmul.mubr.bf16.gmra.mrb[0].mxu0 %v3020
        %v4307 = vpop.f32.mrb[0].mxu0
        %v4308 = vadd.f32 0.0, %v4307
        %v4309 = vpop.f32.mrb[0].mxu0
        %v4310 = vpop.f32.mrb[0].mxu0
        %v4311 = vadd.f32 0.0, %v4310
        %v4312 = vpop.f32.mrb[0].mxu0
        %4313 = vmatprep.mubr.bf16.mxu0 0
        %4314 = vmatmul.mubr.bf16.gmra.mrb[0].mxu0 %v3023
        %v4315 = vpop.f32.mrb[0].mxu0
        %v4316 = vadd.f32 0.0, %v4315
        %v4317 = vpop.f32.mrb[0].mxu0
        %v4318 = vpop.f32.mrb[0].mxu0
        %v4319 = vadd.f32 0.0, %v4318
        %v4320 = vpop.f32.mrb[0].mxu0
        %4321 = vmatprep.mubr.bf16.mxu0 0
        %4322 = vmatmul.mubr.bf16.gmra.mrb[0].mxu0 %v3026
        %v4323 = vpop.f32.mrb[0].mxu0
        %v4324 = vadd.f32 0.0, %v4323
        %v4325 = vpop.f32.mrb[0].mxu0
        %v4326 = vpop.f32.mrb[0].mxu0
        %v4327 = vadd.f32 0.0, %v4326
        %v4328 = vpop.f32.mrb[0].mxu0
        %4329 = vmatprep.mubr.bf16.mxu0 0
        %4330 = vmatmul.mubr.bf16.gmra.mrb[0].mxu0 %v3029
        %v4331 = vpop.f32.mrb[0].mxu0
        %v4332 = vadd.f32 0.0, %v4331
        %v4333 = vpop.f32.mrb[0].mxu0
        %v4334 = vpop.f32.mrb[0].mxu0
        %v4335 = vadd.f32 0.0, %v4334
        %v4336 = vpop.f32.mrb[0].mxu0
        %4337 = vmatprep.mubr.bf16.mxu0 0
        %4338 = vmatmul.mubr.bf16.gmra.mrb[0].mxu0 %v3032
        %v4339 = vpop.f32.mrb[0].mxu0
        %v4340 = vadd.f32 0.0, %v4339
        %v4341 = vpop.f32.mrb[0].mxu0
        %v4342 = vpop.f32.mrb[0].mxu0
        %v4343 = vadd.f32 0.0, %v4342
        %v4344 = vpop.f32.mrb[0].mxu0
        %4345 = vmatprep.mubr.bf16.mxu0 0
        %4346 = vmatmul.mubr.bf16.gmra.mrb[0].mxu0 %v3035
        %v4347 = vpop.f32.mrb[0].mxu0
        %v4348 = vadd.f32 0.0, %v4347
        %v4349 = vpop.f32.mrb[0].mxu0
        %v4350 = vpop.f32.mrb[0].mxu0
        %v4351 = vadd.f32 0.0, %v4350
        %v4352 = vpop.f32.mrb[0].mxu0
        %4353 = vmatprep.mubr.bf16.mxu0 0
        %4354 = vmatmul.mubr.bf16.gmra.mrb[0].mxu0 %v3038
        %v4355 = vpop.f32.mrb[0].mxu0
        %v4356 = vadd.f32 0.0, %v4355
        %v4357 = vpop.f32.mrb[0].mxu0
        %v4358 = vpop.f32.mrb[0].mxu0
        %v4359 = vadd.f32 0.0, %v4358
        %v4360 = vpop.f32.mrb[0].mxu0
        %4361 = vmatprep.mubr.bf16.mxu0 0
        %4362 = vmatmul.mubr.bf16.gmra.mrb[0].mxu0 %v3041
        %v4363 = vpop.f32.mrb[0].mxu0
        %v4364 = vadd.f32 0.0, %v4363
        %v4365 = vpop.f32.mrb[0].mxu0
        %v4366 = vpop.f32.mrb[0].mxu0
        %v4367 = vadd.f32 0.0, %v4366
        %v4368 = vpop.f32.mrb[0].mxu0
        %4369 = vmatprep.mubr.bf16.mxu0 0
        %4370 = vmatmul.mubr.bf16.gmra.mrb[0].mxu0 %v3044
        %v4371 = vpop.f32.mrb[0].mxu0
        %v4372 = vadd.f32 0.0, %v4371
        %v4373 = vpop.f32.mrb[0].mxu0
        %v4374 = vpop.f32.mrb[0].mxu0
        %v4375 = vadd.f32 0.0, %v4374
        %v4376 = vpop.f32.mrb[0].mxu0
        %4377 = vmatprep.mubr.bf16.mxu0 0
        %4378 = vmatmul.mubr.bf16.gmra.mrb[0].mxu0 %v3047
        %v4379 = vpop.f32.mrb[0].mxu0
        %v4380 = vadd.f32 0.0, %v4379
        %v4381 = vpop.f32.mrb[0].mxu0
        %v4382 = vpop.f32.mrb[0].mxu0
        %v4383 = vadd.f32 0.0, %v4382
        %v4384 = vpop.f32.mrb[0].mxu0
        %4385 = vmatprep.mubr.bf16.mxu0 0
        %4386 = vmatmul.mubr.bf16.gmra.mrb[0].mxu0 %v3050
        %v4387 = vpop.f32.mrb[0].mxu0
        %v4388 = vadd.f32 0.0, %v4387
        %v4389 = vpop.f32.mrb[0].mxu0
        %v4390 = vpop.f32.mrb[0].mxu0
        %v4391 = vadd.f32 0.0, %v4390
        %v4392 = vpop.f32.mrb[0].mxu0
        %4393 = vmatprep.mubr.bf16.mxu0 0
        %4394 = vmatmul.mubr.bf16.gmra.mrb[0].mxu0 %v3053
        %v4395 = vpop.f32.mrb[0].mxu0
        %v4396 = vadd.f32 0.0, %v4395
        %v4397 = vpop.f32.mrb[0].mxu0
        %v4398 = vpop.f32.mrb[0].mxu0
        %v4399 = vadd.f32 0.0, %v4398
        %v4400 = vpop.f32.mrb[0].mxu0
        %4401 = vmatprep.mubr.bf16.mxu0 0
        %4402 = vmatmul.mubr.bf16.gmra.mrb[0].mxu0 %v3056
        %v4403 = vpop.f32.mrb[0].mxu0
        %v4404 = vadd.f32 0.0, %v4403
        %v4405 = vpop.f32.mrb[0].mxu0
        %v4406 = vpop.f32.mrb[0].mxu0
        %v4407 = vadd.f32 0.0, %v4406
        %v4408 = vpop.f32.mrb[0].mxu0
        %4409 = vmatprep.mubr.bf16.mxu0 0
        %4410 = vmatmul.mubr.bf16.gmra.mrb[0].mxu0 %v3658
        %v4411 = vpop.f32.mrb[0].mxu0
        %v4412 = vadd.f32 0.0, %v4411
        %v4413 = vpop.f32.mrb[0].mxu0
        %v4414 = vpop.f32.mrb[0].mxu0
        %v4415 = vadd.f32 0.0, %v4414
        %v4416 = vpop.f32.mrb[0].mxu0
        %4417 = vmatprep.mubr.bf16.mxu0 0
        %4418 = vmatmul.mubr.bf16.gmra.mrb[0].mxu0 %v4260
        %v4419 = vpop.f32.mrb[0].mxu0
        %v4420 = vadd.f32 0.0, %v4419
        %v4421 = vpop.f32.mrb[0].mxu0
        %v4422 = vpop.f32.mrb[0].mxu0
        %v4423 = vadd.f32 0.0, %v4422
        %v4424 = vpop.f32.mrb[0].mxu0
        %4425 = vdwg.mxu0
        %v4426 = vadd.f32 %v4225, %v4300
        %v4427 = vadd.f32 %v4226, %v4303
        %v4428 = vadd.f32 %v4227, %v4308
        %v4429 = vadd.f32 %v4228, %v4311
        %v4430 = vadd.f32 %v4229, %v4316
        %v4431 = vadd.f32 %v4230, %v4319
        %v4432 = vadd.f32 %v4231, %v4324
        %v4433 = vadd.f32 %v4232, %v4327
        %v4434 = vadd.f32 %v4233, %v4332
        %v4435 = vadd.f32 %v4234, %v4335
        %v4436 = vadd.f32 %v4235, %v4340
        %v4437 = vadd.f32 %v4236, %v4343
        %v4438 = vadd.f32 %v4237, %v4348
        %v4439 = vadd.f32 %v4238, %v4351
        %v4440 = vadd.f32 %v4239, %v4356
        %v4441 = vadd.f32 %v4240, %v4359
        %v4442 = vadd.f32 %v4241, %v4364
        %v4443 = vadd.f32 %v4242, %v4367
        %v4444 = vadd.f32 %v4243, %v4372
        %v4445 = vadd.f32 %v4244, %v4375
        %v4446 = vadd.f32 %v4245, %v4380
        %v4447 = vadd.f32 %v4246, %v4383
        %v4448 = vadd.f32 %v4247, %v4388
        %v4449 = vadd.f32 %v4248, %v4391
        %v4450 = vadd.f32 %v4249, %v4396
        %v4451 = vadd.f32 %v4250, %v4399
        %v4452 = vadd.f32 %v4251, %v4404
        %v4453 = vadd.f32 %v4252, %v4407
        %v4454 = vadd.f32 %v4253, %v4412
        %v4455 = vadd.f32 %v4254, %v4415
        %v4456 = vadd.f32 %v4255, %v4420
        %v4457 = vadd.f32 %v4256, %v4423
        %v4458 = vld [vmem:[%s5] sm:$0x1]
        %v4460 = vlaneseq
        %v4461 = vshrl.u32 %v4460, 7
        %v4462 = vsub.s32 0, %v4461
        %v4463 = vrot.slane %v4458, %v4462
        %v4465 = vmul.f32 %v4426, %v4463
        %v4466 = vmul.f32 %v4427, %v4463
        %v4467 = vmul.f32 %v4428, %v4463
        %v4468 = vmul.f32 %v4429, %v4463
        %v4469 = vmul.f32 %v4430, %v4463
        %v4470 = vmul.f32 %v4431, %v4463
        %v4471 = vmul.f32 %v4432, %v4463
        %v4472 = vmul.f32 %v4433, %v4463
        %v4473 = vmul.f32 %v4434, %v4463
        %v4474 = vmul.f32 %v4435, %v4463
        %v4475 = vmul.f32 %v4436, %v4463
        %v4476 = vmul.f32 %v4437, %v4463
        %v4477 = vmul.f32 %v4438, %v4463
        %v4478 = vmul.f32 %v4439, %v4463
        %v4479 = vmul.f32 %v4440, %v4463
        %v4480 = vmul.f32 %v4441, %v4463
        %v4481 = vmul.f32 %v4442, %v4463
        %v4482 = vmul.f32 %v4443, %v4463
        %v4483 = vmul.f32 %v4444, %v4463
        %v4484 = vmul.f32 %v4445, %v4463
        %v4485 = vmul.f32 %v4446, %v4463
        %v4486 = vmul.f32 %v4447, %v4463
        %v4487 = vmul.f32 %v4448, %v4463
        %v4488 = vmul.f32 %v4449, %v4463
        %v4489 = vmul.f32 %v4450, %v4463
        %v4490 = vmul.f32 %v4451, %v4463
        %v4491 = vmul.f32 %v4452, %v4463
        %v4492 = vmul.f32 %v4453, %v4463
        %v4493 = vmul.f32 %v4454, %v4463
        %v4494 = vmul.f32 %v4455, %v4463
        %v4495 = vmul.f32 %v4456, %v4463
        %v4496 = vmul.f32 %v4457, %v4463
        %v4497 = vld [vmem:[%s6] sm:$0x1]
        %v4499 = vlaneseq
        %v4500 = vshrl.u32 %v4499, 7
        %v4501 = vsub.s32 0, %v4500
        %v4502 = vrot.slane %v4497, %v4501
        %v4504 = vadd.f32 %v4465, %v4502
        %v4505 = vadd.f32 %v4466, %v4502
        %v4506 = vadd.f32 %v4467, %v4502
        %v4507 = vadd.f32 %v4468, %v4502
        %v4508 = vadd.f32 %v4469, %v4502
        %v4509 = vadd.f32 %v4470, %v4502
        %v4510 = vadd.f32 %v4471, %v4502
        %v4511 = vadd.f32 %v4472, %v4502
        %v4512 = vadd.f32 %v4473, %v4502
        %v4513 = vadd.f32 %v4474, %v4502
        %v4514 = vadd.f32 %v4475, %v4502
        %v4515 = vadd.f32 %v4476, %v4502
        %v4516 = vadd.f32 %v4477, %v4502
        %v4517 = vadd.f32 %v4478, %v4502
        %v4518 = vadd.f32 %v4479, %v4502
        %v4519 = vadd.f32 %v4480, %v4502
        %v4520 = vadd.f32 %v4481, %v4502
        %v4521 = vadd.f32 %v4482, %v4502
        %v4522 = vadd.f32 %v4483, %v4502
        %v4523 = vadd.f32 %v4484, %v4502
        %v4524 = vadd.f32 %v4485, %v4502
        %v4525 = vadd.f32 %v4486, %v4502
        %v4526 = vadd.f32 %v4487, %v4502
        %v4527 = vadd.f32 %v4488, %v4502
        %v4528 = vadd.f32 %v4489, %v4502
        %v4529 = vadd.f32 %v4490, %v4502
        %v4530 = vadd.f32 %v4491, %v4502
        %v4531 = vadd.f32 %v4492, %v4502
        %v4532 = vadd.f32 %v4493, %v4502
        %v4533 = vadd.f32 %v4494, %v4502
        %v4534 = vadd.f32 %v4495, %v4502
        %v4535 = vadd.f32 %v4496, %v4502
        %v4536 = vmax.f32 %v4504, 0.0
        %v4537 = vmax.f32 %v4505, 0.0
        %v4538 = vmax.f32 %v4506, 0.0
        %v4539 = vmax.f32 %v4507, 0.0
        %v4540 = vmax.f32 %v4508, 0.0
        %v4541 = vmax.f32 %v4509, 0.0
        %v4542 = vmax.f32 %v4510, 0.0
        %v4543 = vmax.f32 %v4511, 0.0
        %v4544 = vmax.f32 %v4512, 0.0
        %v4545 = vmax.f32 %v4513, 0.0
        %v4546 = vmax.f32 %v4514, 0.0
        %v4547 = vmax.f32 %v4515, 0.0
        %v4548 = vmax.f32 %v4516, 0.0
        %v4549 = vmax.f32 %v4517, 0.0
        %v4550 = vmax.f32 %v4518, 0.0
        %v4551 = vmax.f32 %v4519, 0.0
        %v4552 = vmax.f32 %v4520, 0.0
        %v4553 = vmax.f32 %v4521, 0.0
        %v4554 = vmax.f32 %v4522, 0.0
        %v4555 = vmax.f32 %v4523, 0.0
        %v4556 = vmax.f32 %v4524, 0.0
        %v4557 = vmax.f32 %v4525, 0.0
        %v4558 = vmax.f32 %v4526, 0.0
        %v4559 = vmax.f32 %v4527, 0.0
        %v4560 = vmax.f32 %v4528, 0.0
        %v4561 = vmax.f32 %v4529, 0.0
        %v4562 = vmax.f32 %v4530, 0.0
        %v4563 = vmax.f32 %v4531, 0.0
        %v4564 = vmax.f32 %v4532, 0.0
        %v4565 = vmax.f32 %v4533, 0.0
        %v4566 = vmax.f32 %v4534, 0.0
        %v4567 = vmax.f32 %v4535, 0.0
        %v4568 = vpack.c.bf16 %v4537, %v4536
        %v4569 = vpack.c.bf16 %v4539, %v4538
        %v4570 = vpack.c.bf16 %v4541, %v4540
        %v4571 = vpack.c.bf16 %v4543, %v4542
        %v4572 = vpack.c.bf16 %v4545, %v4544
        %v4573 = vpack.c.bf16 %v4547, %v4546
        %v4574 = vpack.c.bf16 %v4549, %v4548
        %v4575 = vpack.c.bf16 %v4551, %v4550
        %v4576 = vpack.c.bf16 %v4553, %v4552
        %v4577 = vpack.c.bf16 %v4555, %v4554
        %v4578 = vpack.c.bf16 %v4557, %v4556
        %v4579 = vpack.c.bf16 %v4559, %v4558
        %v4580 = vpack.c.bf16 %v4561, %v4560
        %v4581 = vpack.c.bf16 %v4563, %v4562
        %v4582 = vpack.c.bf16 %v4565, %v4564
        %v4583 = vpack.c.bf16 %v4567, %v4566
        %v4584 = vld [vmem:[%s7] sm:$0x3]
        %v4586 = vsel %vm2598, %v4568, 0
        %v4589 = vsel %vm2598, %v4569, 0
        %v4592 = vsel %vm2598, %v4570, 0
        %v4595 = vsel %vm2598, %v4571, 0
        %v4598 = vsel %vm2598, %v4572, 0
        %v4601 = vsel %vm2598, %v4573, 0
        %v4604 = vsel %vm2598, %v4574, 0
        %v4607 = vsel %vm2598, %v4575, 0
        %v4610 = vsel %vm2598, %v4576, 0
        %v4613 = vsel %vm2598, %v4577, 0
        %v4616 = vsel %vm2598, %v4578, 0
        %v4619 = vsel %vm2598, %v4579, 0
        %v4622 = vsel %vm2598, %v4580, 0
        %v4625 = vsel %vm2598, %v4581, 0
        %v4628 = vsel %vm2598, %v4582, 0
        %v4631 = vsel %vm2598, %v4583, 0
        %v4634 = vsel %vm2631, %v4584, 0
        %4636 = vmatprep.subr.bf16.mxu0 0
        %4637 = vmatpush1.bf16.msra.mxu0 %v4634
        %4638 = vmatprep.subr.bf16.mxu0 0
        %4639 = vmatpush1.bf16.msra.mxu0 0
        %4640 = vmatprep.subr.bf16.mxu0 0
        %4641 = vmatpush1.bf16.msra.mxu0 0
        %4642 = vmatprep.subr.bf16.mxu0 0
        %4643 = vmatpush1.bf16.msra.mxu0 0
        %4644 = vmatprep.subr.bf16.mxu0 0
        %4645 = vmatpush1.bf16.msra.mxu0 0
        %4646 = vmatprep.subr.bf16.mxu0 0
        %4647 = vmatpush1.bf16.msra.mxu0 0
        %4648 = vmatprep.subr.bf16.mxu0 0
        %4649 = vmatpush1.bf16.msra.mxu0 0
        %4650 = vmatprep.subr.bf16.mxu0 0
        %4651 = vmatpush1.bf16.msra.mxu0 0
        %4652 = vmatprep.subr.bf16.mxu0 0
        %4653 = vmatpush1.bf16.msra.mxu0 0
        %4654 = vmatprep.subr.bf16.mxu0 0
        %4655 = vmatpush1.bf16.msra.mxu0 0
        %4656 = vmatprep.subr.bf16.mxu0 0
        %4657 = vmatpush1.bf16.msra.mxu0 0
        %4658 = vmatprep.subr.bf16.mxu0 0
        %4659 = vmatpush1.bf16.msra.mxu0 0
        %4660 = vmatprep.subr.bf16.mxu0 0
        %4661 = vmatpush1.bf16.msra.mxu0 0
        %4662 = vmatprep.subr.bf16.mxu0 0
        %4663 = vmatpush1.bf16.msra.mxu0 0
        %4664 = vmatprep.subr.bf16.mxu0 0
        %4665 = vmatpush1.bf16.msra.mxu0 0
        %4666 = vmatprep.subr.bf16.mxu0 0
        %4667 = vmatpush1.bf16.msra.mxu0 0
        %4668 = vmatprep.mubr.bf16.mxu0 0
        %4669 = vmatmul.mubr.bf16.gmra.mrb[0].mxu0 %v4586
        %v4670 = vpop.f32.mrb[0].mxu0
        %v4671 = vadd.f32 0.0, %v4670
        %v4672 = vpop.f32.mrb[0].mxu0
        %v4673 = vpop.f32.mrb[0].mxu0
        %v4674 = vadd.f32 0.0, %v4673
        %v4675 = vpop.f32.mrb[0].mxu0
        %4676 = vmatprep.mubr.bf16.mxu0 0
        %4677 = vmatmul.mubr.bf16.gmra.mrb[0].mxu0 %v4589
        %v4678 = vpop.f32.mrb[0].mxu0
        %v4679 = vadd.f32 0.0, %v4678
        %v4680 = vpop.f32.mrb[0].mxu0
        %v4681 = vpop.f32.mrb[0].mxu0
        %v4682 = vadd.f32 0.0, %v4681
        %v4683 = vpop.f32.mrb[0].mxu0
        %4684 = vmatprep.mubr.bf16.mxu0 0
        %4685 = vmatmul.mubr.bf16.gmra.mrb[0].mxu0 %v4592
        %v4686 = vpop.f32.mrb[0].mxu0
        %v4687 = vadd.f32 0.0, %v4686
        %v4688 = vpop.f32.mrb[0].mxu0
        %v4689 = vpop.f32.mrb[0].mxu0
        %v4690 = vadd.f32 0.0, %v4689
        %v4691 = vpop.f32.mrb[0].mxu0
        %4692 = vmatprep.mubr.bf16.mxu0 0
        %4693 = vmatmul.mubr.bf16.gmra.mrb[0].mxu0 %v4595
        %v4694 = vpop.f32.mrb[0].mxu0
        %v4695 = vadd.f32 0.0, %v4694
        %v4696 = vpop.f32.mrb[0].mxu0
        %v4697 = vpop.f32.mrb[0].mxu0
        %v4698 = vadd.f32 0.0, %v4697
        %v4699 = vpop.f32.mrb[0].mxu0
        %4700 = vmatprep.mubr.bf16.mxu0 0
        %4701 = vmatmul.mubr.bf16.gmra.mrb[0].mxu0 %v4598
        %v4702 = vpop.f32.mrb[0].mxu0
        %v4703 = vadd.f32 0.0, %v4702
        %v4704 = vpop.f32.mrb[0].mxu0
        %v4705 = vpop.f32.mrb[0].mxu0
        %v4706 = vadd.f32 0.0, %v4705
        %v4707 = vpop.f32.mrb[0].mxu0
        %4708 = vmatprep.mubr.bf16.mxu0 0
        %4709 = vmatmul.mubr.bf16.gmra.mrb[0].mxu0 %v4601
        %v4710 = vpop.f32.mrb[0].mxu0
        %v4711 = vadd.f32 0.0, %v4710
        %v4712 = vpop.f32.mrb[0].mxu0
        %v4713 = vpop.f32.mrb[0].mxu0
        %v4714 = vadd.f32 0.0, %v4713
        %v4715 = vpop.f32.mrb[0].mxu0
        %4716 = vmatprep.mubr.bf16.mxu0 0
        %4717 = vmatmul.mubr.bf16.gmra.mrb[0].mxu0 %v4604
        %v4718 = vpop.f32.mrb[0].mxu0
        %v4719 = vadd.f32 0.0, %v4718
        %v4720 = vpop.f32.mrb[0].mxu0
        %v4721 = vpop.f32.mrb[0].mxu0
        %v4722 = vadd.f32 0.0, %v4721
        %v4723 = vpop.f32.mrb[0].mxu0
        %4724 = vmatprep.mubr.bf16.mxu0 0
        %4725 = vmatmul.mubr.bf16.gmra.mrb[0].mxu0 %v4607
        %v4726 = vpop.f32.mrb[0].mxu0
        %v4727 = vadd.f32 0.0, %v4726
        %v4728 = vpop.f32.mrb[0].mxu0
        %v4729 = vpop.f32.mrb[0].mxu0
        %v4730 = vadd.f32 0.0, %v4729
        %v4731 = vpop.f32.mrb[0].mxu0
        %4732 = vmatprep.mubr.bf16.mxu0 0
        %4733 = vmatmul.mubr.bf16.gmra.mrb[0].mxu0 %v4610
        %v4734 = vpop.f32.mrb[0].mxu0
        %v4735 = vadd.f32 0.0, %v4734
        %v4736 = vpop.f32.mrb[0].mxu0
        %v4737 = vpop.f32.mrb[0].mxu0
        %v4738 = vadd.f32 0.0, %v4737
        %v4739 = vpop.f32.mrb[0].mxu0
        %4740 = vmatprep.mubr.bf16.mxu0 0
        %4741 = vmatmul.mubr.bf16.gmra.mrb[0].mxu0 %v4613
        %v4742 = vpop.f32.mrb[0].mxu0
        %v4743 = vadd.f32 0.0, %v4742
        %v4744 = vpop.f32.mrb[0].mxu0
        %v4745 = vpop.f32.mrb[0].mxu0
        %v4746 = vadd.f32 0.0, %v4745
        %v4747 = vpop.f32.mrb[0].mxu0
        %4748 = vmatprep.mubr.bf16.mxu0 0
        %4749 = vmatmul.mubr.bf16.gmra.mrb[0].mxu0 %v4616
        %v4750 = vpop.f32.mrb[0].mxu0
        %v4751 = vadd.f32 0.0, %v4750
        %v4752 = vpop.f32.mrb[0].mxu0
        %v4753 = vpop.f32.mrb[0].mxu0
        %v4754 = vadd.f32 0.0, %v4753
        %v4755 = vpop.f32.mrb[0].mxu0
        %4756 = vmatprep.mubr.bf16.mxu0 0
        %4757 = vmatmul.mubr.bf16.gmra.mrb[0].mxu0 %v4619
        %v4758 = vpop.f32.mrb[0].mxu0
        %v4759 = vadd.f32 0.0, %v4758
        %v4760 = vpop.f32.mrb[0].mxu0
        %v4761 = vpop.f32.mrb[0].mxu0
        %v4762 = vadd.f32 0.0, %v4761
        %v4763 = vpop.f32.mrb[0].mxu0
        %4764 = vmatprep.mubr.bf16.mxu0 0
        %4765 = vmatmul.mubr.bf16.gmra.mrb[0].mxu0 %v4622
        %v4766 = vpop.f32.mrb[0].mxu0
        %v4767 = vadd.f32 0.0, %v4766
        %v4768 = vpop.f32.mrb[0].mxu0
        %v4769 = vpop.f32.mrb[0].mxu0
        %v4770 = vadd.f32 0.0, %v4769
        %v4771 = vpop.f32.mrb[0].mxu0
        %4772 = vmatprep.mubr.bf16.mxu0 0
        %4773 = vmatmul.mubr.bf16.gmra.mrb[0].mxu0 %v4625
        %v4774 = vpop.f32.mrb[0].mxu0
        %v4775 = vadd.f32 0.0, %v4774
        %v4776 = vpop.f32.mrb[0].mxu0
        %v4777 = vpop.f32.mrb[0].mxu0
        %v4778 = vadd.f32 0.0, %v4777
        %v4779 = vpop.f32.mrb[0].mxu0
        %4780 = vmatprep.mubr.bf16.mxu0 0
        %4781 = vmatmul.mubr.bf16.gmra.mrb[0].mxu0 %v4628
        %v4782 = vpop.f32.mrb[0].mxu0
        %v4783 = vadd.f32 0.0, %v4782
        %v4784 = vpop.f32.mrb[0].mxu0
        %v4785 = vpop.f32.mrb[0].mxu0
        %v4786 = vadd.f32 0.0, %v4785
        %v4787 = vpop.f32.mrb[0].mxu0
        %4788 = vmatprep.mubr.bf16.mxu0 0
        %4789 = vmatmul.mubr.bf16.gmra.mrb[0].mxu0 %v4631
        %v4790 = vpop.f32.mrb[0].mxu0
        %v4791 = vadd.f32 0.0, %v4790
        %v4792 = vpop.f32.mrb[0].mxu0
        %v4793 = vpop.f32.mrb[0].mxu0
        %v4794 = vadd.f32 0.0, %v4793
        %v4795 = vpop.f32.mrb[0].mxu0
        %4796 = vdwg.mxu0
        %v4797 = vld [vmem:[%s8] sm:$0x1]
        %v4799 = vlaneseq
        %v4800 = vshrl.u32 %v4799, 7
        %v4801 = vsub.s32 0, %v4800
        %v4802 = vrot.slane %v4797, %v4801
        %v4804 = vmul.f32 %v4671, %v4802
        %v4805 = vmul.f32 %v4674, %v4802
        %v4806 = vmul.f32 %v4679, %v4802
        %v4807 = vmul.f32 %v4682, %v4802
        %v4808 = vmul.f32 %v4687, %v4802
        %v4809 = vmul.f32 %v4690, %v4802
        %v4810 = vmul.f32 %v4695, %v4802
        %v4811 = vmul.f32 %v4698, %v4802
        %v4812 = vmul.f32 %v4703, %v4802
        %v4813 = vmul.f32 %v4706, %v4802
        %v4814 = vmul.f32 %v4711, %v4802
        %v4815 = vmul.f32 %v4714, %v4802
        %v4816 = vmul.f32 %v4719, %v4802
        %v4817 = vmul.f32 %v4722, %v4802
        %v4818 = vmul.f32 %v4727, %v4802
        %v4819 = vmul.f32 %v4730, %v4802
        %v4820 = vmul.f32 %v4735, %v4802
        %v4821 = vmul.f32 %v4738, %v4802
        %v4822 = vmul.f32 %v4743, %v4802
        %v4823 = vmul.f32 %v4746, %v4802
        %v4824 = vmul.f32 %v4751, %v4802
        %v4825 = vmul.f32 %v4754, %v4802
        %v4826 = vmul.f32 %v4759, %v4802
        %v4827 = vmul.f32 %v4762, %v4802
        %v4828 = vmul.f32 %v4767, %v4802
        %v4829 = vmul.f32 %v4770, %v4802
        %v4830 = vmul.f32 %v4775, %v4802
        %v4831 = vmul.f32 %v4778, %v4802
        %v4832 = vmul.f32 %v4783, %v4802
        %v4833 = vmul.f32 %v4786, %v4802
        %v4834 = vmul.f32 %v4791, %v4802
        %v4835 = vmul.f32 %v4794, %v4802
        %v4836 = vld [vmem:[%s9] sm:$0x1]
        %v4838 = vlaneseq
        %v4839 = vshrl.u32 %v4838, 7
        %v4840 = vsub.s32 0, %v4839
        %v4841 = vrot.slane %v4836, %v4840
        %v4843 = vadd.f32 %v4804, %v4841
        %v4844 = vadd.f32 %v4805, %v4841
        %v4845 = vadd.f32 %v4806, %v4841
        %v4846 = vadd.f32 %v4807, %v4841
        %v4847 = vadd.f32 %v4808, %v4841
        %v4848 = vadd.f32 %v4809, %v4841
        %v4849 = vadd.f32 %v4810, %v4841
        %v4850 = vadd.f32 %v4811, %v4841
        %v4851 = vadd.f32 %v4812, %v4841
        %v4852 = vadd.f32 %v4813, %v4841
        %v4853 = vadd.f32 %v4814, %v4841
        %v4854 = vadd.f32 %v4815, %v4841
        %v4855 = vadd.f32 %v4816, %v4841
        %v4856 = vadd.f32 %v4817, %v4841
        %v4857 = vadd.f32 %v4818, %v4841
        %v4858 = vadd.f32 %v4819, %v4841
        %v4859 = vadd.f32 %v4820, %v4841
        %v4860 = vadd.f32 %v4821, %v4841
        %v4861 = vadd.f32 %v4822, %v4841
        %v4862 = vadd.f32 %v4823, %v4841
        %v4863 = vadd.f32 %v4824, %v4841
        %v4864 = vadd.f32 %v4825, %v4841
        %v4865 = vadd.f32 %v4826, %v4841
        %v4866 = vadd.f32 %v4827, %v4841
        %v4867 = vadd.f32 %v4828, %v4841
        %v4868 = vadd.f32 %v4829, %v4841
        %v4869 = vadd.f32 %v4830, %v4841
        %v4870 = vadd.f32 %v4831, %v4841
        %v4871 = vadd.f32 %v4832, %v4841
        %v4872 = vadd.f32 %v4833, %v4841
        %v4873 = vadd.f32 %v4834, %v4841
        %v4874 = vadd.f32 %v4835, %v4841
        %v4875 = vunpack.c.l.bf16 %v418
        %v4876 = vunpack.c.l.bf16 %v419
        %v4877 = vunpack.c.l.bf16 %v420
        %v4878 = vunpack.c.l.bf16 %v421
        %v4879 = vunpack.c.l.bf16 %v422
        %v4880 = vunpack.c.l.bf16 %v423
        %v4881 = vunpack.c.l.bf16 %v424
        %v4882 = vunpack.c.l.bf16 %v425
        %v4883 = vunpack.c.l.bf16 %v426
        %v4884 = vunpack.c.l.bf16 %v427
        %v4885 = vunpack.c.l.bf16 %v428
        %v4886 = vunpack.c.l.bf16 %v429
        %v4887 = vunpack.c.l.bf16 %v430
        %v4888 = vunpack.c.l.bf16 %v431
        %v4889 = vunpack.c.l.bf16 %v432
        %v4890 = vunpack.c.l.bf16 %v433
        %v4891 = vunpack.c.l.bf16 %v434
        %v4892 = vunpack.c.l.bf16 %v435
        %v4893 = vunpack.c.l.bf16 %v436
        %v4894 = vunpack.c.l.bf16 %v437
        %v4895 = vunpack.c.l.bf16 %v438
        %v4896 = vunpack.c.l.bf16 %v439
        %v4897 = vunpack.c.l.bf16 %v440
        %v4898 = vunpack.c.l.bf16 %v441
        %v4899 = vunpack.c.l.bf16 %v442
        %v4900 = vunpack.c.l.bf16 %v443
        %v4901 = vunpack.c.l.bf16 %v444
        %v4902 = vunpack.c.l.bf16 %v445
        %v4903 = vunpack.c.l.bf16 %v446
        %v4904 = vunpack.c.l.bf16 %v447
        %v4905 = vunpack.c.l.bf16 %v448
        %v4906 = vunpack.c.l.bf16 %v449
        %v4907 = vadd.f32 %v4843, %v4875
        %v4908 = vadd.f32 %v4844, %v4876
        %v4909 = vadd.f32 %v4845, %v4877
        %v4910 = vadd.f32 %v4846, %v4878
        %v4911 = vadd.f32 %v4847, %v4879
        %v4912 = vadd.f32 %v4848, %v4880
        %v4913 = vadd.f32 %v4849, %v4881
        %v4914 = vadd.f32 %v4850, %v4882
        %v4915 = vadd.f32 %v4851, %v4883
        %v4916 = vadd.f32 %v4852, %v4884
        %v4917 = vadd.f32 %v4853, %v4885
        %v4918 = vadd.f32 %v4854, %v4886
        %v4919 = vadd.f32 %v4855, %v4887
        %v4920 = vadd.f32 %v4856, %v4888
        %v4921 = vadd.f32 %v4857, %v4889
        %v4922 = vadd.f32 %v4858, %v4890
        %v4923 = vadd.f32 %v4859, %v4891
        %v4924 = vadd.f32 %v4860, %v4892
        %v4925 = vadd.f32 %v4861, %v4893
        %v4926 = vadd.f32 %v4862, %v4894
        %v4927 = vadd.f32 %v4863, %v4895
        %v4928 = vadd.f32 %v4864, %v4896
        %v4929 = vadd.f32 %v4865, %v4897
        %v4930 = vadd.f32 %v4866, %v4898
        %v4931 = vadd.f32 %v4867, %v4899
        %v4932 = vadd.f32 %v4868, %v4900
        %v4933 = vadd.f32 %v4869, %v4901
        %v4934 = vadd.f32 %v4870, %v4902
        %v4935 = vadd.f32 %v4871, %v4903
        %v4936 = vadd.f32 %v4872, %v4904
        %v4937 = vadd.f32 %v4873, %v4905
        %v4938 = vadd.f32 %v4874, %v4906
        %v4939 = vmax.f32 %v4907, 0.0
        %v4940 = vmax.f32 %v4908, 0.0
        %v4941 = vmax.f32 %v4909, 0.0
        %v4942 = vmax.f32 %v4910, 0.0
        %v4943 = vmax.f32 %v4911, 0.0
        %v4944 = vmax.f32 %v4912, 0.0
        %v4945 = vmax.f32 %v4913, 0.0
        %v4946 = vmax.f32 %v4914, 0.0
        %v4947 = vmax.f32 %v4915, 0.0
        %v4948 = vmax.f32 %v4916, 0.0
        %v4949 = vmax.f32 %v4917, 0.0
        %v4950 = vmax.f32 %v4918, 0.0
        %v4951 = vmax.f32 %v4919, 0.0
        %v4952 = vmax.f32 %v4920, 0.0
        %v4953 = vmax.f32 %v4921, 0.0
        %v4954 = vmax.f32 %v4922, 0.0
        %v4955 = vmax.f32 %v4923, 0.0
        %v4956 = vmax.f32 %v4924, 0.0
        %v4957 = vmax.f32 %v4925, 0.0
        %v4958 = vmax.f32 %v4926, 0.0
        %v4959 = vmax.f32 %v4927, 0.0
        %v4960 = vmax.f32 %v4928, 0.0
        %v4961 = vmax.f32 %v4929, 0.0
        %v4962 = vmax.f32 %v4930, 0.0
        %v4963 = vmax.f32 %v4931, 0.0
        %v4964 = vmax.f32 %v4932, 0.0
        %v4965 = vmax.f32 %v4933, 0.0
        %v4966 = vmax.f32 %v4934, 0.0
        %v4967 = vmax.f32 %v4935, 0.0
        %v4968 = vmax.f32 %v4936, 0.0
        %v4969 = vmax.f32 %v4937, 0.0
        %v4970 = vmax.f32 %v4938, 0.0
        %v4971 = vpack.c.bf16 %v4940, %v4939
        %v4972 = vpack.c.bf16 %v4942, %v4941
        %v4973 = vpack.c.bf16 %v4944, %v4943
        %v4974 = vpack.c.bf16 %v4946, %v4945
        %v4975 = vpack.c.bf16 %v4948, %v4947
        %v4976 = vpack.c.bf16 %v4950, %v4949
        %v4977 = vpack.c.bf16 %v4952, %v4951
        %v4978 = vpack.c.bf16 %v4954, %v4953
        %v4979 = vpack.c.bf16 %v4956, %v4955
        %v4980 = vpack.c.bf16 %v4958, %v4957
        %v4981 = vpack.c.bf16 %v4960, %v4959
        %v4982 = vpack.c.bf16 %v4962, %v4961
        %v4983 = vpack.c.bf16 %v4964, %v4963
        %v4984 = vpack.c.bf16 %v4966, %v4965
        %v4985 = vpack.c.bf16 %v4968, %v4967
        %v4986 = vpack.c.bf16 %v4970, %v4969
        %v5003 = vunpack.c.l.b16 %v4971
        %v5004 = vunpack.c.h.b16 %v4971
        %v5005 = vunpack.c.l.b16 %v4972
        %v5006 = vunpack.c.h.b16 %v4972
        %v5007 = vunpack.c.l.b16 %v4973
        %v5008 = vunpack.c.h.b16 %v4973
        %v5009 = vunpack.c.l.b16 %v4974
        %v5010 = vunpack.c.h.b16 %v4974
        %v5011 = vunpack.c.l.b16 %v4975
        %v5012 = vunpack.c.h.b16 %v4975
        %v5013 = vunpack.c.l.b16 %v4976
        %v5014 = vunpack.c.h.b16 %v4976
        %v5015 = vunpack.c.l.b16 %v4977
        %v5016 = vunpack.c.h.b16 %v4977
        %v5017 = vunpack.c.l.b16 %v4978
        %v5018 = vunpack.c.h.b16 %v4978
        %v5019 = vunpack.c.l.b16 %v4979
        %v5020 = vunpack.c.h.b16 %v4979
        %v5021 = vunpack.c.l.b16 %v4980
        %v5022 = vunpack.c.h.b16 %v4980
        %v5023 = vunpack.c.l.b16 %v4981
        %v5024 = vunpack.c.h.b16 %v4981
        %v5025 = vunpack.c.l.b16 %v4982
        %v5026 = vunpack.c.h.b16 %v4982
        %v5027 = vunpack.c.l.b16 %v4983
        %v5028 = vunpack.c.h.b16 %v4983
        %v5029 = vunpack.c.l.b16 %v4984
        %v5030 = vunpack.c.h.b16 %v4984
        %v5031 = vunpack.c.l.b16 %v4985
        %v5032 = vunpack.c.h.b16 %v4985
        %v5033 = vunpack.c.l.b16 %v4986
        %v5034 = vunpack.c.h.b16 %v4986
        %v5035 = vpack.c.b16 %v5003, %v5003
        %v5036 = vpack.c.b16 %v5004, %v5004
        %v5037 = vpack.c.b16 %v5005, %v5005
        %v5038 = vpack.c.b16 %v5006, %v5006
        %v5039 = vpack.c.b16 %v5007, %v5007
        %v5040 = vpack.c.b16 %v5008, %v5008
        %v5041 = vpack.c.b16 %v5009, %v5009
        %v5042 = vpack.c.b16 %v5010, %v5010
        %v5043 = vpack.c.b16 %v5011, %v5011
        %v5044 = vpack.c.b16 %v5012, %v5012
        %v5045 = vpack.c.b16 %v5013, %v5013
        %v5046 = vpack.c.b16 %v5014, %v5014
        %v5047 = vpack.c.b16 %v5015, %v5015
        %v5048 = vpack.c.b16 %v5016, %v5016
        %v5049 = vpack.c.b16 %v5017, %v5017
        %v5050 = vpack.c.b16 %v5018, %v5018
        %v5051 = vpack.c.b16 %v5019, %v5019
        %v5052 = vpack.c.b16 %v5020, %v5020
        %v5053 = vpack.c.b16 %v5021, %v5021
        %v5054 = vpack.c.b16 %v5022, %v5022
        %v5055 = vpack.c.b16 %v5023, %v5023
        %v5056 = vpack.c.b16 %v5024, %v5024
        %v5057 = vpack.c.b16 %v5025, %v5025
        %v5058 = vpack.c.b16 %v5026, %v5026
        %v5059 = vpack.c.b16 %v5027, %v5027
        %v5060 = vpack.c.b16 %v5028, %v5028
        %v5061 = vpack.c.b16 %v5029, %v5029
        %v5062 = vpack.c.b16 %v5030, %v5030
        %v5063 = vpack.c.b16 %v5031, %v5031
        %v5064 = vpack.c.b16 %v5032, %v5032
        %v5065 = vpack.c.b16 %v5033, %v5033
        %v5066 = vpack.c.b16 %v5034, %v5034
        %vm5099 = vcmask 125952
        %5100 = vst.msk [vmem:[%s401] sm:$0xf] %vm5099, %v5035
        %5101 = vst.msk [vmem:[%s401 + $0x4] sm:$0xf] %vm5099, %v5036
        %5102 = vst.msk [vmem:[%s401 + $0x8] sm:$0xf] %vm5099, %v5037
        %5103 = vst.msk [vmem:[%s401 + $0xc] sm:$0xf] %vm5099, %v5038
        %5104 = vst.msk [vmem:[%s401 + $0x10] sm:$0xf] %vm5099, %v5039
        %5105 = vst.msk [vmem:[%s401 + $0x14] sm:$0xf] %vm5099, %v5040
        %5106 = vst.msk [vmem:[%s401 + $0x18] sm:$0xf] %vm5099, %v5041
        %5107 = vst.msk [vmem:[%s401 + $0x1c] sm:$0xf] %vm5099, %v5042
        %5108 = vst.msk [vmem:[%s401 + $0x20] sm:$0xf] %vm5099, %v5043
        %5109 = vst.msk [vmem:[%s401 + $0x24] sm:$0xf] %vm5099, %v5044
        %5110 = vst.msk [vmem:[%s401 + $0x28] sm:$0xf] %vm5099, %v5045
        %5111 = vst.msk [vmem:[%s401 + $0x2c] sm:$0xf] %vm5099, %v5046
        %5112 = vst.msk [vmem:[%s401 + $0x30] sm:$0xf] %vm5099, %v5047
        %5113 = vst.msk [vmem:[%s401 + $0x34] sm:$0xf] %vm5099, %v5048
        %5114 = vst.msk [vmem:[%s401 + $0x38] sm:$0xf] %vm5099, %v5049
        %5115 = vst.msk [vmem:[%s401 + $0x3c] sm:$0xf] %vm5099, %v5050
        %5116 = vst.msk [vmem:[%s401 + $0x40] sm:$0xf] %vm5099, %v5051
        %5117 = vst.msk [vmem:[%s401 + $0x44] sm:$0xf] %vm5099, %v5052
        %5118 = vst.msk [vmem:[%s401 + $0x48] sm:$0xf] %vm5099, %v5053
        %5119 = vst.msk [vmem:[%s401 + $0x4c] sm:$0xf] %vm5099, %v5054
        %5120 = vst.msk [vmem:[%s401 + $0x50] sm:$0xf] %vm5099, %v5055
        %5121 = vst.msk [vmem:[%s401 + $0x54] sm:$0xf] %vm5099, %v5056
        %5122 = vst.msk [vmem:[%s401 + $0x58] sm:$0xf] %vm5099, %v5057
        %5123 = vst.msk [vmem:[%s401 + $0x5c] sm:$0xf] %vm5099, %v5058
        %5124 = vst.msk [vmem:[%s401 + $0x60] sm:$0xf] %vm5099, %v5059
        %5125 = vst.msk [vmem:[%s401 + $0x64] sm:$0xf] %vm5099, %v5060
        %5126 = vst.msk [vmem:[%s401 + $0x68] sm:$0xf] %vm5099, %v5061
        %5127 = vst.msk [vmem:[%s401 + $0x6c] sm:$0xf] %vm5099, %v5062
        %5128 = vst.msk [vmem:[%s401 + $0x70] sm:$0xf] %vm5099, %v5063
        %5129 = vst.msk [vmem:[%s401 + $0x74] sm:$0xf] %vm5099, %v5064
        %5130 = vst.msk [vmem:[%s401 + $0x78] sm:$0xf] %vm5099, %v5065
        %5131 = vst.msk [vmem:[%s401 + $0x7c] sm:$0xf] %vm5099, %v5066
        %s5132 = smul.u32 32, %s29
        %p5133 = scmp.lt.s32.totalorder %s28, 1
        %s5134 = scalar_select %p5133, %s28, 1
        %p5135 = scmp.lt.s32.totalorder %s5132, 31
        %s5136 = scalar_select %p5135, %s5132, 31
        %s5137 = smul.addr %s5134, 32
        %s5138 = sadd.s32 %s5136, %s5137
        %s5139 = smul.addr %s5138, 4
        %s5140 = scalar_lea.vmem %s10, %s5139
        // Predicated region
        $region65: #{tpu_custom_call.1} parent=59 // pred_check
          %p5141 = pneg %p271
        $region66: #{tpu_custom_call.1} parent=59 // pred_check_branch
          %5143 = sbr.rel (%p5141) target = $region68
        $region67: #{tpu_custom_call.1} parent=59 // pred_region
          %s5144 = smul.u32 32, %s29
        $region68: #{tpu_custom_call.1} parent=59 // pred_fallthru
          _
      $region60: #{tpu_custom_call.1} parent=5 // pred_fallthru
        _
      %p5145 = scmp.le.s32.totalorder 2, %s19
      // Predicated region
      $region69: #{tpu_custom_call.1} parent=5 // pred_check
        %p5146 = pneg %p5145
      $region70: #{tpu_custom_call.1} parent=5 // pred_check_branch
        %5148 = sbr.rel (%p5146) target = $region72
      $region71: #{tpu_custom_call.1} parent=5 // pred_region
        %s5149 = ssub.s32 %s19, 2
        // Predicated region
        $region73: #{tpu_custom_call.1} parent=71 // pred_check
          %p5150 = pneg %p277
        $region74: #{tpu_custom_call.1} parent=71 // pred_check_branch
          %5152 = sbr.rel (%p5150) target = $region76
        $region75: #{tpu_custom_call.1} parent=71 // pred_region
          %s5153 = smul.u32 32, %s31
          %p5154 = scmp.lt.s32.totalorder %s30, 1
          %s5155 = scalar_select %p5154, %s30, 1
          %p5156 = scmp.lt.s32.totalorder %s5153, 31
          %s5157 = scalar_select %p5156, %s5153, 31
          %s5158 = smul.addr %s5155, 32
          %s5159 = sadd.s32 %s5157, %s5158
          %s5160 = smul.addr %s5159, 4
          %s5161 = scalar_lea.vmem %s10, %s5160
        $region76: #{tpu_custom_call.1} parent=71 // pred_fallthru
          _
      $region72: #{tpu_custom_call.1} parent=5 // pred_fallthru
        _
    $region6: #{tpu_custom_call.1} parent=1 // loop_footer
      %s23 = sadd.s32 1, %s19
    $region7: #{tpu_custom_call.1} parent=1 // loop_footer_branch
      %18 = sbr.rel target = $region3
    $region8: #{tpu_custom_call.1} parent=1 // loop_exit
      _
    %5162 = vsyncpa [#allocation3], 1
    %s5163 = scalar_lea.sflag [#allocation3], 1
    %5164 = vsyncpa %s5163, 1

</llo_original>
